<compile_context>
chip_gen: v6e
topology: v6e:2x2x1
jax: 0.10.0
libtpu: 0.0.40
codegen_flags: <defaults>
</compile_context>

<pallas_src>
import functools
import math

import jax
import jax.numpy as jnp
from jax.experimental import pallas as pl
from jax.experimental.pallas import tpu as pltpu


def _round_up(x, m):
    return ((x + m - 1) // m) * m


# --------------------------------------------------------------------------
# Conv path: im2col matmul + bias (+ ReLU) kernel, lane-dense padded outputs
# --------------------------------------------------------------------------

def _matmul_bias_kernel(x_ref, w_ref, b_ref, o_ref, *, activation):
    acc = jnp.dot(x_ref[...], w_ref[...], preferred_element_type=jnp.float32)
    acc = acc + b_ref[...].astype(jnp.float32)
    if activation == "relu":
        acc = jnp.maximum(acc, 0.0)
    o_ref[...] = acc.astype(o_ref.dtype)


def matmul_bias(x, w, b, activation="none"):
    """(M,K) @ (K,N) + (N,), bf16 operands / f32 accumulation.

    N is zero-padded to a multiple of 128 so stores are lane-dense; M is padded
    to the row tile so a pl.cdiv-style grid never needs a ragged tail tile.
    """
    M, K = x.shape
    N = w.shape[1]
    tn = min(512, _round_up(N, 128))
    Np = _round_up(N, tn)
    tm = min(512, _round_up(M, 8))
    Mp = _round_up(M, tm)

    xp = jnp.pad(x, ((0, Mp - M), (0, 0))).astype(jnp.bfloat16)
    wp = jnp.pad(w, ((0, 0), (0, Np - N))).astype(jnp.bfloat16)
    bp = jnp.pad(b, (0, Np - N)).astype(jnp.float32)[None, :]

    out = pl.pallas_call(
        functools.partial(_matmul_bias_kernel, activation=activation),
        out_shape=jax.ShapeDtypeStruct((Mp, Np), jnp.float32),
        grid=(Mp // tm, Np // tn),
        in_specs=[
            pl.BlockSpec((tm, K), lambda i, j: (i, 0)),
            pl.BlockSpec((K, tn), lambda i, j: (0, j)),
            pl.BlockSpec((1, tn), lambda i, j: (0, j)),
        ],
        out_specs=pl.BlockSpec((tm, tn), lambda i, j: (i, j)),
        compiler_params=pltpu.CompilerParams(
            dimension_semantics=("parallel", "parallel"),
            vmem_limit_bytes=64 << 20),
    )(xp, wp, bp)
    return out[:M, :N]


# --------------------------------------------------------------------------
# conv3 + AdaptiveAvgPool2d((1,1)) fused kernel (grid over batch)
# --------------------------------------------------------------------------

def _conv_pool_kernel(x_ref, w_ref, b_ref, o_ref, *, inv_n):
    y = jnp.dot(x_ref[0], w_ref[...], preferred_element_type=jnp.float32)
    y = y + b_ref[...].astype(jnp.float32)
    o_ref[0] = (jnp.sum(y, axis=0, keepdims=True) * inv_n).astype(o_ref.dtype)


def conv_pool(patches, w, b):
    """patches: (B, P, K); w: (K, N); returns (B, N) = mean_P(patches @ w + b)."""
    B, P, K = patches.shape
    N = w.shape[1]
    Np = _round_up(N, 128)
    xp = patches.astype(jnp.bfloat16)
    wp = jnp.pad(w, ((0, 0), (0, Np - N))).astype(jnp.bfloat16)
    bp = jnp.pad(b, (0, Np - N)).astype(jnp.float32)[None, :]

    out = pl.pallas_call(
        functools.partial(_conv_pool_kernel, inv_n=1.0 / P),
        out_shape=jax.ShapeDtypeStruct((B, 1, Np), jnp.float32),
        grid=(B,),
        in_specs=[
            pl.BlockSpec((1, P, K), lambda i: (i, 0, 0)),
            pl.BlockSpec((K, Np), lambda i: (0, 0)),
            pl.BlockSpec((1, Np), lambda i: (0, 0)),
        ],
        out_specs=pl.BlockSpec((1, 1, Np), lambda i: (i, 0, 0)),
        compiler_params=pltpu.CompilerParams(
            dimension_semantics=("parallel",)),
    )(xp, wp, bp)
    return out[:, 0, :N]


# --------------------------------------------------------------------------
# Fused decoder stack: all layers unrolled, per-batch grid, weights resident
# --------------------------------------------------------------------------

def _decoder_stack_kernel(
        x_ref, mem_ref,
        siw_ref, sib_ref, sow_ref, sob_ref,
        cvw_ref, cvb_ref, cow_ref, cob_ref,
        w1_ref, b1_ref, w2_ref, b2_ref,
        lng_ref, lnb_ref,
        fcw_ref, fcb_ref,
        logits_ref,
        *, num_layers, num_heads, eps):
    x = x_ref[0].astype(jnp.float32)                     # (S, E)
    S, E = x.shape
    dh = E // num_heads
    scale = 1.0 / math.sqrt(dh)
    mem = mem_ref[0].astype(jnp.float32)                 # (1, E)

    # Causal mask built in-kernel (no HBM mask array).  Finite -1e9 instead of
    # -inf; every row has at least one allowed key so results match softmax.
    row = jax.lax.broadcasted_iota(jnp.int32, (S, S), 0)
    col = jax.lax.broadcasted_iota(jnp.int32, (S, S), 1)
    mask = jnp.where(col <= row, 0.0, -1e9).astype(jnp.float32)

    nt_dims = (((1,), (1,)), ((), ()))                   # contract last dims (A @ B.T)

    for l in range(num_layers):
        g3 = lng_ref[l]                                  # (3, E)
        b3 = lnb_ref[l]

        def layernorm(v, idx, g3=g3, b3=b3):
            mu = jnp.mean(v, axis=-1, keepdims=True)
            var = jnp.mean(jnp.square(v - mu), axis=-1, keepdims=True)
            y = (v - mu) * jax.lax.rsqrt(var + eps)
            return y * g3[idx:idx + 1] + b3[idx:idx + 1]

        # ---- self-attention (per-batch (S,S) scores, fused QKV / out-proj) ---
        xb = x.astype(jnp.bfloat16)
        qkv = jnp.dot(xb, siw_ref[l], preferred_element_type=jnp.float32)
        qkv = qkv + sib_ref[l]
        heads = []
        for h in range(num_heads):
            q = qkv[:, h * dh:(h + 1) * dh]
            k = qkv[:, E + h * dh:E + (h + 1) * dh]
            v = qkv[:, 2 * E + h * dh:2 * E + (h + 1) * dh]
            s = jax.lax.dot_general(q, k, nt_dims,
                                    preferred_element_type=jnp.float32) * scale
            s = s + mask
            s = s - jnp.max(s, axis=-1, keepdims=True)
            p = jnp.exp(s)
            p = p / jnp.sum(p, axis=-1, keepdims=True)
            heads.append(jnp.dot(p, v, preferred_element_type=jnp.float32))
        o = jnp.concatenate(heads, axis=-1)              # (S, E)
        attn = jnp.dot(o.astype(jnp.bfloat16), sow_ref[l],
                       preferred_element_type=jnp.float32) + sob_ref[l]
        x = layernorm(x + attn, 0)

        # ---- cross-attention: memory length == 1 => softmax weight is 1, so
        #      the attended value is exactly V_proj(memory); q/k projections
        #      cannot affect the output. ------------------------------------
        vm = jnp.dot(mem.astype(jnp.bfloat16), cvw_ref[l],
                     preferred_element_type=jnp.float32) + cvb_ref[l]   # (1, E)
        ca = jnp.dot(vm.astype(jnp.bfloat16), cow_ref[l],
                     preferred_element_type=jnp.float32) + cob_ref[l]   # (1, E)
        x = layernorm(x + ca, 1)

        # ---- feed-forward: hidden (S, F) stays on-chip; w2 lane-dense (E,F) --
        h1 = jnp.dot(x.astype(jnp.bfloat16), w1_ref[l],
                     preferred_element_type=jnp.float32) + b1_ref[l]    # (S, F)
        h1 = jnp.maximum(h1, 0.0)
        ff = jax.lax.dot_general(h1.astype(jnp.bfloat16), w2_ref[l], nt_dims,
                                 preferred_element_type=jnp.float32) + b2_ref[l]
        x = layernorm(x + ff, 2)

    # ---- final vocab projection, lane-dense 128-padded output ---------------
    logits = jnp.dot(x.astype(jnp.bfloat16), fcw_ref[...],
                     preferred_element_type=jnp.float32) + fcb_ref[...]
    logits_ref[0] = logits.astype(logits_ref.dtype)


def decoder_forward(params, x, mem, num_heads):
    """x: (B, S, E) f32 embeddings(+pos); mem: (B, E) encoder memory (len 1)."""
    assert mem.ndim == 2, "cross-attention shortcut requires memory length == 1"
    layers = params["layers"]
    L = len(layers)
    B, S, E = x.shape
    F = layers[0]["w1"].shape[0]
    V = params["fc_w"].shape[0]
    NP = _round_up(V, 128)
    bf = jnp.bfloat16

    stk = lambda f: jnp.stack([f(lp) for lp in layers], axis=0)
    siw = stk(lambda lp: lp["self"]["in_w"].T).astype(bf)              # (L,E,3E)
    sib = stk(lambda lp: lp["self"]["in_b"][None, :])                  # (L,1,3E)
    sow = stk(lambda lp: lp["self"]["out_w"].T).astype(bf)             # (L,E,E)
    sob = stk(lambda lp: lp["self"]["out_b"][None, :])                 # (L,1,E)
    cvw = stk(lambda lp: lp["cross"]["in_w"][2 * E:3 * E].T).astype(bf)
    cvb = stk(lambda lp: lp["cross"]["in_b"][2 * E:3 * E][None, :])
    cow = stk(lambda lp: lp["cross"]["out_w"].T).astype(bf)
    cob = stk(lambda lp: lp["cross"]["out_b"][None, :])
    w1 = stk(lambda lp: lp["w1"].T).astype(bf)                         # (L,E,F)
    b1 = stk(lambda lp: lp["b1"][None, :])                             # (L,1,F)
    w2 = stk(lambda lp: lp["w2"]).astype(bf)                           # (L,E,F) lane-dense, NT contraction
    b2 = stk(lambda lp: lp["b2"][None, :])                             # (L,1,E)
    lng = stk(lambda lp: jnp.stack([lp["ln1_g"], lp["ln2_g"], lp["ln3_g"]]))
    lnb = stk(lambda lp: jnp.stack([lp["ln1_b"], lp["ln2_b"], lp["ln3_b"]]))

    fcw = jnp.zeros((E, NP), bf).at[:, :V].set(params["fc_w"].T.astype(bf))
    fcb = jnp.zeros((1, NP), jnp.float32).at[0, :V].set(params["fc_b"])

    mem3 = mem[:, None, :]                                             # (B,1,E)

    rep = lambda a: pl.BlockSpec(a.shape, lambda b, _n=a.ndim: (0,) * _n)

    logits = pl.pallas_call(
        functools.partial(_decoder_stack_kernel,
                          num_layers=L, num_heads=num_heads, eps=1e-5),
        out_shape=jax.ShapeDtypeStruct((B, S, NP), jnp.float32),
        grid=(B,),
        in_specs=[
            pl.BlockSpec((1, S, E), lambda b: (b, 0, 0)),
            pl.BlockSpec((1, 1, E), lambda b: (b, 0, 0)),
            rep(siw), rep(sib), rep(sow), rep(sob),
            rep(cvw), rep(cvb), rep(cow), rep(cob),
            rep(w1), rep(b1), rep(w2), rep(b2),
            rep(lng), rep(lnb),
            rep(fcw), rep(fcb),
        ],
        out_specs=pl.BlockSpec((1, S, NP), lambda b: (b, 0, 0)),
        compiler_params=pltpu.CompilerParams(
            dimension_semantics=("parallel",),
            vmem_limit_bytes=64 << 20),
    )(x, mem3, siw, sib, sow, sob, cvw, cvb, cow, cob,
      w1, b1, w2, b2, lng, lnb, fcw, fcb)
    return logits[:, :, :V]


# --------------------------------------------------------------------------
# Encoder: NHWC im2col glue + Pallas conv matmuls (conv3 fused with avg-pool)
# --------------------------------------------------------------------------
# TODO(synk): im2col patch extraction / padding and the embedding gather stay
# in plain JAX; dropout (p=0.1) is treated as eval-mode identity.

def im2col_nhwc(x, kh=3, kw=3, stride=2, pad=1):
    """x: (B, H, W, C) -> (B*Ho*Wo, C*kh*kw); per-patch order (C, kh, kw)
    matches PyTorch's Conv2d weight.reshape(Cout, Cin*kh*kw)."""
    B, H, W, C = x.shape
    xp = jnp.pad(x, ((0, 0), (pad, pad), (pad, pad), (0, 0)))
    Ho = (H + 2 * pad - kh) // stride + 1
    Wo = (W + 2 * pad - kw) // stride + 1
    cols = []
    for i in range(kh):
        for j in range(kw):
            cols.append(xp[:, i:i + stride * Ho:stride, j:j + stride * Wo:stride, :])
    patches = jnp.stack(cols, axis=0)                   # (kh*kw, B, Ho, Wo, C)
    patches = jnp.transpose(patches, (1, 2, 3, 4, 0))   # (B, Ho, Wo, C, kh*kw)
    return patches.reshape(B * Ho * Wo, C * kh * kw), Ho, Wo


def encoder_forward(p, img):
    B = img.shape[0]
    x = jnp.transpose(img, (0, 2, 3, 1))                # single NCHW -> NHWC
    # conv1 + ReLU, conv2 + ReLU  (NHWC end-to-end, no inter-layer transposes)
    for wkey, bkey in (("conv1_w", "conv1_b"), ("conv2_w", "conv2_b")):
        w = p[wkey]
        cout = w.shape[0]
        patches, Ho, Wo = im2col_nhwc(x)
        y = matmul_bias(patches, w.reshape(cout, -1).T, p[bkey], activation="relu")
        x = y.reshape(B, Ho, Wo, cout)
    # conv3 (no activation, matching the reference) fused with AdaptiveAvgPool2d
    w3 = p["conv3_w"]
    cout = w3.shape[0]
    patches, Ho, Wo = im2col_nhwc(x)
    mem = conv_pool(patches.reshape(B, Ho * Wo, -1),
                    w3.reshape(cout, -1).T, p["conv3_b"])
    return mem                                           # (B, E) memory (len-1)


# --------------------------------------------------------------------------
# Full model
# --------------------------------------------------------------------------

def model_forward(params, img, tgt, num_heads=4):
    mem = encoder_forward(params["enc"], img)                           # (B, E)
    B, S = tgt.shape
    x = jnp.take(params["embed"], tgt, axis=0) + params["pos"][:, :S]   # (B,S,E)
    return decoder_forward(params, x, mem, num_heads)                   # (B,S,V)


# --------------------------------------------------------------------------
# Parameter init (mirrors the PyTorch module structure)
# --------------------------------------------------------------------------

def init_params(key, vocab_size, embed_dim=32, num_layers=3, ffn_dim=2048):
    keys = iter(jax.random.split(key, 128))

    def nrm(shape, scale=0.02):
        return (scale * jax.random.normal(next(keys), shape)).astype(jnp.float32)

    enc = {
        "conv1_w": nrm((64, 3, 3, 3)), "conv1_b": nrm((64,)),
        "conv2_w": nrm((128, 64, 3, 3)), "conv2_b": nrm((128,)),
        "conv3_w": nrm((embed_dim, 128, 3, 3)), "conv3_b": nrm((embed_dim,)),
    }
    layers = []
    for _ in range(num_layers):
        layers.append({
            "self": {"in_w": nrm((3 * embed_dim, embed_dim)), "in_b": nrm((3 * embed_dim,)),
                     "out_w": nrm((embed_dim, embed_dim)), "out_b": nrm((embed_dim,))},
            "cross": {"in_w": nrm((3 * embed_dim, embed_dim)), "in_b": nrm((3 * embed_dim,)),
                      "out_w": nrm((embed_dim, embed_dim)), "out_b": nrm((embed_dim,))},
            "w1": nrm((ffn_dim, embed_dim)), "b1": nrm((ffn_dim,)),
            "w2": nrm((embed_dim, ffn_dim)), "b2": nrm((embed_dim,)),
            "ln1_g": jnp.ones((embed_dim,), jnp.float32), "ln1_b": jnp.zeros((embed_dim,), jnp.float32),
            "ln2_g": jnp.ones((embed_dim,), jnp.float32), "ln2_b": jnp.zeros((embed_dim,), jnp.float32),
            "ln3_g": jnp.ones((embed_dim,), jnp.float32), "ln3_b": jnp.zeros((embed_dim,), jnp.float32),
        })
    return {
        "enc": enc,
        "embed": nrm((vocab_size, embed_dim), 1.0),
        "pos": nrm((1, 512, embed_dim), 1.0),
        "layers": layers,
        "fc_w": nrm((vocab_size, embed_dim)),
        "fc_b": nrm((vocab_size,)),
    }


# --------------------------------------------------------------------------
# main
# --------------------------------------------------------------------------

if __name__ == "__main__":
    vocab_size = 50
    embed_dim = 32           # small but num_heads-divisible stand-in for 256
    key = jax.random.PRNGKey(0)
    pkey, ikey, tkey = jax.random.split(key, 3)

    params = init_params(pkey, vocab_size, embed_dim)
    img = jax.random.normal(ikey, (2, 3, 16, 16), jnp.float32)          # NCHW
    tgt = jax.random.randint(tkey, (2, 8), 0, vocab_size)               # token ids

    fwd = jax.jit(model_forward)
    logits = fwd(params, img, tgt)
    jax.block_until_ready(logits)
    assert logits.shape == (2, 8, vocab_size), logits.shape
    assert bool(jnp.all(jnp.isfinite(logits)))
    print("KERNEL_OK")
</pallas_src>

<mosaic_0001>
module attributes {stable_mosaic.version = 11 : i64} {
  func.func @_matmul_bias_kernel(%arg0: i32, %arg1: i32, %arg2: memref<128x27xbf16, #tpu.memory_space<vmem>>, %arg3: memref<27x128xbf16, #tpu.memory_space<vmem>>, %arg4: memref<1x128xf32, #tpu.memory_space<vmem>>, %arg5: memref<128x128xf32, #tpu.memory_space<vmem>>) attributes {dimension_semantics = [#tpu.dimension_semantics<parallel>, #tpu.dimension_semantics<parallel>], iteration_bounds = array<i64: 1, 1>, scalar_prefetch = 0 : i64, scratch_operands = 0 : i64, tpu.core_type = #tpu.core_type<tc>, window_params = [{transform_indices = @transform_0, window_bounds = array<i64: 128, 27>}, {transform_indices = @transform_1, window_bounds = array<i64: 27, 128>}, {transform_indices = @transform_2, window_bounds = array<i64: 1, 128>}, {transform_indices = @transform_3, window_bounds = array<i64: 128, 128>}]} {
    %c0 = arith.constant 0 : index
    %c0_0 = arith.constant 0 : index
    %0 = vector.load %arg2[%c0, %c0_0] : memref<128x27xbf16, #tpu.memory_space<vmem>>, vector<128x27xbf16>
    %c0_1 = arith.constant 0 : index
    %c0_2 = arith.constant 0 : index
    %1 = vector.load %arg3[%c0_1, %c0_2] : memref<27x128xbf16, #tpu.memory_space<vmem>>, vector<27x128xbf16>
    %cst = arith.constant dense<0.000000e+00> : vector<128x128xf32>
    %2 = tpu.matmul %0, %1, %cst {dimension_numbers = #tpu.dot_dimension_numbers<[1], [0], [0], [1], [0, 0, 1, 1], [], []>} : vector<128x27xbf16>, vector<27x128xbf16>, vector<128x128xf32> -> vector<128x128xf32>
    %c0_3 = arith.constant 0 : index
    %c0_4 = arith.constant 0 : index
    %3 = vector.load %arg4[%c0_3, %c0_4] : memref<1x128xf32, #tpu.memory_space<vmem>>, vector<1x128xf32>
    %4 = vector.broadcast %3 : vector<1x128xf32> to vector<128x128xf32>
    %5 = arith.addf %2, %4 : vector<128x128xf32>
    %cst_5 = arith.constant 0.000000e+00 : f32
    %6 = vector.broadcast %cst_5 : f32 to vector<128x128xf32>
    %7 = arith.maximumf %5, %6 : vector<128x128xf32>
    %c0_6 = arith.constant 0 : index
    %c0_7 = arith.constant 0 : index
    %8 = vector.load %arg5[%c0_6, %c0_7] : memref<128x128xf32, #tpu.memory_space<vmem>>, vector<128x128xf32>
    tpu.vector_store %arg5[%c0_6, %c0_7], %7 {strides = array<i32>} : memref<128x128xf32, #tpu.memory_space<vmem>>, vector<128x128xf32>,
    return
  }
  func.func @transform_0(%arg0: i32, %arg1: i32) -> (i32, i32) {
    %c0_i32 = arith.constant 0 : i32
    %c0_i32_0 = arith.constant 0 : i32
    return %arg0, %c0_i32 : i32, i32
  }
  func.func @transform_1(%arg0: i32, %arg1: i32) -> (i32, i32) {
    %c0_i32 = arith.constant 0 : i32
    %c0_i32_0 = arith.constant 0 : i32
    return %c0_i32, %arg1 : i32, i32
  }
  func.func @transform_2(%arg0: i32, %arg1: i32) -> (i32, i32) {
    %c0_i32 = arith.constant 0 : i32
    %c0_i32_0 = arith.constant 0 : i32
    return %c0_i32, %arg1 : i32, i32
  }
  func.func @transform_3(%arg0: i32, %arg1: i32) -> (i32, i32) {
    %c0_i32 = arith.constant 0 : i32
    return %arg0, %arg1 : i32, i32
  }
}

module attributes {stable_mosaic.version = 11 : i64} {
  func.func @_matmul_bias_kernel(%arg0: i32, %arg1: i32, %arg2: memref<32x576xbf16, #tpu.memory_space<vmem>>, %arg3: memref<576x128xbf16, #tpu.memory_space<vmem>>, %arg4: memref<1x128xf32, #tpu.memory_space<vmem>>, %arg5: memref<32x128xf32, #tpu.memory_space<vmem>>) attributes {dimension_semantics = [#tpu.dimension_semantics<parallel>, #tpu.dimension_semantics<parallel>], iteration_bounds = array<i64: 1, 1>, scalar_prefetch = 0 : i64, scratch_operands = 0 : i64, tpu.core_type = #tpu.core_type<tc>, window_params = [{transform_indices = @transform_0, window_bounds = array<i64: 32, 576>}, {transform_indices = @transform_1, window_bounds = array<i64: 576, 128>}, {transform_indices = @transform_2, window_bounds = array<i64: 1, 128>}, {transform_indices = @transform_3, window_bounds = array<i64: 32, 128>}]} {
    %c0 = arith.constant 0 : index
    %c0_0 = arith.constant 0 : index
    %0 = vector.load %arg2[%c0, %c0_0] : memref<32x576xbf16, #tpu.memory_space<vmem>>, vector<32x576xbf16>
    %c0_1 = arith.constant 0 : index
    %c0_2 = arith.constant 0 : index
    %1 = vector.load %arg3[%c0_1, %c0_2] : memref<576x128xbf16, #tpu.memory_space<vmem>>, vector<576x128xbf16>
    %cst = arith.constant dense<0.000000e+00> : vector<32x128xf32>
    %2 = tpu.matmul %0, %1, %cst {dimension_numbers = #tpu.dot_dimension_numbers<[1], [0], [0], [1], [0, 0, 1, 1], [], []>} : vector<32x576xbf16>, vector<576x128xbf16>, vector<32x128xf32> -> vector<32x128xf32>
    %c0_3 = arith.constant 0 : index
    %c0_4 = arith.constant 0 : index
    %3 = vector.load %arg4[%c0_3, %c0_4] : memref<1x128xf32, #tpu.memory_space<vmem>>, vector<1x128xf32>
    %4 = vector.broadcast %3 : vector<1x128xf32> to vector<32x128xf32>
    %5 = arith.addf %2, %4 : vector<32x128xf32>
    %cst_5 = arith.constant 0.000000e+00 : f32
    %6 = vector.broadcast %cst_5 : f32 to vector<32x128xf32>
    %7 = arith.maximumf %5, %6 : vector<32x128xf32>
    %c0_6 = arith.constant 0 : index
    %c0_7 = arith.constant 0 : index
    %8 = vector.load %arg5[%c0_6, %c0_7] : memref<32x128xf32, #tpu.memory_space<vmem>>, vector<32x128xf32>
    tpu.vector_store %arg5[%c0_6, %c0_7], %7 {strides = array<i32>} : memref<32x128xf32, #tpu.memory_space<vmem>>, vector<32x128xf32>,
    return
  }
  func.func @transform_0(%arg0: i32, %arg1: i32) -> (i32, i32) {
    %c0_i32 = arith.constant 0 : i32
    %c0_i32_0 = arith.constant 0 : i32
    return %arg0, %c0_i32 : i32, i32
  }
  func.func @transform_1(%arg0: i32, %arg1: i32) -> (i32, i32) {
    %c0_i32 = arith.constant 0 : i32
    %c0_i32_0 = arith.constant 0 : i32
    return %c0_i32, %arg1 : i32, i32
  }
  func.func @transform_2(%arg0: i32, %arg1: i32) -> (i32, i32) {
    %c0_i32 = arith.constant 0 : i32
    %c0_i32_0 = arith.constant 0 : i32
    return %c0_i32, %arg1 : i32, i32
  }
  func.func @transform_3(%arg0: i32, %arg1: i32) -> (i32, i32) {
    %c0_i32 = arith.constant 0 : i32
    return %arg0, %arg1 : i32, i32
  }
}

module attributes {stable_mosaic.version = 11 : i64} {
  func.func @_conv_pool_kernel(%arg0: i32, %arg1: memref<1x4x1152xbf16, #tpu.memory_space<vmem>>, %arg2: memref<1152x128xbf16, #tpu.memory_space<vmem>>, %arg3: memref<1x128xf32, #tpu.memory_space<vmem>>, %arg4: memref<1x1x128xf32, #tpu.memory_space<vmem>>) attributes {dimension_semantics = [#tpu.dimension_semantics<parallel>], iteration_bounds = array<i64: 2>, scalar_prefetch = 0 : i64, scratch_operands = 0 : i64, tpu.core_type = #tpu.core_type<tc>, window_params = [{transform_indices = @transform_0, window_bounds = array<i64: 1, 4, 1152>}, {pipeline_mode = #tpu.pipeline_mode<synchronous>, transform_indices = @transform_1, window_bounds = array<i64: 1152, 128>}, {pipeline_mode = #tpu.pipeline_mode<synchronous>, transform_indices = @transform_2, window_bounds = array<i64: 1, 128>}, {transform_indices = @transform_3, window_bounds = array<i64: 1, 1, 128>}]} {
    %c0 = arith.constant 0 : index
    %c0_0 = arith.constant 0 : index
    %c0_1 = arith.constant 0 : index
    %0 = vector.load %arg1[%c0, %c0_0, %c0_1] : memref<1x4x1152xbf16, #tpu.memory_space<vmem>>, vector<1x4x1152xbf16>
    %1 = vector.shape_cast %0 : vector<1x4x1152xbf16> to vector<4x1152xbf16>
    %c0_2 = arith.constant 0 : index
    %c0_3 = arith.constant 0 : index
    %2 = vector.load %arg2[%c0_2, %c0_3] : memref<1152x128xbf16, #tpu.memory_space<vmem>>, vector<1152x128xbf16>
    %cst = arith.constant dense<0.000000e+00> : vector<4x128xf32>
    %3 = tpu.matmul %1, %2, %cst {dimension_numbers = #tpu.dot_dimension_numbers<[1], [0], [0], [1], [0, 0, 1, 1], [], []>} : vector<4x1152xbf16>, vector<1152x128xbf16>, vector<4x128xf32> -> vector<4x128xf32>
    %c0_4 = arith.constant 0 : index
    %c0_5 = arith.constant 0 : index
    %4 = vector.load %arg3[%c0_4, %c0_5] : memref<1x128xf32, #tpu.memory_space<vmem>>, vector<1x128xf32>
    %5 = vector.broadcast %4 : vector<1x128xf32> to vector<4x128xf32>
    %6 = arith.addf %3, %5 : vector<4x128xf32>
    %cst_6 = arith.constant dense<0.000000e+00> : vector<128xf32>
    %7 = vector.multi_reduction <add>, %6, %cst_6 [0] : vector<4x128xf32> to vector<128xf32>
    %8 = vector.shape_cast %7 : vector<128xf32> to vector<1x128xf32>
    %cst_7 = arith.constant 2.500000e-01 : f32
    %9 = vector.broadcast %cst_7 : f32 to vector<1x128xf32>
    %10 = arith.mulf %8, %9 : vector<1x128xf32>
    %c0_8 = arith.constant 0 : index
    %c0_9 = arith.constant 0 : index
    %c0_10 = arith.constant 0 : index
    %11 = vector.load %arg4[%c0_8, %c0_9, %c0_10] : memref<1x1x128xf32, #tpu.memory_space<vmem>>, vector<1x1x128xf32>
    %12 = vector.shape_cast %11 : vector<1x1x128xf32> to vector<1x128xf32>
    %13 = vector.shape_cast %10 : vector<1x128xf32> to vector<1x1x128xf32>
    tpu.vector_store %arg4[%c0_8, %c0_9, %c0_10], %13 {strides = array<i32>} : memref<1x1x128xf32, #tpu.memory_space<vmem>>, vector<1x1x128xf32>,
    return
  }
  func.func @transform_0(%arg0: i32) -> (i32, i32, i32) {
    %c0_i32 = arith.constant 0 : i32
    %c0_i32_0 = arith.constant 0 : i32
    %c0_i32_1 = arith.constant 0 : i32
    return %arg0, %c0_i32, %c0_i32_0 : i32, i32, i32
  }
  func.func @transform_1(%arg0: i32) -> (i32, i32) {
    %c0_i32 = arith.constant 0 : i32
    %c0_i32_0 = arith.constant 0 : i32
    %c0_i32_1 = arith.constant 0 : i32
    return %c0_i32, %c0_i32_0 : i32, i32
  }
  func.func @transform_2(%arg0: i32) -> (i32, i32) {
    %c0_i32 = arith.constant 0 : i32
    %c0_i32_0 = arith.constant 0 : i32
    %c0_i32_1 = arith.constant 0 : i32
    return %c0_i32, %c0_i32_0 : i32, i32
  }
  func.func @transform_3(%arg0: i32) -> (i32, i32, i32) {
    %c0_i32 = arith.constant 0 : i32
    %c0_i32_0 = arith.constant 0 : i32
    %c0_i32_1 = arith.constant 0 : i32
    return %arg0, %c0_i32, %c0_i32_0 : i32, i32, i32
  }
}

module attributes {stable_mosaic.version = 11 : i64} {
  func.func @_decoder_stack_kernel(%arg0: i32, %arg1: memref<1x8x32xf32, #tpu.memory_space<vmem>>, %arg2: memref<1x1x32xf32, #tpu.memory_space<vmem>>, %arg3: memref<3x32x96xbf16, #tpu.memory_space<vmem>>, %arg4: memref<3x1x96xf32, #tpu.memory_space<vmem>>, %arg5: memref<3x32x32xbf16, #tpu.memory_space<vmem>>, %arg6: memref<3x1x32xf32, #tpu.memory_space<vmem>>, %arg7: memref<3x32x32xbf16, #tpu.memory_space<vmem>>, %arg8: memref<3x1x32xf32, #tpu.memory_space<vmem>>, %arg9: memref<3x32x32xbf16, #tpu.memory_space<vmem>>, %arg10: memref<3x1x32xf32, #tpu.memory_space<vmem>>, %arg11: memref<3x32x2048xbf16, #tpu.memory_space<vmem>>, %arg12: memref<3x1x2048xf32, #tpu.memory_space<vmem>>, %arg13: memref<3x32x2048xbf16, #tpu.memory_space<vmem>>, %arg14: memref<3x1x32xf32, #tpu.memory_space<vmem>>, %arg15: memref<3x3x32xf32, #tpu.memory_space<vmem>>, %arg16: memref<3x3x32xf32, #tpu.memory_space<vmem>>, %arg17: memref<32x128xbf16, #tpu.memory_space<vmem>>, %arg18: memref<1x128xf32, #tpu.memory_space<vmem>>, %arg19: memref<1x8x128xf32, #tpu.memory_space<vmem>>) attributes {dimension_semantics = [#tpu.dimension_semantics<parallel>], iteration_bounds = array<i64: 2>, scalar_prefetch = 0 : i64, scratch_operands = 0 : i64, tpu.core_type = #tpu.core_type<tc>, window_params = [{transform_indices = @transform_0, window_bounds = array<i64: 1, 8, 32>}, {transform_indices = @transform_1, window_bounds = array<i64: 1, 1, 32>}, {pipeline_mode = #tpu.pipeline_mode<synchronous>, transform_indices = @transform_2, window_bounds = array<i64: 3, 32, 96>}, {pipeline_mode = #tpu.pipeline_mode<synchronous>, transform_indices = @transform_3, window_bounds = array<i64: 3, 1, 96>}, {pipeline_mode = #tpu.pipeline_mode<synchronous>, transform_indices = @transform_4, window_bounds = array<i64: 3, 32, 32>}, {pipeline_mode = #tpu.pipeline_mode<synchronous>, transform_indices = @transform_5, window_bounds = array<i64: 3, 1, 32>}, {pipeline_mode = #tpu.pipeline_mode<synchronous>, transform_indices = @transform_6, window_bounds = array<i64: 3, 32, 32>}, {pipeline_mode = #tpu.pipeline_mode<synchronous>, transform_indices = @transform_7, window_bounds = array<i64: 3, 1, 32>}, {pipeline_mode = #tpu.pipeline_mode<synchronous>, transform_indices = @transform_8, window_bounds = array<i64: 3, 32, 32>}, {pipeline_mode = #tpu.pipeline_mode<synchronous>, transform_indices = @transform_9, window_bounds = array<i64: 3, 1, 32>}, {pipeline_mode = #tpu.pipeline_mode<synchronous>, transform_indices = @transform_10, window_bounds = array<i64: 3, 32, 2048>}, {pipeline_mode = #tpu.pipeline_mode<synchronous>, transform_indices = @transform_11, window_bounds = array<i64: 3, 1, 2048>}, {pipeline_mode = #tpu.pipeline_mode<synchronous>, transform_indices = @transform_12, window_bounds = array<i64: 3, 32, 2048>}, {pipeline_mode = #tpu.pipeline_mode<synchronous>, transform_indices = @transform_13, window_bounds = array<i64: 3, 1, 32>}, {pipeline_mode = #tpu.pipeline_mode<synchronous>, transform_indices = @transform_14, window_bounds = array<i64: 3, 3, 32>}, {pipeline_mode = #tpu.pipeline_mode<synchronous>, transform_indices = @transform_15, window_bounds = array<i64: 3, 3, 32>}, {pipeline_mode = #tpu.pipeline_mode<synchronous>, transform_indices = @transform_16, window_bounds = array<i64: 32, 128>}, {pipeline_mode = #tpu.pipeline_mode<synchronous>, transform_indices = @transform_17, window_bounds = array<i64: 1, 128>}, {transform_indices = @transform_18, window_bounds = array<i64: 1, 8, 128>}]} {
    %c0 = arith.constant 0 : index
    %c0_0 = arith.constant 0 : index
    %c0_1 = arith.constant 0 : index
    %0 = vector.load %arg1[%c0, %c0_0, %c0_1] : memref<1x8x32xf32, #tpu.memory_space<vmem>>, vector<1x8x32xf32>
    %1 = vector.shape_cast %0 : vector<1x8x32xf32> to vector<8x32xf32>
    %c0_2 = arith.constant 0 : index
    %c0_3 = arith.constant 0 : index
    %c0_4 = arith.constant 0 : index
    %2 = vector.load %arg2[%c0_2, %c0_3, %c0_4] : memref<1x1x32xf32, #tpu.memory_space<vmem>>, vector<1x1x32xf32>
    %3 = vector.shape_cast %2 : vector<1x1x32xf32> to vector<1x32xf32>
    %4 = tpu.iota {dimensions = array<i32: 0>} : vector<8x8xi32>
    %5 = tpu.iota {dimensions = array<i32: 1>} : vector<8x8xi32>
    %6 = arith.cmpi sle, %5, %4 : vector<8x8xi32>
    %cst = arith.constant 0.000000e+00 : f32
    %cst_5 = arith.constant -1.000000e+09 : f32
    %7 = vector.broadcast %cst : f32 to vector<8x8xf32>
    %8 = vector.broadcast %cst_5 : f32 to vector<8x8xf32>
    %9 = arith.select %6, %7, %8 : vector<8x8xi1>, vector<8x8xf32>
    %c0_6 = arith.constant 0 : index
    %c0_7 = arith.constant 0 : index
    %c0_8 = arith.constant 0 : index
    %10 = vector.load %arg15[%c0_6, %c0_7, %c0_8] : memref<3x3x32xf32, #tpu.memory_space<vmem>>, vector<1x3x32xf32>
    %11 = vector.shape_cast %10 : vector<1x3x32xf32> to vector<3x32xf32>
    %c0_9 = arith.constant 0 : index
    %c0_10 = arith.constant 0 : index
    %c0_11 = arith.constant 0 : index
    %12 = vector.load %arg16[%c0_9, %c0_10, %c0_11] : memref<3x3x32xf32, #tpu.memory_space<vmem>>, vector<1x3x32xf32>
    %13 = vector.shape_cast %12 : vector<1x3x32xf32> to vector<3x32xf32>
    %14 = arith.truncf %1 : vector<8x32xf32> to vector<8x32xbf16>
    %c0_12 = arith.constant 0 : index
    %c0_13 = arith.constant 0 : index
    %c0_14 = arith.constant 0 : index
    %15 = vector.load %arg3[%c0_12, %c0_13, %c0_14] : memref<3x32x96xbf16, #tpu.memory_space<vmem>>, vector<1x32x96xbf16>
    %16 = vector.shape_cast %15 : vector<1x32x96xbf16> to vector<32x96xbf16>
    %cst_15 = arith.constant dense<0.000000e+00> : vector<8x96xf32>
    %17 = tpu.matmul %14, %16, %cst_15 {dimension_numbers = #tpu.dot_dimension_numbers<[1], [0], [0], [1], [0, 0, 1, 1], [], []>} : vector<8x32xbf16>, vector<32x96xbf16>, vector<8x96xf32> -> vector<8x96xf32>
    %c0_16 = arith.constant 0 : index
    %c0_17 = arith.constant 0 : index
    %c0_18 = arith.constant 0 : index
    %18 = vector.load %arg4[%c0_16, %c0_17, %c0_18] : memref<3x1x96xf32, #tpu.memory_space<vmem>>, vector<1x1x96xf32>
    %19 = vector.shape_cast %18 : vector<1x1x96xf32> to vector<1x96xf32>
    %20 = vector.broadcast %19 : vector<1x96xf32> to vector<8x96xf32>
    %21 = arith.addf %17, %20 : vector<8x96xf32>
    %22 = vector.extract_strided_slice %21 {offsets = [0, 0], sizes = [8, 8], strides = [1, 1]} : vector<8x96xf32> to vector<8x8xf32>
    %23 = vector.extract_strided_slice %21 {offsets = [0, 32], sizes = [8, 8], strides = [1, 1]} : vector<8x96xf32> to vector<8x8xf32>
    %24 = vector.extract_strided_slice %21 {offsets = [0, 64], sizes = [8, 8], strides = [1, 1]} : vector<8x96xf32> to vector<8x8xf32>
    %cst_19 = arith.constant dense<0.000000e+00> : vector<8x8xf32>
    %25 = tpu.matmul %22, %23, %cst_19 {dimension_numbers = #tpu.dot_dimension_numbers<[1], [1], [0], [0], [0, 0, 1, 0], [], []>} : vector<8x8xf32>, vector<8x8xf32>, vector<8x8xf32> -> vector<8x8xf32>
    %cst_20 = arith.constant 0.353553385 : f32
    %26 = vector.broadcast %cst_20 : f32 to vector<8x8xf32>
    %27 = arith.mulf %25, %26 : vector<8x8xf32>
    %28 = arith.addf %27, %9 : vector<8x8xf32>
    %cst_21 = arith.constant dense<0xFF800000> : vector<8xf32>
    %29 = vector.multi_reduction <maximumf>, %28, %cst_21 [1] : vector<8x8xf32> to vector<8xf32>
    %30 = vector.shape_cast %29 : vector<8xf32> to vector<8x1xf32>
    %31 = vector.broadcast %30 : vector<8x1xf32> to vector<8x8xf32>
    %32 = arith.subf %28, %31 : vector<8x8xf32>
    %33 = math.exp %32 : vector<8x8xf32>
    %cst_22 = arith.constant dense<0.000000e+00> : vector<8xf32>
    %34 = vector.multi_reduction <add>, %33, %cst_22 [1] : vector<8x8xf32> to vector<8xf32>
    %35 = vector.shape_cast %34 : vector<8xf32> to vector<8x1xf32>
    %36 = vector.broadcast %35 : vector<8x1xf32> to vector<8x8xf32>
    %37 = arith.divf %33, %36 : vector<8x8xf32>
    %cst_23 = arith.constant dense<0.000000e+00> : vector<8x8xf32>
    %38 = tpu.matmul %37, %24, %cst_23 {dimension_numbers = #tpu.dot_dimension_numbers<[1], [0], [0], [1], [0, 0, 1, 1], [], []>} : vector<8x8xf32>, vector<8x8xf32>, vector<8x8xf32> -> vector<8x8xf32>
    %39 = vector.extract_strided_slice %21 {offsets = [0, 8], sizes = [8, 8], strides = [1, 1]} : vector<8x96xf32> to vector<8x8xf32>
    %40 = vector.extract_strided_slice %21 {offsets = [0, 40], sizes = [8, 8], strides = [1, 1]} : vector<8x96xf32> to vector<8x8xf32>
    %41 = vector.extract_strided_slice %21 {offsets = [0, 72], sizes = [8, 8], strides = [1, 1]} : vector<8x96xf32> to vector<8x8xf32>
    %cst_24 = arith.constant dense<0.000000e+00> : vector<8x8xf32>
    %42 = tpu.matmul %39, %40, %cst_24 {dimension_numbers = #tpu.dot_dimension_numbers<[1], [1], [0], [0], [0, 0, 1, 0], [], []>} : vector<8x8xf32>, vector<8x8xf32>, vector<8x8xf32> -> vector<8x8xf32>
    %cst_25 = arith.constant 0.353553385 : f32
    %43 = vector.broadcast %cst_25 : f32 to vector<8x8xf32>
    %44 = arith.mulf %42, %43 : vector<8x8xf32>
    %45 = arith.addf %44, %9 : vector<8x8xf32>
    %cst_26 = arith.constant dense<0xFF800000> : vector<8xf32>
    %46 = vector.multi_reduction <maximumf>, %45, %cst_26 [1] : vector<8x8xf32> to vector<8xf32>
    %47 = vector.shape_cast %46 : vector<8xf32> to vector<8x1xf32>
    %48 = vector.broadcast %47 : vector<8x1xf32> to vector<8x8xf32>
    %49 = arith.subf %45, %48 : vector<8x8xf32>
    %50 = math.exp %49 : vector<8x8xf32>
    %cst_27 = arith.constant dense<0.000000e+00> : vector<8xf32>
    %51 = vector.multi_reduction <add>, %50, %cst_27 [1] : vector<8x8xf32> to vector<8xf32>
    %52 = vector.shape_cast %51 : vector<8xf32> to vector<8x1xf32>
    %53 = vector.broadcast %52 : vector<8x1xf32> to vector<8x8xf32>
    %54 = arith.divf %50, %53 : vector<8x8xf32>
    %cst_28 = arith.constant dense<0.000000e+00> : vector<8x8xf32>
    %55 = tpu.matmul %54, %41, %cst_28 {dimension_numbers = #tpu.dot_dimension_numbers<[1], [0], [0], [1], [0, 0, 1, 1], [], []>} : vector<8x8xf32>, vector<8x8xf32>, vector<8x8xf32> -> vector<8x8xf32>
    %56 = vector.extract_strided_slice %21 {offsets = [0, 16], sizes = [8, 8], strides = [1, 1]} : vector<8x96xf32> to vector<8x8xf32>
    %57 = vector.extract_strided_slice %21 {offsets = [0, 48], sizes = [8, 8], strides = [1, 1]} : vector<8x96xf32> to vector<8x8xf32>
    %58 = vector.extract_strided_slice %21 {offsets = [0, 80], sizes = [8, 8], strides = [1, 1]} : vector<8x96xf32> to vector<8x8xf32>
    %cst_29 = arith.constant dense<0.000000e+00> : vector<8x8xf32>
    %59 = tpu.matmul %56, %57, %cst_29 {dimension_numbers = #tpu.dot_dimension_numbers<[1], [1], [0], [0], [0, 0, 1, 0], [], []>} : vector<8x8xf32>, vector<8x8xf32>, vector<8x8xf32> -> vector<8x8xf32>
    %cst_30 = arith.constant 0.353553385 : f32
    %60 = vector.broadcast %cst_30 : f32 to vector<8x8xf32>
    %61 = arith.mulf %59, %60 : vector<8x8xf32>
    %62 = arith.addf %61, %9 : vector<8x8xf32>
    %cst_31 = arith.constant dense<0xFF800000> : vector<8xf32>
    %63 = vector.multi_reduction <maximumf>, %62, %cst_31 [1] : vector<8x8xf32> to vector<8xf32>
    %64 = vector.shape_cast %63 : vector<8xf32> to vector<8x1xf32>
    %65 = vector.broadcast %64 : vector<8x1xf32> to vector<8x8xf32>
    %66 = arith.subf %62, %65 : vector<8x8xf32>
    %67 = math.exp %66 : vector<8x8xf32>
    %cst_32 = arith.constant dense<0.000000e+00> : vector<8xf32>
    %68 = vector.multi_reduction <add>, %67, %cst_32 [1] : vector<8x8xf32> to vector<8xf32>
    %69 = vector.shape_cast %68 : vector<8xf32> to vector<8x1xf32>
    %70 = vector.broadcast %69 : vector<8x1xf32> to vector<8x8xf32>
    %71 = arith.divf %67, %70 : vector<8x8xf32>
    %cst_33 = arith.constant dense<0.000000e+00> : vector<8x8xf32>
    %72 = tpu.matmul %71, %58, %cst_33 {dimension_numbers = #tpu.dot_dimension_numbers<[1], [0], [0], [1], [0, 0, 1, 1], [], []>} : vector<8x8xf32>, vector<8x8xf32>, vector<8x8xf32> -> vector<8x8xf32>
    %73 = vector.extract_strided_slice %21 {offsets = [0, 24], sizes = [8, 8], strides = [1, 1]} : vector<8x96xf32> to vector<8x8xf32>
    %74 = vector.extract_strided_slice %21 {offsets = [0, 56], sizes = [8, 8], strides = [1, 1]} : vector<8x96xf32> to vector<8x8xf32>
    %75 = vector.extract_strided_slice %21 {offsets = [0, 88], sizes = [8, 8], strides = [1, 1]} : vector<8x96xf32> to vector<8x8xf32>
    %cst_34 = arith.constant dense<0.000000e+00> : vector<8x8xf32>
    %76 = tpu.matmul %73, %74, %cst_34 {dimension_numbers = #tpu.dot_dimension_numbers<[1], [1], [0], [0], [0, 0, 1, 0], [], []>} : vector<8x8xf32>, vector<8x8xf32>, vector<8x8xf32> -> vector<8x8xf32>
    %cst_35 = arith.constant 0.353553385 : f32
    %77 = vector.broadcast %cst_35 : f32 to vector<8x8xf32>
    %78 = arith.mulf %76, %77 : vector<8x8xf32>
    %79 = arith.addf %78, %9 : vector<8x8xf32>
    %cst_36 = arith.constant dense<0xFF800000> : vector<8xf32>
    %80 = vector.multi_reduction <maximumf>, %79, %cst_36 [1] : vector<8x8xf32> to vector<8xf32>
    %81 = vector.shape_cast %80 : vector<8xf32> to vector<8x1xf32>
    %82 = vector.broadcast %81 : vector<8x1xf32> to vector<8x8xf32>
    %83 = arith.subf %79, %82 : vector<8x8xf32>
    %84 = math.exp %83 : vector<8x8xf32>
    %cst_37 = arith.constant dense<0.000000e+00> : vector<8xf32>
    %85 = vector.multi_reduction <add>, %84, %cst_37 [1] : vector<8x8xf32> to vector<8xf32>
    %86 = vector.shape_cast %85 : vector<8xf32> to vector<8x1xf32>
    %87 = vector.broadcast %86 : vector<8x1xf32> to vector<8x8xf32>
    %88 = arith.divf %84, %87 : vector<8x8xf32>
    %cst_38 = arith.constant dense<0.000000e+00> : vector<8x8xf32>
    %89 = tpu.matmul %88, %75, %cst_38 {dimension_numbers = #tpu.dot_dimension_numbers<[1], [0], [0], [1], [0, 0, 1, 1], [], []>} : vector<8x8xf32>, vector<8x8xf32>, vector<8x8xf32> -> vector<8x8xf32>
    %90 = tpu.concatenate %38, %55, %72, %89 in 1 : vector<8x8xf32>, vector<8x8xf32>, vector<8x8xf32>, vector<8x8xf32> -> vector<8x32xf32>
    %91 = arith.truncf %90 : vector<8x32xf32> to vector<8x32xbf16>
    %c0_39 = arith.constant 0 : index
    %c0_40 = arith.constant 0 : index
    %c0_41 = arith.constant 0 : index
    %92 = vector.load %arg5[%c0_39, %c0_40, %c0_41] : memref<3x32x32xbf16, #tpu.memory_space<vmem>>, vector<1x32x32xbf16>
    %93 = vector.shape_cast %92 : vector<1x32x32xbf16> to vector<32x32xbf16>
    %cst_42 = arith.constant dense<0.000000e+00> : vector<8x32xf32>
    %94 = tpu.matmul %91, %93, %cst_42 {dimension_numbers = #tpu.dot_dimension_numbers<[1], [0], [0], [1], [0, 0, 1, 1], [], []>} : vector<8x32xbf16>, vector<32x32xbf16>, vector<8x32xf32> -> vector<8x32xf32>
    %c0_43 = arith.constant 0 : index
    %c0_44 = arith.constant 0 : index
    %c0_45 = arith.constant 0 : index
    %95 = vector.load %arg6[%c0_43, %c0_44, %c0_45] : memref<3x1x32xf32, #tpu.memory_space<vmem>>, vector<1x1x32xf32>
    %96 = vector.shape_cast %95 : vector<1x1x32xf32> to vector<1x32xf32>
    %97 = vector.broadcast %96 : vector<1x32xf32> to vector<8x32xf32>
    %98 = arith.addf %94, %97 : vector<8x32xf32>
    %99 = arith.addf %1, %98 : vector<8x32xf32>
    %cst_46 = arith.constant dense<0.000000e+00> : vector<8xf32>
    %100 = vector.multi_reduction <add>, %99, %cst_46 [1] : vector<8x32xf32> to vector<8xf32>
    %101 = vector.shape_cast %100 : vector<8xf32> to vector<8x1xf32>
    %cst_47 = arith.constant 3.200000e+01 : f32
    %102 = vector.broadcast %cst_47 : f32 to vector<8x1xf32>
    %103 = arith.divf %101, %102 : vector<8x1xf32>
    %104 = vector.broadcast %103 : vector<8x1xf32> to vector<8x32xf32>
    %105 = arith.subf %99, %104 : vector<8x32xf32>
    %106 = arith.mulf %105, %105 : vector<8x32xf32>
    %cst_48 = arith.constant dense<0.000000e+00> : vector<8xf32>
    %107 = vector.multi_reduction <add>, %106, %cst_48 [1] : vector<8x32xf32> to vector<8xf32>
    %108 = vector.shape_cast %107 : vector<8xf32> to vector<8x1xf32>
    %cst_49 = arith.constant 3.200000e+01 : f32
    %109 = vector.broadcast %cst_49 : f32 to vector<8x1xf32>
    %110 = arith.divf %108, %109 : vector<8x1xf32>
    %111 = vector.broadcast %103 : vector<8x1xf32> to vector<8x32xf32>
    %112 = arith.subf %99, %111 : vector<8x32xf32>
    %cst_50 = arith.constant 9.99999974E-6 : f32
    %113 = vector.broadcast %cst_50 : f32 to vector<8x1xf32>
    %114 = arith.addf %110, %113 : vector<8x1xf32>
    %115 = math.rsqrt %114 : vector<8x1xf32>
    %116 = vector.broadcast %115 : vector<8x1xf32> to vector<8x32xf32>
    %117 = arith.mulf %112, %116 : vector<8x32xf32>
    %118 = vector.extract_strided_slice %11 {offsets = [0, 0], sizes = [1, 32], strides = [1, 1]} : vector<3x32xf32> to vector<1x32xf32>
    %119 = vector.broadcast %118 : vector<1x32xf32> to vector<8x32xf32>
    %120 = arith.mulf %117, %119 : vector<8x32xf32>
    %121 = vector.extract_strided_slice %13 {offsets = [0, 0], sizes = [1, 32], strides = [1, 1]} : vector<3x32xf32> to vector<1x32xf32>
    %122 = vector.broadcast %121 : vector<1x32xf32> to vector<8x32xf32>
    %123 = arith.addf %120, %122 : vector<8x32xf32>
    %124 = arith.truncf %3 : vector<1x32xf32> to vector<1x32xbf16>
    %c0_51 = arith.constant 0 : index
    %c0_52 = arith.constant 0 : index
    %c0_53 = arith.constant 0 : index
    %125 = vector.load %arg7[%c0_51, %c0_52, %c0_53] : memref<3x32x32xbf16, #tpu.memory_space<vmem>>, vector<1x32x32xbf16>
    %126 = vector.shape_cast %125 : vector<1x32x32xbf16> to vector<32x32xbf16>
    %cst_54 = arith.constant dense<0.000000e+00> : vector<1x32xf32>
    %127 = tpu.matmul %124, %126, %cst_54 {dimension_numbers = #tpu.dot_dimension_numbers<[1], [0], [0], [1], [0, 0, 1, 1], [], []>} : vector<1x32xbf16>, vector<32x32xbf16>, vector<1x32xf32> -> vector<1x32xf32>
    %c0_55 = arith.constant 0 : index
    %c0_56 = arith.constant 0 : index
    %c0_57 = arith.constant 0 : index
    %128 = vector.load %arg8[%c0_55, %c0_56, %c0_57] : memref<3x1x32xf32, #tpu.memory_space<vmem>>, vector<1x1x32xf32>
    %129 = vector.shape_cast %128 : vector<1x1x32xf32> to vector<1x32xf32>
    %130 = arith.addf %127, %129 : vector<1x32xf32>
    %131 = arith.truncf %130 : vector<1x32xf32> to vector<1x32xbf16>
    %c0_58 = arith.constant 0 : index
    %c0_59 = arith.constant 0 : index
    %c0_60 = arith.constant 0 : index
    %132 = vector.load %arg9[%c0_58, %c0_59, %c0_60] : memref<3x32x32xbf16, #tpu.memory_space<vmem>>, vector<1x32x32xbf16>
    %133 = vector.shape_cast %132 : vector<1x32x32xbf16> to vector<32x32xbf16>
    %cst_61 = arith.constant dense<0.000000e+00> : vector<1x32xf32>
    %134 = tpu.matmul %131, %133, %cst_61 {dimension_numbers = #tpu.dot_dimension_numbers<[1], [0], [0], [1], [0, 0, 1, 1], [], []>} : vector<1x32xbf16>, vector<32x32xbf16>, vector<1x32xf32> -> vector<1x32xf32>
    %c0_62 = arith.constant 0 : index
    %c0_63 = arith.constant 0 : index
    %c0_64 = arith.constant 0 : index
    %135 = vector.load %arg10[%c0_62, %c0_63, %c0_64] : memref<3x1x32xf32, #tpu.memory_space<vmem>>, vector<1x1x32xf32>
    %136 = vector.shape_cast %135 : vector<1x1x32xf32> to vector<1x32xf32>
    %137 = arith.addf %134, %136 : vector<1x32xf32>
    %138 = vector.broadcast %137 : vector<1x32xf32> to vector<8x32xf32>
    %139 = arith.addf %123, %138 : vector<8x32xf32>
    %cst_65 = arith.constant dense<0.000000e+00> : vector<8xf32>
    %140 = vector.multi_reduction <add>, %139, %cst_65 [1] : vector<8x32xf32> to vector<8xf32>
    %141 = vector.shape_cast %140 : vector<8xf32> to vector<8x1xf32>
    %cst_66 = arith.constant 3.200000e+01 : f32
    %142 = vector.broadcast %cst_66 : f32 to vector<8x1xf32>
    %143 = arith.divf %141, %142 : vector<8x1xf32>
    %144 = vector.broadcast %143 : vector<8x1xf32> to vector<8x32xf32>
    %145 = arith.subf %139, %144 : vector<8x32xf32>
    %146 = arith.mulf %145, %145 : vector<8x32xf32>
    %cst_67 = arith.constant dense<0.000000e+00> : vector<8xf32>
    %147 = vector.multi_reduction <add>, %146, %cst_67 [1] : vector<8x32xf32> to vector<8xf32>
    %148 = vector.shape_cast %147 : vector<8xf32> to vector<8x1xf32>
    %cst_68 = arith.constant 3.200000e+01 : f32
    %149 = vector.broadcast %cst_68 : f32 to vector<8x1xf32>
    %150 = arith.divf %148, %149 : vector<8x1xf32>
    %151 = vector.broadcast %143 : vector<8x1xf32> to vector<8x32xf32>
    %152 = arith.subf %139, %151 : vector<8x32xf32>
    %cst_69 = arith.constant 9.99999974E-6 : f32
    %153 = vector.broadcast %cst_69 : f32 to vector<8x1xf32>
    %154 = arith.addf %150, %153 : vector<8x1xf32>
    %155 = math.rsqrt %154 : vector<8x1xf32>
    %156 = vector.broadcast %155 : vector<8x1xf32> to vector<8x32xf32>
    %157 = arith.mulf %152, %156 : vector<8x32xf32>
    %158 = vector.extract_strided_slice %11 {offsets = [1, 0], sizes = [1, 32], strides = [1, 1]} : vector<3x32xf32> to vector<1x32xf32>
    %159 = vector.broadcast %158 : vector<1x32xf32> to vector<8x32xf32>
    %160 = arith.mulf %157, %159 : vector<8x32xf32>
    %161 = vector.extract_strided_slice %13 {offsets = [1, 0], sizes = [1, 32], strides = [1, 1]} : vector<3x32xf32> to vector<1x32xf32>
    %162 = vector.broadcast %161 : vector<1x32xf32> to vector<8x32xf32>
    %163 = arith.addf %160, %162 : vector<8x32xf32>
    %164 = arith.truncf %163 : vector<8x32xf32> to vector<8x32xbf16>
    %c0_70 = arith.constant 0 : index
    %c0_71 = arith.constant 0 : index
    %c0_72 = arith.constant 0 : index
    %165 = vector.load %arg11[%c0_70, %c0_71, %c0_72] : memref<3x32x2048xbf16, #tpu.memory_space<vmem>>, vector<1x32x2048xbf16>
    %166 = vector.shape_cast %165 : vector<1x32x2048xbf16> to vector<32x2048xbf16>
    %cst_73 = arith.constant dense<0.000000e+00> : vector<8x2048xf32>
    %167 = tpu.matmul %164, %166, %cst_73 {dimension_numbers = #tpu.dot_dimension_numbers<[1], [0], [0], [1], [0, 0, 1, 1], [], []>} : vector<8x32xbf16>, vector<32x2048xbf16>, vector<8x2048xf32> -> vector<8x2048xf32>
    %c0_74 = arith.constant 0 : index
    %c0_75 = arith.constant 0 : index
    %c0_76 = arith.constant 0 : index
    %168 = vector.load %arg12[%c0_74, %c0_75, %c0_76] : memref<3x1x2048xf32, #tpu.memory_space<vmem>>, vector<1x1x2048xf32>
    %169 = vector.shape_cast %168 : vector<1x1x2048xf32> to vector<1x2048xf32>
    %170 = vector.broadcast %169 : vector<1x2048xf32> to vector<8x2048xf32>
    %171 = arith.addf %167, %170 : vector<8x2048xf32>
    %cst_77 = arith.constant 0.000000e+00 : f32
    %172 = vector.broadcast %cst_77 : f32 to vector<8x2048xf32>
    %173 = arith.maximumf %171, %172 : vector<8x2048xf32>
    %174 = arith.truncf %173 : vector<8x2048xf32> to vector<8x2048xbf16>
    %c0_78 = arith.constant 0 : index
    %c0_79 = arith.constant 0 : index
    %c0_80 = arith.constant 0 : index
    %175 = vector.load %arg13[%c0_78, %c0_79, %c0_80] : memref<3x32x2048xbf16, #tpu.memory_space<vmem>>, vector<1x32x2048xbf16>
    %176 = vector.shape_cast %175 : vector<1x32x2048xbf16> to vector<32x2048xbf16>
    %cst_81 = arith.constant dense<0.000000e+00> : vector<8x32xf32>
    %177 = tpu.matmul %174, %176, %cst_81 {dimension_numbers = #tpu.dot_dimension_numbers<[1], [1], [0], [0], [0, 0, 1, 0], [], []>} : vector<8x2048xbf16>, vector<32x2048xbf16>, vector<8x32xf32> -> vector<8x32xf32>
    %c0_82 = arith.constant 0 : index
    %c0_83 = arith.constant 0 : index
    %c0_84 = arith.constant 0 : index
    %178 = vector.load %arg14[%c0_82, %c0_83, %c0_84] : memref<3x1x32xf32, #tpu.memory_space<vmem>>, vector<1x1x32xf32>
    %179 = vector.shape_cast %178 : vector<1x1x32xf32> to vector<1x32xf32>
    %180 = vector.broadcast %179 : vector<1x32xf32> to vector<8x32xf32>
    %181 = arith.addf %177, %180 : vector<8x32xf32>
    %182 = arith.addf %163, %181 : vector<8x32xf32>
    %cst_85 = arith.constant dense<0.000000e+00> : vector<8xf32>
    %183 = vector.multi_reduction <add>, %182, %cst_85 [1] : vector<8x32xf32> to vector<8xf32>
    %184 = vector.shape_cast %183 : vector<8xf32> to vector<8x1xf32>
    %cst_86 = arith.constant 3.200000e+01 : f32
    %185 = vector.broadcast %cst_86 : f32 to vector<8x1xf32>
    %186 = arith.divf %184, %185 : vector<8x1xf32>
    %187 = vector.broadcast %186 : vector<8x1xf32> to vector<8x32xf32>
    %188 = arith.subf %182, %187 : vector<8x32xf32>
    %189 = arith.mulf %188, %188 : vector<8x32xf32>
    %cst_87 = arith.constant dense<0.000000e+00> : vector<8xf32>
    %190 = vector.multi_reduction <add>, %189, %cst_87 [1] : vector<8x32xf32> to vector<8xf32>
    %191 = vector.shape_cast %190 : vector<8xf32> to vector<8x1xf32>
    %cst_88 = arith.constant 3.200000e+01 : f32
    %192 = vector.broadcast %cst_88 : f32 to vector<8x1xf32>
    %193 = arith.divf %191, %192 : vector<8x1xf32>
    %194 = vector.broadcast %186 : vector<8x1xf32> to vector<8x32xf32>
    %195 = arith.subf %182, %194 : vector<8x32xf32>
    %cst_89 = arith.constant 9.99999974E-6 : f32
    %196 = vector.broadcast %cst_89 : f32 to vector<8x1xf32>
    %197 = arith.addf %193, %196 : vector<8x1xf32>
    %198 = math.rsqrt %197 : vector<8x1xf32>
    %199 = vector.broadcast %198 : vector<8x1xf32> to vector<8x32xf32>
    %200 = arith.mulf %195, %199 : vector<8x32xf32>
    %201 = vector.extract_strided_slice %11 {offsets = [2, 0], sizes = [1, 32], strides = [1, 1]} : vector<3x32xf32> to vector<1x32xf32>
    %202 = vector.broadcast %201 : vector<1x32xf32> to vector<8x32xf32>
    %203 = arith.mulf %200, %202 : vector<8x32xf32>
    %204 = vector.extract_strided_slice %13 {offsets = [2, 0], sizes = [1, 32], strides = [1, 1]} : vector<3x32xf32> to vector<1x32xf32>
    %205 = vector.broadcast %204 : vector<1x32xf32> to vector<8x32xf32>
    %206 = arith.addf %203, %205 : vector<8x32xf32>
    %c1 = arith.constant 1 : index
    %c0_90 = arith.constant 0 : index
    %c0_91 = arith.constant 0 : index
    %207 = vector.load %arg15[%c1, %c0_90, %c0_91] : memref<3x3x32xf32, #tpu.memory_space<vmem>>, vector<1x3x32xf32>
    %208 = vector.shape_cast %207 : vector<1x3x32xf32> to vector<3x32xf32>
    %c1_92 = arith.constant 1 : index
    %c0_93 = arith.constant 0 : index
    %c0_94 = arith.constant 0 : index
    %209 = vector.load %arg16[%c1_92, %c0_93, %c0_94] : memref<3x3x32xf32, #tpu.memory_space<vmem>>, vector<1x3x32xf32>
    %210 = vector.shape_cast %209 : vector<1x3x32xf32> to vector<3x32xf32>
    %211 = arith.truncf %206 : vector<8x32xf32> to vector<8x32xbf16>
    %c1_95 = arith.constant 1 : index
    %c0_96 = arith.constant 0 : index
    %c0_97 = arith.constant 0 : index
    %212 = vector.load %arg3[%c1_95, %c0_96, %c0_97] : memref<3x32x96xbf16, #tpu.memory_space<vmem>>, vector<1x32x96xbf16>
    %213 = vector.shape_cast %212 : vector<1x32x96xbf16> to vector<32x96xbf16>
    %cst_98 = arith.constant dense<0.000000e+00> : vector<8x96xf32>
    %214 = tpu.matmul %211, %213, %cst_98 {dimension_numbers = #tpu.dot_dimension_numbers<[1], [0], [0], [1], [0, 0, 1, 1], [], []>} : vector<8x32xbf16>, vector<32x96xbf16>, vector<8x96xf32> -> vector<8x96xf32>
    %c1_99 = arith.constant 1 : index
    %c0_100 = arith.constant 0 : index
    %c0_101 = arith.constant 0 : index
    %215 = vector.load %arg4[%c1_99, %c0_100, %c0_101] : memref<3x1x96xf32, #tpu.memory_space<vmem>>, vector<1x1x96xf32>
    %216 = vector.shape_cast %215 : vector<1x1x96xf32> to vector<1x96xf32>
    %217 = vector.broadcast %216 : vector<1x96xf32> to vector<8x96xf32>
    %218 = arith.addf %214, %217 : vector<8x96xf32>
    %219 = vector.extract_strided_slice %218 {offsets = [0, 0], sizes = [8, 8], strides = [1, 1]} : vector<8x96xf32> to vector<8x8xf32>
    %220 = vector.extract_strided_slice %218 {offsets = [0, 32], sizes = [8, 8], strides = [1, 1]} : vector<8x96xf32> to vector<8x8xf32>
    %221 = vector.extract_strided_slice %218 {offsets = [0, 64], sizes = [8, 8], strides = [1, 1]} : vector<8x96xf32> to vector<8x8xf32>
    %cst_102 = arith.constant dense<0.000000e+00> : vector<8x8xf32>
    %222 = tpu.matmul %219, %220, %cst_102 {dimension_numbers = #tpu.dot_dimension_numbers<[1], [1], [0], [0], [0, 0, 1, 0], [], []>} : vector<8x8xf32>, vector<8x8xf32>, vector<8x8xf32> -> vector<8x8xf32>
    %cst_103 = arith.constant 0.353553385 : f32
    %223 = vector.broadcast %cst_103 : f32 to vector<8x8xf32>
    %224 = arith.mulf %222, %223 : vector<8x8xf32>
    %225 = arith.addf %224, %9 : vector<8x8xf32>
    %cst_104 = arith.constant dense<0xFF800000> : vector<8xf32>
    %226 = vector.multi_reduction <maximumf>, %225, %cst_104 [1] : vector<8x8xf32> to vector<8xf32>
    %227 = vector.shape_cast %226 : vector<8xf32> to vector<8x1xf32>
    %228 = vector.broadcast %227 : vector<8x1xf32> to vector<8x8xf32>
    %229 = arith.subf %225, %228 : vector<8x8xf32>
    %230 = math.exp %229 : vector<8x8xf32>
    %cst_105 = arith.constant dense<0.000000e+00> : vector<8xf32>
    %231 = vector.multi_reduction <add>, %230, %cst_105 [1] : vector<8x8xf32> to vector<8xf32>
    %232 = vector.shape_cast %231 : vector<8xf32> to vector<8x1xf32>
    %233 = vector.broadcast %232 : vector<8x1xf32> to vector<8x8xf32>
    %234 = arith.divf %230, %233 : vector<8x8xf32>
    %cst_106 = arith.constant dense<0.000000e+00> : vector<8x8xf32>
    %235 = tpu.matmul %234, %221, %cst_106 {dimension_numbers = #tpu.dot_dimension_numbers<[1], [0], [0], [1], [0, 0, 1, 1], [], []>} : vector<8x8xf32>, vector<8x8xf32>, vector<8x8xf32> -> vector<8x8xf32>
    %236 = vector.extract_strided_slice %218 {offsets = [0, 8], sizes = [8, 8], strides = [1, 1]} : vector<8x96xf32> to vector<8x8xf32>
    %237 = vector.extract_strided_slice %218 {offsets = [0, 40], sizes = [8, 8], strides = [1, 1]} : vector<8x96xf32> to vector<8x8xf32>
    %238 = vector.extract_strided_slice %218 {offsets = [0, 72], sizes = [8, 8], strides = [1, 1]} : vector<8x96xf32> to vector<8x8xf32>
    %cst_107 = arith.constant dense<0.000000e+00> : vector<8x8xf32>
    %239 = tpu.matmul %236, %237, %cst_107 {dimension_numbers = #tpu.dot_dimension_numbers<[1], [1], [0], [0], [0, 0, 1, 0], [], []>} : vector<8x8xf32>, vector<8x8xf32>, vector<8x8xf32> -> vector<8x8xf32>
    %cst_108 = arith.constant 0.353553385 : f32
    %240 = vector.broadcast %cst_108 : f32 to vector<8x8xf32>
    %241 = arith.mulf %239, %240 : vector<8x8xf32>
    %242 = arith.addf %241, %9 : vector<8x8xf32>
    %cst_109 = arith.constant dense<0xFF800000> : vector<8xf32>
    %243 = vector.multi_reduction <maximumf>, %242, %cst_109 [1] : vector<8x8xf32> to vector<8xf32>
    %244 = vector.shape_cast %243 : vector<8xf32> to vector<8x1xf32>
    %245 = vector.broadcast %244 : vector<8x1xf32> to vector<8x8xf32>
    %246 = arith.subf %242, %245 : vector<8x8xf32>
    %247 = math.exp %246 : vector<8x8xf32>
    %cst_110 = arith.constant dense<0.000000e+00> : vector<8xf32>
    %248 = vector.multi_reduction <add>, %247, %cst_110 [1] : vector<8x8xf32> to vector<8xf32>
    %249 = vector.shape_cast %248 : vector<8xf32> to vector<8x1xf32>
    %250 = vector.broadcast %249 : vector<8x1xf32> to vector<8x8xf32>
    %251 = arith.divf %247, %250 : vector<8x8xf32>
    %cst_111 = arith.constant dense<0.000000e+00> : vector<8x8xf32>
    %252 = tpu.matmul %251, %238, %cst_111 {dimension_numbers = #tpu.dot_dimension_numbers<[1], [0], [0], [1], [0, 0, 1, 1], [], []>} : vector<8x8xf32>, vector<8x8xf32>, vector<8x8xf32> -> vector<8x8xf32>
    %253 = vector.extract_strided_slice %218 {offsets = [0, 16], sizes = [8, 8], strides = [1, 1]} : vector<8x96xf32> to vector<8x8xf32>
    %254 = vector.extract_strided_slice %218 {offsets = [0, 48], sizes = [8, 8], strides = [1, 1]} : vector<8x96xf32> to vector<8x8xf32>
    %255 = vector.extract_strided_slice %218 {offsets = [0, 80], sizes = [8, 8], strides = [1, 1]} : vector<8x96xf32> to vector<8x8xf32>
    %cst_112 = arith.constant dense<0.000000e+00> : vector<8x8xf32>
    %256 = tpu.matmul %253, %254, %cst_112 {dimension_numbers = #tpu.dot_dimension_numbers<[1], [1], [0], [0], [0, 0, 1, 0], [], []>} : vector<8x8xf32>, vector<8x8xf32>, vector<8x8xf32> -> vector<8x8xf32>
    %cst_113 = arith.constant 0.353553385 : f32
    %257 = vector.broadcast %cst_113 : f32 to vector<8x8xf32>
    %258 = arith.mulf %256, %257 : vector<8x8xf32>
    %259 = arith.addf %258, %9 : vector<8x8xf32>
    %cst_114 = arith.constant dense<0xFF800000> : vector<8xf32>
    %260 = vector.multi_reduction <maximumf>, %259, %cst_114 [1] : vector<8x8xf32> to vector<8xf32>
    %261 = vector.shape_cast %260 : vector<8xf32> to vector<8x1xf32>
    %262 = vector.broadcast %261 : vector<8x1xf32> to vector<8x8xf32>
    %263 = arith.subf %259, %262 : vector<8x8xf32>
    %264 = math.exp %263 : vector<8x8xf32>
    %cst_115 = arith.constant dense<0.000000e+00> : vector<8xf32>
    %265 = vector.multi_reduction <add>, %264, %cst_115 [1] : vector<8x8xf32> to vector<8xf32>
    %266 = vector.shape_cast %265 : vector<8xf32> to vector<8x1xf32>
    %267 = vector.broadcast %266 : vector<8x1xf32> to vector<8x8xf32>
    %268 = arith.divf %264, %267 : vector<8x8xf32>
    %cst_116 = arith.constant dense<0.000000e+00> : vector<8x8xf32>
    %269 = tpu.matmul %268, %255, %cst_116 {dimension_numbers = #tpu.dot_dimension_numbers<[1], [0], [0], [1], [0, 0, 1, 1], [], []>} : vector<8x8xf32>, vector<8x8xf32>, vector<8x8xf32> -> vector<8x8xf32>
    %270 = vector.extract_strided_slice %218 {offsets = [0, 24], sizes = [8, 8], strides = [1, 1]} : vector<8x96xf32> to vector<8x8xf32>
    %271 = vector.extract_strided_slice %218 {offsets = [0, 56], sizes = [8, 8], strides = [1, 1]} : vector<8x96xf32> to vector<8x8xf32>
    %272 = vector.extract_strided_slice %218 {offsets = [0, 88], sizes = [8, 8], strides = [1, 1]} : vector<8x96xf32> to vector<8x8xf32>
    %cst_117 = arith.constant dense<0.000000e+00> : vector<8x8xf32>
    %273 = tpu.matmul %270, %271, %cst_117 {dimension_numbers = #tpu.dot_dimension_numbers<[1], [1], [0], [0], [0, 0, 1, 0], [], []>} : vector<8x8xf32>, vector<8x8xf32>, vector<8x8xf32> -> vector<8x8xf32>
    %cst_118 = arith.constant 0.353553385 : f32
    %274 = vector.broadcast %cst_118 : f32 to vector<8x8xf32>
    %275 = arith.mulf %273, %274 : vector<8x8xf32>
    %276 = arith.addf %275, %9 : vector<8x8xf32>
    %cst_119 = arith.constant dense<0xFF800000> : vector<8xf32>
    %277 = vector.multi_reduction <maximumf>, %276, %cst_119 [1] : vector<8x8xf32> to vector<8xf32>
    %278 = vector.shape_cast %277 : vector<8xf32> to vector<8x1xf32>
    %279 = vector.broadcast %278 : vector<8x1xf32> to vector<8x8xf32>
    %280 = arith.subf %276, %279 : vector<8x8xf32>
    %281 = math.exp %280 : vector<8x8xf32>
    %cst_120 = arith.constant dense<0.000000e+00> : vector<8xf32>
    %282 = vector.multi_reduction <add>, %281, %cst_120 [1] : vector<8x8xf32> to vector<8xf32>
    %283 = vector.shape_cast %282 : vector<8xf32> to vector<8x1xf32>
    %284 = vector.broadcast %283 : vector<8x1xf32> to vector<8x8xf32>
    %285 = arith.divf %281, %284 : vector<8x8xf32>
    %cst_121 = arith.constant dense<0.000000e+00> : vector<8x8xf32>
    %286 = tpu.matmul %285, %272, %cst_121 {dimension_numbers = #tpu.dot_dimension_numbers<[1], [0], [0], [1], [0, 0, 1, 1], [], []>} : vector<8x8xf32>, vector<8x8xf32>, vector<8x8xf32> -> vector<8x8xf32>
    %287 = tpu.concatenate %235, %252, %269, %286 in 1 : vector<8x8xf32>, vector<8x8xf32>, vector<8x8xf32>, vector<8x8xf32> -> vector<8x32xf32>
    %288 = arith.truncf %287 : vector<8x32xf32> to vector<8x32xbf16>
    %c1_122 = arith.constant 1 : index
    %c0_123 = arith.constant 0 : index
    %c0_124 = arith.constant 0 : index
    %289 = vector.load %arg5[%c1_122, %c0_123, %c0_124] : memref<3x32x32xbf16, #tpu.memory_space<vmem>>, vector<1x32x32xbf16>
    %290 = vector.shape_cast %289 : vector<1x32x32xbf16> to vector<32x32xbf16>
    %cst_125 = arith.constant dense<0.000000e+00> : vector<8x32xf32>
    %291 = tpu.matmul %288, %290, %cst_125 {dimension_numbers = #tpu.dot_dimension_numbers<[1], [0], [0], [1], [0, 0, 1, 1], [], []>} : vector<8x32xbf16>, vector<32x32xbf16>, vector<8x32xf32> -> vector<8x32xf32>
    %c1_126 = arith.constant 1 : index
    %c0_127 = arith.constant 0 : index
    %c0_128 = arith.constant 0 : index
    %292 = vector.load %arg6[%c1_126, %c0_127, %c0_128] : memref<3x1x32xf32, #tpu.memory_space<vmem>>, vector<1x1x32xf32>
    %293 = vector.shape_cast %292 : vector<1x1x32xf32> to vector<1x32xf32>
    %294 = vector.broadcast %293 : vector<1x32xf32> to vector<8x32xf32>
    %295 = arith.addf %291, %294 : vector<8x32xf32>
    %296 = arith.addf %206, %295 : vector<8x32xf32>
    %cst_129 = arith.constant dense<0.000000e+00> : vector<8xf32>
    %297 = vector.multi_reduction <add>, %296, %cst_129 [1] : vector<8x32xf32> to vector<8xf32>
    %298 = vector.shape_cast %297 : vector<8xf32> to vector<8x1xf32>
    %cst_130 = arith.constant 3.200000e+01 : f32
    %299 = vector.broadcast %cst_130 : f32 to vector<8x1xf32>
    %300 = arith.divf %298, %299 : vector<8x1xf32>
    %301 = vector.broadcast %300 : vector<8x1xf32> to vector<8x32xf32>
    %302 = arith.subf %296, %301 : vector<8x32xf32>
    %303 = arith.mulf %302, %302 : vector<8x32xf32>
    %cst_131 = arith.constant dense<0.000000e+00> : vector<8xf32>
    %304 = vector.multi_reduction <add>, %303, %cst_131 [1] : vector<8x32xf32> to vector<8xf32>
    %305 = vector.shape_cast %304 : vector<8xf32> to vector<8x1xf32>
    %cst_132 = arith.constant 3.200000e+01 : f32
    %306 = vector.broadcast %cst_132 : f32 to vector<8x1xf32>
    %307 = arith.divf %305, %306 : vector<8x1xf32>
    %308 = vector.broadcast %300 : vector<8x1xf32> to vector<8x32xf32>
    %309 = arith.subf %296, %308 : vector<8x32xf32>
    %cst_133 = arith.constant 9.99999974E-6 : f32
    %310 = vector.broadcast %cst_133 : f32 to vector<8x1xf32>
    %311 = arith.addf %307, %310 : vector<8x1xf32>
    %312 = math.rsqrt %311 : vector<8x1xf32>
    %313 = vector.broadcast %312 : vector<8x1xf32> to vector<8x32xf32>
    %314 = arith.mulf %309, %313 : vector<8x32xf32>
    %315 = vector.extract_strided_slice %208 {offsets = [0, 0], sizes = [1, 32], strides = [1, 1]} : vector<3x32xf32> to vector<1x32xf32>
    %316 = vector.broadcast %315 : vector<1x32xf32> to vector<8x32xf32>
    %317 = arith.mulf %314, %316 : vector<8x32xf32>
    %318 = vector.extract_strided_slice %210 {offsets = [0, 0], sizes = [1, 32], strides = [1, 1]} : vector<3x32xf32> to vector<1x32xf32>
    %319 = vector.broadcast %318 : vector<1x32xf32> to vector<8x32xf32>
    %320 = arith.addf %317, %319 : vector<8x32xf32>
    %321 = arith.truncf %3 : vector<1x32xf32> to vector<1x32xbf16>
    %c1_134 = arith.constant 1 : index
    %c0_135 = arith.constant 0 : index
    %c0_136 = arith.constant 0 : index
    %322 = vector.load %arg7[%c1_134, %c0_135, %c0_136] : memref<3x32x32xbf16, #tpu.memory_space<vmem>>, vector<1x32x32xbf16>
    %323 = vector.shape_cast %322 : vector<1x32x32xbf16> to vector<32x32xbf16>
    %cst_137 = arith.constant dense<0.000000e+00> : vector<1x32xf32>
    %324 = tpu.matmul %321, %323, %cst_137 {dimension_numbers = #tpu.dot_dimension_numbers<[1], [0], [0], [1], [0, 0, 1, 1], [], []>} : vector<1x32xbf16>, vector<32x32xbf16>, vector<1x32xf32> -> vector<1x32xf32>
    %c1_138 = arith.constant 1 : index
    %c0_139 = arith.constant 0 : index
    %c0_140 = arith.constant 0 : index
    %325 = vector.load %arg8[%c1_138, %c0_139, %c0_140] : memref<3x1x32xf32, #tpu.memory_space<vmem>>, vector<1x1x32xf32>
    %326 = vector.shape_cast %325 : vector<1x1x32xf32> to vector<1x32xf32>
    %327 = arith.addf %324, %326 : vector<1x32xf32>
    %328 = arith.truncf %327 : vector<1x32xf32> to vector<1x32xbf16>
    %c1_141 = arith.constant 1 : index
    %c0_142 = arith.constant 0 : index
    %c0_143 = arith.constant 0 : index
    %329 = vector.load %arg9[%c1_141, %c0_142, %c0_143] : memref<3x32x32xbf16, #tpu.memory_space<vmem>>, vector<1x32x32xbf16>
    %330 = vector.shape_cast %329 : vector<1x32x32xbf16> to vector<32x32xbf16>
    %cst_144 = arith.constant dense<0.000000e+00> : vector<1x32xf32>
    %331 = tpu.matmul %328, %330, %cst_144 {dimension_numbers = #tpu.dot_dimension_numbers<[1], [0], [0], [1], [0, 0, 1, 1], [], []>} : vector<1x32xbf16>, vector<32x32xbf16>, vector<1x32xf32> -> vector<1x32xf32>
    %c1_145 = arith.constant 1 : index
    %c0_146 = arith.constant 0 : index
    %c0_147 = arith.constant 0 : index
    %332 = vector.load %arg10[%c1_145, %c0_146, %c0_147] : memref<3x1x32xf32, #tpu.memory_space<vmem>>, vector<1x1x32xf32>
    %333 = vector.shape_cast %332 : vector<1x1x32xf32> to vector<1x32xf32>
    %334 = arith.addf %331, %333 : vector<1x32xf32>
    %335 = vector.broadcast %334 : vector<1x32xf32> to vector<8x32xf32>
    %336 = arith.addf %320, %335 : vector<8x32xf32>
    %cst_148 = arith.constant dense<0.000000e+00> : vector<8xf32>
    %337 = vector.multi_reduction <add>, %336, %cst_148 [1] : vector<8x32xf32> to vector<8xf32>
    %338 = vector.shape_cast %337 : vector<8xf32> to vector<8x1xf32>
    %cst_149 = arith.constant 3.200000e+01 : f32
    %339 = vector.broadcast %cst_149 : f32 to vector<8x1xf32>
    %340 = arith.divf %338, %339 : vector<8x1xf32>
    %341 = vector.broadcast %340 : vector<8x1xf32> to vector<8x32xf32>
    %342 = arith.subf %336, %341 : vector<8x32xf32>
    %343 = arith.mulf %342, %342 : vector<8x32xf32>
    %cst_150 = arith.constant dense<0.000000e+00> : vector<8xf32>
    %344 = vector.multi_reduction <add>, %343, %cst_150 [1] : vector<8x32xf32> to vector<8xf32>
    %345 = vector.shape_cast %344 : vector<8xf32> to vector<8x1xf32>
    %cst_151 = arith.constant 3.200000e+01 : f32
    %346 = vector.broadcast %cst_151 : f32 to vector<8x1xf32>
    %347 = arith.divf %345, %346 : vector<8x1xf32>
    %348 = vector.broadcast %340 : vector<8x1xf32> to vector<8x32xf32>
    %349 = arith.subf %336, %348 : vector<8x32xf32>
    %cst_152 = arith.constant 9.99999974E-6 : f32
    %350 = vector.broadcast %cst_152 : f32 to vector<8x1xf32>
    %351 = arith.addf %347, %350 : vector<8x1xf32>
    %352 = math.rsqrt %351 : vector<8x1xf32>
    %353 = vector.broadcast %352 : vector<8x1xf32> to vector<8x32xf32>
    %354 = arith.mulf %349, %353 : vector<8x32xf32>
    %355 = vector.extract_strided_slice %208 {offsets = [1, 0], sizes = [1, 32], strides = [1, 1]} : vector<3x32xf32> to vector<1x32xf32>
    %356 = vector.broadcast %355 : vector<1x32xf32> to vector<8x32xf32>
    %357 = arith.mulf %354, %356 : vector<8x32xf32>
    %358 = vector.extract_strided_slice %210 {offsets = [1, 0], sizes = [1, 32], strides = [1, 1]} : vector<3x32xf32> to vector<1x32xf32>
    %359 = vector.broadcast %358 : vector<1x32xf32> to vector<8x32xf32>
    %360 = arith.addf %357, %359 : vector<8x32xf32>
    %361 = arith.truncf %360 : vector<8x32xf32> to vector<8x32xbf16>
    %c1_153 = arith.constant 1 : index
    %c0_154 = arith.constant 0 : index
    %c0_155 = arith.constant 0 : index
    %362 = vector.load %arg11[%c1_153, %c0_154, %c0_155] : memref<3x32x2048xbf16, #tpu.memory_space<vmem>>, vector<1x32x2048xbf16>
    %363 = vector.shape_cast %362 : vector<1x32x2048xbf16> to vector<32x2048xbf16>
    %cst_156 = arith.constant dense<0.000000e+00> : vector<8x2048xf32>
    %364 = tpu.matmul %361, %363, %cst_156 {dimension_numbers = #tpu.dot_dimension_numbers<[1], [0], [0], [1], [0, 0, 1, 1], [], []>} : vector<8x32xbf16>, vector<32x2048xbf16>, vector<8x2048xf32> -> vector<8x2048xf32>
    %c1_157 = arith.constant 1 : index
    %c0_158 = arith.constant 0 : index
    %c0_159 = arith.constant 0 : index
    %365 = vector.load %arg12[%c1_157, %c0_158, %c0_159] : memref<3x1x2048xf32, #tpu.memory_space<vmem>>, vector<1x1x2048xf32>
    %366 = vector.shape_cast %365 : vector<1x1x2048xf32> to vector<1x2048xf32>
    %367 = vector.broadcast %366 : vector<1x2048xf32> to vector<8x2048xf32>
    %368 = arith.addf %364, %367 : vector<8x2048xf32>
    %cst_160 = arith.constant 0.000000e+00 : f32
    %369 = vector.broadcast %cst_160 : f32 to vector<8x2048xf32>
    %370 = arith.maximumf %368, %369 : vector<8x2048xf32>
    %371 = arith.truncf %370 : vector<8x2048xf32> to vector<8x2048xbf16>
    %c1_161 = arith.constant 1 : index
    %c0_162 = arith.constant 0 : index
    %c0_163 = arith.constant 0 : index
    %372 = vector.load %arg13[%c1_161, %c0_162, %c0_163] : memref<3x32x2048xbf16, #tpu.memory_space<vmem>>, vector<1x32x2048xbf16>
    %373 = vector.shape_cast %372 : vector<1x32x2048xbf16> to vector<32x2048xbf16>
    %cst_164 = arith.constant dense<0.000000e+00> : vector<8x32xf32>
    %374 = tpu.matmul %371, %373, %cst_164 {dimension_numbers = #tpu.dot_dimension_numbers<[1], [1], [0], [0], [0, 0, 1, 0], [], []>} : vector<8x2048xbf16>, vector<32x2048xbf16>, vector<8x32xf32> -> vector<8x32xf32>
    %c1_165 = arith.constant 1 : index
    %c0_166 = arith.constant 0 : index
    %c0_167 = arith.constant 0 : index
    %375 = vector.load %arg14[%c1_165, %c0_166, %c0_167] : memref<3x1x32xf32, #tpu.memory_space<vmem>>, vector<1x1x32xf32>
    %376 = vector.shape_cast %375 : vector<1x1x32xf32> to vector<1x32xf32>
    %377 = vector.broadcast %376 : vector<1x32xf32> to vector<8x32xf32>
    %378 = arith.addf %374, %377 : vector<8x32xf32>
    %379 = arith.addf %360, %378 : vector<8x32xf32>
    %cst_168 = arith.constant dense<0.000000e+00> : vector<8xf32>
    %380 = vector.multi_reduction <add>, %379, %cst_168 [1] : vector<8x32xf32> to vector<8xf32>
    %381 = vector.shape_cast %380 : vector<8xf32> to vector<8x1xf32>
    %cst_169 = arith.constant 3.200000e+01 : f32
    %382 = vector.broadcast %cst_169 : f32 to vector<8x1xf32>
    %383 = arith.divf %381, %382 : vector<8x1xf32>
    %384 = vector.broadcast %383 : vector<8x1xf32> to vector<8x32xf32>
    %385 = arith.subf %379, %384 : vector<8x32xf32>
    %386 = arith.mulf %385, %385 : vector<8x32xf32>
    %cst_170 = arith.constant dense<0.000000e+00> : vector<8xf32>
    %387 = vector.multi_reduction <add>, %386, %cst_170 [1] : vector<8x32xf32> to vector<8xf32>
    %388 = vector.shape_cast %387 : vector<8xf32> to vector<8x1xf32>
    %cst_171 = arith.constant 3.200000e+01 : f32
    %389 = vector.broadcast %cst_171 : f32 to vector<8x1xf32>
    %390 = arith.divf %388, %389 : vector<8x1xf32>
    %391 = vector.broadcast %383 : vector<8x1xf32> to vector<8x32xf32>
    %392 = arith.subf %379, %391 : vector<8x32xf32>
    %cst_172 = arith.constant 9.99999974E-6 : f32
    %393 = vector.broadcast %cst_172 : f32 to vector<8x1xf32>
    %394 = arith.addf %390, %393 : vector<8x1xf32>
    %395 = math.rsqrt %394 : vector<8x1xf32>
    %396 = vector.broadcast %395 : vector<8x1xf32> to vector<8x32xf32>
    %397 = arith.mulf %392, %396 : vector<8x32xf32>
    %398 = vector.extract_strided_slice %208 {offsets = [2, 0], sizes = [1, 32], strides = [1, 1]} : vector<3x32xf32> to vector<1x32xf32>
    %399 = vector.broadcast %398 : vector<1x32xf32> to vector<8x32xf32>
    %400 = arith.mulf %397, %399 : vector<8x32xf32>
    %401 = vector.extract_strided_slice %210 {offsets = [2, 0], sizes = [1, 32], strides = [1, 1]} : vector<3x32xf32> to vector<1x32xf32>
    %402 = vector.broadcast %401 : vector<1x32xf32> to vector<8x32xf32>
    %403 = arith.addf %400, %402 : vector<8x32xf32>
    %c2 = arith.constant 2 : index
    %c0_173 = arith.constant 0 : index
    %c0_174 = arith.constant 0 : index
    %404 = vector.load %arg15[%c2, %c0_173, %c0_174] : memref<3x3x32xf32, #tpu.memory_space<vmem>>, vector<1x3x32xf32>
    %405 = vector.shape_cast %404 : vector<1x3x32xf32> to vector<3x32xf32>
    %c2_175 = arith.constant 2 : index
    %c0_176 = arith.constant 0 : index
    %c0_177 = arith.constant 0 : index
    %406 = vector.load %arg16[%c2_175, %c0_176, %c0_177] : memref<3x3x32xf32, #tpu.memory_space<vmem>>, vector<1x3x32xf32>
    %407 = vector.shape_cast %406 : vector<1x3x32xf32> to vector<3x32xf32>
    %408 = arith.truncf %403 : vector<8x32xf32> to vector<8x32xbf16>
    %c2_178 = arith.constant 2 : index
    %c0_179 = arith.constant 0 : index
    %c0_180 = arith.constant 0 : index
    %409 = vector.load %arg3[%c2_178, %c0_179, %c0_180] : memref<3x32x96xbf16, #tpu.memory_space<vmem>>, vector<1x32x96xbf16>
    %410 = vector.shape_cast %409 : vector<1x32x96xbf16> to vector<32x96xbf16>
    %cst_181 = arith.constant dense<0.000000e+00> : vector<8x96xf32>
    %411 = tpu.matmul %408, %410, %cst_181 {dimension_numbers = #tpu.dot_dimension_numbers<[1], [0], [0], [1], [0, 0, 1, 1], [], []>} : vector<8x32xbf16>, vector<32x96xbf16>, vector<8x96xf32> -> vector<8x96xf32>
    %c2_182 = arith.constant 2 : index
    %c0_183 = arith.constant 0 : index
    %c0_184 = arith.constant 0 : index
    %412 = vector.load %arg4[%c2_182, %c0_183, %c0_184] : memref<3x1x96xf32, #tpu.memory_space<vmem>>, vector<1x1x96xf32>
    %413 = vector.shape_cast %412 : vector<1x1x96xf32> to vector<1x96xf32>
    %414 = vector.broadcast %413 : vector<1x96xf32> to vector<8x96xf32>
    %415 = arith.addf %411, %414 : vector<8x96xf32>
    %416 = vector.extract_strided_slice %415 {offsets = [0, 0], sizes = [8, 8], strides = [1, 1]} : vector<8x96xf32> to vector<8x8xf32>
    %417 = vector.extract_strided_slice %415 {offsets = [0, 32], sizes = [8, 8], strides = [1, 1]} : vector<8x96xf32> to vector<8x8xf32>
    %418 = vector.extract_strided_slice %415 {offsets = [0, 64], sizes = [8, 8], strides = [1, 1]} : vector<8x96xf32> to vector<8x8xf32>
    %cst_185 = arith.constant dense<0.000000e+00> : vector<8x8xf32>
    %419 = tpu.matmul %416, %417, %cst_185 {dimension_numbers = #tpu.dot_dimension_numbers<[1], [1], [0], [0], [0, 0, 1, 0], [], []>} : vector<8x8xf32>, vector<8x8xf32>, vector<8x8xf32> -> vector<8x8xf32>
    %cst_186 = arith.constant 0.353553385 : f32
    %420 = vector.broadcast %cst_186 : f32 to vector<8x8xf32>
    %421 = arith.mulf %419, %420 : vector<8x8xf32>
    %422 = arith.addf %421, %9 : vector<8x8xf32>
    %cst_187 = arith.constant dense<0xFF800000> : vector<8xf32>
    %423 = vector.multi_reduction <maximumf>, %422, %cst_187 [1] : vector<8x8xf32> to vector<8xf32>
    %424 = vector.shape_cast %423 : vector<8xf32> to vector<8x1xf32>
    %425 = vector.broadcast %424 : vector<8x1xf32> to vector<8x8xf32>
    %426 = arith.subf %422, %425 : vector<8x8xf32>
    %427 = math.exp %426 : vector<8x8xf32>
    %cst_188 = arith.constant dense<0.000000e+00> : vector<8xf32>
    %428 = vector.multi_reduction <add>, %427, %cst_188 [1] : vector<8x8xf32> to vector<8xf32>
    %429 = vector.shape_cast %428 : vector<8xf32> to vector<8x1xf32>
    %430 = vector.broadcast %429 : vector<8x1xf32> to vector<8x8xf32>
    %431 = arith.divf %427, %430 : vector<8x8xf32>
    %cst_189 = arith.constant dense<0.000000e+00> : vector<8x8xf32>
    %432 = tpu.matmul %431, %418, %cst_189 {dimension_numbers = #tpu.dot_dimension_numbers<[1], [0], [0], [1], [0, 0, 1, 1], [], []>} : vector<8x8xf32>, vector<8x8xf32>, vector<8x8xf32> -> vector<8x8xf32>
    %433 = vector.extract_strided_slice %415 {offsets = [0, 8], sizes = [8, 8], strides = [1, 1]} : vector<8x96xf32> to vector<8x8xf32>
    %434 = vector.extract_strided_slice %415 {offsets = [0, 40], sizes = [8, 8], strides = [1, 1]} : vector<8x96xf32> to vector<8x8xf32>
    %435 = vector.extract_strided_slice %415 {offsets = [0, 72], sizes = [8, 8], strides = [1, 1]} : vector<8x96xf32> to vector<8x8xf32>
    %cst_190 = arith.constant dense<0.000000e+00> : vector<8x8xf32>
    %436 = tpu.matmul %433, %434, %cst_190 {dimension_numbers = #tpu.dot_dimension_numbers<[1], [1], [0], [0], [0, 0, 1, 0], [], []>} : vector<8x8xf32>, vector<8x8xf32>, vector<8x8xf32> -> vector<8x8xf32>
    %cst_191 = arith.constant 0.353553385 : f32
    %437 = vector.broadcast %cst_191 : f32 to vector<8x8xf32>
    %438 = arith.mulf %436, %437 : vector<8x8xf32>
    %439 = arith.addf %438, %9 : vector<8x8xf32>
    %cst_192 = arith.constant dense<0xFF800000> : vector<8xf32>
    %440 = vector.multi_reduction <maximumf>, %439, %cst_192 [1] : vector<8x8xf32> to vector<8xf32>
    %441 = vector.shape_cast %440 : vector<8xf32> to vector<8x1xf32>
    %442 = vector.broadcast %441 : vector<8x1xf32> to vector<8x8xf32>
    %443 = arith.subf %439, %442 : vector<8x8xf32>
    %444 = math.exp %443 : vector<8x8xf32>
    %cst_193 = arith.constant dense<0.000000e+00> : vector<8xf32>
    %445 = vector.multi_reduction <add>, %444, %cst_193 [1] : vector<8x8xf32> to vector<8xf32>
    %446 = vector.shape_cast %445 : vector<8xf32> to vector<8x1xf32>
    %447 = vector.broadcast %446 : vector<8x1xf32> to vector<8x8xf32>
    %448 = arith.divf %444, %447 : vector<8x8xf32>
    %cst_194 = arith.constant dense<0.000000e+00> : vector<8x8xf32>
    %449 = tpu.matmul %448, %435, %cst_194 {dimension_numbers = #tpu.dot_dimension_numbers<[1], [0], [0], [1], [0, 0, 1, 1], [], []>} : vector<8x8xf32>, vector<8x8xf32>, vector<8x8xf32> -> vector<8x8xf32>
    %450 = vector.extract_strided_slice %415 {offsets = [0, 16], sizes = [8, 8], strides = [1, 1]} : vector<8x96xf32> to vector<8x8xf32>
    %451 = vector.extract_strided_slice %415 {offsets = [0, 48], sizes = [8, 8], strides = [1, 1]} : vector<8x96xf32> to vector<8x8xf32>
    %452 = vector.extract_strided_slice %415 {offsets = [0, 80], sizes = [8, 8], strides = [1, 1]} : vector<8x96xf32> to vector<8x8xf32>
    %cst_195 = arith.constant dense<0.000000e+00> : vector<8x8xf32>
    %453 = tpu.matmul %450, %451, %cst_195 {dimension_numbers = #tpu.dot_dimension_numbers<[1], [1], [0], [0], [0, 0, 1, 0], [], []>} : vector<8x8xf32>, vector<8x8xf32>, vector<8x8xf32> -> vector<8x8xf32>
    %cst_196 = arith.constant 0.353553385 : f32
    %454 = vector.broadcast %cst_196 : f32 to vector<8x8xf32>
    %455 = arith.mulf %453, %454 : vector<8x8xf32>
    %456 = arith.addf %455, %9 : vector<8x8xf32>
    %cst_197 = arith.constant dense<0xFF800000> : vector<8xf32>
    %457 = vector.multi_reduction <maximumf>, %456, %cst_197 [1] : vector<8x8xf32> to vector<8xf32>
    %458 = vector.shape_cast %457 : vector<8xf32> to vector<8x1xf32>
    %459 = vector.broadcast %458 : vector<8x1xf32> to vector<8x8xf32>
    %460 = arith.subf %456, %459 : vector<8x8xf32>
    %461 = math.exp %460 : vector<8x8xf32>
    %cst_198 = arith.constant dense<0.000000e+00> : vector<8xf32>
    %462 = vector.multi_reduction <add>, %461, %cst_198 [1] : vector<8x8xf32> to vector<8xf32>
    %463 = vector.shape_cast %462 : vector<8xf32> to vector<8x1xf32>
    %464 = vector.broadcast %463 : vector<8x1xf32> to vector<8x8xf32>
    %465 = arith.divf %461, %464 : vector<8x8xf32>
    %cst_199 = arith.constant dense<0.000000e+00> : vector<8x8xf32>
    %466 = tpu.matmul %465, %452, %cst_199 {dimension_numbers = #tpu.dot_dimension_numbers<[1], [0], [0], [1], [0, 0, 1, 1], [], []>} : vector<8x8xf32>, vector<8x8xf32>, vector<8x8xf32> -> vector<8x8xf32>
    %467 = vector.extract_strided_slice %415 {offsets = [0, 24], sizes = [8, 8], strides = [1, 1]} : vector<8x96xf32> to vector<8x8xf32>
    %468 = vector.extract_strided_slice %415 {offsets = [0, 56], sizes = [8, 8], strides = [1, 1]} : vector<8x96xf32> to vector<8x8xf32>
    %469 = vector.extract_strided_slice %415 {offsets = [0, 88], sizes = [8, 8], strides = [1, 1]} : vector<8x96xf32> to vector<8x8xf32>
    %cst_200 = arith.constant dense<0.000000e+00> : vector<8x8xf32>
    %470 = tpu.matmul %467, %468, %cst_200 {dimension_numbers = #tpu.dot_dimension_numbers<[1], [1], [0], [0], [0, 0, 1, 0], [], []>} : vector<8x8xf32>, vector<8x8xf32>, vector<8x8xf32> -> vector<8x8xf32>
    %cst_201 = arith.constant 0.353553385 : f32
    %471 = vector.broadcast %cst_201 : f32 to vector<8x8xf32>
    %472 = arith.mulf %470, %471 : vector<8x8xf32>
    %473 = arith.addf %472, %9 : vector<8x8xf32>
    %cst_202 = arith.constant dense<0xFF800000> : vector<8xf32>
    %474 = vector.multi_reduction <maximumf>, %473, %cst_202 [1] : vector<8x8xf32> to vector<8xf32>
    %475 = vector.shape_cast %474 : vector<8xf32> to vector<8x1xf32>
    %476 = vector.broadcast %475 : vector<8x1xf32> to vector<8x8xf32>
    %477 = arith.subf %473, %476 : vector<8x8xf32>
    %478 = math.exp %477 : vector<8x8xf32>
    %cst_203 = arith.constant dense<0.000000e+00> : vector<8xf32>
    %479 = vector.multi_reduction <add>, %478, %cst_203 [1] : vector<8x8xf32> to vector<8xf32>
    %480 = vector.shape_cast %479 : vector<8xf32> to vector<8x1xf32>
    %481 = vector.broadcast %480 : vector<8x1xf32> to vector<8x8xf32>
    %482 = arith.divf %478, %481 : vector<8x8xf32>
    %cst_204 = arith.constant dense<0.000000e+00> : vector<8x8xf32>
    %483 = tpu.matmul %482, %469, %cst_204 {dimension_numbers = #tpu.dot_dimension_numbers<[1], [0], [0], [1], [0, 0, 1, 1], [], []>} : vector<8x8xf32>, vector<8x8xf32>, vector<8x8xf32> -> vector<8x8xf32>
    %484 = tpu.concatenate %432, %449, %466, %483 in 1 : vector<8x8xf32>, vector<8x8xf32>, vector<8x8xf32>, vector<8x8xf32> -> vector<8x32xf32>
    %485 = arith.truncf %484 : vector<8x32xf32> to vector<8x32xbf16>
    %c2_205 = arith.constant 2 : index
    %c0_206 = arith.constant 0 : index
    %c0_207 = arith.constant 0 : index
    %486 = vector.load %arg5[%c2_205, %c0_206, %c0_207] : memref<3x32x32xbf16, #tpu.memory_space<vmem>>, vector<1x32x32xbf16>
    %487 = vector.shape_cast %486 : vector<1x32x32xbf16> to vector<32x32xbf16>
    %cst_208 = arith.constant dense<0.000000e+00> : vector<8x32xf32>
    %488 = tpu.matmul %485, %487, %cst_208 {dimension_numbers = #tpu.dot_dimension_numbers<[1], [0], [0], [1], [0, 0, 1, 1], [], []>} : vector<8x32xbf16>, vector<32x32xbf16>, vector<8x32xf32> -> vector<8x32xf32>
    %c2_209 = arith.constant 2 : index
    %c0_210 = arith.constant 0 : index
    %c0_211 = arith.constant 0 : index
    %489 = vector.load %arg6[%c2_209, %c0_210, %c0_211] : memref<3x1x32xf32, #tpu.memory_space<vmem>>, vector<1x1x32xf32>
    %490 = vector.shape_cast %489 : vector<1x1x32xf32> to vector<1x32xf32>
    %491 = vector.broadcast %490 : vector<1x32xf32> to vector<8x32xf32>
    %492 = arith.addf %488, %491 : vector<8x32xf32>
    %493 = arith.addf %403, %492 : vector<8x32xf32>
    %cst_212 = arith.constant dense<0.000000e+00> : vector<8xf32>
    %494 = vector.multi_reduction <add>, %493, %cst_212 [1] : vector<8x32xf32> to vector<8xf32>
    %495 = vector.shape_cast %494 : vector<8xf32> to vector<8x1xf32>
    %cst_213 = arith.constant 3.200000e+01 : f32
    %496 = vector.broadcast %cst_213 : f32 to vector<8x1xf32>
    %497 = arith.divf %495, %496 : vector<8x1xf32>
    %498 = vector.broadcast %497 : vector<8x1xf32> to vector<8x32xf32>
    %499 = arith.subf %493, %498 : vector<8x32xf32>
    %500 = arith.mulf %499, %499 : vector<8x32xf32>
    %cst_214 = arith.constant dense<0.000000e+00> : vector<8xf32>
    %501 = vector.multi_reduction <add>, %500, %cst_214 [1] : vector<8x32xf32> to vector<8xf32>
    %502 = vector.shape_cast %501 : vector<8xf32> to vector<8x1xf32>
    %cst_215 = arith.constant 3.200000e+01 : f32
    %503 = vector.broadcast %cst_215 : f32 to vector<8x1xf32>
    %504 = arith.divf %502, %503 : vector<8x1xf32>
    %505 = vector.broadcast %497 : vector<8x1xf32> to vector<8x32xf32>
    %506 = arith.subf %493, %505 : vector<8x32xf32>
    %cst_216 = arith.constant 9.99999974E-6 : f32
    %507 = vector.broadcast %cst_216 : f32 to vector<8x1xf32>
    %508 = arith.addf %504, %507 : vector<8x1xf32>
    %509 = math.rsqrt %508 : vector<8x1xf32>
    %510 = vector.broadcast %509 : vector<8x1xf32> to vector<8x32xf32>
    %511 = arith.mulf %506, %510 : vector<8x32xf32>
    %512 = vector.extract_strided_slice %405 {offsets = [0, 0], sizes = [1, 32], strides = [1, 1]} : vector<3x32xf32> to vector<1x32xf32>
    %513 = vector.broadcast %512 : vector<1x32xf32> to vector<8x32xf32>
    %514 = arith.mulf %511, %513 : vector<8x32xf32>
    %515 = vector.extract_strided_slice %407 {offsets = [0, 0], sizes = [1, 32], strides = [1, 1]} : vector<3x32xf32> to vector<1x32xf32>
    %516 = vector.broadcast %515 : vector<1x32xf32> to vector<8x32xf32>
    %517 = arith.addf %514, %516 : vector<8x32xf32>
    %518 = arith.truncf %3 : vector<1x32xf32> to vector<1x32xbf16>
    %c2_217 = arith.constant 2 : index
    %c0_218 = arith.constant 0 : index
    %c0_219 = arith.constant 0 : index
    %519 = vector.load %arg7[%c2_217, %c0_218, %c0_219] : memref<3x32x32xbf16, #tpu.memory_space<vmem>>, vector<1x32x32xbf16>
    %520 = vector.shape_cast %519 : vector<1x32x32xbf16> to vector<32x32xbf16>
    %cst_220 = arith.constant dense<0.000000e+00> : vector<1x32xf32>
    %521 = tpu.matmul %518, %520, %cst_220 {dimension_numbers = #tpu.dot_dimension_numbers<[1], [0], [0], [1], [0, 0, 1, 1], [], []>} : vector<1x32xbf16>, vector<32x32xbf16>, vector<1x32xf32> -> vector<1x32xf32>
    %c2_221 = arith.constant 2 : index
    %c0_222 = arith.constant 0 : index
    %c0_223 = arith.constant 0 : index
    %522 = vector.load %arg8[%c2_221, %c0_222, %c0_223] : memref<3x1x32xf32, #tpu.memory_space<vmem>>, vector<1x1x32xf32>
    %523 = vector.shape_cast %522 : vector<1x1x32xf32> to vector<1x32xf32>
    %524 = arith.addf %521, %523 : vector<1x32xf32>
    %525 = arith.truncf %524 : vector<1x32xf32> to vector<1x32xbf16>
    %c2_224 = arith.constant 2 : index
    %c0_225 = arith.constant 0 : index
    %c0_226 = arith.constant 0 : index
    %526 = vector.load %arg9[%c2_224, %c0_225, %c0_226] : memref<3x32x32xbf16, #tpu.memory_space<vmem>>, vector<1x32x32xbf16>
    %527 = vector.shape_cast %526 : vector<1x32x32xbf16> to vector<32x32xbf16>
    %cst_227 = arith.constant dense<0.000000e+00> : vector<1x32xf32>
    %528 = tpu.matmul %525, %527, %cst_227 {dimension_numbers = #tpu.dot_dimension_numbers<[1], [0], [0], [1], [0, 0, 1, 1], [], []>} : vector<1x32xbf16>, vector<32x32xbf16>, vector<1x32xf32> -> vector<1x32xf32>
    %c2_228 = arith.constant 2 : index
    %c0_229 = arith.constant 0 : index
    %c0_230 = arith.constant 0 : index
    %529 = vector.load %arg10[%c2_228, %c0_229, %c0_230] : memref<3x1x32xf32, #tpu.memory_space<vmem>>, vector<1x1x32xf32>
    %530 = vector.shape_cast %529 : vector<1x1x32xf32> to vector<1x32xf32>
    %531 = arith.addf %528, %530 : vector<1x32xf32>
    %532 = vector.broadcast %531 : vector<1x32xf32> to vector<8x32xf32>
    %533 = arith.addf %517, %532 : vector<8x32xf32>
    %cst_231 = arith.constant dense<0.000000e+00> : vector<8xf32>
    %534 = vector.multi_reduction <add>, %533, %cst_231 [1] : vector<8x32xf32> to vector<8xf32>
    %535 = vector.shape_cast %534 : vector<8xf32> to vector<8x1xf32>
    %cst_232 = arith.constant 3.200000e+01 : f32
    %536 = vector.broadcast %cst_232 : f32 to vector<8x1xf32>
    %537 = arith.divf %535, %536 : vector<8x1xf32>
    %538 = vector.broadcast %537 : vector<8x1xf32> to vector<8x32xf32>
    %539 = arith.subf %533, %538 : vector<8x32xf32>
    %540 = arith.mulf %539, %539 : vector<8x32xf32>
    %cst_233 = arith.constant dense<0.000000e+00> : vector<8xf32>
    %541 = vector.multi_reduction <add>, %540, %cst_233 [1] : vector<8x32xf32> to vector<8xf32>
    %542 = vector.shape_cast %541 : vector<8xf32> to vector<8x1xf32>
    %cst_234 = arith.constant 3.200000e+01 : f32
    %543 = vector.broadcast %cst_234 : f32 to vector<8x1xf32>
    %544 = arith.divf %542, %543 : vector<8x1xf32>
    %545 = vector.broadcast %537 : vector<8x1xf32> to vector<8x32xf32>
    %546 = arith.subf %533, %545 : vector<8x32xf32>
    %cst_235 = arith.constant 9.99999974E-6 : f32
    %547 = vector.broadcast %cst_235 : f32 to vector<8x1xf32>
    %548 = arith.addf %544, %547 : vector<8x1xf32>
    %549 = math.rsqrt %548 : vector<8x1xf32>
    %550 = vector.broadcast %549 : vector<8x1xf32> to vector<8x32xf32>
    %551 = arith.mulf %546, %550 : vector<8x32xf32>
    %552 = vector.extract_strided_slice %405 {offsets = [1, 0], sizes = [1, 32], strides = [1, 1]} : vector<3x32xf32> to vector<1x32xf32>
    %553 = vector.broadcast %552 : vector<1x32xf32> to vector<8x32xf32>
    %554 = arith.mulf %551, %553 : vector<8x32xf32>
    %555 = vector.extract_strided_slice %407 {offsets = [1, 0], sizes = [1, 32], strides = [1, 1]} : vector<3x32xf32> to vector<1x32xf32>
    %556 = vector.broadcast %555 : vector<1x32xf32> to vector<8x32xf32>
    %557 = arith.addf %554, %556 : vector<8x32xf32>
    %558 = arith.truncf %557 : vector<8x32xf32> to vector<8x32xbf16>
    %c2_236 = arith.constant 2 : index
    %c0_237 = arith.constant 0 : index
    %c0_238 = arith.constant 0 : index
    %559 = vector.load %arg11[%c2_236, %c0_237, %c0_238] : memref<3x32x2048xbf16, #tpu.memory_space<vmem>>, vector<1x32x2048xbf16>
    %560 = vector.shape_cast %559 : vector<1x32x2048xbf16> to vector<32x2048xbf16>
    %cst_239 = arith.constant dense<0.000000e+00> : vector<8x2048xf32>
    %561 = tpu.matmul %558, %560, %cst_239 {dimension_numbers = #tpu.dot_dimension_numbers<[1], [0], [0], [1], [0, 0, 1, 1], [], []>} : vector<8x32xbf16>, vector<32x2048xbf16>, vector<8x2048xf32> -> vector<8x2048xf32>
    %c2_240 = arith.constant 2 : index
    %c0_241 = arith.constant 0 : index
    %c0_242 = arith.constant 0 : index
    %562 = vector.load %arg12[%c2_240, %c0_241, %c0_242] : memref<3x1x2048xf32, #tpu.memory_space<vmem>>, vector<1x1x2048xf32>
    %563 = vector.shape_cast %562 : vector<1x1x2048xf32> to vector<1x2048xf32>
    %564 = vector.broadcast %563 : vector<1x2048xf32> to vector<8x2048xf32>
    %565 = arith.addf %561, %564 : vector<8x2048xf32>
    %cst_243 = arith.constant 0.000000e+00 : f32
    %566 = vector.broadcast %cst_243 : f32 to vector<8x2048xf32>
    %567 = arith.maximumf %565, %566 : vector<8x2048xf32>
    %568 = arith.truncf %567 : vector<8x2048xf32> to vector<8x2048xbf16>
    %c2_244 = arith.constant 2 : index
    %c0_245 = arith.constant 0 : index
    %c0_246 = arith.constant 0 : index
    %569 = vector.load %arg13[%c2_244, %c0_245, %c0_246] : memref<3x32x2048xbf16, #tpu.memory_space<vmem>>, vector<1x32x2048xbf16>
    %570 = vector.shape_cast %569 : vector<1x32x2048xbf16> to vector<32x2048xbf16>
    %cst_247 = arith.constant dense<0.000000e+00> : vector<8x32xf32>
    %571 = tpu.matmul %568, %570, %cst_247 {dimension_numbers = #tpu.dot_dimension_numbers<[1], [1], [0], [0], [0, 0, 1, 0], [], []>} : vector<8x2048xbf16>, vector<32x2048xbf16>, vector<8x32xf32> -> vector<8x32xf32>
    %c2_248 = arith.constant 2 : index
    %c0_249 = arith.constant 0 : index
    %c0_250 = arith.constant 0 : index
    %572 = vector.load %arg14[%c2_248, %c0_249, %c0_250] : memref<3x1x32xf32, #tpu.memory_space<vmem>>, vector<1x1x32xf32>
    %573 = vector.shape_cast %572 : vector<1x1x32xf32> to vector<1x32xf32>
    %574 = vector.broadcast %573 : vector<1x32xf32> to vector<8x32xf32>
    %575 = arith.addf %571, %574 : vector<8x32xf32>
    %576 = arith.addf %557, %575 : vector<8x32xf32>
    %cst_251 = arith.constant dense<0.000000e+00> : vector<8xf32>
    %577 = vector.multi_reduction <add>, %576, %cst_251 [1] : vector<8x32xf32> to vector<8xf32>
    %578 = vector.shape_cast %577 : vector<8xf32> to vector<8x1xf32>
    %cst_252 = arith.constant 3.200000e+01 : f32
    %579 = vector.broadcast %cst_252 : f32 to vector<8x1xf32>
    %580 = arith.divf %578, %579 : vector<8x1xf32>
    %581 = vector.broadcast %580 : vector<8x1xf32> to vector<8x32xf32>
    %582 = arith.subf %576, %581 : vector<8x32xf32>
    %583 = arith.mulf %582, %582 : vector<8x32xf32>
    %cst_253 = arith.constant dense<0.000000e+00> : vector<8xf32>
    %584 = vector.multi_reduction <add>, %583, %cst_253 [1] : vector<8x32xf32> to vector<8xf32>
    %585 = vector.shape_cast %584 : vector<8xf32> to vector<8x1xf32>
    %cst_254 = arith.constant 3.200000e+01 : f32
    %586 = vector.broadcast %cst_254 : f32 to vector<8x1xf32>
    %587 = arith.divf %585, %586 : vector<8x1xf32>
    %588 = vector.broadcast %580 : vector<8x1xf32> to vector<8x32xf32>
    %589 = arith.subf %576, %588 : vector<8x32xf32>
    %cst_255 = arith.constant 9.99999974E-6 : f32
    %590 = vector.broadcast %cst_255 : f32 to vector<8x1xf32>
    %591 = arith.addf %587, %590 : vector<8x1xf32>
    %592 = math.rsqrt %591 : vector<8x1xf32>
    %593 = vector.broadcast %592 : vector<8x1xf32> to vector<8x32xf32>
    %594 = arith.mulf %589, %593 : vector<8x32xf32>
    %595 = vector.extract_strided_slice %405 {offsets = [2, 0], sizes = [1, 32], strides = [1, 1]} : vector<3x32xf32> to vector<1x32xf32>
    %596 = vector.broadcast %595 : vector<1x32xf32> to vector<8x32xf32>
    %597 = arith.mulf %594, %596 : vector<8x32xf32>
    %598 = vector.extract_strided_slice %407 {offsets = [2, 0], sizes = [1, 32], strides = [1, 1]} : vector<3x32xf32> to vector<1x32xf32>
    %599 = vector.broadcast %598 : vector<1x32xf32> to vector<8x32xf32>
    %600 = arith.addf %597, %599 : vector<8x32xf32>
    %601 = arith.truncf %600 : vector<8x32xf32> to vector<8x32xbf16>
    %c0_256 = arith.constant 0 : index
    %c0_257 = arith.constant 0 : index
    %602 = vector.load %arg17[%c0_256, %c0_257] : memref<32x128xbf16, #tpu.memory_space<vmem>>, vector<32x128xbf16>
    %cst_258 = arith.constant dense<0.000000e+00> : vector<8x128xf32>
    %603 = tpu.matmul %601, %602, %cst_258 {dimension_numbers = #tpu.dot_dimension_numbers<[1], [0], [0], [1], [0, 0, 1, 1], [], []>} : vector<8x32xbf16>, vector<32x128xbf16>, vector<8x128xf32> -> vector<8x128xf32>
    %c0_259 = arith.constant 0 : index
    %c0_260 = arith.constant 0 : index
    %604 = vector.load %arg18[%c0_259, %c0_260] : memref<1x128xf32, #tpu.memory_space<vmem>>, vector<1x128xf32>
    %605 = vector.broadcast %604 : vector<1x128xf32> to vector<8x128xf32>
    %606 = arith.addf %603, %605 : vector<8x128xf32>
    %c0_261 = arith.constant 0 : index
    %c0_262 = arith.constant 0 : index
    %c0_263 = arith.constant 0 : index
    %607 = vector.load %arg19[%c0_261, %c0_262, %c0_263] : memref<1x8x128xf32, #tpu.memory_space<vmem>>, vector<1x8x128xf32>
    %608 = vector.shape_cast %607 : vector<1x8x128xf32> to vector<8x128xf32>
    %609 = vector.shape_cast %606 : vector<8x128xf32> to vector<1x8x128xf32>
    tpu.vector_store %arg19[%c0_261, %c0_262, %c0_263], %609 {strides = array<i32>} : memref<1x8x128xf32, #tpu.memory_space<vmem>>, vector<1x8x128xf32>,
    return
  }
  func.func @transform_0(%arg0: i32) -> (i32, i32, i32) {
    %c0_i32 = arith.constant 0 : i32
    %c0_i32_0 = arith.constant 0 : i32
    %c0_i32_1 = arith.constant 0 : i32
    return %arg0, %c0_i32, %c0_i32_0 : i32, i32, i32
  }
  func.func @transform_1(%arg0: i32) -> (i32, i32, i32) {
    %c0_i32 = arith.constant 0 : i32
    %c0_i32_0 = arith.constant 0 : i32
    %c0_i32_1 = arith.constant 0 : i32
    return %arg0, %c0_i32, %c0_i32_0 : i32, i32, i32
  }
  func.func @transform_2(%arg0: i32) -> (i32, i32, i32) {
    %c0_i32 = arith.constant 0 : i32
    %c0_i32_0 = arith.constant 0 : i32
    %c0_i32_1 = arith.constant 0 : i32
    %c0_i32_2 = arith.constant 0 : i32
    return %c0_i32, %c0_i32_0, %c0_i32_1 : i32, i32, i32
  }
  func.func @transform_3(%arg0: i32) -> (i32, i32, i32) {
    %c0_i32 = arith.constant 0 : i32
    %c0_i32_0 = arith.constant 0 : i32
    %c0_i32_1 = arith.constant 0 : i32
    %c0_i32_2 = arith.constant 0 : i32
    return %c0_i32, %c0_i32_0, %c0_i32_1 : i32, i32, i32
  }
  func.func @transform_4(%arg0: i32) -> (i32, i32, i32) {
    %c0_i32 = arith.constant 0 : i32
    %c0_i32_0 = arith.constant 0 : i32
    %c0_i32_1 = arith.constant 0 : i32
    %c0_i32_2 = arith.constant 0 : i32
    return %c0_i32, %c0_i32_0, %c0_i32_1 : i32, i32, i32
  }
  func.func @transform_5(%arg0: i32) -> (i32, i32, i32) {
    %c0_i32 = arith.constant 0 : i32
    %c0_i32_0 = arith.constant 0 : i32
    %c0_i32_1 = arith.constant 0 : i32
    %c0_i32_2 = arith.constant 0 : i32
    return %c0_i32, %c0_i32_0, %c0_i32_1 : i32, i32, i32
  }
  func.func @transform_6(%arg0: i32) -> (i32, i32, i32) {
    %c0_i32 = arith.constant 0 : i32
    %c0_i32_0 = arith.constant 0 : i32
    %c0_i32_1 = arith.constant 0 : i32
    %c0_i32_2 = arith.constant 0 : i32
    return %c0_i32, %c0_i32_0, %c0_i32_1 : i32, i32, i32
  }
  func.func @transform_7(%arg0: i32) -> (i32, i32, i32) {
    %c0_i32 = arith.constant 0 : i32
    %c0_i32_0 = arith.constant 0 : i32
    %c0_i32_1 = arith.constant 0 : i32
    %c0_i32_2 = arith.constant 0 : i32
    return %c0_i32, %c0_i32_0, %c0_i32_1 : i32, i32, i32
  }
  func.func @transform_8(%arg0: i32) -> (i32, i32, i32) {
    %c0_i32 = arith.constant 0 : i32
    %c0_i32_0 = arith.constant 0 : i32
    %c0_i32_1 = arith.constant 0 : i32
    %c0_i32_2 = arith.constant 0 : i32
    return %c0_i32, %c0_i32_0, %c0_i32_1 : i32, i32, i32
  }
  func.func @transform_9(%arg0: i32) -> (i32, i32, i32) {
    %c0_i32 = arith.constant 0 : i32
    %c0_i32_0 = arith.constant 0 : i32
    %c0_i32_1 = arith.constant 0 : i32
    %c0_i32_2 = arith.constant 0 : i32
    return %c0_i32, %c0_i32_0, %c0_i32_1 : i32, i32, i32
  }
  func.func @transform_10(%arg0: i32) -> (i32, i32, i32) {
    %c0_i32 = arith.constant 0 : i32
    %c0_i32_0 = arith.constant 0 : i32
    %c0_i32_1 = arith.constant 0 : i32
    %c0_i32_2 = arith.constant 0 : i32
    return %c0_i32, %c0_i32_0, %c0_i32_1 : i32, i32, i32
  }
  func.func @transform_11(%arg0: i32) -> (i32, i32, i32) {
    %c0_i32 = arith.constant 0 : i32
    %c0_i32_0 = arith.constant 0 : i32
    %c0_i32_1 = arith.constant 0 : i32
    %c0_i32_2 = arith.constant 0 : i32
    return %c0_i32, %c0_i32_0, %c0_i32_1 : i32, i32, i32
  }
  func.func @transform_12(%arg0: i32) -> (i32, i32, i32) {
    %c0_i32 = arith.constant 0 : i32
    %c0_i32_0 = arith.constant 0 : i32
    %c0_i32_1 = arith.constant 0 : i32
    %c0_i32_2 = arith.constant 0 : i32
    return %c0_i32, %c0_i32_0, %c0_i32_1 : i32, i32, i32
  }
  func.func @transform_13(%arg0: i32) -> (i32, i32, i32) {
    %c0_i32 = arith.constant 0 : i32
    %c0_i32_0 = arith.constant 0 : i32
    %c0_i32_1 = arith.constant 0 : i32
    %c0_i32_2 = arith.constant 0 : i32
    return %c0_i32, %c0_i32_0, %c0_i32_1 : i32, i32, i32
  }
  func.func @transform_14(%arg0: i32) -> (i32, i32, i32) {
    %c0_i32 = arith.constant 0 : i32
    %c0_i32_0 = arith.constant 0 : i32
    %c0_i32_1 = arith.constant 0 : i32
    %c0_i32_2 = arith.constant 0 : i32
    return %c0_i32, %c0_i32_0, %c0_i32_1 : i32, i32, i32
  }
  func.func @transform_15(%arg0: i32) -> (i32, i32, i32) {
    %c0_i32 = arith.constant 0 : i32
    %c0_i32_0 = arith.constant 0 : i32
    %c0_i32_1 = arith.constant 0 : i32
    %c0_i32_2 = arith.constant 0 : i32
    return %c0_i32, %c0_i32_0, %c0_i32_1 : i32, i32, i32
  }
  func.func @transform_16(%arg0: i32) -> (i32, i32) {
    %c0_i32 = arith.constant 0 : i32
    %c0_i32_0 = arith.constant 0 : i32
    %c0_i32_1 = arith.constant 0 : i32
    return %c0_i32, %c0_i32_0 : i32, i32
  }
  func.func @transform_17(%arg0: i32) -> (i32, i32) {
    %c0_i32 = arith.constant 0 : i32
    %c0_i32_0 = arith.constant 0 : i32
    %c0_i32_1 = arith.constant 0 : i32
    return %c0_i32, %c0_i32_0 : i32, i32
  }
  func.func @transform_18(%arg0: i32) -> (i32, i32, i32) {
    %c0_i32 = arith.constant 0 : i32
    %c0_i32_0 = arith.constant 0 : i32
    %c0_i32_1 = arith.constant 0 : i32
    return %arg0, %c0_i32, %c0_i32_0 : i32, i32, i32
  }
}

</mosaic_0001>

<llo_original>
// kernel: model_forward.4
$region0: #{model_forward.4}
  #allocation0 [shape = 'u32[]', space=smem, size = 0x4, offset = 0x4, fixed_abs, tag = 'smem constant byte address 0x4 - core index']
  #allocation1 [shape = 'u32[144,128]{1,0:T(1,128)}', space=vmem, size = 0x12000, scoped, tag = 'internal scratch']
  %s0 = inlined_call_operand.vmem [shape: bf16[128,27], index: 0, kind: input, shape index: {}]
  %s1 = inlined_call_operand.vmem [shape: bf16[27,128], index: 1, kind: input, shape index: {}]
  %s2 = inlined_call_operand.vmem [shape: f32[1,128], index: 2, kind: input, shape index: {}]
  %s3 = inlined_call_operand.vmem [shape: f32[128,128], index: 3, kind: output, shape index: {}]
  %s4 = sld [smem:[#allocation0]]
  $region22: #{model_forward.4} parent=0
    _
  %s6 = ssub.s32 1, %s4
  %s7 = scalar_select 0, %s6, %s4
  // Predicated region
  $region2: #{model_forward.4} parent=0 // pred_check
    _
  $region3: #{model_forward.4} parent=0 // pred_check_branch
    %9 = sbr.rel (0) target = $region5
  $region4: #{model_forward.4} parent=0 // pred_region
    _
  $region5: #{model_forward.4} parent=0 // pred_fallthru
    _
  // Predicated region
  $region6: #{model_forward.4} parent=0 // pred_check
    _
  $region7: #{model_forward.4} parent=0 // pred_check_branch
    %11 = sbr.rel (0) target = $region9
  $region8: #{model_forward.4} parent=0 // pred_region
    _
  $region9: #{model_forward.4} parent=0 // pred_fallthru
    _
  // Predicated region
  $region10: #{model_forward.4} parent=0 // pred_check
    _
  $region11: #{model_forward.4} parent=0 // pred_check_branch
    %13 = sbr.rel (0) target = $region13
  $region12: #{model_forward.4} parent=0 // pred_region
    _
  $region13: #{model_forward.4} parent=0 // pred_fallthru
    _
  %v15 = vld [vmem:[%s0] sm:$0xf]
  %v16 = vld [vmem:[%s0 + $0x4] sm:$0xf]
  %v17 = vld [vmem:[%s0 + $0x8] sm:$0xf]
  %v18 = vld [vmem:[%s0 + $0xc] sm:$0xf]
  %v19 = vld [vmem:[%s0 + $0x10] sm:$0xf]
  %v20 = vld [vmem:[%s0 + $0x14] sm:$0xf]
  %v21 = vld [vmem:[%s0 + $0x18] sm:$0xf]
  %v22 = vld [vmem:[%s0 + $0x1c] sm:$0xf]
  %v23 = vld [vmem:[%s0 + $0x20] sm:$0xf]
  %v24 = vld [vmem:[%s0 + $0x24] sm:$0xf]
  %v25 = vld [vmem:[%s0 + $0x28] sm:$0xf]
  %v26 = vld [vmem:[%s0 + $0x2c] sm:$0xf]
  %v27 = vld [vmem:[%s0 + $0x30] sm:$0xf]
  %v28 = vld [vmem:[%s0 + $0x34] sm:$0xf]
  %v29 = vld [vmem:[%s0 + $0x38] sm:$0xf]
  %v30 = vld [vmem:[%s0 + $0x3c] sm:$0xf]
  %v31 = vld [vmem:[%s1] sm:$0xf]
  %v32 = vld [vmem:[%s1 + $0x4] sm:$0xf]
  %v33 = vld [vmem:[%s1 + $0x8] sm:$0xf]
  %v34 = vld [vmem:[%s1 + $0xc] sm:$0x3]
  %v35 = vld [vmem:[%s2] sm:$0x1]
  %v37 = vlaneseq
  %v38 = vshrl.u32 %v37, 7
  %v39 = vsub.s32 0, %v38
  %v40 = vrot.slane %v35, %v39
  %v58 = vunpack.c.l.b16 %v15
  %v59 = vunpack.c.l.b16 %v16
  %v60 = vunpack.c.l.b16 %v17
  %v61 = vunpack.c.l.b16 %v18
  %v62 = vunpack.c.l.b16 %v19
  %v63 = vunpack.c.l.b16 %v20
  %v64 = vunpack.c.l.b16 %v21
  %v65 = vunpack.c.l.b16 %v22
  %v66 = vunpack.c.l.b16 %v23
  %v67 = vunpack.c.l.b16 %v24
  %v68 = vunpack.c.l.b16 %v25
  %v69 = vunpack.c.l.b16 %v26
  %v70 = vunpack.c.l.b16 %v27
  %v71 = vunpack.c.l.b16 %v28
  %v72 = vunpack.c.l.b16 %v29
  %v73 = vunpack.c.l.b16 %v30
  %v74 = vpack.c.b16 %v59, %v58
  %v75 = vpack.c.b16 %v61, %v60
  %v76 = vpack.c.b16 %v63, %v62
  %v77 = vpack.c.b16 %v65, %v64
  %v78 = vpack.c.b16 %v67, %v66
  %v79 = vpack.c.b16 %v69, %v68
  %v80 = vpack.c.b16 %v71, %v70
  %v81 = vpack.c.b16 %v73, %v72
  %v86 = vunpack.c.l.b16 %v31
  %v87 = vunpack.c.l.b16 %v32
  %v88 = vunpack.c.l.b16 %v33
  %v89 = vunpack.c.l.b16 %v34
  %v90 = vpack.c.b16 %v87, %v86
  %v91 = vpack.c.b16 %v89, %v88
  %vm93 = vcmask 220160
  %v95 = vsel %vm93, %v74, 0
  %v98 = vsel %vm93, %v75, 0
  %v101 = vsel %vm93, %v76, 0
  %v104 = vsel %vm93, %v77, 0
  %v107 = vsel %vm93, %v78, 0
  %v110 = vsel %vm93, %v79, 0
  %v113 = vsel %vm93, %v80, 0
  %v116 = vsel %vm93, %v81, 0
  %vm118 = vcmask 1044480
  %vm119 = vcmask 1045504
  %v120 = vsel %vm118, 4294967295, 65535
  %v121 = vsel %vm119, %v120, 0
  %v123 = vand.u32 %v91, %v121
  %125 = vmatprep.subr.bf16.mxu0 0
  %126 = vmatpush1.bf16.msra.mxu0 0
  %127 = vmatprep.subr.bf16.mxu0 0
  %128 = vmatpush1.bf16.msra.mxu0 0
  %129 = vmatprep.subr.bf16.mxu0 0
  %130 = vmatpush1.bf16.msra.mxu0 0
  %131 = vmatprep.subr.bf16.mxu0 0
  %132 = vmatpush1.bf16.msra.mxu0 0
  %133 = vmatprep.subr.bf16.mxu0 0
  %134 = vmatpush1.bf16.msra.mxu0 0
  %135 = vmatprep.subr.bf16.mxu0 0
  %136 = vmatpush1.bf16.msra.mxu0 0
  %137 = vmatprep.subr.bf16.mxu0 0
  %138 = vmatpush1.bf16.msra.mxu0 %v123
  %139 = vmatprep.subr.bf16.mxu0 0
  %140 = vmatpush1.bf16.msra.mxu0 %v90
  %141 = vmatprep.subr.bf16.mxu0 0
  %142 = vmatpush2.bf16.msra.mxu0 0
  %143 = vmatprep.subr.bf16.mxu0 0
  %144 = vmatpush2.bf16.msra.mxu0 0
  %145 = vmatprep.subr.bf16.mxu0 0
  %146 = vmatpush2.bf16.msra.mxu0 0
  %147 = vmatprep.subr.bf16.mxu0 0
  %148 = vmatpush2.bf16.msra.mxu0 0
  %149 = vmatprep.subr.bf16.mxu0 0
  %150 = vmatpush2.bf16.msra.mxu0 0
  %151 = vmatprep.subr.bf16.mxu0 0
  %152 = vmatpush2.bf16.msra.mxu0 0
  %153 = vmatprep.subr.bf16.mxu0 0
  %154 = vmatpush2.bf16.msra.mxu0 0
  %155 = vmatprep.subr.bf16.mxu0 0
  %156 = vmatpush2.bf16.msra.mxu0 0
  %157 = vmatprep.mubr.bf16.mxu0 0
  %158 = vmatmul.mubr.bf16.gmra.mxu0 %v95
  %v159 = vpop.f32.mrf.mxu0
  %v160 = vadd.f32 %v40, %v159
  %v161 = vpop.f32.mrf.mxu0
  %v162 = vpop.f32.mrf.mxu0
  %v163 = vadd.f32 %v40, %v162
  %v164 = vpop.f32.mrf.mxu0
  %165 = vmatprep.mubr.bf16.mxu0 0
  %166 = vmatmul.mubr.bf16.gmra.mxu0 %v98
  %v167 = vpop.f32.mrf.mxu0
  %v168 = vadd.f32 %v40, %v167
  %v169 = vpop.f32.mrf.mxu0
  %v170 = vpop.f32.mrf.mxu0
  %v171 = vadd.f32 %v40, %v170
  %v172 = vpop.f32.mrf.mxu0
  %173 = vmatprep.mubr.bf16.mxu0 0
  %174 = vmatmul.mubr.bf16.gmra.mxu0 %v101
  %v175 = vpop.f32.mrf.mxu0
  %v176 = vadd.f32 %v40, %v175
  %v177 = vpop.f32.mrf.mxu0
  %v178 = vpop.f32.mrf.mxu0
  %v179 = vadd.f32 %v40, %v178
  %v180 = vpop.f32.mrf.mxu0
  %181 = vmatprep.mubr.bf16.mxu0 0
  %182 = vmatmul.mubr.bf16.gmra.mxu0 %v104
  %v183 = vpop.f32.mrf.mxu0
  %v184 = vadd.f32 %v40, %v183
  %v185 = vpop.f32.mrf.mxu0
  %v186 = vpop.f32.mrf.mxu0
  %v187 = vadd.f32 %v40, %v186
  %v188 = vpop.f32.mrf.mxu0
  %189 = vmatprep.mubr.bf16.mxu0 0
  %190 = vmatmul.mubr.bf16.gmra.mxu0 %v107
  %v191 = vpop.f32.mrf.mxu0
  %v192 = vadd.f32 %v40, %v191
  %v193 = vpop.f32.mrf.mxu0
  %v194 = vpop.f32.mrf.mxu0
  %v195 = vadd.f32 %v40, %v194
  %v196 = vpop.f32.mrf.mxu0
  %197 = vmatprep.mubr.bf16.mxu0 0
  %198 = vmatmul.mubr.bf16.gmra.mxu0 %v110
  %v199 = vpop.f32.mrf.mxu0
  %v200 = vadd.f32 %v40, %v199
  %v201 = vpop.f32.mrf.mxu0
  %v202 = vpop.f32.mrf.mxu0
  %v203 = vadd.f32 %v40, %v202
  %v204 = vpop.f32.mrf.mxu0
  %205 = vmatprep.mubr.bf16.mxu0 0
  %206 = vmatmul.mubr.bf16.gmra.mxu0 %v113
  %v207 = vpop.f32.mrf.mxu0
  %v208 = vadd.f32 %v40, %v207
  %v209 = vpop.f32.mrf.mxu0
  %v210 = vpop.f32.mrf.mxu0
  %v211 = vadd.f32 %v40, %v210
  %v212 = vpop.f32.mrf.mxu0
  %213 = vmatprep.mubr.bf16.mxu0 0
  %214 = vmatmul.mubr.bf16.gmra.mxu0 %v116
  %v215 = vpop.f32.mrf.mxu0
  %v216 = vadd.f32 %v40, %v215
  %v217 = vpop.f32.mrf.mxu0
  %v218 = vpop.f32.mrf.mxu0
  %v219 = vadd.f32 %v40, %v218
  %v220 = vpop.f32.mrf.mxu0
  %221 = vdwg.mxu0
  %v222 = vmax.f32 %v160, 0.0
  %v223 = vmax.f32 %v163, 0.0
  %v224 = vmax.f32 %v168, 0.0
  %v225 = vmax.f32 %v171, 0.0
  %v226 = vmax.f32 %v176, 0.0
  %v227 = vmax.f32 %v179, 0.0
  %v228 = vmax.f32 %v184, 0.0
  %v229 = vmax.f32 %v187, 0.0
  %v230 = vmax.f32 %v192, 0.0
  %v231 = vmax.f32 %v195, 0.0
  %v232 = vmax.f32 %v200, 0.0
  %v233 = vmax.f32 %v203, 0.0
  %v234 = vmax.f32 %v208, 0.0
  %v235 = vmax.f32 %v211, 0.0
  %v236 = vmax.f32 %v216, 0.0
  %v237 = vmax.f32 %v219, 0.0
  %238 = vst [vmem:[%s3] sm:$0xff] %v222
  %239 = vst [vmem:[%s3 + $0x8] sm:$0xff] %v223
  %240 = vst [vmem:[%s3 + $0x10] sm:$0xff] %v224
  %241 = vst [vmem:[%s3 + $0x18] sm:$0xff] %v225
  %242 = vst [vmem:[%s3 + $0x20] sm:$0xff] %v226
  %243 = vst [vmem:[%s3 + $0x28] sm:$0xff] %v227
  %244 = vst [vmem:[%s3 + $0x30] sm:$0xff] %v228
  %245 = vst [vmem:[%s3 + $0x38] sm:$0xff] %v229
  %246 = vst [vmem:[%s3 + $0x40] sm:$0xff] %v230
  %247 = vst [vmem:[%s3 + $0x48] sm:$0xff] %v231
  %248 = vst [vmem:[%s3 + $0x50] sm:$0xff] %v232
  %249 = vst [vmem:[%s3 + $0x58] sm:$0xff] %v233
  %250 = vst [vmem:[%s3 + $0x60] sm:$0xff] %v234
  %251 = vst [vmem:[%s3 + $0x68] sm:$0xff] %v235
  %252 = vst [vmem:[%s3 + $0x70] sm:$0xff] %v236
  %253 = vst [vmem:[%s3 + $0x78] sm:$0xff] %v237
  // Predicated region
  $region14: #{model_forward.4} parent=0 // pred_check
    _
  $region15: #{model_forward.4} parent=0 // pred_check_branch
    %255 = sbr.rel (0) target = $region17
  $region16: #{model_forward.4} parent=0 // pred_region
    _
  $region17: #{model_forward.4} parent=0 // pred_fallthru
    _
  // Predicated region
  $region18: #{model_forward.4} parent=0 // pred_check
    _
  $region19: #{model_forward.4} parent=0 // pred_check_branch
    %257 = sbr.rel (0) target = $region21
  $region20: #{model_forward.4} parent=0 // pred_region
    _
  $region21: #{model_forward.4} parent=0 // pred_fallthru
    _

// kernel: model_forward.5
$region0: #{model_forward.5}
  #allocation0 [shape = 'u32[]', space=smem, size = 0x4, offset = 0x4, fixed_abs, tag = 'smem constant byte address 0x4 - core index']
  #allocation1 [shape = 'u32[144,128]{1,0:T(1,128)}', space=vmem, size = 0x12000, scoped, tag = 'internal scratch']
  %s0 = inlined_call_operand.vmem [shape: bf16[32,576], index: 0, kind: input, shape index: {}]
  %s1 = inlined_call_operand.vmem [shape: bf16[576,128], index: 1, kind: input, shape index: {}]
  %s2 = inlined_call_operand.vmem [shape: f32[1,128], index: 2, kind: input, shape index: {}]
  %s3 = inlined_call_operand.vmem [shape: f32[32,128], index: 3, kind: output, shape index: {}]
  %s4 = sld [smem:[#allocation0]]
  $region22: #{model_forward.5} parent=0
    _
  %s6 = ssub.s32 1, %s4
  %s7 = scalar_select 0, %s6, %s4
  // Predicated region
  $region2: #{model_forward.5} parent=0 // pred_check
    _
  $region3: #{model_forward.5} parent=0 // pred_check_branch
    %9 = sbr.rel (0) target = $region5
  $region4: #{model_forward.5} parent=0 // pred_region
    _
  $region5: #{model_forward.5} parent=0 // pred_fallthru
    _
  // Predicated region
  $region6: #{model_forward.5} parent=0 // pred_check
    _
  $region7: #{model_forward.5} parent=0 // pred_check_branch
    %11 = sbr.rel (0) target = $region9
  $region8: #{model_forward.5} parent=0 // pred_region
    _
  $region9: #{model_forward.5} parent=0 // pred_fallthru
    _
  // Predicated region
  $region10: #{model_forward.5} parent=0 // pred_check
    _
  $region11: #{model_forward.5} parent=0 // pred_check_branch
    %13 = sbr.rel (0) target = $region13
  $region12: #{model_forward.5} parent=0 // pred_region
    _
  $region13: #{model_forward.5} parent=0 // pred_fallthru
    _
  %v15 = vld [vmem:[%s0] sm:$0xff]
  %v16 = vld [vmem:[%s0 + $0x8] sm:$0xff]
  %v17 = vld [vmem:[%s0 + $0x10] sm:$0xf]
  %v18 = vld [vmem:[%s0 + $0x14] sm:$0xff]
  %v19 = vld [vmem:[%s0 + $0x1c] sm:$0xff]
  %v20 = vld [vmem:[%s0 + $0x24] sm:$0xf]
  %v21 = vld [vmem:[%s0 + $0x28] sm:$0xff]
  %v22 = vld [vmem:[%s0 + $0x30] sm:$0xff]
  %v23 = vld [vmem:[%s0 + $0x38] sm:$0xf]
  %v24 = vld [vmem:[%s0 + $0x3c] sm:$0xff]
  %v25 = vld [vmem:[%s0 + $0x44] sm:$0xff]
  %v26 = vld [vmem:[%s0 + $0x4c] sm:$0xf]
  %v27 = vld [vmem:[%s1] sm:$0xf]
  %v28 = vld [vmem:[%s1 + $0x4] sm:$0xf]
  %v29 = vld [vmem:[%s1 + $0x8] sm:$0xf]
  %v30 = vld [vmem:[%s1 + $0xc] sm:$0xf]
  %v31 = vld [vmem:[%s1 + $0x10] sm:$0xf]
  %v32 = vld [vmem:[%s1 + $0x14] sm:$0xf]
  %v33 = vld [vmem:[%s1 + $0x18] sm:$0xf]
  %v34 = vld [vmem:[%s1 + $0x1c] sm:$0xf]
  %v35 = vld [vmem:[%s1 + $0x20] sm:$0xf]
  %v36 = vld [vmem:[%s1 + $0x24] sm:$0xf]
  %v37 = vld [vmem:[%s1 + $0x28] sm:$0xf]
  %v38 = vld [vmem:[%s1 + $0x2c] sm:$0xf]
  %v39 = vld [vmem:[%s1 + $0x30] sm:$0xf]
  %v40 = vld [vmem:[%s1 + $0x34] sm:$0xf]
  %v41 = vld [vmem:[%s1 + $0x38] sm:$0xf]
  %v42 = vld [vmem:[%s1 + $0x3c] sm:$0xf]
  %v43 = vld [vmem:[%s1 + $0x40] sm:$0xf]
  %v44 = vld [vmem:[%s1 + $0x44] sm:$0xf]
  %v45 = vld [vmem:[%s1 + $0x48] sm:$0xf]
  %v46 = vld [vmem:[%s1 + $0x4c] sm:$0xf]
  %v47 = vld [vmem:[%s1 + $0x50] sm:$0xf]
  %v48 = vld [vmem:[%s1 + $0x54] sm:$0xf]
  %v49 = vld [vmem:[%s1 + $0x58] sm:$0xf]
  %v50 = vld [vmem:[%s1 + $0x5c] sm:$0xf]
  %v51 = vld [vmem:[%s1 + $0x60] sm:$0xf]
  %v52 = vld [vmem:[%s1 + $0x64] sm:$0xf]
  %v53 = vld [vmem:[%s1 + $0x68] sm:$0xf]
  %v54 = vld [vmem:[%s1 + $0x6c] sm:$0xf]
  %v55 = vld [vmem:[%s1 + $0x70] sm:$0xf]
  %v56 = vld [vmem:[%s1 + $0x74] sm:$0xf]
  %v57 = vld [vmem:[%s1 + $0x78] sm:$0xf]
  %v58 = vld [vmem:[%s1 + $0x7c] sm:$0xf]
  %v59 = vld [vmem:[%s1 + $0x80] sm:$0xf]
  %v60 = vld [vmem:[%s1 + $0x84] sm:$0xf]
  %v61 = vld [vmem:[%s1 + $0x88] sm:$0xf]
  %v62 = vld [vmem:[%s1 + $0x8c] sm:$0xf]
  %v63 = vld [vmem:[%s1 + $0x90] sm:$0xf]
  %v64 = vld [vmem:[%s1 + $0x94] sm:$0xf]
  %v65 = vld [vmem:[%s1 + $0x98] sm:$0xf]
  %v66 = vld [vmem:[%s1 + $0x9c] sm:$0xf]
  %v67 = vld [vmem:[%s1 + $0xa0] sm:$0xf]
  %v68 = vld [vmem:[%s1 + $0xa4] sm:$0xf]
  %v69 = vld [vmem:[%s1 + $0xa8] sm:$0xf]
  %v70 = vld [vmem:[%s1 + $0xac] sm:$0xf]
  %v71 = vld [vmem:[%s1 + $0xb0] sm:$0xf]
  %v72 = vld [vmem:[%s1 + $0xb4] sm:$0xf]
  %v73 = vld [vmem:[%s1 + $0xb8] sm:$0xf]
  %v74 = vld [vmem:[%s1 + $0xbc] sm:$0xf]
  %v75 = vld [vmem:[%s1 + $0xc0] sm:$0xf]
  %v76 = vld [vmem:[%s1 + $0xc4] sm:$0xf]
  %v77 = vld [vmem:[%s1 + $0xc8] sm:$0xf]
  %v78 = vld [vmem:[%s1 + $0xcc] sm:$0xf]
  %v79 = vld [vmem:[%s1 + $0xd0] sm:$0xf]
  %v80 = vld [vmem:[%s1 + $0xd4] sm:$0xf]
  %v81 = vld [vmem:[%s1 + $0xd8] sm:$0xf]
  %v82 = vld [vmem:[%s1 + $0xdc] sm:$0xf]
  %v83 = vld [vmem:[%s1 + $0xe0] sm:$0xf]
  %v84 = vld [vmem:[%s1 + $0xe4] sm:$0xf]
  %v85 = vld [vmem:[%s1 + $0xe8] sm:$0xf]
  %v86 = vld [vmem:[%s1 + $0xec] sm:$0xf]
  %v87 = vld [vmem:[%s1 + $0xf0] sm:$0xf]
  %v88 = vld [vmem:[%s1 + $0xf4] sm:$0xf]
  %v89 = vld [vmem:[%s1 + $0xf8] sm:$0xf]
  %v90 = vld [vmem:[%s1 + $0xfc] sm:$0xf]
  %v91 = vld [vmem:[%s1 + $0x100] sm:$0xf]
  %v92 = vld [vmem:[%s1 + $0x104] sm:$0xf]
  %v93 = vld [vmem:[%s1 + $0x108] sm:$0xf]
  %v94 = vld [vmem:[%s1 + $0x10c] sm:$0xf]
  %v95 = vld [vmem:[%s1 + $0x110] sm:$0xf]
  %v96 = vld [vmem:[%s1 + $0x114] sm:$0xf]
  %v97 = vld [vmem:[%s1 + $0x118] sm:$0xf]
  %v98 = vld [vmem:[%s1 + $0x11c] sm:$0xf]
  %v99 = vld [vmem:[%s2] sm:$0x1]
  %v101 = vlaneseq
  %v102 = vshrl.u32 %v101, 7
  %v103 = vsub.s32 0, %v102
  %v104 = vrot.slane %v99, %v103
  %v118 = vunpack.c.l.b16 %v15
  %v119 = vunpack.c.h.b16 %v15
  %v120 = vunpack.c.l.b16 %v16
  %v121 = vunpack.c.h.b16 %v16
  %v122 = vunpack.c.l.b16 %v17
  %v123 = vunpack.c.l.b16 %v18
  %v124 = vunpack.c.h.b16 %v18
  %v125 = vunpack.c.l.b16 %v19
  %v126 = vunpack.c.h.b16 %v19
  %v127 = vunpack.c.l.b16 %v20
  %v128 = vunpack.c.l.b16 %v21
  %v129 = vunpack.c.h.b16 %v21
  %v130 = vunpack.c.l.b16 %v22
  %v131 = vunpack.c.h.b16 %v22
  %v132 = vunpack.c.l.b16 %v23
  %v133 = vunpack.c.l.b16 %v24
  %v134 = vunpack.c.h.b16 %v24
  %v135 = vunpack.c.l.b16 %v25
  %v136 = vunpack.c.h.b16 %v25
  %v137 = vunpack.c.l.b16 %v26
  %v138 = vpack.c.b16 %v123, %v118
  %v139 = vpack.c.b16 %v124, %v119
  %v140 = vpack.c.b16 %v125, %v120
  %v141 = vpack.c.b16 %v126, %v121
  %v142 = vpack.c.b16 %v127, %v122
  %v143 = vpack.c.b16 %v133, %v128
  %v144 = vpack.c.b16 %v134, %v129
  %v145 = vpack.c.b16 %v135, %v130
  %v146 = vpack.c.b16 %v136, %v131
  %v147 = vpack.c.b16 %v137, %v132
  %v228 = vunpack.c.l.b16 %v27
  %v229 = vunpack.c.l.b16 %v28
  %v230 = vunpack.c.l.b16 %v29
  %v231 = vunpack.c.l.b16 %v30
  %v232 = vunpack.c.l.b16 %v31
  %v233 = vunpack.c.l.b16 %v32
  %v234 = vunpack.c.l.b16 %v33
  %v235 = vunpack.c.l.b16 %v34
  %v236 = vunpack.c.l.b16 %v35
  %v237 = vunpack.c.l.b16 %v36
  %v238 = vunpack.c.l.b16 %v37
  %v239 = vunpack.c.l.b16 %v38
  %v240 = vunpack.c.l.b16 %v39
  %v241 = vunpack.c.l.b16 %v40
  %v242 = vunpack.c.l.b16 %v41
  %v243 = vunpack.c.l.b16 %v42
  %v244 = vunpack.c.l.b16 %v43
  %v245 = vunpack.c.l.b16 %v44
  %v246 = vunpack.c.l.b16 %v45
  %v247 = vunpack.c.l.b16 %v46
  %v248 = vunpack.c.l.b16 %v47
  %v249 = vunpack.c.l.b16 %v48
  %v250 = vunpack.c.l.b16 %v49
  %v251 = vunpack.c.l.b16 %v50
  %v252 = vunpack.c.l.b16 %v51
  %v253 = vunpack.c.l.b16 %v52
  %v254 = vunpack.c.l.b16 %v53
  %v255 = vunpack.c.l.b16 %v54
  %v256 = vunpack.c.l.b16 %v55
  %v257 = vunpack.c.l.b16 %v56
  %v258 = vunpack.c.l.b16 %v57
  %v259 = vunpack.c.l.b16 %v58
  %v260 = vunpack.c.l.b16 %v59
  %v261 = vunpack.c.l.b16 %v60
  %v262 = vunpack.c.l.b16 %v61
  %v263 = vunpack.c.l.b16 %v62
  %v264 = vunpack.c.l.b16 %v63
  %v265 = vunpack.c.l.b16 %v64
  %v266 = vunpack.c.l.b16 %v65
  %v267 = vunpack.c.l.b16 %v66
  %v268 = vunpack.c.l.b16 %v67
  %v269 = vunpack.c.l.b16 %v68
  %v270 = vunpack.c.l.b16 %v69
  %v271 = vunpack.c.l.b16 %v70
  %v272 = vunpack.c.l.b16 %v71
  %v273 = vunpack.c.l.b16 %v72
  %v274 = vunpack.c.l.b16 %v73
  %v275 = vunpack.c.l.b16 %v74
  %v276 = vunpack.c.l.b16 %v75
  %v277 = vunpack.c.l.b16 %v76
  %v278 = vunpack.c.l.b16 %v77
  %v279 = vunpack.c.l.b16 %v78
  %v280 = vunpack.c.l.b16 %v79
  %v281 = vunpack.c.l.b16 %v80
  %v282 = vunpack.c.l.b16 %v81
  %v283 = vunpack.c.l.b16 %v82
  %v284 = vunpack.c.l.b16 %v83
  %v285 = vunpack.c.l.b16 %v84
  %v286 = vunpack.c.l.b16 %v85
  %v287 = vunpack.c.l.b16 %v86
  %v288 = vunpack.c.l.b16 %v87
  %v289 = vunpack.c.l.b16 %v88
  %v290 = vunpack.c.l.b16 %v89
  %v291 = vunpack.c.l.b16 %v90
  %v292 = vunpack.c.l.b16 %v91
  %v293 = vunpack.c.l.b16 %v92
  %v294 = vunpack.c.l.b16 %v93
  %v295 = vunpack.c.l.b16 %v94
  %v296 = vunpack.c.l.b16 %v95
  %v297 = vunpack.c.l.b16 %v96
  %v298 = vunpack.c.l.b16 %v97
  %v299 = vunpack.c.l.b16 %v98
  %v300 = vpack.c.b16 %v229, %v228
  %v301 = vpack.c.b16 %v231, %v230
  %v302 = vpack.c.b16 %v233, %v232
  %v303 = vpack.c.b16 %v235, %v234
  %v304 = vpack.c.b16 %v237, %v236
  %v305 = vpack.c.b16 %v239, %v238
  %v306 = vpack.c.b16 %v241, %v240
  %v307 = vpack.c.b16 %v243, %v242
  %v308 = vpack.c.b16 %v245, %v244
  %v309 = vpack.c.b16 %v247, %v246
  %v310 = vpack.c.b16 %v249, %v248
  %v311 = vpack.c.b16 %v251, %v250
  %v312 = vpack.c.b16 %v253, %v252
  %v313 = vpack.c.b16 %v255, %v254
  %v314 = vpack.c.b16 %v257, %v256
  %v315 = vpack.c.b16 %v259, %v258
  %v316 = vpack.c.b16 %v261, %v260
  %v317 = vpack.c.b16 %v263, %v262
  %v318 = vpack.c.b16 %v265, %v264
  %v319 = vpack.c.b16 %v267, %v266
  %v320 = vpack.c.b16 %v269, %v268
  %v321 = vpack.c.b16 %v271, %v270
  %v322 = vpack.c.b16 %v273, %v272
  %v323 = vpack.c.b16 %v275, %v274
  %v324 = vpack.c.b16 %v277, %v276
  %v325 = vpack.c.b16 %v279, %v278
  %v326 = vpack.c.b16 %v281, %v280
  %v327 = vpack.c.b16 %v283, %v282
  %v328 = vpack.c.b16 %v285, %v284
  %v329 = vpack.c.b16 %v287, %v286
  %v330 = vpack.c.b16 %v289, %v288
  %v331 = vpack.c.b16 %v291, %v290
  %v332 = vpack.c.b16 %v293, %v292
  %v333 = vpack.c.b16 %v295, %v294
  %v334 = vpack.c.b16 %v297, %v296
  %v335 = vpack.c.b16 %v299, %v298
  %vm372 = vcmask 523264
  %v374 = vsel %vm372, %v142, 0
  %v377 = vsel %vm372, %v147, 0
  %379 = vmatprep.subr.bf16.mxu0 0
  %380 = vmatpush1.bf16.msra.mxu0 %v307
  %381 = vmatprep.subr.bf16.mxu0 0
  %382 = vmatpush1.bf16.msra.mxu0 %v306
  %383 = vmatprep.subr.bf16.mxu0 0
  %384 = vmatpush1.bf16.msra.mxu0 %v305
  %385 = vmatprep.subr.bf16.mxu0 0
  %386 = vmatpush1.bf16.msra.mxu0 %v304
  %387 = vmatprep.subr.bf16.mxu0 0
  %388 = vmatpush1.bf16.msra.mxu0 %v303
  %389 = vmatprep.subr.bf16.mxu0 0
  %390 = vmatpush1.bf16.msra.mxu0 %v302
  %391 = vmatprep.subr.bf16.mxu0 0
  %392 = vmatpush1.bf16.msra.mxu0 %v301
  %393 = vmatprep.subr.bf16.mxu0 0
  %394 = vmatpush1.bf16.msra.mxu0 %v300
  %395 = vmatprep.subr.bf16.mxu0 0
  %396 = vmatpush2.bf16.msra.mxu0 %v315
  %397 = vmatprep.subr.bf16.mxu0 0
  %398 = vmatpush2.bf16.msra.mxu0 %v314
  %399 = vmatprep.subr.bf16.mxu0 0
  %400 = vmatpush2.bf16.msra.mxu0 %v313
  %401 = vmatprep.subr.bf16.mxu0 0
  %402 = vmatpush2.bf16.msra.mxu0 %v312
  %403 = vmatprep.subr.bf16.mxu0 0
  %404 = vmatpush2.bf16.msra.mxu0 %v311
  %405 = vmatprep.subr.bf16.mxu0 0
  %406 = vmatpush2.bf16.msra.mxu0 %v310
  %407 = vmatprep.subr.bf16.mxu0 0
  %408 = vmatpush2.bf16.msra.mxu0 %v309
  %409 = vmatprep.subr.bf16.mxu0 0
  %410 = vmatpush2.bf16.msra.mxu0 %v308
  %411 = vmatprep.mubr.bf16.mxu0 %v139
  %412 = vmatmul.mubr.bf16.gmra.mxu0 %v138
  %v413 = vpop.f32.mrf.mxu0
  %v414 = vadd.f32 %v104, %v413
  %v415 = vpop.f32.mrf.mxu0
  %v416 = vpop.f32.mrf.mxu0
  %v417 = vadd.f32 %v104, %v416
  %v418 = vpop.f32.mrf.mxu0
  %419 = vmatprep.mubr.bf16.mxu0 %v144
  %420 = vmatmul.mubr.bf16.gmra.mxu0 %v143
  %v421 = vpop.f32.mrf.mxu0
  %v422 = vadd.f32 %v104, %v421
  %v423 = vpop.f32.mrf.mxu0
  %v424 = vpop.f32.mrf.mxu0
  %v425 = vadd.f32 %v104, %v424
  %v426 = vpop.f32.mrf.mxu0
  %427 = vdwg.mxu0
  %428 = vmatprep.subr.bf16.mxu0 0
  %429 = vmatpush1.bf16.msra.mxu0 %v323
  %430 = vmatprep.subr.bf16.mxu0 0
  %431 = vmatpush1.bf16.msra.mxu0 %v322
  %432 = vmatprep.subr.bf16.mxu0 0
  %433 = vmatpush1.bf16.msra.mxu0 %v321
  %434 = vmatprep.subr.bf16.mxu0 0
  %435 = vmatpush1.bf16.msra.mxu0 %v320
  %436 = vmatprep.subr.bf16.mxu0 0
  %437 = vmatpush1.bf16.msra.mxu0 %v319
  %438 = vmatprep.subr.bf16.mxu0 0
  %439 = vmatpush1.bf16.msra.mxu0 %v318
  %440 = vmatprep.subr.bf16.mxu0 0
  %441 = vmatpush1.bf16.msra.mxu0 %v317
  %442 = vmatprep.subr.bf16.mxu0 0
  %443 = vmatpush1.bf16.msra.mxu0 %v316
  %444 = vmatprep.subr.bf16.mxu0 0
  %445 = vmatpush2.bf16.msra.mxu0 %v331
  %446 = vmatprep.subr.bf16.mxu0 0
  %447 = vmatpush2.bf16.msra.mxu0 %v330
  %448 = vmatprep.subr.bf16.mxu0 0
  %449 = vmatpush2.bf16.msra.mxu0 %v329
  %450 = vmatprep.subr.bf16.mxu0 0
  %451 = vmatpush2.bf16.msra.mxu0 %v328
  %452 = vmatprep.subr.bf16.mxu0 0
  %453 = vmatpush2.bf16.msra.mxu0 %v327
  %454 = vmatprep.subr.bf16.mxu0 0
  %455 = vmatpush2.bf16.msra.mxu0 %v326
  %456 = vmatprep.subr.bf16.mxu0 0
  %457 = vmatpush2.bf16.msra.mxu0 %v325
  %458 = vmatprep.subr.bf16.mxu0 0
  %459 = vmatpush2.bf16.msra.mxu0 %v324
  %460 = vmatprep.mubr.bf16.mxu0 %v141
  %461 = vmatmul.mubr.bf16.gmra.mxu0 %v140
  %v462 = vpop.f32.mrf.mxu0
  %v463 = vadd.f32 %v414, %v462
  %v464 = vpop.f32.mrf.mxu0
  %v465 = vpop.f32.mrf.mxu0
  %v466 = vadd.f32 %v417, %v465
  %v467 = vpop.f32.mrf.mxu0
  %468 = vmatprep.mubr.bf16.mxu0 %v146
  %469 = vmatmul.mubr.bf16.gmra.mxu0 %v145
  %v470 = vpop.f32.mrf.mxu0
  %v471 = vadd.f32 %v422, %v470
  %v472 = vpop.f32.mrf.mxu0
  %v473 = vpop.f32.mrf.mxu0
  %v474 = vadd.f32 %v425, %v473
  %v475 = vpop.f32.mrf.mxu0
  %476 = vdwg.mxu0
  %477 = vmatprep.subr.bf16.mxu0 0
  %478 = vmatpush1.bf16.msra.mxu0 0
  %479 = vmatprep.subr.bf16.mxu0 0
  %480 = vmatpush1.bf16.msra.mxu0 0
  %481 = vmatprep.subr.bf16.mxu0 0
  %482 = vmatpush1.bf16.msra.mxu0 0
  %483 = vmatprep.subr.bf16.mxu0 0
  %484 = vmatpush1.bf16.msra.mxu0 0
  %485 = vmatprep.subr.bf16.mxu0 0
  %486 = vmatpush1.bf16.msra.mxu0 %v335
  %487 = vmatprep.subr.bf16.mxu0 0
  %488 = vmatpush1.bf16.msra.mxu0 %v334
  %489 = vmatprep.subr.bf16.mxu0 0
  %490 = vmatpush1.bf16.msra.mxu0 %v333
  %491 = vmatprep.subr.bf16.mxu0 0
  %492 = vmatpush1.bf16.msra.mxu0 %v332
  %493 = vmatprep.subr.bf16.mxu0 0
  %494 = vmatpush2.bf16.msra.mxu0 0
  %495 = vmatprep.subr.bf16.mxu0 0
  %496 = vmatpush2.bf16.msra.mxu0 0
  %497 = vmatprep.subr.bf16.mxu0 0
  %498 = vmatpush2.bf16.msra.mxu0 0
  %499 = vmatprep.subr.bf16.mxu0 0
  %500 = vmatpush2.bf16.msra.mxu0 0
  %501 = vmatprep.subr.bf16.mxu0 0
  %502 = vmatpush2.bf16.msra.mxu0 0
  %503 = vmatprep.subr.bf16.mxu0 0
  %504 = vmatpush2.bf16.msra.mxu0 0
  %505 = vmatprep.subr.bf16.mxu0 0
  %506 = vmatpush2.bf16.msra.mxu0 0
  %507 = vmatprep.subr.bf16.mxu0 0
  %508 = vmatpush2.bf16.msra.mxu0 0
  %509 = vmatprep.mubr.bf16.mxu0 0
  %510 = vmatmul.mubr.bf16.gmra.mxu0 %v374
  %v511 = vpop.f32.mrf.mxu0
  %v512 = vadd.f32 %v463, %v511
  %v513 = vpop.f32.mrf.mxu0
  %v514 = vpop.f32.mrf.mxu0
  %v515 = vadd.f32 %v466, %v514
  %v516 = vpop.f32.mrf.mxu0
  %517 = vmatprep.mubr.bf16.mxu0 0
  %518 = vmatmul.mubr.bf16.gmra.mxu0 %v377
  %v519 = vpop.f32.mrf.mxu0
  %v520 = vadd.f32 %v471, %v519
  %v521 = vpop.f32.mrf.mxu0
  %v522 = vpop.f32.mrf.mxu0
  %v523 = vadd.f32 %v474, %v522
  %v524 = vpop.f32.mrf.mxu0
  %525 = vdwg.mxu0
  %v526 = vmax.f32 %v512, 0.0
  %v527 = vmax.f32 %v515, 0.0
  %v528 = vmax.f32 %v520, 0.0
  %v529 = vmax.f32 %v523, 0.0
  %530 = vst [vmem:[%s3] sm:$0xff] %v526
  %531 = vst [vmem:[%s3 + $0x8] sm:$0xff] %v527
  %532 = vst [vmem:[%s3 + $0x10] sm:$0xff] %v528
  %533 = vst [vmem:[%s3 + $0x18] sm:$0xff] %v529
  // Predicated region
  $region14: #{model_forward.5} parent=0 // pred_check
    _
  $region15: #{model_forward.5} parent=0 // pred_check_branch
    %535 = sbr.rel (0) target = $region17
  $region16: #{model_forward.5} parent=0 // pred_region
    _
  $region17: #{model_forward.5} parent=0 // pred_fallthru
    _
  // Predicated region
  $region18: #{model_forward.5} parent=0 // pred_check
    _
  $region19: #{model_forward.5} parent=0 // pred_check_branch
    %537 = sbr.rel (0) target = $region21
  $region20: #{model_forward.5} parent=0 // pred_region
    _
  $region21: #{model_forward.5} parent=0 // pred_fallthru
    _

// kernel: model_forward.6
$region0: #{model_forward.6}
  #allocation0 [shape = 'u32[]', space=smem, size = 0x4, offset = 0x4, fixed_abs, tag = 'smem constant byte address 0x4 - core index']
  #allocation1 [shape = 'u32[144,128]{1,0:T(1,128)}', space=vmem, size = 0x12000, scoped, tag = 'internal scratch']
  %s0 = inlined_call_operand.vmem [shape: bf16[2,4,1152], index: 0, kind: input, shape index: {}]
  %s1 = inlined_call_operand.vmem [shape: bf16[1152,128], index: 1, kind: input, shape index: {}]
  %s2 = inlined_call_operand.vmem [shape: f32[1,128], index: 2, kind: input, shape index: {}]
  %s3 = inlined_call_operand.vmem [shape: f32[2,1,128], index: 3, kind: output, shape index: {}]
  %s4 = sld [smem:[#allocation0]]
  $region45: #{model_forward.6} parent=0
    _
  %s6 = ssub.s32 1, %s4
  %s7 = scalar_select 0, %s6, %s4
  loop: start=0, step=1, limit=4
  $region2: #{model_forward.6} parent=0 // loop_pre_header
    _
  $region3: #{model_forward.6} parent=0 // loop_header
    %s9 = sphi 0, %s13
    %p10 = scmp.ge.s32.totalorder %s9, 4
    %s19 = sphi 0, %s21
    %s22 = sphi 0, %s19
    %s23 = sphi 0, %s22
    %s39 = sphi 0, %s23
    %s43 = sphi 0, %s43
    %s45 = sphi 0, %s43
    %s46 = sphi 0, %s45
    %s60 = sphi 0, %s46
    %s64 = sphi 0, %s64
    %s66 = sphi 0, %s64
    %s67 = sphi 0, %s66
    %s81 = sphi 0, %s67
    %s87 = sphi 0, %s89
    %s90 = sphi 0, %s87
    %s91 = sphi 0, %s90
    %s107 = sphi 0, %s91
  $region4: #{model_forward.6} parent=0 // loop_header_branch
    %12 = sbr.rel (%p10) target = $region8
  $region5: #{model_forward.6} parent=0 // loop_body
    %s14 = ssub.s32 %s9, 1
    %s15 = ssub.s32 %s9, 2
    %s16 = sadd.s32 %s9, 1
    %s17 = ssub.s32 %s9, %s16
    %p18 = scmp.eq.s32.totalorder %s17, 0
    %s20 = sadd.s32 %s19, 1
    %s21 = scalar_select %p18, %s19, %s20
    %p24 = pneg %p18
    %p25 = scmp.eq.s32.totalorder %s9, 1
    %p26 = por %p24, %p25
    %p27 = scmp.ne.s32.totalorder %s19, %s22
    %p28 = scmp.eq.s32.totalorder %s9, 0
    %p29 = por %p27, %p28
    %p30 = scmp.ne.s32.totalorder %s19, %s22
    %p31 = scmp.eq.s32.totalorder %s14, 1
    %p32 = por %p30, %p31
    %p33 = scmp.ne.s32.totalorder %s22, %s23
    %p34 = scmp.eq.s32.totalorder %s14, 0
    %p35 = por %p33, %p34
    %p36 = scmp.ne.s32.totalorder %s22, %s23
    %p37 = scmp.eq.s32.totalorder %s15, 1
    %p38 = por %p36, %p37
    %p40 = scmp.ne.s32.totalorder %s23, %s39
    %p41 = scmp.eq.s32.totalorder %s15, 0
    %p42 = por %p40, %p41
    %s44 = sadd.s32 %s43, 1
    %p47 = scmp.eq.s32.totalorder %s9, 1
    %p48 = scmp.ne.s32.totalorder %s43, %s45
    %p49 = scmp.eq.s32.totalorder %s9, 0
    %p50 = por %p48, %p49
    %p51 = scmp.ne.s32.totalorder %s43, %s45
    %p52 = scmp.eq.s32.totalorder %s14, 1
    %p53 = por %p51, %p52
    %p54 = scmp.ne.s32.totalorder %s45, %s46
    %p55 = scmp.eq.s32.totalorder %s14, 0
    %p56 = por %p54, %p55
    %p57 = scmp.ne.s32.totalorder %s45, %s46
    %p58 = scmp.eq.s32.totalorder %s15, 1
    %p59 = por %p57, %p58
    %p61 = scmp.ne.s32.totalorder %s46, %s60
    %p62 = scmp.eq.s32.totalorder %s15, 0
    %p63 = por %p61, %p62
    %s65 = sadd.s32 %s64, 1
    %p68 = scmp.eq.s32.totalorder %s9, 1
    %p69 = scmp.ne.s32.totalorder %s64, %s66
    %p70 = scmp.eq.s32.totalorder %s9, 0
    %p71 = por %p69, %p70
    %p72 = scmp.ne.s32.totalorder %s64, %s66
    %p73 = scmp.eq.s32.totalorder %s14, 1
    %p74 = por %p72, %p73
    %p75 = scmp.ne.s32.totalorder %s66, %s67
    %p76 = scmp.eq.s32.totalorder %s14, 0
    %p77 = por %p75, %p76
    %p78 = scmp.ne.s32.totalorder %s66, %s67
    %p79 = scmp.eq.s32.totalorder %s15, 1
    %p80 = por %p78, %p79
    %p82 = scmp.ne.s32.totalorder %s67, %s81
    %p83 = scmp.eq.s32.totalorder %s15, 0
    %p84 = por %p82, %p83
    %s85 = ssub.s32 %s9, %s16
    %p86 = scmp.eq.s32.totalorder %s85, 0
    %s88 = sadd.s32 %s87, 1
    %s89 = scalar_select %p86, %s87, %s88
    %p92 = pneg %p86
    %p93 = scmp.eq.s32.totalorder %s9, 1
    %p94 = por %p92, %p93
    %p95 = scmp.ne.s32.totalorder %s87, %s90
    %p96 = scmp.eq.s32.totalorder %s9, 0
    %p97 = por %p95, %p96
    %p98 = scmp.ne.s32.totalorder %s87, %s90
    %p99 = scmp.eq.s32.totalorder %s14, 1
    %p100 = por %p98, %p99
    %p101 = scmp.ne.s32.totalorder %s90, %s91
    %p102 = scmp.eq.s32.totalorder %s14, 0
    %p103 = por %p101, %p102
    %p104 = scmp.ne.s32.totalorder %s90, %s91
    %p105 = scmp.eq.s32.totalorder %s15, 1
    %p106 = por %p104, %p105
    %p108 = scmp.ne.s32.totalorder %s91, %s107
    %p109 = scmp.eq.s32.totalorder %s15, 0
    %p110 = por %p108, %p109
    %p111 = scmp.le.s32.totalorder 1, %s9
    %p112 = scmp.lt.s32.totalorder %s9, 3
    %p113 = pnand %p111, %p112
    %p114 = pneg %p113
    // Predicated region
    $region9: #{model_forward.6} parent=5 // pred_check
      _
    $region10: #{model_forward.6} parent=5 // pred_check_branch
      %116 = sbr.rel (%p113) target = $region12
    $region11: #{model_forward.6} parent=5 // pred_region
      %s117 = ssub.s32 %s9, 1
      // Predicated region
      $region13: #{model_forward.6} parent=11 // pred_check
        %p118 = pneg %p56
      $region14: #{model_forward.6} parent=11 // pred_check_branch
        %120 = sbr.rel (%p118) target = $region16
      $region15: #{model_forward.6} parent=11 // pred_region
        _
      $region16: #{model_forward.6} parent=11 // pred_fallthru
        _
      // Predicated region
      $region17: #{model_forward.6} parent=11 // pred_check
        %p121 = pneg %p77
      $region18: #{model_forward.6} parent=11 // pred_check_branch
        %123 = sbr.rel (%p121) target = $region20
      $region19: #{model_forward.6} parent=11 // pred_region
        _
      $region20: #{model_forward.6} parent=11 // pred_fallthru
        _
    $region12: #{model_forward.6} parent=5 // pred_fallthru
      _
    %p124 = scmp.lt.s32.totalorder %s9, 2
    // Predicated region
    $region21: #{model_forward.6} parent=5 // pred_check
      %p125 = pneg %p124
    $region22: #{model_forward.6} parent=5 // pred_check_branch
      %127 = sbr.rel (%p125) target = $region24
    $region23: #{model_forward.6} parent=5 // pred_region
      // Predicated region
      $region25: #{model_forward.6} parent=23 // pred_check
        %p128 = pneg %p29
      $region26: #{model_forward.6} parent=23 // pred_check_branch
        %130 = sbr.rel (%p128) target = $region28
      $region27: #{model_forward.6} parent=23 // pred_region
        %p131 = scmp.lt.s32.totalorder %s9, 1
        %s132 = scalar_select %p131, %s9, 1
        %s133 = smul.addr %s132, 9
        %s134 = smul.addr %s133, 2
        %s135 = scalar_lea.vmem %s0, %s134
      $region28: #{model_forward.6} parent=23 // pred_fallthru
        _
    $region24: #{model_forward.6} parent=5 // pred_fallthru
      _
    %p136 = scmp.le.s32.totalorder 1, %s9
    %p137 = scmp.lt.s32.totalorder %s9, 3
    %p138 = pnand %p136, %p137
    %p139 = pneg %p138
    // Predicated region
    $region29: #{model_forward.6} parent=5 // pred_check
      _
    $region30: #{model_forward.6} parent=5 // pred_check_branch
      %141 = sbr.rel (%p138) target = $region32
    $region31: #{model_forward.6} parent=5 // pred_region
      %s142 = ssub.s32 %s9, 1
      %p143 = scmp.lt.s32.totalorder %s14, 1
      %s144 = scalar_select %p143, %s14, 1
      %s145 = smul.addr %s144, 9
      %s146 = smul.addr %s145, 2
      %s147 = scalar_lea.vmem %s0, %s146
      %p148 = pneg %p35
      %p149 = pneg %p32
      %p150 = pneg %p56
      %p151 = pneg %p53
      %p152 = pneg %p77
      %p153 = pneg %p74
      %p154 = pneg %p103
      %p155 = pneg %p100
      %p156 = scmp.lt.s32.totalorder %s14, 1
      %s157 = scalar_select %p156, %s14, 1
      %s158 = scalar_lea.vmem %s3, %s157
      %p159 = scmp.lt.s32.totalorder %s14, 1
      %s160 = scalar_select %p159, %s14, 1
      %s161 = smul.addr %s160, 9
      %s162 = smul.addr %s161, 2
      %s163 = scalar_lea.vmem %s0, %s162
      %p164 = scmp.lt.s32.totalorder %s14, 1
      %s165 = scalar_select %p164, %s14, 1
      %s166 = scalar_lea.vmem %s3, %s165
      %v168 = vld [vmem:[%s163] sm:$0xff]
      %v169 = vld [vmem:[%s163 + $0x8] sm:$0xff]
      %v170 = vld [vmem:[%s163 + $0x10] sm:$0x3]
      %v171 = vld [vmem:[%s1] sm:$0xf]
      %v172 = vld [vmem:[%s1 + $0x4] sm:$0xf]
      %v173 = vld [vmem:[%s1 + $0x8] sm:$0xf]
      %v174 = vld [vmem:[%s1 + $0xc] sm:$0xf]
      %v175 = vld [vmem:[%s1 + $0x10] sm:$0xf]
      %v176 = vld [vmem:[%s1 + $0x14] sm:$0xf]
      %v177 = vld [vmem:[%s1 + $0x18] sm:$0xf]
      %v178 = vld [vmem:[%s1 + $0x1c] sm:$0xf]
      %v179 = vld [vmem:[%s1 + $0x20] sm:$0xf]
      %v180 = vld [vmem:[%s1 + $0x24] sm:$0xf]
      %v181 = vld [vmem:[%s1 + $0x28] sm:$0xf]
      %v182 = vld [vmem:[%s1 + $0x2c] sm:$0xf]
      %v183 = vld [vmem:[%s1 + $0x30] sm:$0xf]
      %v184 = vld [vmem:[%s1 + $0x34] sm:$0xf]
      %v185 = vld [vmem:[%s1 + $0x38] sm:$0xf]
      %v186 = vld [vmem:[%s1 + $0x3c] sm:$0xf]
      %v187 = vld [vmem:[%s1 + $0x40] sm:$0xf]
      %v188 = vld [vmem:[%s1 + $0x44] sm:$0xf]
      %v189 = vld [vmem:[%s1 + $0x48] sm:$0xf]
      %v190 = vld [vmem:[%s1 + $0x4c] sm:$0xf]
      %v191 = vld [vmem:[%s1 + $0x50] sm:$0xf]
      %v192 = vld [vmem:[%s1 + $0x54] sm:$0xf]
      %v193 = vld [vmem:[%s1 + $0x58] sm:$0xf]
      %v194 = vld [vmem:[%s1 + $0x5c] sm:$0xf]
      %v195 = vld [vmem:[%s1 + $0x60] sm:$0xf]
      %v196 = vld [vmem:[%s1 + $0x64] sm:$0xf]
      %v197 = vld [vmem:[%s1 + $0x68] sm:$0xf]
      %v198 = vld [vmem:[%s1 + $0x6c] sm:$0xf]
      %v199 = vld [vmem:[%s1 + $0x70] sm:$0xf]
      %v200 = vld [vmem:[%s1 + $0x74] sm:$0xf]
      %v201 = vld [vmem:[%s1 + $0x78] sm:$0xf]
      %v202 = vld [vmem:[%s1 + $0x7c] sm:$0xf]
      %v203 = vld [vmem:[%s1 + $0x80] sm:$0xf]
      %v204 = vld [vmem:[%s1 + $0x84] sm:$0xf]
      %v205 = vld [vmem:[%s1 + $0x88] sm:$0xf]
      %v206 = vld [vmem:[%s1 + $0x8c] sm:$0xf]
      %v207 = vld [vmem:[%s1 + $0x90] sm:$0xf]
      %v208 = vld [vmem:[%s1 + $0x94] sm:$0xf]
      %v209 = vld [vmem:[%s1 + $0x98] sm:$0xf]
      %v210 = vld [vmem:[%s1 + $0x9c] sm:$0xf]
      %v211 = vld [vmem:[%s1 + $0xa0] sm:$0xf]
      %v212 = vld [vmem:[%s1 + $0xa4] sm:$0xf]
      %v213 = vld [vmem:[%s1 + $0xa8] sm:$0xf]
      %v214 = vld [vmem:[%s1 + $0xac] sm:$0xf]
      %v215 = vld [vmem:[%s1 + $0xb0] sm:$0xf]
      %v216 = vld [vmem:[%s1 + $0xb4] sm:$0xf]
      %v217 = vld [vmem:[%s1 + $0xb8] sm:$0xf]
      %v218 = vld [vmem:[%s1 + $0xbc] sm:$0xf]
      %v219 = vld [vmem:[%s1 + $0xc0] sm:$0xf]
      %v220 = vld [vmem:[%s1 + $0xc4] sm:$0xf]
      %v221 = vld [vmem:[%s1 + $0xc8] sm:$0xf]
      %v222 = vld [vmem:[%s1 + $0xcc] sm:$0xf]
      %v223 = vld [vmem:[%s1 + $0xd0] sm:$0xf]
      %v224 = vld [vmem:[%s1 + $0xd4] sm:$0xf]
      %v225 = vld [vmem:[%s1 + $0xd8] sm:$0xf]
      %v226 = vld [vmem:[%s1 + $0xdc] sm:$0xf]
      %v227 = vld [vmem:[%s1 + $0xe0] sm:$0xf]
      %v228 = vld [vmem:[%s1 + $0xe4] sm:$0xf]
      %v229 = vld [vmem:[%s1 + $0xe8] sm:$0xf]
      %v230 = vld [vmem:[%s1 + $0xec] sm:$0xf]
      %v231 = vld [vmem:[%s1 + $0xf0] sm:$0xf]
      %v232 = vld [vmem:[%s1 + $0xf4] sm:$0xf]
      %v233 = vld [vmem:[%s1 + $0xf8] sm:$0xf]
      %v234 = vld [vmem:[%s1 + $0xfc] sm:$0xf]
      %v235 = vld [vmem:[%s1 + $0x100] sm:$0xf]
      %v236 = vld [vmem:[%s1 + $0x104] sm:$0xf]
      %v237 = vld [vmem:[%s1 + $0x108] sm:$0xf]
      %v238 = vld [vmem:[%s1 + $0x10c] sm:$0xf]
      %v239 = vld [vmem:[%s1 + $0x110] sm:$0xf]
      %v240 = vld [vmem:[%s1 + $0x114] sm:$0xf]
      %v241 = vld [vmem:[%s1 + $0x118] sm:$0xf]
      %v242 = vld [vmem:[%s1 + $0x11c] sm:$0xf]
      %v243 = vld [vmem:[%s1 + $0x120] sm:$0xf]
      %v244 = vld [vmem:[%s1 + $0x124] sm:$0xf]
      %v245 = vld [vmem:[%s1 + $0x128] sm:$0xf]
      %v246 = vld [vmem:[%s1 + $0x12c] sm:$0xf]
      %v247 = vld [vmem:[%s1 + $0x130] sm:$0xf]
      %v248 = vld [vmem:[%s1 + $0x134] sm:$0xf]
      %v249 = vld [vmem:[%s1 + $0x138] sm:$0xf]
      %v250 = vld [vmem:[%s1 + $0x13c] sm:$0xf]
      %v251 = vld [vmem:[%s1 + $0x140] sm:$0xf]
      %v252 = vld [vmem:[%s1 + $0x144] sm:$0xf]
      %v253 = vld [vmem:[%s1 + $0x148] sm:$0xf]
      %v254 = vld [vmem:[%s1 + $0x14c] sm:$0xf]
      %v255 = vld [vmem:[%s1 + $0x150] sm:$0xf]
      %v256 = vld [vmem:[%s1 + $0x154] sm:$0xf]
      %v257 = vld [vmem:[%s1 + $0x158] sm:$0xf]
      %v258 = vld [vmem:[%s1 + $0x15c] sm:$0xf]
      %v259 = vld [vmem:[%s1 + $0x160] sm:$0xf]
      %v260 = vld [vmem:[%s1 + $0x164] sm:$0xf]
      %v261 = vld [vmem:[%s1 + $0x168] sm:$0xf]
      %v262 = vld [vmem:[%s1 + $0x16c] sm:$0xf]
      %v263 = vld [vmem:[%s1 + $0x170] sm:$0xf]
      %v264 = vld [vmem:[%s1 + $0x174] sm:$0xf]
      %v265 = vld [vmem:[%s1 + $0x178] sm:$0xf]
      %v266 = vld [vmem:[%s1 + $0x17c] sm:$0xf]
      %v267 = vld [vmem:[%s1 + $0x180] sm:$0xf]
      %v268 = vld [vmem:[%s1 + $0x184] sm:$0xf]
      %v269 = vld [vmem:[%s1 + $0x188] sm:$0xf]
      %v270 = vld [vmem:[%s1 + $0x18c] sm:$0xf]
      %v271 = vld [vmem:[%s1 + $0x190] sm:$0xf]
      %v272 = vld [vmem:[%s1 + $0x194] sm:$0xf]
      %v273 = vld [vmem:[%s1 + $0x198] sm:$0xf]
      %v274 = vld [vmem:[%s1 + $0x19c] sm:$0xf]
      %v275 = vld [vmem:[%s1 + $0x1a0] sm:$0xf]
      %v276 = vld [vmem:[%s1 + $0x1a4] sm:$0xf]
      %v277 = vld [vmem:[%s1 + $0x1a8] sm:$0xf]
      %v278 = vld [vmem:[%s1 + $0x1ac] sm:$0xf]
      %v279 = vld [vmem:[%s1 + $0x1b0] sm:$0xf]
      %v280 = vld [vmem:[%s1 + $0x1b4] sm:$0xf]
      %v281 = vld [vmem:[%s1 + $0x1b8] sm:$0xf]
      %v282 = vld [vmem:[%s1 + $0x1bc] sm:$0xf]
      %v283 = vld [vmem:[%s1 + $0x1c0] sm:$0xf]
      %v284 = vld [vmem:[%s1 + $0x1c4] sm:$0xf]
      %v285 = vld [vmem:[%s1 + $0x1c8] sm:$0xf]
      %v286 = vld [vmem:[%s1 + $0x1cc] sm:$0xf]
      %v287 = vld [vmem:[%s1 + $0x1d0] sm:$0xf]
      %v288 = vld [vmem:[%s1 + $0x1d4] sm:$0xf]
      %v289 = vld [vmem:[%s1 + $0x1d8] sm:$0xf]
      %v290 = vld [vmem:[%s1 + $0x1dc] sm:$0xf]
      %v291 = vld [vmem:[%s1 + $0x1e0] sm:$0xf]
      %v292 = vld [vmem:[%s1 + $0x1e4] sm:$0xf]
      %v293 = vld [vmem:[%s1 + $0x1e8] sm:$0xf]
      %v294 = vld [vmem:[%s1 + $0x1ec] sm:$0xf]
      %v295 = vld [vmem:[%s1 + $0x1f0] sm:$0xf]
      %v296 = vld [vmem:[%s1 + $0x1f4] sm:$0xf]
      %v297 = vld [vmem:[%s1 + $0x1f8] sm:$0xf]
      %v298 = vld [vmem:[%s1 + $0x1fc] sm:$0xf]
      %v299 = vld [vmem:[%s1 + $0x200] sm:$0xf]
      %v300 = vld [vmem:[%s1 + $0x204] sm:$0xf]
      %v301 = vld [vmem:[%s1 + $0x208] sm:$0xf]
      %v302 = vld [vmem:[%s1 + $0x20c] sm:$0xf]
      %v303 = vld [vmem:[%s1 + $0x210] sm:$0xf]
      %v304 = vld [vmem:[%s1 + $0x214] sm:$0xf]
      %v305 = vld [vmem:[%s1 + $0x218] sm:$0xf]
      %v306 = vld [vmem:[%s1 + $0x21c] sm:$0xf]
      %v307 = vld [vmem:[%s1 + $0x220] sm:$0xf]
      %v308 = vld [vmem:[%s1 + $0x224] sm:$0xf]
      %v309 = vld [vmem:[%s1 + $0x228] sm:$0xf]
      %v310 = vld [vmem:[%s1 + $0x22c] sm:$0xf]
      %v311 = vld [vmem:[%s1 + $0x230] sm:$0xf]
      %v312 = vld [vmem:[%s1 + $0x234] sm:$0xf]
      %v313 = vld [vmem:[%s1 + $0x238] sm:$0xf]
      %v314 = vld [vmem:[%s1 + $0x23c] sm:$0xf]
      %v315 = vld [vmem:[%s2] sm:$0x1]
      %v317 = vlaneseq
      %v318 = vshrl.u32 %v317, 7
      %v319 = vsub.s32 0, %v318
      %v320 = vrot.slane %v315, %v319
      %v325 = vcombine.high %v168, %v168
      %v327 = vunpack.c.l.s4 1983009808
      %v328 = vunpack.c.0.s8 %v327
      %v329 = vlaneseq
      %v330 = vshrl.u32 %v329, 7
      %v331 = vsub.s32 %v328, %v330
      %v332 = vrot.slane %v168, %v331
      %v334 = vunpack.c.l.s4 1983009808
      %v335 = vunpack.c.0.s8 %v334
      %v336 = vlaneseq
      %v337 = vshrl.u32 %v336, 7
      %v338 = vsub.s32 %v335, %v337
      %v339 = vrot.slane %v325, %v338
      %v340 = vcombine.high %v332, %v332
      %v341 = vcombine.high %v339, %v339
      %v342 = vcombine.high %v169, %v169
      %v344 = vunpack.c.l.s4 1983009808
      %v345 = vunpack.c.0.s8 %v344
      %v346 = vlaneseq
      %v347 = vshrl.u32 %v346, 7
      %v348 = vsub.s32 %v345, %v347
      %v349 = vrot.slane %v169, %v348
      %v351 = vunpack.c.l.s4 1983009808
      %v352 = vunpack.c.0.s8 %v351
      %v353 = vlaneseq
      %v354 = vshrl.u32 %v353, 7
      %v355 = vsub.s32 %v352, %v354
      %v356 = vrot.slane %v342, %v355
      %v357 = vcombine.high %v349, %v349
      %v358 = vcombine.high %v356, %v356
      %v360 = vunpack.c.l.s4 1983009808
      %v361 = vunpack.c.0.s8 %v360
      %v362 = vlaneseq
      %v363 = vshrl.u32 %v362, 7
      %v364 = vsub.s32 %v361, %v363
      %v365 = vrot.slane %v170, %v364
      %v519 = vunpack.c.l.b16 %v171
      %v520 = vunpack.c.l.b16 %v172
      %v521 = vunpack.c.l.b16 %v173
      %v522 = vunpack.c.l.b16 %v174
      %v523 = vunpack.c.l.b16 %v175
      %v524 = vunpack.c.l.b16 %v176
      %v525 = vunpack.c.l.b16 %v177
      %v526 = vunpack.c.l.b16 %v178
      %v527 = vunpack.c.l.b16 %v179
      %v528 = vunpack.c.l.b16 %v180
      %v529 = vunpack.c.l.b16 %v181
      %v530 = vunpack.c.l.b16 %v182
      %v531 = vunpack.c.l.b16 %v183
      %v532 = vunpack.c.l.b16 %v184
      %v533 = vunpack.c.l.b16 %v185
      %v534 = vunpack.c.l.b16 %v186
      %v535 = vunpack.c.l.b16 %v187
      %v536 = vunpack.c.l.b16 %v188
      %v537 = vunpack.c.l.b16 %v189
      %v538 = vunpack.c.l.b16 %v190
      %v539 = vunpack.c.l.b16 %v191
      %v540 = vunpack.c.l.b16 %v192
      %v541 = vunpack.c.l.b16 %v193
      %v542 = vunpack.c.l.b16 %v194
      %v543 = vunpack.c.l.b16 %v195
      %v544 = vunpack.c.l.b16 %v196
      %v545 = vunpack.c.l.b16 %v197
      %v546 = vunpack.c.l.b16 %v198
      %v547 = vunpack.c.l.b16 %v199
      %v548 = vunpack.c.l.b16 %v200
      %v549 = vunpack.c.l.b16 %v201
      %v550 = vunpack.c.l.b16 %v202
      %v551 = vunpack.c.l.b16 %v203
      %v552 = vunpack.c.l.b16 %v204
      %v553 = vunpack.c.l.b16 %v205
      %v554 = vunpack.c.l.b16 %v206
      %v555 = vunpack.c.l.b16 %v207
      %v556 = vunpack.c.l.b16 %v208
      %v557 = vunpack.c.l.b16 %v209
      %v558 = vunpack.c.l.b16 %v210
      %v559 = vunpack.c.l.b16 %v211
      %v560 = vunpack.c.l.b16 %v212
      %v561 = vunpack.c.l.b16 %v213
      %v562 = vunpack.c.l.b16 %v214
      %v563 = vunpack.c.l.b16 %v215
      %v564 = vunpack.c.l.b16 %v216
      %v565 = vunpack.c.l.b16 %v217
      %v566 = vunpack.c.l.b16 %v218
      %v567 = vunpack.c.l.b16 %v219
      %v568 = vunpack.c.l.b16 %v220
      %v569 = vunpack.c.l.b16 %v221
      %v570 = vunpack.c.l.b16 %v222
      %v571 = vunpack.c.l.b16 %v223
      %v572 = vunpack.c.l.b16 %v224
      %v573 = vunpack.c.l.b16 %v225
      %v574 = vunpack.c.l.b16 %v226
      %v575 = vunpack.c.l.b16 %v227
      %v576 = vunpack.c.l.b16 %v228
      %v577 = vunpack.c.l.b16 %v229
      %v578 = vunpack.c.l.b16 %v230
      %v579 = vunpack.c.l.b16 %v231
      %v580 = vunpack.c.l.b16 %v232
      %v581 = vunpack.c.l.b16 %v233
      %v582 = vunpack.c.l.b16 %v234
      %v583 = vunpack.c.l.b16 %v235
      %v584 = vunpack.c.l.b16 %v236
      %v585 = vunpack.c.l.b16 %v237
      %v586 = vunpack.c.l.b16 %v238
      %v587 = vunpack.c.l.b16 %v239
      %v588 = vunpack.c.l.b16 %v240
      %v589 = vunpack.c.l.b16 %v241
      %v590 = vunpack.c.l.b16 %v242
      %v591 = vunpack.c.l.b16 %v243
      %v592 = vunpack.c.l.b16 %v244
      %v593 = vunpack.c.l.b16 %v245
      %v594 = vunpack.c.l.b16 %v246
      %v595 = vunpack.c.l.b16 %v247
      %v596 = vunpack.c.l.b16 %v248
      %v597 = vunpack.c.l.b16 %v249
      %v598 = vunpack.c.l.b16 %v250
      %v599 = vunpack.c.l.b16 %v251
      %v600 = vunpack.c.l.b16 %v252
      %v601 = vunpack.c.l.b16 %v253
      %v602 = vunpack.c.l.b16 %v254
      %v603 = vunpack.c.l.b16 %v255
      %v604 = vunpack.c.l.b16 %v256
      %v605 = vunpack.c.l.b16 %v257
      %v606 = vunpack.c.l.b16 %v258
      %v607 = vunpack.c.l.b16 %v259
      %v608 = vunpack.c.l.b16 %v260
      %v609 = vunpack.c.l.b16 %v261
      %v610 = vunpack.c.l.b16 %v262
      %v611 = vunpack.c.l.b16 %v263
      %v612 = vunpack.c.l.b16 %v264
      %v613 = vunpack.c.l.b16 %v265
      %v614 = vunpack.c.l.b16 %v266
      %v615 = vunpack.c.l.b16 %v267
      %v616 = vunpack.c.l.b16 %v268
      %v617 = vunpack.c.l.b16 %v269
      %v618 = vunpack.c.l.b16 %v270
      %v619 = vunpack.c.l.b16 %v271
      %v620 = vunpack.c.l.b16 %v272
      %v621 = vunpack.c.l.b16 %v273
      %v622 = vunpack.c.l.b16 %v274
      %v623 = vunpack.c.l.b16 %v275
      %v624 = vunpack.c.l.b16 %v276
      %v625 = vunpack.c.l.b16 %v277
      %v626 = vunpack.c.l.b16 %v278
      %v627 = vunpack.c.l.b16 %v279
      %v628 = vunpack.c.l.b16 %v280
      %v629 = vunpack.c.l.b16 %v281
      %v630 = vunpack.c.l.b16 %v282
      %v631 = vunpack.c.l.b16 %v283
      %v632 = vunpack.c.l.b16 %v284
      %v633 = vunpack.c.l.b16 %v285
      %v634 = vunpack.c.l.b16 %v286
      %v635 = vunpack.c.l.b16 %v287
      %v636 = vunpack.c.l.b16 %v288
      %v637 = vunpack.c.l.b16 %v289
      %v638 = vunpack.c.l.b16 %v290
      %v639 = vunpack.c.l.b16 %v291
      %v640 = vunpack.c.l.b16 %v292
      %v641 = vunpack.c.l.b16 %v293
      %v642 = vunpack.c.l.b16 %v294
      %v643 = vunpack.c.l.b16 %v295
      %v644 = vunpack.c.l.b16 %v296
      %v645 = vunpack.c.l.b16 %v297
      %v646 = vunpack.c.l.b16 %v298
      %v647 = vunpack.c.l.b16 %v299
      %v648 = vunpack.c.l.b16 %v300
      %v649 = vunpack.c.l.b16 %v301
      %v650 = vunpack.c.l.b16 %v302
      %v651 = vunpack.c.l.b16 %v303
      %v652 = vunpack.c.l.b16 %v304
      %v653 = vunpack.c.l.b16 %v305
      %v654 = vunpack.c.l.b16 %v306
      %v655 = vunpack.c.l.b16 %v307
      %v656 = vunpack.c.l.b16 %v308
      %v657 = vunpack.c.l.b16 %v309
      %v658 = vunpack.c.l.b16 %v310
      %v659 = vunpack.c.l.b16 %v311
      %v660 = vunpack.c.l.b16 %v312
      %v661 = vunpack.c.l.b16 %v313
      %v662 = vunpack.c.l.b16 %v314
      %v663 = vpack.c.b16 %v520, %v519
      %v664 = vpack.c.b16 %v522, %v521
      %v665 = vpack.c.b16 %v524, %v523
      %v666 = vpack.c.b16 %v526, %v525
      %v667 = vpack.c.b16 %v528, %v527
      %v668 = vpack.c.b16 %v530, %v529
      %v669 = vpack.c.b16 %v532, %v531
      %v670 = vpack.c.b16 %v534, %v533
      %v671 = vpack.c.b16 %v536, %v535
      %v672 = vpack.c.b16 %v538, %v537
      %v673 = vpack.c.b16 %v540, %v539
      %v674 = vpack.c.b16 %v542, %v541
      %v675 = vpack.c.b16 %v544, %v543
      %v676 = vpack.c.b16 %v546, %v545
      %v677 = vpack.c.b16 %v548, %v547
      %v678 = vpack.c.b16 %v550, %v549
      %v679 = vpack.c.b16 %v552, %v551
      %v680 = vpack.c.b16 %v554, %v553
      %v681 = vpack.c.b16 %v556, %v555
      %v682 = vpack.c.b16 %v558, %v557
      %v683 = vpack.c.b16 %v560, %v559
      %v684 = vpack.c.b16 %v562, %v561
      %v685 = vpack.c.b16 %v564, %v563
      %v686 = vpack.c.b16 %v566, %v565
      %v687 = vpack.c.b16 %v568, %v567
      %v688 = vpack.c.b16 %v570, %v569
      %v689 = vpack.c.b16 %v572, %v571
      %v690 = vpack.c.b16 %v574, %v573
      %v691 = vpack.c.b16 %v576, %v575
      %v692 = vpack.c.b16 %v578, %v577
      %v693 = vpack.c.b16 %v580, %v579
      %v694 = vpack.c.b16 %v582, %v581
      %v695 = vpack.c.b16 %v584, %v583
      %v696 = vpack.c.b16 %v586, %v585
      %v697 = vpack.c.b16 %v588, %v587
      %v698 = vpack.c.b16 %v590, %v589
      %v699 = vpack.c.b16 %v592, %v591
      %v700 = vpack.c.b16 %v594, %v593
      %v701 = vpack.c.b16 %v596, %v595
      %v702 = vpack.c.b16 %v598, %v597
      %v703 = vpack.c.b16 %v600, %v599
      %v704 = vpack.c.b16 %v602, %v601
      %v705 = vpack.c.b16 %v604, %v603
      %v706 = vpack.c.b16 %v606, %v605
      %v707 = vpack.c.b16 %v608, %v607
      %v708 = vpack.c.b16 %v610, %v609
      %v709 = vpack.c.b16 %v612, %v611
      %v710 = vpack.c.b16 %v614, %v613
      %v711 = vpack.c.b16 %v616, %v615
      %v712 = vpack.c.b16 %v618, %v617
      %v713 = vpack.c.b16 %v620, %v619
      %v714 = vpack.c.b16 %v622, %v621
      %v715 = vpack.c.b16 %v624, %v623
      %v716 = vpack.c.b16 %v626, %v625
      %v717 = vpack.c.b16 %v628, %v627
      %v718 = vpack.c.b16 %v630, %v629
      %v719 = vpack.c.b16 %v632, %v631
      %v720 = vpack.c.b16 %v634, %v633
      %v721 = vpack.c.b16 %v636, %v635
      %v722 = vpack.c.b16 %v638, %v637
      %v723 = vpack.c.b16 %v640, %v639
      %v724 = vpack.c.b16 %v642, %v641
      %v725 = vpack.c.b16 %v644, %v643
      %v726 = vpack.c.b16 %v646, %v645
      %v727 = vpack.c.b16 %v648, %v647
      %v728 = vpack.c.b16 %v650, %v649
      %v729 = vpack.c.b16 %v652, %v651
      %v730 = vpack.c.b16 %v654, %v653
      %v731 = vpack.c.b16 %v656, %v655
      %v732 = vpack.c.b16 %v658, %v657
      %v733 = vpack.c.b16 %v660, %v659
      %v734 = vpack.c.b16 %v662, %v661
      %807 = vmatprep.subr.bf16.mxu0 0
      %808 = vmatpush1.bf16.msra.mxu0 %v670
      %809 = vmatprep.subr.bf16.mxu0 0
      %810 = vmatpush1.bf16.msra.mxu0 %v669
      %811 = vmatprep.subr.bf16.mxu0 0
      %812 = vmatpush1.bf16.msra.mxu0 %v668
      %813 = vmatprep.subr.bf16.mxu0 0
      %814 = vmatpush1.bf16.msra.mxu0 %v667
      %815 = vmatprep.subr.bf16.mxu0 0
      %816 = vmatpush1.bf16.msra.mxu0 %v666
      %817 = vmatprep.subr.bf16.mxu0 0
      %818 = vmatpush1.bf16.msra.mxu0 %v665
      %819 = vmatprep.subr.bf16.mxu0 0
      %820 = vmatpush1.bf16.msra.mxu0 %v664
      %821 = vmatprep.subr.bf16.mxu0 0
      %822 = vmatpush1.bf16.msra.mxu0 %v663
      %823 = vmatprep.subr.bf16.mxu0 0
      %824 = vmatpush2.bf16.msra.mxu0 %v678
      %825 = vmatprep.subr.bf16.mxu0 0
      %826 = vmatpush2.bf16.msra.mxu0 %v677
      %827 = vmatprep.subr.bf16.mxu0 0
      %828 = vmatpush2.bf16.msra.mxu0 %v676
      %829 = vmatprep.subr.bf16.mxu0 0
      %830 = vmatpush2.bf16.msra.mxu0 %v675
      %831 = vmatprep.subr.bf16.mxu0 0
      %832 = vmatpush2.bf16.msra.mxu0 %v674
      %833 = vmatprep.subr.bf16.mxu0 0
      %834 = vmatpush2.bf16.msra.mxu0 %v673
      %835 = vmatprep.subr.bf16.mxu0 0
      %836 = vmatpush2.bf16.msra.mxu0 %v672
      %837 = vmatprep.subr.bf16.mxu0 0
      %838 = vmatpush2.bf16.msra.mxu0 %v671
      %839 = vmatprep.mubr.bf16.mxu0 %v340
      %840 = vmatmul.mubr.bf16.gmra.mxu0 %v332
      %v841 = vpop.f32.mrf.mxu0
      %v842 = vadd.f32 %v320, %v841
      %v843 = vpop.f32.mrf.mxu0
      %v844 = vpop.f32.mrf.mxu0
      %v845 = vpop.f32.mrf.mxu0
      %846 = vdwg.mxu0
      %847 = vmatprep.subr.bf16.mxu0 0
      %848 = vmatpush1.bf16.msra.mxu0 %v686
      %849 = vmatprep.subr.bf16.mxu0 0
      %850 = vmatpush1.bf16.msra.mxu0 %v685
      %851 = vmatprep.subr.bf16.mxu0 0
      %852 = vmatpush1.bf16.msra.mxu0 %v684
      %853 = vmatprep.subr.bf16.mxu0 0
      %854 = vmatpush1.bf16.msra.mxu0 %v683
      %855 = vmatprep.subr.bf16.mxu0 0
      %856 = vmatpush1.bf16.msra.mxu0 %v682
      %857 = vmatprep.subr.bf16.mxu0 0
      %858 = vmatpush1.bf16.msra.mxu0 %v681
      %859 = vmatprep.subr.bf16.mxu0 0
      %860 = vmatpush1.bf16.msra.mxu0 %v680
      %861 = vmatprep.subr.bf16.mxu0 0
      %862 = vmatpush1.bf16.msra.mxu0 %v679
      %863 = vmatprep.subr.bf16.mxu0 0
      %864 = vmatpush2.bf16.msra.mxu0 %v694
      %865 = vmatprep.subr.bf16.mxu0 0
      %866 = vmatpush2.bf16.msra.mxu0 %v693
      %867 = vmatprep.subr.bf16.mxu0 0
      %868 = vmatpush2.bf16.msra.mxu0 %v692
      %869 = vmatprep.subr.bf16.mxu0 0
      %870 = vmatpush2.bf16.msra.mxu0 %v691
      %871 = vmatprep.subr.bf16.mxu0 0
      %872 = vmatpush2.bf16.msra.mxu0 %v690
      %873 = vmatprep.subr.bf16.mxu0 0
      %874 = vmatpush2.bf16.msra.mxu0 %v689
      %875 = vmatprep.subr.bf16.mxu0 0
      %876 = vmatpush2.bf16.msra.mxu0 %v688
      %877 = vmatprep.subr.bf16.mxu0 0
      %878 = vmatpush2.bf16.msra.mxu0 %v687
      %879 = vmatprep.mubr.bf16.mxu0 %v341
      %880 = vmatmul.mubr.bf16.gmra.mxu0 %v339
      %v881 = vpop.f32.mrf.mxu0
      %v882 = vadd.f32 %v842, %v881
      %v883 = vpop.f32.mrf.mxu0
      %v884 = vpop.f32.mrf.mxu0
      %v885 = vpop.f32.mrf.mxu0
      %886 = vdwg.mxu0
      %887 = vmatprep.subr.bf16.mxu0 0
      %888 = vmatpush1.bf16.msra.mxu0 %v702
      %889 = vmatprep.subr.bf16.mxu0 0
      %890 = vmatpush1.bf16.msra.mxu0 %v701
      %891 = vmatprep.subr.bf16.mxu0 0
      %892 = vmatpush1.bf16.msra.mxu0 %v700
      %893 = vmatprep.subr.bf16.mxu0 0
      %894 = vmatpush1.bf16.msra.mxu0 %v699
      %895 = vmatprep.subr.bf16.mxu0 0
      %896 = vmatpush1.bf16.msra.mxu0 %v698
      %897 = vmatprep.subr.bf16.mxu0 0
      %898 = vmatpush1.bf16.msra.mxu0 %v697
      %899 = vmatprep.subr.bf16.mxu0 0
      %900 = vmatpush1.bf16.msra.mxu0 %v696
      %901 = vmatprep.subr.bf16.mxu0 0
      %902 = vmatpush1.bf16.msra.mxu0 %v695
      %903 = vmatprep.subr.bf16.mxu0 0
      %904 = vmatpush2.bf16.msra.mxu0 %v710
      %905 = vmatprep.subr.bf16.mxu0 0
      %906 = vmatpush2.bf16.msra.mxu0 %v709
      %907 = vmatprep.subr.bf16.mxu0 0
      %908 = vmatpush2.bf16.msra.mxu0 %v708
      %909 = vmatprep.subr.bf16.mxu0 0
      %910 = vmatpush2.bf16.msra.mxu0 %v707
      %911 = vmatprep.subr.bf16.mxu0 0
      %912 = vmatpush2.bf16.msra.mxu0 %v706
      %913 = vmatprep.subr.bf16.mxu0 0
      %914 = vmatpush2.bf16.msra.mxu0 %v705
      %915 = vmatprep.subr.bf16.mxu0 0
      %916 = vmatpush2.bf16.msra.mxu0 %v704
      %917 = vmatprep.subr.bf16.mxu0 0
      %918 = vmatpush2.bf16.msra.mxu0 %v703
      %919 = vmatprep.mubr.bf16.mxu0 %v357
      %920 = vmatmul.mubr.bf16.gmra.mxu0 %v349
      %v921 = vpop.f32.mrf.mxu0
      %v922 = vadd.f32 %v882, %v921
      %v923 = vpop.f32.mrf.mxu0
      %v924 = vpop.f32.mrf.mxu0
      %v925 = vpop.f32.mrf.mxu0
      %926 = vdwg.mxu0
      %927 = vmatprep.subr.bf16.mxu0 0
      %928 = vmatpush1.bf16.msra.mxu0 %v718
      %929 = vmatprep.subr.bf16.mxu0 0
      %930 = vmatpush1.bf16.msra.mxu0 %v717
      %931 = vmatprep.subr.bf16.mxu0 0
      %932 = vmatpush1.bf16.msra.mxu0 %v716
      %933 = vmatprep.subr.bf16.mxu0 0
      %934 = vmatpush1.bf16.msra.mxu0 %v715
      %935 = vmatprep.subr.bf16.mxu0 0
      %936 = vmatpush1.bf16.msra.mxu0 %v714
      %937 = vmatprep.subr.bf16.mxu0 0
      %938 = vmatpush1.bf16.msra.mxu0 %v713
      %939 = vmatprep.subr.bf16.mxu0 0
      %940 = vmatpush1.bf16.msra.mxu0 %v712
      %941 = vmatprep.subr.bf16.mxu0 0
      %942 = vmatpush1.bf16.msra.mxu0 %v711
      %943 = vmatprep.subr.bf16.mxu0 0
      %944 = vmatpush2.bf16.msra.mxu0 %v726
      %945 = vmatprep.subr.bf16.mxu0 0
      %946 = vmatpush2.bf16.msra.mxu0 %v725
      %947 = vmatprep.subr.bf16.mxu0 0
      %948 = vmatpush2.bf16.msra.mxu0 %v724
      %949 = vmatprep.subr.bf16.mxu0 0
      %950 = vmatpush2.bf16.msra.mxu0 %v723
      %951 = vmatprep.subr.bf16.mxu0 0
      %952 = vmatpush2.bf16.msra.mxu0 %v722
      %953 = vmatprep.subr.bf16.mxu0 0
      %954 = vmatpush2.bf16.msra.mxu0 %v721
      %955 = vmatprep.subr.bf16.mxu0 0
      %956 = vmatpush2.bf16.msra.mxu0 %v720
      %957 = vmatprep.subr.bf16.mxu0 0
      %958 = vmatpush2.bf16.msra.mxu0 %v719
      %959 = vmatprep.mubr.bf16.mxu0 %v358
      %960 = vmatmul.mubr.bf16.gmra.mxu0 %v356
      %v961 = vpop.f32.mrf.mxu0
      %v962 = vadd.f32 %v922, %v961
      %v963 = vpop.f32.mrf.mxu0
      %v964 = vpop.f32.mrf.mxu0
      %v965 = vpop.f32.mrf.mxu0
      %966 = vdwg.mxu0
      %967 = vmatprep.subr.bf16.mxu0 0
      %968 = vmatpush1.bf16.msra.mxu0 %v734
      %969 = vmatprep.subr.bf16.mxu0 0
      %970 = vmatpush1.bf16.msra.mxu0 %v733
      %971 = vmatprep.subr.bf16.mxu0 0
      %972 = vmatpush1.bf16.msra.mxu0 %v732
      %973 = vmatprep.subr.bf16.mxu0 0
      %974 = vmatpush1.bf16.msra.mxu0 %v731
      %975 = vmatprep.subr.bf16.mxu0 0
      %976 = vmatpush1.bf16.msra.mxu0 %v730
      %977 = vmatprep.subr.bf16.mxu0 0
      %978 = vmatpush1.bf16.msra.mxu0 %v729
      %979 = vmatprep.subr.bf16.mxu0 0
      %980 = vmatpush1.bf16.msra.mxu0 %v728
      %981 = vmatprep.subr.bf16.mxu0 0
      %982 = vmatpush1.bf16.msra.mxu0 %v727
      %983 = vmatprep.subr.bf16.mxu0 0
      %984 = vmatpush2.bf16.msra.mxu0 0
      %985 = vmatprep.subr.bf16.mxu0 0
      %986 = vmatpush2.bf16.msra.mxu0 0
      %987 = vmatprep.subr.bf16.mxu0 0
      %988 = vmatpush2.bf16.msra.mxu0 0
      %989 = vmatprep.subr.bf16.mxu0 0
      %990 = vmatpush2.bf16.msra.mxu0 0
      %991 = vmatprep.subr.bf16.mxu0 0
      %992 = vmatpush2.bf16.msra.mxu0 0
      %993 = vmatprep.subr.bf16.mxu0 0
      %994 = vmatpush2.bf16.msra.mxu0 0
      %995 = vmatprep.subr.bf16.mxu0 0
      %996 = vmatpush2.bf16.msra.mxu0 0
      %997 = vmatprep.subr.bf16.mxu0 0
      %998 = vmatpush2.bf16.msra.mxu0 0
      %999 = vmatprep.mubr.bf16.mxu0 0
      %1000 = vmatmul.mubr.bf16.gmra.mxu0 %v365
      %v1001 = vpop.f32.mrf.mxu0
      %v1002 = vadd.f32 %v962, %v1001
      %v1003 = vpop.f32.mrf.mxu0
      %v1004 = vpop.f32.mrf.mxu0
      %v1005 = vpop.f32.mrf.mxu0
      %1006 = vdwg.mxu0
      %vm1007 = vcmask 1043456
      %v1008 = vsel %vm1007, %v1002, 0.0
      %v1009 = vrot.slane %v1008, 4
      %v1010 = vadd.f32 %v1008, %v1009
      %v1011 = vrot.slane %v1010, 2
      %v1012 = vadd.f32 %v1010, %v1011
      %v1013 = vrot.slane %v1012, 1
      %v1014 = vadd.f32 %v1012, %v1013
      %v1015 = vmul.f32 %v1014, 0.25
      %1016 = vst [vmem:[%s166] sm:$0x1] %v1015
      %p1017 = scmp.lt.s32.totalorder %s14, 1
      %s1018 = scalar_select %p1017, %s14, 1
      %s1019 = scalar_lea.vmem %s3, %s1018
      // Predicated region
      $region33: #{model_forward.6} parent=31 // pred_check
        %p1020 = pneg %p100
      $region34: #{model_forward.6} parent=31 // pred_check_branch
        %1022 = sbr.rel (%p1020) target = $region36
      $region35: #{model_forward.6} parent=31 // pred_region
        _
      $region36: #{model_forward.6} parent=31 // pred_fallthru
        _
    $region32: #{model_forward.6} parent=5 // pred_fallthru
      _
    %p1023 = scmp.le.s32.totalorder 2, %s9
    // Predicated region
    $region37: #{model_forward.6} parent=5 // pred_check
      %p1024 = pneg %p1023
    $region38: #{model_forward.6} parent=5 // pred_check_branch
      %1026 = sbr.rel (%p1024) target = $region40
    $region39: #{model_forward.6} parent=5 // pred_region
      %s1027 = ssub.s32 %s9, 2
      // Predicated region
      $region41: #{model_forward.6} parent=39 // pred_check
        %p1028 = pneg %p106
      $region42: #{model_forward.6} parent=39 // pred_check_branch
        %1030 = sbr.rel (%p1028) target = $region44
      $region43: #{model_forward.6} parent=39 // pred_region
        %p1031 = scmp.lt.s32.totalorder %s15, 1
        %s1032 = scalar_select %p1031, %s15, 1
        %s1033 = scalar_lea.vmem %s3, %s1032
      $region44: #{model_forward.6} parent=39 // pred_fallthru
        _
    $region40: #{model_forward.6} parent=5 // pred_fallthru
      _
  $region6: #{model_forward.6} parent=0 // loop_footer
    %s13 = sadd.s32 1, %s9
  $region7: #{model_forward.6} parent=0 // loop_footer_branch
    %8 = sbr.rel target = $region3
  $region8: #{model_forward.6} parent=0 // loop_exit
    _

// kernel: model_forward.7
$region0: #{model_forward.7}
  #allocation0 [shape = 'u32[]', space=smem, size = 0x4, offset = 0x4, fixed_abs, tag = 'smem constant byte address 0x4 - core index']
  #allocation1 [shape = 'u32[144,128]{1,0:T(1,128)}', space=vmem, size = 0x12000, scoped, tag = 'internal scratch']
  %s0 = inlined_call_operand.vmem [shape: f32[2,8,32], index: 0, kind: input, shape index: {}]
  %s1 = inlined_call_operand.vmem [shape: f32[2,1,32], index: 1, kind: input, shape index: {}]
  %s2 = inlined_call_operand.vmem [shape: bf16[3,32,96], index: 2, kind: input, shape index: {}]
  %s3 = inlined_call_operand.vmem [shape: f32[3,1,96], index: 3, kind: input, shape index: {}]
  %s4 = inlined_call_operand.vmem [shape: bf16[3,32,32], index: 4, kind: input, shape index: {}]
  %s5 = inlined_call_operand.vmem [shape: f32[3,1,32], index: 5, kind: input, shape index: {}]
  %s6 = inlined_call_operand.vmem [shape: bf16[3,32,32], index: 6, kind: input, shape index: {}]
  %s7 = inlined_call_operand.vmem [shape: f32[3,1,32], index: 7, kind: input, shape index: {}]
  %s8 = inlined_call_operand.vmem [shape: bf16[3,32,32], index: 8, kind: input, shape index: {}]
  %s9 = inlined_call_operand.vmem [shape: f32[3,1,32], index: 9, kind: input, shape index: {}]
  %s10 = inlined_call_operand.vmem [shape: bf16[3,32,2048], index: 10, kind: input, shape index: {}]
  %s11 = inlined_call_operand.vmem [shape: f32[3,1,2048], index: 11, kind: input, shape index: {}]
  %s12 = inlined_call_operand.vmem [shape: bf16[3,32,2048], index: 12, kind: input, shape index: {}]
  %s13 = inlined_call_operand.vmem [shape: f32[3,1,32], index: 13, kind: input, shape index: {}]
  %s14 = inlined_call_operand.vmem [shape: f32[3,3,32], index: 14, kind: input, shape index: {}]
  %s15 = inlined_call_operand.vmem [shape: f32[3,3,32], index: 15, kind: input, shape index: {}]
  %s16 = inlined_call_operand.vmem [shape: bf16[32,128], index: 16, kind: input, shape index: {}]
  %s17 = inlined_call_operand.vmem [shape: f32[1,128], index: 17, kind: input, shape index: {}]
  %s18 = inlined_call_operand.hbm [shape: f32[2,8,128], index: 18, kind: output, shape index: {}]
  %s19 = sld [smem:[#allocation0]]
  $region105: #{model_forward.7} parent=0
    _
  %s21 = ssub.s32 1, %s19
  %s22 = scalar_select 0, %s21, %s19
  $region1: #{model_forward.7} parent=0
    #allocation2 [shape = 'u8[8192]{0}', space=vmem, size = 0x2000, scoped, tag = 'output window, operand 0']
    #allocation3 [shape = 's32[2]{0}', space=sflag, size = 0x8, scoped, tag = 'scoped memory for model_forward.7']
    %23 = vsyncpa [#allocation3], 0
    %s24 = scalar_lea.sflag [#allocation3], 1
    %25 = vsyncpa %s24, 0
    loop: start=0, step=1, limit=4
    $region2: #{model_forward.7} parent=1 // loop_pre_header
      _
    $region3: #{model_forward.7} parent=1 // loop_header
      %s27 = sphi 0, %s31
      %p28 = scmp.ge.s32.totalorder %s27, 4
      %s37 = sphi 0, %s39
      %s40 = sphi 0, %s37
      %s41 = sphi 0, %s40
      %s57 = sphi 0, %s41
      %s63 = sphi 0, %s65
      %s66 = sphi 0, %s63
      %s67 = sphi 0, %s66
      %s83 = sphi 0, %s67
      %s87 = sphi 0, %s87
      %s89 = sphi 0, %s87
      %s90 = sphi 0, %s89
      %s104 = sphi 0, %s90
      %s108 = sphi 0, %s108
      %s110 = sphi 0, %s108
      %s111 = sphi 0, %s110
      %s125 = sphi 0, %s111
      %s129 = sphi 0, %s129
      %s131 = sphi 0, %s129
      %s132 = sphi 0, %s131
      %s146 = sphi 0, %s132
      %s150 = sphi 0, %s150
      %s152 = sphi 0, %s150
      %s153 = sphi 0, %s152
      %s167 = sphi 0, %s153
      %s171 = sphi 0, %s171
      %s173 = sphi 0, %s171
      %s174 = sphi 0, %s173
      %s188 = sphi 0, %s174
      %s192 = sphi 0, %s192
      %s194 = sphi 0, %s192
      %s195 = sphi 0, %s194
      %s209 = sphi 0, %s195
      %s213 = sphi 0, %s213
      %s215 = sphi 0, %s213
      %s216 = sphi 0, %s215
      %s230 = sphi 0, %s216
      %s234 = sphi 0, %s234
      %s236 = sphi 0, %s234
      %s237 = sphi 0, %s236
      %s251 = sphi 0, %s237
      %s255 = sphi 0, %s255
      %s257 = sphi 0, %s255
      %s258 = sphi 0, %s257
      %s272 = sphi 0, %s258
      %s276 = sphi 0, %s276
      %s278 = sphi 0, %s276
      %s279 = sphi 0, %s278
      %s293 = sphi 0, %s279
      %s297 = sphi 0, %s297
      %s299 = sphi 0, %s297
      %s300 = sphi 0, %s299
      %s314 = sphi 0, %s300
      %s318 = sphi 0, %s318
      %s320 = sphi 0, %s318
      %s321 = sphi 0, %s320
      %s335 = sphi 0, %s321
      %s339 = sphi 0, %s339
      %s341 = sphi 0, %s339
      %s342 = sphi 0, %s341
      %s356 = sphi 0, %s342
      %s360 = sphi 0, %s360
      %s362 = sphi 0, %s360
      %s363 = sphi 0, %s362
      %s377 = sphi 0, %s363
      %s381 = sphi 0, %s381
      %s383 = sphi 0, %s381
      %s384 = sphi 0, %s383
      %s398 = sphi 0, %s384
      %s402 = sphi 0, %s402
      %s404 = sphi 0, %s402
      %s405 = sphi 0, %s404
      %s419 = sphi 0, %s405
      %s425 = sphi 0, %s427
      %s428 = sphi 0, %s425
      %s429 = sphi 0, %s428
      %s445 = sphi 0, %s429
    $region4: #{model_forward.7} parent=1 // loop_header_branch
      %30 = sbr.rel (%p28) target = $region8
    $region5: #{model_forward.7} parent=1 // loop_body
      %s32 = ssub.s32 %s27, 1
      %s33 = ssub.s32 %s27, 2
      %s34 = sadd.s32 %s27, 1
      %s35 = ssub.s32 %s27, %s34
      %p36 = scmp.eq.s32.totalorder %s35, 0
      %s38 = sadd.s32 %s37, 1
      %s39 = scalar_select %p36, %s37, %s38
      %p42 = pneg %p36
      %p43 = scmp.eq.s32.totalorder %s27, 1
      %p44 = por %p42, %p43
      %p45 = scmp.ne.s32.totalorder %s37, %s40
      %p46 = scmp.eq.s32.totalorder %s27, 0
      %p47 = por %p45, %p46
      %p48 = scmp.ne.s32.totalorder %s37, %s40
      %p49 = scmp.eq.s32.totalorder %s32, 1
      %p50 = por %p48, %p49
      %p51 = scmp.ne.s32.totalorder %s40, %s41
      %p52 = scmp.eq.s32.totalorder %s32, 0
      %p53 = por %p51, %p52
      %p54 = scmp.ne.s32.totalorder %s40, %s41
      %p55 = scmp.eq.s32.totalorder %s33, 1
      %p56 = por %p54, %p55
      %p58 = scmp.ne.s32.totalorder %s41, %s57
      %p59 = scmp.eq.s32.totalorder %s33, 0
      %p60 = por %p58, %p59
      %s61 = ssub.s32 %s27, %s34
      %p62 = scmp.eq.s32.totalorder %s61, 0
      %s64 = sadd.s32 %s63, 1
      %s65 = scalar_select %p62, %s63, %s64
      %p68 = pneg %p62
      %p69 = scmp.eq.s32.totalorder %s27, 1
      %p70 = por %p68, %p69
      %p71 = scmp.ne.s32.totalorder %s63, %s66
      %p72 = scmp.eq.s32.totalorder %s27, 0
      %p73 = por %p71, %p72
      %p74 = scmp.ne.s32.totalorder %s63, %s66
      %p75 = scmp.eq.s32.totalorder %s32, 1
      %p76 = por %p74, %p75
      %p77 = scmp.ne.s32.totalorder %s66, %s67
      %p78 = scmp.eq.s32.totalorder %s32, 0
      %p79 = por %p77, %p78
      %p80 = scmp.ne.s32.totalorder %s66, %s67
      %p81 = scmp.eq.s32.totalorder %s33, 1
      %p82 = por %p80, %p81
      %p84 = scmp.ne.s32.totalorder %s67, %s83
      %p85 = scmp.eq.s32.totalorder %s33, 0
      %p86 = por %p84, %p85
      %s88 = sadd.s32 %s87, 1
      %p91 = scmp.eq.s32.totalorder %s27, 1
      %p92 = scmp.ne.s32.totalorder %s87, %s89
      %p93 = scmp.eq.s32.totalorder %s27, 0
      %p94 = por %p92, %p93
      %p95 = scmp.ne.s32.totalorder %s87, %s89
      %p96 = scmp.eq.s32.totalorder %s32, 1
      %p97 = por %p95, %p96
      %p98 = scmp.ne.s32.totalorder %s89, %s90
      %p99 = scmp.eq.s32.totalorder %s32, 0
      %p100 = por %p98, %p99
      %p101 = scmp.ne.s32.totalorder %s89, %s90
      %p102 = scmp.eq.s32.totalorder %s33, 1
      %p103 = por %p101, %p102
      %p105 = scmp.ne.s32.totalorder %s90, %s104
      %p106 = scmp.eq.s32.totalorder %s33, 0
      %p107 = por %p105, %p106
      %s109 = sadd.s32 %s108, 1
      %p112 = scmp.eq.s32.totalorder %s27, 1
      %p113 = scmp.ne.s32.totalorder %s108, %s110
      %p114 = scmp.eq.s32.totalorder %s27, 0
      %p115 = por %p113, %p114
      %p116 = scmp.ne.s32.totalorder %s108, %s110
      %p117 = scmp.eq.s32.totalorder %s32, 1
      %p118 = por %p116, %p117
      %p119 = scmp.ne.s32.totalorder %s110, %s111
      %p120 = scmp.eq.s32.totalorder %s32, 0
      %p121 = por %p119, %p120
      %p122 = scmp.ne.s32.totalorder %s110, %s111
      %p123 = scmp.eq.s32.totalorder %s33, 1
      %p124 = por %p122, %p123
      %p126 = scmp.ne.s32.totalorder %s111, %s125
      %p127 = scmp.eq.s32.totalorder %s33, 0
      %p128 = por %p126, %p127
      %s130 = sadd.s32 %s129, 1
      %p133 = scmp.eq.s32.totalorder %s27, 1
      %p134 = scmp.ne.s32.totalorder %s129, %s131
      %p135 = scmp.eq.s32.totalorder %s27, 0
      %p136 = por %p134, %p135
      %p137 = scmp.ne.s32.totalorder %s129, %s131
      %p138 = scmp.eq.s32.totalorder %s32, 1
      %p139 = por %p137, %p138
      %p140 = scmp.ne.s32.totalorder %s131, %s132
      %p141 = scmp.eq.s32.totalorder %s32, 0
      %p142 = por %p140, %p141
      %p143 = scmp.ne.s32.totalorder %s131, %s132
      %p144 = scmp.eq.s32.totalorder %s33, 1
      %p145 = por %p143, %p144
      %p147 = scmp.ne.s32.totalorder %s132, %s146
      %p148 = scmp.eq.s32.totalorder %s33, 0
      %p149 = por %p147, %p148
      %s151 = sadd.s32 %s150, 1
      %p154 = scmp.eq.s32.totalorder %s27, 1
      %p155 = scmp.ne.s32.totalorder %s150, %s152
      %p156 = scmp.eq.s32.totalorder %s27, 0
      %p157 = por %p155, %p156
      %p158 = scmp.ne.s32.totalorder %s150, %s152
      %p159 = scmp.eq.s32.totalorder %s32, 1
      %p160 = por %p158, %p159
      %p161 = scmp.ne.s32.totalorder %s152, %s153
      %p162 = scmp.eq.s32.totalorder %s32, 0
      %p163 = por %p161, %p162
      %p164 = scmp.ne.s32.totalorder %s152, %s153
      %p165 = scmp.eq.s32.totalorder %s33, 1
      %p166 = por %p164, %p165
      %p168 = scmp.ne.s32.totalorder %s153, %s167
      %p169 = scmp.eq.s32.totalorder %s33, 0
      %p170 = por %p168, %p169
      %s172 = sadd.s32 %s171, 1
      %p175 = scmp.eq.s32.totalorder %s27, 1
      %p176 = scmp.ne.s32.totalorder %s171, %s173
      %p177 = scmp.eq.s32.totalorder %s27, 0
      %p178 = por %p176, %p177
      %p179 = scmp.ne.s32.totalorder %s171, %s173
      %p180 = scmp.eq.s32.totalorder %s32, 1
      %p181 = por %p179, %p180
      %p182 = scmp.ne.s32.totalorder %s173, %s174
      %p183 = scmp.eq.s32.totalorder %s32, 0
      %p184 = por %p182, %p183
      %p185 = scmp.ne.s32.totalorder %s173, %s174
      %p186 = scmp.eq.s32.totalorder %s33, 1
      %p187 = por %p185, %p186
      %p189 = scmp.ne.s32.totalorder %s174, %s188
      %p190 = scmp.eq.s32.totalorder %s33, 0
      %p191 = por %p189, %p190
      %s193 = sadd.s32 %s192, 1
      %p196 = scmp.eq.s32.totalorder %s27, 1
      %p197 = scmp.ne.s32.totalorder %s192, %s194
      %p198 = scmp.eq.s32.totalorder %s27, 0
      %p199 = por %p197, %p198
      %p200 = scmp.ne.s32.totalorder %s192, %s194
      %p201 = scmp.eq.s32.totalorder %s32, 1
      %p202 = por %p200, %p201
      %p203 = scmp.ne.s32.totalorder %s194, %s195
      %p204 = scmp.eq.s32.totalorder %s32, 0
      %p205 = por %p203, %p204
      %p206 = scmp.ne.s32.totalorder %s194, %s195
      %p207 = scmp.eq.s32.totalorder %s33, 1
      %p208 = por %p206, %p207
      %p210 = scmp.ne.s32.totalorder %s195, %s209
      %p211 = scmp.eq.s32.totalorder %s33, 0
      %p212 = por %p210, %p211
      %s214 = sadd.s32 %s213, 1
      %p217 = scmp.eq.s32.totalorder %s27, 1
      %p218 = scmp.ne.s32.totalorder %s213, %s215
      %p219 = scmp.eq.s32.totalorder %s27, 0
      %p220 = por %p218, %p219
      %p221 = scmp.ne.s32.totalorder %s213, %s215
      %p222 = scmp.eq.s32.totalorder %s32, 1
      %p223 = por %p221, %p222
      %p224 = scmp.ne.s32.totalorder %s215, %s216
      %p225 = scmp.eq.s32.totalorder %s32, 0
      %p226 = por %p224, %p225
      %p227 = scmp.ne.s32.totalorder %s215, %s216
      %p228 = scmp.eq.s32.totalorder %s33, 1
      %p229 = por %p227, %p228
      %p231 = scmp.ne.s32.totalorder %s216, %s230
      %p232 = scmp.eq.s32.totalorder %s33, 0
      %p233 = por %p231, %p232
      %s235 = sadd.s32 %s234, 1
      %p238 = scmp.eq.s32.totalorder %s27, 1
      %p239 = scmp.ne.s32.totalorder %s234, %s236
      %p240 = scmp.eq.s32.totalorder %s27, 0
      %p241 = por %p239, %p240
      %p242 = scmp.ne.s32.totalorder %s234, %s236
      %p243 = scmp.eq.s32.totalorder %s32, 1
      %p244 = por %p242, %p243
      %p245 = scmp.ne.s32.totalorder %s236, %s237
      %p246 = scmp.eq.s32.totalorder %s32, 0
      %p247 = por %p245, %p246
      %p248 = scmp.ne.s32.totalorder %s236, %s237
      %p249 = scmp.eq.s32.totalorder %s33, 1
      %p250 = por %p248, %p249
      %p252 = scmp.ne.s32.totalorder %s237, %s251
      %p253 = scmp.eq.s32.totalorder %s33, 0
      %p254 = por %p252, %p253
      %s256 = sadd.s32 %s255, 1
      %p259 = scmp.eq.s32.totalorder %s27, 1
      %p260 = scmp.ne.s32.totalorder %s255, %s257
      %p261 = scmp.eq.s32.totalorder %s27, 0
      %p262 = por %p260, %p261
      %p263 = scmp.ne.s32.totalorder %s255, %s257
      %p264 = scmp.eq.s32.totalorder %s32, 1
      %p265 = por %p263, %p264
      %p266 = scmp.ne.s32.totalorder %s257, %s258
      %p267 = scmp.eq.s32.totalorder %s32, 0
      %p268 = por %p266, %p267
      %p269 = scmp.ne.s32.totalorder %s257, %s258
      %p270 = scmp.eq.s32.totalorder %s33, 1
      %p271 = por %p269, %p270
      %p273 = scmp.ne.s32.totalorder %s258, %s272
      %p274 = scmp.eq.s32.totalorder %s33, 0
      %p275 = por %p273, %p274
      %s277 = sadd.s32 %s276, 1
      %p280 = scmp.eq.s32.totalorder %s27, 1
      %p281 = scmp.ne.s32.totalorder %s276, %s278
      %p282 = scmp.eq.s32.totalorder %s27, 0
      %p283 = por %p281, %p282
      %p284 = scmp.ne.s32.totalorder %s276, %s278
      %p285 = scmp.eq.s32.totalorder %s32, 1
      %p286 = por %p284, %p285
      %p287 = scmp.ne.s32.totalorder %s278, %s279
      %p288 = scmp.eq.s32.totalorder %s32, 0
      %p289 = por %p287, %p288
      %p290 = scmp.ne.s32.totalorder %s278, %s279
      %p291 = scmp.eq.s32.totalorder %s33, 1
      %p292 = por %p290, %p291
      %p294 = scmp.ne.s32.totalorder %s279, %s293
      %p295 = scmp.eq.s32.totalorder %s33, 0
      %p296 = por %p294, %p295
      %s298 = sadd.s32 %s297, 1
      %p301 = scmp.eq.s32.totalorder %s27, 1
      %p302 = scmp.ne.s32.totalorder %s297, %s299
      %p303 = scmp.eq.s32.totalorder %s27, 0
      %p304 = por %p302, %p303
      %p305 = scmp.ne.s32.totalorder %s297, %s299
      %p306 = scmp.eq.s32.totalorder %s32, 1
      %p307 = por %p305, %p306
      %p308 = scmp.ne.s32.totalorder %s299, %s300
      %p309 = scmp.eq.s32.totalorder %s32, 0
      %p310 = por %p308, %p309
      %p311 = scmp.ne.s32.totalorder %s299, %s300
      %p312 = scmp.eq.s32.totalorder %s33, 1
      %p313 = por %p311, %p312
      %p315 = scmp.ne.s32.totalorder %s300, %s314
      %p316 = scmp.eq.s32.totalorder %s33, 0
      %p317 = por %p315, %p316
      %s319 = sadd.s32 %s318, 1
      %p322 = scmp.eq.s32.totalorder %s27, 1
      %p323 = scmp.ne.s32.totalorder %s318, %s320
      %p324 = scmp.eq.s32.totalorder %s27, 0
      %p325 = por %p323, %p324
      %p326 = scmp.ne.s32.totalorder %s318, %s320
      %p327 = scmp.eq.s32.totalorder %s32, 1
      %p328 = por %p326, %p327
      %p329 = scmp.ne.s32.totalorder %s320, %s321
      %p330 = scmp.eq.s32.totalorder %s32, 0
      %p331 = por %p329, %p330
      %p332 = scmp.ne.s32.totalorder %s320, %s321
      %p333 = scmp.eq.s32.totalorder %s33, 1
      %p334 = por %p332, %p333
      %p336 = scmp.ne.s32.totalorder %s321, %s335
      %p337 = scmp.eq.s32.totalorder %s33, 0
      %p338 = por %p336, %p337
      %s340 = sadd.s32 %s339, 1
      %p343 = scmp.eq.s32.totalorder %s27, 1
      %p344 = scmp.ne.s32.totalorder %s339, %s341
      %p345 = scmp.eq.s32.totalorder %s27, 0
      %p346 = por %p344, %p345
      %p347 = scmp.ne.s32.totalorder %s339, %s341
      %p348 = scmp.eq.s32.totalorder %s32, 1
      %p349 = por %p347, %p348
      %p350 = scmp.ne.s32.totalorder %s341, %s342
      %p351 = scmp.eq.s32.totalorder %s32, 0
      %p352 = por %p350, %p351
      %p353 = scmp.ne.s32.totalorder %s341, %s342
      %p354 = scmp.eq.s32.totalorder %s33, 1
      %p355 = por %p353, %p354
      %p357 = scmp.ne.s32.totalorder %s342, %s356
      %p358 = scmp.eq.s32.totalorder %s33, 0
      %p359 = por %p357, %p358
      %s361 = sadd.s32 %s360, 1
      %p364 = scmp.eq.s32.totalorder %s27, 1
      %p365 = scmp.ne.s32.totalorder %s360, %s362
      %p366 = scmp.eq.s32.totalorder %s27, 0
      %p367 = por %p365, %p366
      %p368 = scmp.ne.s32.totalorder %s360, %s362
      %p369 = scmp.eq.s32.totalorder %s32, 1
      %p370 = por %p368, %p369
      %p371 = scmp.ne.s32.totalorder %s362, %s363
      %p372 = scmp.eq.s32.totalorder %s32, 0
      %p373 = por %p371, %p372
      %p374 = scmp.ne.s32.totalorder %s362, %s363
      %p375 = scmp.eq.s32.totalorder %s33, 1
      %p376 = por %p374, %p375
      %p378 = scmp.ne.s32.totalorder %s363, %s377
      %p379 = scmp.eq.s32.totalorder %s33, 0
      %p380 = por %p378, %p379
      %s382 = sadd.s32 %s381, 1
      %p385 = scmp.eq.s32.totalorder %s27, 1
      %p386 = scmp.ne.s32.totalorder %s381, %s383
      %p387 = scmp.eq.s32.totalorder %s27, 0
      %p388 = por %p386, %p387
      %p389 = scmp.ne.s32.totalorder %s381, %s383
      %p390 = scmp.eq.s32.totalorder %s32, 1
      %p391 = por %p389, %p390
      %p392 = scmp.ne.s32.totalorder %s383, %s384
      %p393 = scmp.eq.s32.totalorder %s32, 0
      %p394 = por %p392, %p393
      %p395 = scmp.ne.s32.totalorder %s383, %s384
      %p396 = scmp.eq.s32.totalorder %s33, 1
      %p397 = por %p395, %p396
      %p399 = scmp.ne.s32.totalorder %s384, %s398
      %p400 = scmp.eq.s32.totalorder %s33, 0
      %p401 = por %p399, %p400
      %s403 = sadd.s32 %s402, 1
      %p406 = scmp.eq.s32.totalorder %s27, 1
      %p407 = scmp.ne.s32.totalorder %s402, %s404
      %p408 = scmp.eq.s32.totalorder %s27, 0
      %p409 = por %p407, %p408
      %p410 = scmp.ne.s32.totalorder %s402, %s404
      %p411 = scmp.eq.s32.totalorder %s32, 1
      %p412 = por %p410, %p411
      %p413 = scmp.ne.s32.totalorder %s404, %s405
      %p414 = scmp.eq.s32.totalorder %s32, 0
      %p415 = por %p413, %p414
      %p416 = scmp.ne.s32.totalorder %s404, %s405
      %p417 = scmp.eq.s32.totalorder %s33, 1
      %p418 = por %p416, %p417
      %p420 = scmp.ne.s32.totalorder %s405, %s419
      %p421 = scmp.eq.s32.totalorder %s33, 0
      %p422 = por %p420, %p421
      %s423 = ssub.s32 %s27, %s34
      %p424 = scmp.eq.s32.totalorder %s423, 0
      %s426 = sadd.s32 %s425, 1
      %s427 = scalar_select %p424, %s425, %s426
      %p430 = pneg %p424
      %p431 = scmp.eq.s32.totalorder %s27, 1
      %p432 = por %p430, %p431
      %p433 = scmp.ne.s32.totalorder %s425, %s428
      %p434 = scmp.eq.s32.totalorder %s27, 0
      %p435 = por %p433, %p434
      %p436 = scmp.ne.s32.totalorder %s425, %s428
      %p437 = scmp.eq.s32.totalorder %s32, 1
      %p438 = por %p436, %p437
      %p439 = scmp.ne.s32.totalorder %s428, %s429
      %p440 = scmp.eq.s32.totalorder %s32, 0
      %p441 = por %p439, %p440
      %p442 = scmp.ne.s32.totalorder %s428, %s429
      %p443 = scmp.eq.s32.totalorder %s33, 1
      %p444 = por %p442, %p443
      %p446 = scmp.ne.s32.totalorder %s429, %s445
      %p447 = scmp.eq.s32.totalorder %s33, 0
      %p448 = por %p446, %p447
      %p449 = scmp.le.s32.totalorder 1, %s27
      %p450 = scmp.lt.s32.totalorder %s27, 3
      %p451 = pnand %p449, %p450
      %p452 = pneg %p451
      // Predicated region
      $region9: #{model_forward.7} parent=5 // pred_check
        _
      $region10: #{model_forward.7} parent=5 // pred_check_branch
        %454 = sbr.rel (%p451) target = $region12
      $region11: #{model_forward.7} parent=5 // pred_region
        %s455 = ssub.s32 %s27, 1
        // Predicated region
        $region13: #{model_forward.7} parent=11 // pred_check
          %p456 = pneg %p100
        $region14: #{model_forward.7} parent=11 // pred_check_branch
          %458 = sbr.rel (%p456) target = $region16
        $region15: #{model_forward.7} parent=11 // pred_region
          _
        $region16: #{model_forward.7} parent=11 // pred_fallthru
          _
        // Predicated region
        $region17: #{model_forward.7} parent=11 // pred_check
          %p459 = pneg %p121
        $region18: #{model_forward.7} parent=11 // pred_check_branch
          %461 = sbr.rel (%p459) target = $region20
        $region19: #{model_forward.7} parent=11 // pred_region
          _
        $region20: #{model_forward.7} parent=11 // pred_fallthru
          _
        // Predicated region
        $region21: #{model_forward.7} parent=11 // pred_check
          %p462 = pneg %p142
        $region22: #{model_forward.7} parent=11 // pred_check_branch
          %464 = sbr.rel (%p462) target = $region24
        $region23: #{model_forward.7} parent=11 // pred_region
          _
        $region24: #{model_forward.7} parent=11 // pred_fallthru
          _
        // Predicated region
        $region25: #{model_forward.7} parent=11 // pred_check
          %p465 = pneg %p163
        $region26: #{model_forward.7} parent=11 // pred_check_branch
          %467 = sbr.rel (%p465) target = $region28
        $region27: #{model_forward.7} parent=11 // pred_region
          _
        $region28: #{model_forward.7} parent=11 // pred_fallthru
          _
        // Predicated region
        $region29: #{model_forward.7} parent=11 // pred_check
          %p468 = pneg %p184
        $region30: #{model_forward.7} parent=11 // pred_check_branch
          %470 = sbr.rel (%p468) target = $region32
        $region31: #{model_forward.7} parent=11 // pred_region
          _
        $region32: #{model_forward.7} parent=11 // pred_fallthru
          _
        // Predicated region
        $region33: #{model_forward.7} parent=11 // pred_check
          %p471 = pneg %p205
        $region34: #{model_forward.7} parent=11 // pred_check_branch
          %473 = sbr.rel (%p471) target = $region36
        $region35: #{model_forward.7} parent=11 // pred_region
          _
        $region36: #{model_forward.7} parent=11 // pred_fallthru
          _
        // Predicated region
        $region37: #{model_forward.7} parent=11 // pred_check
          %p474 = pneg %p226
        $region38: #{model_forward.7} parent=11 // pred_check_branch
          %476 = sbr.rel (%p474) target = $region40
        $region39: #{model_forward.7} parent=11 // pred_region
          _
        $region40: #{model_forward.7} parent=11 // pred_fallthru
          _
        // Predicated region
        $region41: #{model_forward.7} parent=11 // pred_check
          %p477 = pneg %p247
        $region42: #{model_forward.7} parent=11 // pred_check_branch
          %479 = sbr.rel (%p477) target = $region44
        $region43: #{model_forward.7} parent=11 // pred_region
          _
        $region44: #{model_forward.7} parent=11 // pred_fallthru
          _
        // Predicated region
        $region45: #{model_forward.7} parent=11 // pred_check
          %p480 = pneg %p268
        $region46: #{model_forward.7} parent=11 // pred_check_branch
          %482 = sbr.rel (%p480) target = $region48
        $region47: #{model_forward.7} parent=11 // pred_region
          _
        $region48: #{model_forward.7} parent=11 // pred_fallthru
          _
        // Predicated region
        $region49: #{model_forward.7} parent=11 // pred_check
          %p483 = pneg %p289
        $region50: #{model_forward.7} parent=11 // pred_check_branch
          %485 = sbr.rel (%p483) target = $region52
        $region51: #{model_forward.7} parent=11 // pred_region
          _
        $region52: #{model_forward.7} parent=11 // pred_fallthru
          _
        // Predicated region
        $region53: #{model_forward.7} parent=11 // pred_check
          %p486 = pneg %p310
        $region54: #{model_forward.7} parent=11 // pred_check_branch
          %488 = sbr.rel (%p486) target = $region56
        $region55: #{model_forward.7} parent=11 // pred_region
          _
        $region56: #{model_forward.7} parent=11 // pred_fallthru
          _
        // Predicated region
        $region57: #{model_forward.7} parent=11 // pred_check
          %p489 = pneg %p331
        $region58: #{model_forward.7} parent=11 // pred_check_branch
          %491 = sbr.rel (%p489) target = $region60
        $region59: #{model_forward.7} parent=11 // pred_region
          _
        $region60: #{model_forward.7} parent=11 // pred_fallthru
          _
        // Predicated region
        $region61: #{model_forward.7} parent=11 // pred_check
          %p492 = pneg %p352
        $region62: #{model_forward.7} parent=11 // pred_check_branch
          %494 = sbr.rel (%p492) target = $region64
        $region63: #{model_forward.7} parent=11 // pred_region
          _
        $region64: #{model_forward.7} parent=11 // pred_fallthru
          _
        // Predicated region
        $region65: #{model_forward.7} parent=11 // pred_check
          %p495 = pneg %p373
        $region66: #{model_forward.7} parent=11 // pred_check_branch
          %497 = sbr.rel (%p495) target = $region68
        $region67: #{model_forward.7} parent=11 // pred_region
          _
        $region68: #{model_forward.7} parent=11 // pred_fallthru
          _
        // Predicated region
        $region69: #{model_forward.7} parent=11 // pred_check
          %p498 = pneg %p394
        $region70: #{model_forward.7} parent=11 // pred_check_branch
          %500 = sbr.rel (%p498) target = $region72
        $region71: #{model_forward.7} parent=11 // pred_region
          _
        $region72: #{model_forward.7} parent=11 // pred_fallthru
          _
        // Predicated region
        $region73: #{model_forward.7} parent=11 // pred_check
          %p501 = pneg %p415
        $region74: #{model_forward.7} parent=11 // pred_check_branch
          %503 = sbr.rel (%p501) target = $region76
        $region75: #{model_forward.7} parent=11 // pred_region
          _
        $region76: #{model_forward.7} parent=11 // pred_fallthru
          _
      $region12: #{model_forward.7} parent=5 // pred_fallthru
        _
      %p504 = scmp.lt.s32.totalorder %s27, 2
      // Predicated region
      $region77: #{model_forward.7} parent=5 // pred_check
        %p505 = pneg %p504
      $region78: #{model_forward.7} parent=5 // pred_check_branch
        %507 = sbr.rel (%p505) target = $region80
      $region79: #{model_forward.7} parent=5 // pred_region
        // Predicated region
        $region81: #{model_forward.7} parent=79 // pred_check
          %p508 = pneg %p47
        $region82: #{model_forward.7} parent=79 // pred_check_branch
          %510 = sbr.rel (%p508) target = $region84
        $region83: #{model_forward.7} parent=79 // pred_region
          %p511 = scmp.lt.s32.totalorder %s27, 1
          %s512 = scalar_select %p511, %s27, 1
          %s513 = smul.addr %s512, 8
          %s514 = scalar_lea.vmem %s0, %s513
        $region84: #{model_forward.7} parent=79 // pred_fallthru
          _
        // Predicated region
        $region85: #{model_forward.7} parent=79 // pred_check
          %p515 = pneg %p73
        $region86: #{model_forward.7} parent=79 // pred_check_branch
          %517 = sbr.rel (%p515) target = $region88
        $region87: #{model_forward.7} parent=79 // pred_region
          %p518 = scmp.lt.s32.totalorder %s27, 1
          %s519 = scalar_select %p518, %s27, 1
          %s520 = scalar_lea.vmem %s1, %s519
        $region88: #{model_forward.7} parent=79 // pred_fallthru
          _
      $region80: #{model_forward.7} parent=5 // pred_fallthru
        _
      %p521 = scmp.le.s32.totalorder 1, %s27
      %p522 = scmp.lt.s32.totalorder %s27, 3
      %p523 = pnand %p521, %p522
      %p524 = pneg %p523
      // Predicated region
      $region89: #{model_forward.7} parent=5 // pred_check
        _
      $region90: #{model_forward.7} parent=5 // pred_check_branch
        %526 = sbr.rel (%p523) target = $region92
      $region91: #{model_forward.7} parent=5 // pred_region
        %s527 = ssub.s32 %s27, 1
        %p528 = scmp.lt.s32.totalorder %s32, 1
        %s529 = scalar_select %p528, %s32, 1
        %s530 = smul.addr %s529, 8
        %s531 = scalar_lea.vmem %s0, %s530
        %p532 = pneg %p53
        %p533 = pneg %p50
        %p534 = scmp.lt.s32.totalorder %s32, 1
        %s535 = scalar_select %p534, %s32, 1
        %s536 = scalar_lea.vmem %s1, %s535
        %p537 = pneg %p79
        %p538 = pneg %p76
        %p539 = pneg %p100
        %p540 = pneg %p97
        %p541 = pneg %p121
        %p542 = pneg %p118
        %p543 = pneg %p142
        %p544 = pneg %p139
        %p545 = pneg %p163
        %p546 = pneg %p160
        %p547 = pneg %p184
        %p548 = pneg %p181
        %p549 = pneg %p205
        %p550 = pneg %p202
        %p551 = pneg %p226
        %p552 = pneg %p223
        %p553 = pneg %p247
        %p554 = pneg %p244
        %p555 = pneg %p268
        %p556 = pneg %p265
        %p557 = pneg %p289
        %p558 = pneg %p286
        %p559 = pneg %p310
        %p560 = pneg %p307
        %p561 = pneg %p331
        %p562 = pneg %p328
        %p563 = pneg %p352
        %p564 = pneg %p349
        %p565 = pneg %p373
        %p566 = pneg %p370
        %p567 = pneg %p394
        %p568 = pneg %p391
        %p569 = pneg %p415
        %p570 = pneg %p412
        %p571 = pneg %p441
        %p572 = pneg %p438
        %s573 = sand.u32 %s428, 1
        %s574 = scalar_lea.sflag [#allocation3], %s573
        %s575 = sand.u32 %s428, 1
        %s576 = smul.addr %s575, 8
        %s577 = scalar_lea.vmem [#allocation2], %s576
        %p578 = scmp.lt.s32.totalorder %s32, 1
        %s579 = scalar_select %p578, %s32, 1
        %s580 = smul.addr %s579, 8
        %s581 = scalar_lea.vmem %s0, %s580
        %p582 = scmp.lt.s32.totalorder %s32, 1
        %s583 = scalar_select %p582, %s32, 1
        %s584 = scalar_lea.vmem %s1, %s583
        %v586 = vld [vmem:[%s581] sm:$0xff]
        %v587 = vld [vmem:[%s584] sm:$0x1]
        %v588 = vlaneseq
        %v589 = vshrl.u32 %v588, 7
        %v590 = vlaneseq
        %v591 = vand.u32 %v590, 127
        %vm592 = vcmp.le.s32.totalorder %v591, %v589
        %v593 = vsel %vm592, 0.0, -1e+09
        %v594 = vld [vmem:[%s14] sm:$0x7]
        %v595 = vld [vmem:[%s15] sm:$0x7]
        %v596 = vpack.c.bf16 %v586, %v586
        %v597 = vld [vmem:[%s2] sm:$0xf]
        %v598 = vld [vmem:[%s2 + $0x4] sm:$0xf]
        %v599 = vld [vmem:[%s2 + $0x8] sm:$0xf]
        %v600 = vld [vmem:[%s2 + $0xc] sm:$0xf]
        %v601 = vld [vmem:[%s3] sm:$0x1]
        %v603 = vlaneseq
        %v604 = vshrl.u32 %v603, 7
        %v605 = vsub.s32 0, %v604
        %v606 = vrot.slane %v601, %v605
        %v612 = vunpack.c.l.b16 %v597
        %v613 = vunpack.c.l.b16 %v598
        %v614 = vunpack.c.l.b16 %v599
        %v615 = vunpack.c.l.b16 %v600
        %v616 = vpack.c.b16 %v613, %v612
        %v617 = vpack.c.b16 %v615, %v614
        %vm620 = vcmask 261120
        %v622 = vsel %vm620, %v596, 0
        %624 = vmatprep.subr.bf16.mxu0 0
        %625 = vmatpush1.bf16.msra.mxu0 0
        %626 = vmatprep.subr.bf16.mxu0 0
        %627 = vmatpush1.bf16.msra.mxu0 0
        %628 = vmatprep.subr.bf16.mxu0 0
        %629 = vmatpush1.bf16.msra.mxu0 0
        %630 = vmatprep.subr.bf16.mxu0 0
        %631 = vmatpush1.bf16.msra.mxu0 0
        %632 = vmatprep.subr.bf16.mxu0 0
        %633 = vmatpush1.bf16.msra.mxu0 0
        %634 = vmatprep.subr.bf16.mxu0 0
        %635 = vmatpush1.bf16.msra.mxu0 0
        %636 = vmatprep.subr.bf16.mxu0 0
        %637 = vmatpush1.bf16.msra.mxu0 %v617
        %638 = vmatprep.subr.bf16.mxu0 0
        %639 = vmatpush1.bf16.msra.mxu0 %v616
        %640 = vmatprep.subr.bf16.mxu0 0
        %641 = vmatpush2.bf16.msra.mxu0 0
        %642 = vmatprep.subr.bf16.mxu0 0
        %643 = vmatpush2.bf16.msra.mxu0 0
        %644 = vmatprep.subr.bf16.mxu0 0
        %645 = vmatpush2.bf16.msra.mxu0 0
        %646 = vmatprep.subr.bf16.mxu0 0
        %647 = vmatpush2.bf16.msra.mxu0 0
        %648 = vmatprep.subr.bf16.mxu0 0
        %649 = vmatpush2.bf16.msra.mxu0 0
        %650 = vmatprep.subr.bf16.mxu0 0
        %651 = vmatpush2.bf16.msra.mxu0 0
        %652 = vmatprep.subr.bf16.mxu0 0
        %653 = vmatpush2.bf16.msra.mxu0 0
        %654 = vmatprep.subr.bf16.mxu0 0
        %655 = vmatpush2.bf16.msra.mxu0 0
        %656 = vmatprep.mubr.bf16.mxu0 0
        %657 = vmatmul.mubr.bf16.gmra.mxu0 %v622
        %v658 = vpop.f32.mrf.mxu0
        %v659 = vadd.f32 %v606, %v658
        %v660 = vpop.f32.mrf.mxu0
        %v661 = vpop.f32.mrf.mxu0
        %v662 = vpop.f32.mrf.mxu0
        %663 = vdwg.mxu0
        %665 = vrot.lane.b32.xlu0 %v659, 96
        %v666 = vpop.permute.xlu0 %665
        %vm667 = vcmask 64512
        %v668 = vsel %vm667, %v659, 0
        %v670 = vsel %vm667, %v666, 0
        %672 = vmatprep.subr.mxu0 0.0
        %673 = vmatpush1.xpose.msra.mxu0 0.0
        %674 = vmatprep.subr.mxu0 0.0
        %675 = vmatpush1.xpose.msra.mxu0 0.0
        %676 = vmatprep.subr.mxu0 0.0
        %677 = vmatpush1.xpose.msra.mxu0 0.0
        %678 = vmatprep.subr.mxu0 0.0
        %679 = vmatpush1.xpose.msra.mxu0 0.0
        %680 = vmatprep.subr.mxu0 0.0
        %681 = vmatpush1.xpose.msra.mxu0 0.0
        %682 = vmatprep.subr.mxu0 0.0
        %683 = vmatpush1.xpose.msra.mxu0 0.0
        %684 = vmatprep.subr.mxu0 0.0
        %685 = vmatpush1.xpose.msra.mxu0 0.0
        %686 = vmatprep.subr.mxu0 0.0
        %687 = vmatpush1.xpose.msra.mxu0 0.0
        %688 = vmatprep.subr.mxu0 0.0
        %689 = vmatpush1.xpose.msra.mxu0 0.0
        %690 = vmatprep.subr.mxu0 0.0
        %691 = vmatpush1.xpose.msra.mxu0 0.0
        %692 = vmatprep.subr.mxu0 0.0
        %693 = vmatpush1.xpose.msra.mxu0 0.0
        %694 = vmatprep.subr.mxu0 0.0
        %695 = vmatpush1.xpose.msra.mxu0 0.0
        %696 = vmatprep.subr.mxu0 0.0
        %697 = vmatpush1.xpose.msra.mxu0 0.0
        %698 = vmatprep.subr.mxu0 0.0
        %699 = vmatpush1.xpose.msra.mxu0 0.0
        %700 = vmatprep.subr.mxu0 0.0
        %701 = vmatpush1.xpose.msra.mxu0 0.0
        %702 = vmatprep.subr.mxu0 0.0
        %703 = vmatpush1.xpose.msra.mxu0 %v670
        %704 = vmatprep.subr.mxu0 0.0
        %705 = vmatpush2.xpose.msra.mxu0 0.0
        %706 = vmatprep.subr.mxu0 0.0
        %707 = vmatpush2.xpose.msra.mxu0 0.0
        %708 = vmatprep.subr.mxu0 0.0
        %709 = vmatpush2.xpose.msra.mxu0 0.0
        %710 = vmatprep.subr.mxu0 0.0
        %711 = vmatpush2.xpose.msra.mxu0 0.0
        %712 = vmatprep.subr.mxu0 0.0
        %713 = vmatpush2.xpose.msra.mxu0 0.0
        %714 = vmatprep.subr.mxu0 0.0
        %715 = vmatpush2.xpose.msra.mxu0 0.0
        %716 = vmatprep.subr.mxu0 0.0
        %717 = vmatpush2.xpose.msra.mxu0 0.0
        %718 = vmatprep.subr.mxu0 0.0
        %719 = vmatpush2.xpose.msra.mxu0 0.0
        %720 = vmatprep.subr.mxu0 0.0
        %721 = vmatpush2.xpose.msra.mxu0 0.0
        %722 = vmatprep.subr.mxu0 0.0
        %723 = vmatpush2.xpose.msra.mxu0 0.0
        %724 = vmatprep.subr.mxu0 0.0
        %725 = vmatpush2.xpose.msra.mxu0 0.0
        %726 = vmatprep.subr.mxu0 0.0
        %727 = vmatpush2.xpose.msra.mxu0 0.0
        %728 = vmatprep.subr.mxu0 0.0
        %729 = vmatpush2.xpose.msra.mxu0 0.0
        %730 = vmatprep.subr.mxu0 0.0
        %731 = vmatpush2.xpose.msra.mxu0 0.0
        %732 = vmatprep.subr.mxu0 0.0
        %733 = vmatpush2.xpose.msra.mxu0 0.0
        %734 = vmatprep.subr.mxu0 0.0
        %735 = vmatpush2.xpose.msra.mxu0 0.0
        %736 = vmatprep.mubr.f32.mxu0 0.0
        %737 = vmatmul.mubr.f32.gmra.mxu0 %v668
        %v738 = vpop.f32.mrf.mxu0
        %v739 = vadd.f32 0.0, %v738
        %v740 = vpop.f32.mrf.mxu0
        %741 = vdwg.mxu0
        %v742 = vmul.f32 %v739, 0.35355338
        %v743 = vadd.f32 %v742, %v593
        %v744 = vsel %vm667, %v743, -inf
        %745 = vmax.xlane.f32.xlu0 %v744
        %v746 = vpop.xlane.xlu0 %745
        %v747 = vsub.f32 %v743, %v746
        %v748 = vmul.f32 %v747, 1.442695
        %v749 = vpow.pop %v748
        %v750 = vsel %vm667, %v749, 0.0
        %751 = vadd.xlane.f32.xlu0 %v750
        %v752 = vpop.xlane.xlu0 %751
        %v753 = vrcp.pop %v752
        %v754 = vmul.f32 %v749, %v753
        %755 = vrot.lane.b32.xlu0 %v659, 64
        %v756 = vpop.permute.xlu0 %755
        %v759 = vsel %vm667, %v754, 0
        %761 = vmatprep.subr.mxu0 0.0
        %762 = vmatpush1.msra.mxu0 0.0
        %763 = vmatprep.subr.mxu0 0.0
        %764 = vmatpush1.msra.mxu0 0.0
        %765 = vmatprep.subr.mxu0 0.0
        %766 = vmatpush1.msra.mxu0 0.0
        %767 = vmatprep.subr.mxu0 0.0
        %768 = vmatpush1.msra.mxu0 0.0
        %769 = vmatprep.subr.mxu0 0.0
        %770 = vmatpush1.msra.mxu0 0.0
        %771 = vmatprep.subr.mxu0 0.0
        %772 = vmatpush1.msra.mxu0 0.0
        %773 = vmatprep.subr.mxu0 0.0
        %774 = vmatpush1.msra.mxu0 0.0
        %775 = vmatprep.subr.mxu0 0.0
        %776 = vmatpush1.msra.mxu0 0.0
        %777 = vmatprep.subr.mxu0 0.0
        %778 = vmatpush1.msra.mxu0 0.0
        %779 = vmatprep.subr.mxu0 0.0
        %780 = vmatpush1.msra.mxu0 0.0
        %781 = vmatprep.subr.mxu0 0.0
        %782 = vmatpush1.msra.mxu0 0.0
        %783 = vmatprep.subr.mxu0 0.0
        %784 = vmatpush1.msra.mxu0 0.0
        %785 = vmatprep.subr.mxu0 0.0
        %786 = vmatpush1.msra.mxu0 0.0
        %787 = vmatprep.subr.mxu0 0.0
        %788 = vmatpush1.msra.mxu0 0.0
        %789 = vmatprep.subr.mxu0 0.0
        %790 = vmatpush1.msra.mxu0 0.0
        %791 = vmatprep.subr.mxu0 0.0
        %792 = vmatpush1.msra.mxu0 %v756
        %793 = vmatprep.subr.mxu0 0.0
        %794 = vmatpush2.msra.mxu0 0.0
        %795 = vmatprep.subr.mxu0 0.0
        %796 = vmatpush2.msra.mxu0 0.0
        %797 = vmatprep.subr.mxu0 0.0
        %798 = vmatpush2.msra.mxu0 0.0
        %799 = vmatprep.subr.mxu0 0.0
        %800 = vmatpush2.msra.mxu0 0.0
        %801 = vmatprep.subr.mxu0 0.0
        %802 = vmatpush2.msra.mxu0 0.0
        %803 = vmatprep.subr.mxu0 0.0
        %804 = vmatpush2.msra.mxu0 0.0
        %805 = vmatprep.subr.mxu0 0.0
        %806 = vmatpush2.msra.mxu0 0.0
        %807 = vmatprep.subr.mxu0 0.0
        %808 = vmatpush2.msra.mxu0 0.0
        %809 = vmatprep.subr.mxu0 0.0
        %810 = vmatpush2.msra.mxu0 0.0
        %811 = vmatprep.subr.mxu0 0.0
        %812 = vmatpush2.msra.mxu0 0.0
        %813 = vmatprep.subr.mxu0 0.0
        %814 = vmatpush2.msra.mxu0 0.0
        %815 = vmatprep.subr.mxu0 0.0
        %816 = vmatpush2.msra.mxu0 0.0
        %817 = vmatprep.subr.mxu0 0.0
        %818 = vmatpush2.msra.mxu0 0.0
        %819 = vmatprep.subr.mxu0 0.0
        %820 = vmatpush2.msra.mxu0 0.0
        %821 = vmatprep.subr.mxu0 0.0
        %822 = vmatpush2.msra.mxu0 0.0
        %823 = vmatprep.subr.mxu0 0.0
        %824 = vmatpush2.msra.mxu0 0.0
        %825 = vmatprep.mubr.f32.mxu0 0.0
        %826 = vmatmul.mubr.f32.gmra.mxu0 %v759
        %v827 = vpop.f32.mrf.mxu0
        %v828 = vadd.f32 0.0, %v827
        %v829 = vpop.f32.mrf.mxu0
        %830 = vdwg.mxu0
        %831 = vrot.lane.b32.xlu0 %v659, 120
        %v832 = vpop.permute.xlu0 %831
        %833 = vrot.lane.b32.xlu0 %v659, 88
        %v834 = vpop.permute.xlu0 %833
        %v835 = vsel %vm667, %v832, 0
        %v837 = vsel %vm667, %v834, 0
        %839 = vmatprep.subr.mxu0 0.0
        %840 = vmatpush1.xpose.msra.mxu0 0.0
        %841 = vmatprep.subr.mxu0 0.0
        %842 = vmatpush1.xpose.msra.mxu0 0.0
        %843 = vmatprep.subr.mxu0 0.0
        %844 = vmatpush1.xpose.msra.mxu0 0.0
        %845 = vmatprep.subr.mxu0 0.0
        %846 = vmatpush1.xpose.msra.mxu0 0.0
        %847 = vmatprep.subr.mxu0 0.0
        %848 = vmatpush1.xpose.msra.mxu0 0.0
        %849 = vmatprep.subr.mxu0 0.0
        %850 = vmatpush1.xpose.msra.mxu0 0.0
        %851 = vmatprep.subr.mxu0 0.0
        %852 = vmatpush1.xpose.msra.mxu0 0.0
        %853 = vmatprep.subr.mxu0 0.0
        %854 = vmatpush1.xpose.msra.mxu0 0.0
        %855 = vmatprep.subr.mxu0 0.0
        %856 = vmatpush1.xpose.msra.mxu0 0.0
        %857 = vmatprep.subr.mxu0 0.0
        %858 = vmatpush1.xpose.msra.mxu0 0.0
        %859 = vmatprep.subr.mxu0 0.0
        %860 = vmatpush1.xpose.msra.mxu0 0.0
        %861 = vmatprep.subr.mxu0 0.0
        %862 = vmatpush1.xpose.msra.mxu0 0.0
        %863 = vmatprep.subr.mxu0 0.0
        %864 = vmatpush1.xpose.msra.mxu0 0.0
        %865 = vmatprep.subr.mxu0 0.0
        %866 = vmatpush1.xpose.msra.mxu0 0.0
        %867 = vmatprep.subr.mxu0 0.0
        %868 = vmatpush1.xpose.msra.mxu0 0.0
        %869 = vmatprep.subr.mxu0 0.0
        %870 = vmatpush1.xpose.msra.mxu0 %v837
        %871 = vmatprep.subr.mxu0 0.0
        %872 = vmatpush2.xpose.msra.mxu0 0.0
        %873 = vmatprep.subr.mxu0 0.0
        %874 = vmatpush2.xpose.msra.mxu0 0.0
        %875 = vmatprep.subr.mxu0 0.0
        %876 = vmatpush2.xpose.msra.mxu0 0.0
        %877 = vmatprep.subr.mxu0 0.0
        %878 = vmatpush2.xpose.msra.mxu0 0.0
        %879 = vmatprep.subr.mxu0 0.0
        %880 = vmatpush2.xpose.msra.mxu0 0.0
        %881 = vmatprep.subr.mxu0 0.0
        %882 = vmatpush2.xpose.msra.mxu0 0.0
        %883 = vmatprep.subr.mxu0 0.0
        %884 = vmatpush2.xpose.msra.mxu0 0.0
        %885 = vmatprep.subr.mxu0 0.0
        %886 = vmatpush2.xpose.msra.mxu0 0.0
        %887 = vmatprep.subr.mxu0 0.0
        %888 = vmatpush2.xpose.msra.mxu0 0.0
        %889 = vmatprep.subr.mxu0 0.0
        %890 = vmatpush2.xpose.msra.mxu0 0.0
        %891 = vmatprep.subr.mxu0 0.0
        %892 = vmatpush2.xpose.msra.mxu0 0.0
        %893 = vmatprep.subr.mxu0 0.0
        %894 = vmatpush2.xpose.msra.mxu0 0.0
        %895 = vmatprep.subr.mxu0 0.0
        %896 = vmatpush2.xpose.msra.mxu0 0.0
        %897 = vmatprep.subr.mxu0 0.0
        %898 = vmatpush2.xpose.msra.mxu0 0.0
        %899 = vmatprep.subr.mxu0 0.0
        %900 = vmatpush2.xpose.msra.mxu0 0.0
        %901 = vmatprep.subr.mxu0 0.0
        %902 = vmatpush2.xpose.msra.mxu0 0.0
        %903 = vmatprep.mubr.f32.mxu0 0.0
        %904 = vmatmul.mubr.f32.gmra.mxu0 %v835
        %v905 = vpop.f32.mrf.mxu0
        %v906 = vadd.f32 0.0, %v905
        %v907 = vpop.f32.mrf.mxu0
        %908 = vdwg.mxu0
        %v909 = vmul.f32 %v906, 0.35355338
        %v910 = vadd.f32 %v909, %v593
        %v911 = vsel %vm667, %v910, -inf
        %912 = vmax.xlane.f32.xlu0 %v911
        %v913 = vpop.xlane.xlu0 %912
        %v914 = vsub.f32 %v910, %v913
        %v915 = vmul.f32 %v914, 1.442695
        %v916 = vpow.pop %v915
        %v917 = vsel %vm667, %v916, 0.0
        %918 = vadd.xlane.f32.xlu0 %v917
        %v919 = vpop.xlane.xlu0 %918
        %v920 = vrcp.pop %v919
        %v921 = vmul.f32 %v916, %v920
        %922 = vrot.lane.b32.xlu0 %v659, 56
        %v923 = vpop.permute.xlu0 %922
        %v926 = vsel %vm667, %v921, 0
        %928 = vmatprep.subr.mxu0 0.0
        %929 = vmatpush1.msra.mxu0 0.0
        %930 = vmatprep.subr.mxu0 0.0
        %931 = vmatpush1.msra.mxu0 0.0
        %932 = vmatprep.subr.mxu0 0.0
        %933 = vmatpush1.msra.mxu0 0.0
        %934 = vmatprep.subr.mxu0 0.0
        %935 = vmatpush1.msra.mxu0 0.0
        %936 = vmatprep.subr.mxu0 0.0
        %937 = vmatpush1.msra.mxu0 0.0
        %938 = vmatprep.subr.mxu0 0.0
        %939 = vmatpush1.msra.mxu0 0.0
        %940 = vmatprep.subr.mxu0 0.0
        %941 = vmatpush1.msra.mxu0 0.0
        %942 = vmatprep.subr.mxu0 0.0
        %943 = vmatpush1.msra.mxu0 0.0
        %944 = vmatprep.subr.mxu0 0.0
        %945 = vmatpush1.msra.mxu0 0.0
        %946 = vmatprep.subr.mxu0 0.0
        %947 = vmatpush1.msra.mxu0 0.0
        %948 = vmatprep.subr.mxu0 0.0
        %949 = vmatpush1.msra.mxu0 0.0
        %950 = vmatprep.subr.mxu0 0.0
        %951 = vmatpush1.msra.mxu0 0.0
        %952 = vmatprep.subr.mxu0 0.0
        %953 = vmatpush1.msra.mxu0 0.0
        %954 = vmatprep.subr.mxu0 0.0
        %955 = vmatpush1.msra.mxu0 0.0
        %956 = vmatprep.subr.mxu0 0.0
        %957 = vmatpush1.msra.mxu0 0.0
        %958 = vmatprep.subr.mxu0 0.0
        %959 = vmatpush1.msra.mxu0 %v923
        %960 = vmatprep.subr.mxu0 0.0
        %961 = vmatpush2.msra.mxu0 0.0
        %962 = vmatprep.subr.mxu0 0.0
        %963 = vmatpush2.msra.mxu0 0.0
        %964 = vmatprep.subr.mxu0 0.0
        %965 = vmatpush2.msra.mxu0 0.0
        %966 = vmatprep.subr.mxu0 0.0
        %967 = vmatpush2.msra.mxu0 0.0
        %968 = vmatprep.subr.mxu0 0.0
        %969 = vmatpush2.msra.mxu0 0.0
        %970 = vmatprep.subr.mxu0 0.0
        %971 = vmatpush2.msra.mxu0 0.0
        %972 = vmatprep.subr.mxu0 0.0
        %973 = vmatpush2.msra.mxu0 0.0
        %974 = vmatprep.subr.mxu0 0.0
        %975 = vmatpush2.msra.mxu0 0.0
        %976 = vmatprep.subr.mxu0 0.0
        %977 = vmatpush2.msra.mxu0 0.0
        %978 = vmatprep.subr.mxu0 0.0
        %979 = vmatpush2.msra.mxu0 0.0
        %980 = vmatprep.subr.mxu0 0.0
        %981 = vmatpush2.msra.mxu0 0.0
        %982 = vmatprep.subr.mxu0 0.0
        %983 = vmatpush2.msra.mxu0 0.0
        %984 = vmatprep.subr.mxu0 0.0
        %985 = vmatpush2.msra.mxu0 0.0
        %986 = vmatprep.subr.mxu0 0.0
        %987 = vmatpush2.msra.mxu0 0.0
        %988 = vmatprep.subr.mxu0 0.0
        %989 = vmatpush2.msra.mxu0 0.0
        %990 = vmatprep.subr.mxu0 0.0
        %991 = vmatpush2.msra.mxu0 0.0
        %992 = vmatprep.mubr.f32.mxu0 0.0
        %993 = vmatmul.mubr.f32.gmra.mxu0 %v926
        %v994 = vpop.f32.mrf.mxu0
        %v995 = vadd.f32 0.0, %v994
        %v996 = vpop.f32.mrf.mxu0
        %997 = vdwg.mxu0
        %998 = vrot.lane.b32.xlu0 %v659, 112
        %v999 = vpop.permute.xlu0 %998
        %1000 = vrot.lane.b32.xlu0 %v659, 80
        %v1001 = vpop.permute.xlu0 %1000
        %v1002 = vsel %vm667, %v999, 0
        %v1004 = vsel %vm667, %v1001, 0
        %1006 = vmatprep.subr.mxu0 0.0
        %1007 = vmatpush1.xpose.msra.mxu0 0.0
        %1008 = vmatprep.subr.mxu0 0.0
        %1009 = vmatpush1.xpose.msra.mxu0 0.0
        %1010 = vmatprep.subr.mxu0 0.0
        %1011 = vmatpush1.xpose.msra.mxu0 0.0
        %1012 = vmatprep.subr.mxu0 0.0
        %1013 = vmatpush1.xpose.msra.mxu0 0.0
        %1014 = vmatprep.subr.mxu0 0.0
        %1015 = vmatpush1.xpose.msra.mxu0 0.0
        %1016 = vmatprep.subr.mxu0 0.0
        %1017 = vmatpush1.xpose.msra.mxu0 0.0
        %1018 = vmatprep.subr.mxu0 0.0
        %1019 = vmatpush1.xpose.msra.mxu0 0.0
        %1020 = vmatprep.subr.mxu0 0.0
        %1021 = vmatpush1.xpose.msra.mxu0 0.0
        %1022 = vmatprep.subr.mxu0 0.0
        %1023 = vmatpush1.xpose.msra.mxu0 0.0
        %1024 = vmatprep.subr.mxu0 0.0
        %1025 = vmatpush1.xpose.msra.mxu0 0.0
        %1026 = vmatprep.subr.mxu0 0.0
        %1027 = vmatpush1.xpose.msra.mxu0 0.0
        %1028 = vmatprep.subr.mxu0 0.0
        %1029 = vmatpush1.xpose.msra.mxu0 0.0
        %1030 = vmatprep.subr.mxu0 0.0
        %1031 = vmatpush1.xpose.msra.mxu0 0.0
        %1032 = vmatprep.subr.mxu0 0.0
        %1033 = vmatpush1.xpose.msra.mxu0 0.0
        %1034 = vmatprep.subr.mxu0 0.0
        %1035 = vmatpush1.xpose.msra.mxu0 0.0
        %1036 = vmatprep.subr.mxu0 0.0
        %1037 = vmatpush1.xpose.msra.mxu0 %v1004
        %1038 = vmatprep.subr.mxu0 0.0
        %1039 = vmatpush2.xpose.msra.mxu0 0.0
        %1040 = vmatprep.subr.mxu0 0.0
        %1041 = vmatpush2.xpose.msra.mxu0 0.0
        %1042 = vmatprep.subr.mxu0 0.0
        %1043 = vmatpush2.xpose.msra.mxu0 0.0
        %1044 = vmatprep.subr.mxu0 0.0
        %1045 = vmatpush2.xpose.msra.mxu0 0.0
        %1046 = vmatprep.subr.mxu0 0.0
        %1047 = vmatpush2.xpose.msra.mxu0 0.0
        %1048 = vmatprep.subr.mxu0 0.0
        %1049 = vmatpush2.xpose.msra.mxu0 0.0
        %1050 = vmatprep.subr.mxu0 0.0
        %1051 = vmatpush2.xpose.msra.mxu0 0.0
        %1052 = vmatprep.subr.mxu0 0.0
        %1053 = vmatpush2.xpose.msra.mxu0 0.0
        %1054 = vmatprep.subr.mxu0 0.0
        %1055 = vmatpush2.xpose.msra.mxu0 0.0
        %1056 = vmatprep.subr.mxu0 0.0
        %1057 = vmatpush2.xpose.msra.mxu0 0.0
        %1058 = vmatprep.subr.mxu0 0.0
        %1059 = vmatpush2.xpose.msra.mxu0 0.0
        %1060 = vmatprep.subr.mxu0 0.0
        %1061 = vmatpush2.xpose.msra.mxu0 0.0
        %1062 = vmatprep.subr.mxu0 0.0
        %1063 = vmatpush2.xpose.msra.mxu0 0.0
        %1064 = vmatprep.subr.mxu0 0.0
        %1065 = vmatpush2.xpose.msra.mxu0 0.0
        %1066 = vmatprep.subr.mxu0 0.0
        %1067 = vmatpush2.xpose.msra.mxu0 0.0
        %1068 = vmatprep.subr.mxu0 0.0
        %1069 = vmatpush2.xpose.msra.mxu0 0.0
        %1070 = vmatprep.mubr.f32.mxu0 0.0
        %1071 = vmatmul.mubr.f32.gmra.mxu0 %v1002
        %v1072 = vpop.f32.mrf.mxu0
        %v1073 = vadd.f32 0.0, %v1072
        %v1074 = vpop.f32.mrf.mxu0
        %1075 = vdwg.mxu0
        %v1076 = vmul.f32 %v1073, 0.35355338
        %v1077 = vadd.f32 %v1076, %v593
        %v1078 = vsel %vm667, %v1077, -inf
        %1079 = vmax.xlane.f32.xlu0 %v1078
        %v1080 = vpop.xlane.xlu0 %1079
        %v1081 = vsub.f32 %v1077, %v1080
        %v1082 = vmul.f32 %v1081, 1.442695
        %v1083 = vpow.pop %v1082
        %v1084 = vsel %vm667, %v1083, 0.0
        %1085 = vadd.xlane.f32.xlu0 %v1084
        %v1086 = vpop.xlane.xlu0 %1085
        %v1087 = vrcp.pop %v1086
        %v1088 = vmul.f32 %v1083, %v1087
        %1089 = vrot.lane.b32.xlu0 %v659, 48
        %v1090 = vpop.permute.xlu0 %1089
        %v1093 = vsel %vm667, %v1088, 0
        %1095 = vmatprep.subr.mxu0 0.0
        %1096 = vmatpush1.msra.mxu0 0.0
        %1097 = vmatprep.subr.mxu0 0.0
        %1098 = vmatpush1.msra.mxu0 0.0
        %1099 = vmatprep.subr.mxu0 0.0
        %1100 = vmatpush1.msra.mxu0 0.0
        %1101 = vmatprep.subr.mxu0 0.0
        %1102 = vmatpush1.msra.mxu0 0.0
        %1103 = vmatprep.subr.mxu0 0.0
        %1104 = vmatpush1.msra.mxu0 0.0
        %1105 = vmatprep.subr.mxu0 0.0
        %1106 = vmatpush1.msra.mxu0 0.0
        %1107 = vmatprep.subr.mxu0 0.0
        %1108 = vmatpush1.msra.mxu0 0.0
        %1109 = vmatprep.subr.mxu0 0.0
        %1110 = vmatpush1.msra.mxu0 0.0
        %1111 = vmatprep.subr.mxu0 0.0
        %1112 = vmatpush1.msra.mxu0 0.0
        %1113 = vmatprep.subr.mxu0 0.0
        %1114 = vmatpush1.msra.mxu0 0.0
        %1115 = vmatprep.subr.mxu0 0.0
        %1116 = vmatpush1.msra.mxu0 0.0
        %1117 = vmatprep.subr.mxu0 0.0
        %1118 = vmatpush1.msra.mxu0 0.0
        %1119 = vmatprep.subr.mxu0 0.0
        %1120 = vmatpush1.msra.mxu0 0.0
        %1121 = vmatprep.subr.mxu0 0.0
        %1122 = vmatpush1.msra.mxu0 0.0
        %1123 = vmatprep.subr.mxu0 0.0
        %1124 = vmatpush1.msra.mxu0 0.0
        %1125 = vmatprep.subr.mxu0 0.0
        %1126 = vmatpush1.msra.mxu0 %v1090
        %1127 = vmatprep.subr.mxu0 0.0
        %1128 = vmatpush2.msra.mxu0 0.0
        %1129 = vmatprep.subr.mxu0 0.0
        %1130 = vmatpush2.msra.mxu0 0.0
        %1131 = vmatprep.subr.mxu0 0.0
        %1132 = vmatpush2.msra.mxu0 0.0
        %1133 = vmatprep.subr.mxu0 0.0
        %1134 = vmatpush2.msra.mxu0 0.0
        %1135 = vmatprep.subr.mxu0 0.0
        %1136 = vmatpush2.msra.mxu0 0.0
        %1137 = vmatprep.subr.mxu0 0.0
        %1138 = vmatpush2.msra.mxu0 0.0
        %1139 = vmatprep.subr.mxu0 0.0
        %1140 = vmatpush2.msra.mxu0 0.0
        %1141 = vmatprep.subr.mxu0 0.0
        %1142 = vmatpush2.msra.mxu0 0.0
        %1143 = vmatprep.subr.mxu0 0.0
        %1144 = vmatpush2.msra.mxu0 0.0
        %1145 = vmatprep.subr.mxu0 0.0
        %1146 = vmatpush2.msra.mxu0 0.0
        %1147 = vmatprep.subr.mxu0 0.0
        %1148 = vmatpush2.msra.mxu0 0.0
        %1149 = vmatprep.subr.mxu0 0.0
        %1150 = vmatpush2.msra.mxu0 0.0
        %1151 = vmatprep.subr.mxu0 0.0
        %1152 = vmatpush2.msra.mxu0 0.0
        %1153 = vmatprep.subr.mxu0 0.0
        %1154 = vmatpush2.msra.mxu0 0.0
        %1155 = vmatprep.subr.mxu0 0.0
        %1156 = vmatpush2.msra.mxu0 0.0
        %1157 = vmatprep.subr.mxu0 0.0
        %1158 = vmatpush2.msra.mxu0 0.0
        %1159 = vmatprep.mubr.f32.mxu0 0.0
        %1160 = vmatmul.mubr.f32.gmra.mxu0 %v1093
        %v1161 = vpop.f32.mrf.mxu0
        %v1162 = vadd.f32 0.0, %v1161
        %v1163 = vpop.f32.mrf.mxu0
        %1164 = vdwg.mxu0
        %1165 = vrot.lane.b32.xlu0 %v659, 104
        %v1166 = vpop.permute.xlu0 %1165
        %1167 = vrot.lane.b32.xlu0 %v659, 72
        %v1168 = vpop.permute.xlu0 %1167
        %v1169 = vsel %vm667, %v1166, 0
        %v1171 = vsel %vm667, %v1168, 0
        %1173 = vmatprep.subr.mxu0 0.0
        %1174 = vmatpush1.xpose.msra.mxu0 0.0
        %1175 = vmatprep.subr.mxu0 0.0
        %1176 = vmatpush1.xpose.msra.mxu0 0.0
        %1177 = vmatprep.subr.mxu0 0.0
        %1178 = vmatpush1.xpose.msra.mxu0 0.0
        %1179 = vmatprep.subr.mxu0 0.0
        %1180 = vmatpush1.xpose.msra.mxu0 0.0
        %1181 = vmatprep.subr.mxu0 0.0
        %1182 = vmatpush1.xpose.msra.mxu0 0.0
        %1183 = vmatprep.subr.mxu0 0.0
        %1184 = vmatpush1.xpose.msra.mxu0 0.0
        %1185 = vmatprep.subr.mxu0 0.0
        %1186 = vmatpush1.xpose.msra.mxu0 0.0
        %1187 = vmatprep.subr.mxu0 0.0
        %1188 = vmatpush1.xpose.msra.mxu0 0.0
        %1189 = vmatprep.subr.mxu0 0.0
        %1190 = vmatpush1.xpose.msra.mxu0 0.0
        %1191 = vmatprep.subr.mxu0 0.0
        %1192 = vmatpush1.xpose.msra.mxu0 0.0
        %1193 = vmatprep.subr.mxu0 0.0
        %1194 = vmatpush1.xpose.msra.mxu0 0.0
        %1195 = vmatprep.subr.mxu0 0.0
        %1196 = vmatpush1.xpose.msra.mxu0 0.0
        %1197 = vmatprep.subr.mxu0 0.0
        %1198 = vmatpush1.xpose.msra.mxu0 0.0
        %1199 = vmatprep.subr.mxu0 0.0
        %1200 = vmatpush1.xpose.msra.mxu0 0.0
        %1201 = vmatprep.subr.mxu0 0.0
        %1202 = vmatpush1.xpose.msra.mxu0 0.0
        %1203 = vmatprep.subr.mxu0 0.0
        %1204 = vmatpush1.xpose.msra.mxu0 %v1171
        %1205 = vmatprep.subr.mxu0 0.0
        %1206 = vmatpush2.xpose.msra.mxu0 0.0
        %1207 = vmatprep.subr.mxu0 0.0
        %1208 = vmatpush2.xpose.msra.mxu0 0.0
        %1209 = vmatprep.subr.mxu0 0.0
        %1210 = vmatpush2.xpose.msra.mxu0 0.0
        %1211 = vmatprep.subr.mxu0 0.0
        %1212 = vmatpush2.xpose.msra.mxu0 0.0
        %1213 = vmatprep.subr.mxu0 0.0
        %1214 = vmatpush2.xpose.msra.mxu0 0.0
        %1215 = vmatprep.subr.mxu0 0.0
        %1216 = vmatpush2.xpose.msra.mxu0 0.0
        %1217 = vmatprep.subr.mxu0 0.0
        %1218 = vmatpush2.xpose.msra.mxu0 0.0
        %1219 = vmatprep.subr.mxu0 0.0
        %1220 = vmatpush2.xpose.msra.mxu0 0.0
        %1221 = vmatprep.subr.mxu0 0.0
        %1222 = vmatpush2.xpose.msra.mxu0 0.0
        %1223 = vmatprep.subr.mxu0 0.0
        %1224 = vmatpush2.xpose.msra.mxu0 0.0
        %1225 = vmatprep.subr.mxu0 0.0
        %1226 = vmatpush2.xpose.msra.mxu0 0.0
        %1227 = vmatprep.subr.mxu0 0.0
        %1228 = vmatpush2.xpose.msra.mxu0 0.0
        %1229 = vmatprep.subr.mxu0 0.0
        %1230 = vmatpush2.xpose.msra.mxu0 0.0
        %1231 = vmatprep.subr.mxu0 0.0
        %1232 = vmatpush2.xpose.msra.mxu0 0.0
        %1233 = vmatprep.subr.mxu0 0.0
        %1234 = vmatpush2.xpose.msra.mxu0 0.0
        %1235 = vmatprep.subr.mxu0 0.0
        %1236 = vmatpush2.xpose.msra.mxu0 0.0
        %1237 = vmatprep.mubr.f32.mxu0 0.0
        %1238 = vmatmul.mubr.f32.gmra.mxu0 %v1169
        %v1239 = vpop.f32.mrf.mxu0
        %v1240 = vadd.f32 0.0, %v1239
        %v1241 = vpop.f32.mrf.mxu0
        %1242 = vdwg.mxu0
        %v1243 = vmul.f32 %v1240, 0.35355338
        %v1244 = vadd.f32 %v1243, %v593
        %v1245 = vsel %vm667, %v1244, -inf
        %1246 = vmax.xlane.f32.xlu0 %v1245
        %v1247 = vpop.xlane.xlu0 %1246
        %v1248 = vsub.f32 %v1244, %v1247
        %v1249 = vmul.f32 %v1248, 1.442695
        %v1250 = vpow.pop %v1249
        %v1251 = vsel %vm667, %v1250, 0.0
        %1252 = vadd.xlane.f32.xlu0 %v1251
        %v1253 = vpop.xlane.xlu0 %1252
        %v1254 = vrcp.pop %v1253
        %v1255 = vmul.f32 %v1250, %v1254
        %1256 = vrot.lane.b32.xlu0 %v659, 40
        %v1257 = vpop.permute.xlu0 %1256
        %v1260 = vsel %vm667, %v1255, 0
        %1262 = vmatprep.subr.mxu0 0.0
        %1263 = vmatpush1.msra.mxu0 0.0
        %1264 = vmatprep.subr.mxu0 0.0
        %1265 = vmatpush1.msra.mxu0 0.0
        %1266 = vmatprep.subr.mxu0 0.0
        %1267 = vmatpush1.msra.mxu0 0.0
        %1268 = vmatprep.subr.mxu0 0.0
        %1269 = vmatpush1.msra.mxu0 0.0
        %1270 = vmatprep.subr.mxu0 0.0
        %1271 = vmatpush1.msra.mxu0 0.0
        %1272 = vmatprep.subr.mxu0 0.0
        %1273 = vmatpush1.msra.mxu0 0.0
        %1274 = vmatprep.subr.mxu0 0.0
        %1275 = vmatpush1.msra.mxu0 0.0
        %1276 = vmatprep.subr.mxu0 0.0
        %1277 = vmatpush1.msra.mxu0 0.0
        %1278 = vmatprep.subr.mxu0 0.0
        %1279 = vmatpush1.msra.mxu0 0.0
        %1280 = vmatprep.subr.mxu0 0.0
        %1281 = vmatpush1.msra.mxu0 0.0
        %1282 = vmatprep.subr.mxu0 0.0
        %1283 = vmatpush1.msra.mxu0 0.0
        %1284 = vmatprep.subr.mxu0 0.0
        %1285 = vmatpush1.msra.mxu0 0.0
        %1286 = vmatprep.subr.mxu0 0.0
        %1287 = vmatpush1.msra.mxu0 0.0
        %1288 = vmatprep.subr.mxu0 0.0
        %1289 = vmatpush1.msra.mxu0 0.0
        %1290 = vmatprep.subr.mxu0 0.0
        %1291 = vmatpush1.msra.mxu0 0.0
        %1292 = vmatprep.subr.mxu0 0.0
        %1293 = vmatpush1.msra.mxu0 %v1257
        %1294 = vmatprep.subr.mxu0 0.0
        %1295 = vmatpush2.msra.mxu0 0.0
        %1296 = vmatprep.subr.mxu0 0.0
        %1297 = vmatpush2.msra.mxu0 0.0
        %1298 = vmatprep.subr.mxu0 0.0
        %1299 = vmatpush2.msra.mxu0 0.0
        %1300 = vmatprep.subr.mxu0 0.0
        %1301 = vmatpush2.msra.mxu0 0.0
        %1302 = vmatprep.subr.mxu0 0.0
        %1303 = vmatpush2.msra.mxu0 0.0
        %1304 = vmatprep.subr.mxu0 0.0
        %1305 = vmatpush2.msra.mxu0 0.0
        %1306 = vmatprep.subr.mxu0 0.0
        %1307 = vmatpush2.msra.mxu0 0.0
        %1308 = vmatprep.subr.mxu0 0.0
        %1309 = vmatpush2.msra.mxu0 0.0
        %1310 = vmatprep.subr.mxu0 0.0
        %1311 = vmatpush2.msra.mxu0 0.0
        %1312 = vmatprep.subr.mxu0 0.0
        %1313 = vmatpush2.msra.mxu0 0.0
        %1314 = vmatprep.subr.mxu0 0.0
        %1315 = vmatpush2.msra.mxu0 0.0
        %1316 = vmatprep.subr.mxu0 0.0
        %1317 = vmatpush2.msra.mxu0 0.0
        %1318 = vmatprep.subr.mxu0 0.0
        %1319 = vmatpush2.msra.mxu0 0.0
        %1320 = vmatprep.subr.mxu0 0.0
        %1321 = vmatpush2.msra.mxu0 0.0
        %1322 = vmatprep.subr.mxu0 0.0
        %1323 = vmatpush2.msra.mxu0 0.0
        %1324 = vmatprep.subr.mxu0 0.0
        %1325 = vmatpush2.msra.mxu0 0.0
        %1326 = vmatprep.mubr.f32.mxu0 0.0
        %1327 = vmatmul.mubr.f32.gmra.mxu0 %v1260
        %v1328 = vpop.f32.mrf.mxu0
        %v1329 = vadd.f32 0.0, %v1328
        %v1330 = vpop.f32.mrf.mxu0
        %1331 = vdwg.mxu0
        %1333 = vrot.lane.b32.xlu0 %v995, 8
        %v1334 = vpop.permute.xlu0 %1333
        %1337 = vrot.lane.b32.xlu0 %v1162, 16
        %v1338 = vpop.permute.xlu0 %1337
        %1341 = vrot.lane.b32.xlu0 %v1329, 24
        %v1342 = vpop.permute.xlu0 %1341
        %v1344 = vsel %vm667, %v828, %v1334
        %vm1345 = vcmask 130048
        %v1346 = vsel %vm1345, %v1344, %v1338
        %vm1347 = vcmask 195584
        %v1348 = vsel %vm1347, %v1346, %v1342
        %v1349 = vpack.c.bf16 %v1348, %v1348
        %v1350 = vld [vmem:[%s4] sm:$0xf]
        %v1351 = vld [vmem:[%s4 + $0x4] sm:$0xf]
        %v1352 = vld [vmem:[%s4 + $0x8] sm:$0xf]
        %v1353 = vld [vmem:[%s4 + $0xc] sm:$0xf]
        %v1354 = vld [vmem:[%s5] sm:$0x1]
        %v1356 = vlaneseq
        %v1357 = vshrl.u32 %v1356, 7
        %v1358 = vsub.s32 0, %v1357
        %v1359 = vrot.slane %v1354, %v1358
        %v1365 = vunpack.c.l.b16 %v1350
        %v1366 = vunpack.c.l.b16 %v1351
        %v1367 = vunpack.c.l.b16 %v1352
        %v1368 = vunpack.c.l.b16 %v1353
        %v1369 = vpack.c.b16 %v1366, %v1365
        %v1370 = vpack.c.b16 %v1368, %v1367
        %v1374 = vsel %vm620, %v1349, 0
        %1376 = vmatprep.subr.bf16.mxu0 0
        %1377 = vmatpush1.bf16.msra.mxu0 0
        %1378 = vmatprep.subr.bf16.mxu0 0
        %1379 = vmatpush1.bf16.msra.mxu0 0
        %1380 = vmatprep.subr.bf16.mxu0 0
        %1381 = vmatpush1.bf16.msra.mxu0 0
        %1382 = vmatprep.subr.bf16.mxu0 0
        %1383 = vmatpush1.bf16.msra.mxu0 0
        %1384 = vmatprep.subr.bf16.mxu0 0
        %1385 = vmatpush1.bf16.msra.mxu0 0
        %1386 = vmatprep.subr.bf16.mxu0 0
        %1387 = vmatpush1.bf16.msra.mxu0 0
        %1388 = vmatprep.subr.bf16.mxu0 0
        %1389 = vmatpush1.bf16.msra.mxu0 %v1370
        %1390 = vmatprep.subr.bf16.mxu0 0
        %1391 = vmatpush1.bf16.msra.mxu0 %v1369
        %1392 = vmatprep.subr.bf16.mxu0 0
        %1393 = vmatpush2.bf16.msra.mxu0 0
        %1394 = vmatprep.subr.bf16.mxu0 0
        %1395 = vmatpush2.bf16.msra.mxu0 0
        %1396 = vmatprep.subr.bf16.mxu0 0
        %1397 = vmatpush2.bf16.msra.mxu0 0
        %1398 = vmatprep.subr.bf16.mxu0 0
        %1399 = vmatpush2.bf16.msra.mxu0 0
        %1400 = vmatprep.subr.bf16.mxu0 0
        %1401 = vmatpush2.bf16.msra.mxu0 0
        %1402 = vmatprep.subr.bf16.mxu0 0
        %1403 = vmatpush2.bf16.msra.mxu0 0
        %1404 = vmatprep.subr.bf16.mxu0 0
        %1405 = vmatpush2.bf16.msra.mxu0 0
        %1406 = vmatprep.subr.bf16.mxu0 0
        %1407 = vmatpush2.bf16.msra.mxu0 0
        %1408 = vmatprep.mubr.bf16.mxu0 0
        %1409 = vmatmul.mubr.bf16.gmra.mxu0 %v1374
        %v1410 = vpop.f32.mrf.mxu0
        %v1411 = vadd.f32 %v1359, %v1410
        %v1412 = vpop.f32.mrf.mxu0
        %v1413 = vpop.f32.mrf.mxu0
        %v1414 = vpop.f32.mrf.mxu0
        %1415 = vdwg.mxu0
        %v1416 = vadd.f32 %v586, %v1411
        %v1417 = vsel %vm620, %v1416, 0.0
        %1418 = vadd.xlane.f32.xlu0 %v1417
        %v1419 = vpop.xlane.xlu0 %1418
        %v1420 = vrcp.pop 32.0
        %v1421 = vmul.f32 %v1419, %v1420
        %v1422 = vsub.f32 %v1416, %v1421
        %v1423 = vmul.f32 %v1422, %v1422
        %v1424 = vsel %vm620, %v1423, 0.0
        %1425 = vadd.xlane.f32.xlu0 %v1424
        %v1426 = vpop.xlane.xlu0 %1425
        %v1427 = vmul.f32 %v1426, %v1420
        %v1428 = vadd.f32 %v1427, 1e-05
        %v1429 = vrsqrt.pop %v1428
        %v1430 = vmul.f32 %v1422, %v1429
        %v1431 = vlaneseq
        %v1432 = vshrl.u32 %v1431, 7
        %v1433 = vsub.s32 0, %v1432
        %v1434 = vrot.slane %v594, %v1433
        %v1435 = vmul.f32 %v1430, %v1434
        %v1436 = vlaneseq
        %v1437 = vshrl.u32 %v1436, 7
        %v1438 = vsub.s32 0, %v1437
        %v1439 = vrot.slane %v595, %v1438
        %v1440 = vadd.f32 %v1435, %v1439
        %v1441 = vpack.c.bf16 %v587, %v587
        %v1442 = vld [vmem:[%s6] sm:$0xf]
        %v1443 = vld [vmem:[%s6 + $0x4] sm:$0xf]
        %v1444 = vld [vmem:[%s6 + $0x8] sm:$0xf]
        %v1445 = vld [vmem:[%s6 + $0xc] sm:$0xf]
        %v1446 = vld [vmem:[%s7] sm:$0x1]
        %v1451 = vunpack.c.l.b16 %v1442
        %v1452 = vunpack.c.l.b16 %v1443
        %v1453 = vunpack.c.l.b16 %v1444
        %v1454 = vunpack.c.l.b16 %v1445
        %v1455 = vpack.c.b16 %v1452, %v1451
        %v1456 = vpack.c.b16 %v1454, %v1453
        %v1460 = vsel %vm620, %v1441, 0
        %1462 = vmatprep.subr.bf16.mxu0 0
        %1463 = vmatpush1.bf16.msra.mxu0 0
        %1464 = vmatprep.subr.bf16.mxu0 0
        %1465 = vmatpush1.bf16.msra.mxu0 0
        %1466 = vmatprep.subr.bf16.mxu0 0
        %1467 = vmatpush1.bf16.msra.mxu0 0
        %1468 = vmatprep.subr.bf16.mxu0 0
        %1469 = vmatpush1.bf16.msra.mxu0 0
        %1470 = vmatprep.subr.bf16.mxu0 0
        %1471 = vmatpush1.bf16.msra.mxu0 0
        %1472 = vmatprep.subr.bf16.mxu0 0
        %1473 = vmatpush1.bf16.msra.mxu0 0
        %1474 = vmatprep.subr.bf16.mxu0 0
        %1475 = vmatpush1.bf16.msra.mxu0 %v1456
        %1476 = vmatprep.subr.bf16.mxu0 0
        %1477 = vmatpush1.bf16.msra.mxu0 %v1455
        %1478 = vmatprep.subr.bf16.mxu0 0
        %1479 = vmatpush2.bf16.msra.mxu0 0
        %1480 = vmatprep.subr.bf16.mxu0 0
        %1481 = vmatpush2.bf16.msra.mxu0 0
        %1482 = vmatprep.subr.bf16.mxu0 0
        %1483 = vmatpush2.bf16.msra.mxu0 0
        %1484 = vmatprep.subr.bf16.mxu0 0
        %1485 = vmatpush2.bf16.msra.mxu0 0
        %1486 = vmatprep.subr.bf16.mxu0 0
        %1487 = vmatpush2.bf16.msra.mxu0 0
        %1488 = vmatprep.subr.bf16.mxu0 0
        %1489 = vmatpush2.bf16.msra.mxu0 0
        %1490 = vmatprep.subr.bf16.mxu0 0
        %1491 = vmatpush2.bf16.msra.mxu0 0
        %1492 = vmatprep.subr.bf16.mxu0 0
        %1493 = vmatpush2.bf16.msra.mxu0 0
        %1494 = vmatprep.mubr.bf16.mxu0 0
        %1495 = vmatmul.mubr.bf16.gmra.mxu0 %v1460
        %v1496 = vpop.f32.mrf.mxu0
        %v1497 = vadd.f32 %v1446, %v1496
        %v1498 = vpop.f32.mrf.mxu0
        %v1499 = vpop.f32.mrf.mxu0
        %v1500 = vpop.f32.mrf.mxu0
        %1501 = vdwg.mxu0
        %v1502 = vpack.c.bf16 %v1497, %v1497
        %v1503 = vld [vmem:[%s8] sm:$0xf]
        %v1504 = vld [vmem:[%s8 + $0x4] sm:$0xf]
        %v1505 = vld [vmem:[%s8 + $0x8] sm:$0xf]
        %v1506 = vld [vmem:[%s8 + $0xc] sm:$0xf]
        %v1507 = vld [vmem:[%s9] sm:$0x1]
        %v1512 = vunpack.c.l.b16 %v1503
        %v1513 = vunpack.c.l.b16 %v1504
        %v1514 = vunpack.c.l.b16 %v1505
        %v1515 = vunpack.c.l.b16 %v1506
        %v1516 = vpack.c.b16 %v1513, %v1512
        %v1517 = vpack.c.b16 %v1515, %v1514
        %v1521 = vsel %vm620, %v1502, 0
        %1523 = vmatprep.subr.bf16.mxu0 0
        %1524 = vmatpush1.bf16.msra.mxu0 0
        %1525 = vmatprep.subr.bf16.mxu0 0
        %1526 = vmatpush1.bf16.msra.mxu0 0
        %1527 = vmatprep.subr.bf16.mxu0 0
        %1528 = vmatpush1.bf16.msra.mxu0 0
        %1529 = vmatprep.subr.bf16.mxu0 0
        %1530 = vmatpush1.bf16.msra.mxu0 0
        %1531 = vmatprep.subr.bf16.mxu0 0
        %1532 = vmatpush1.bf16.msra.mxu0 0
        %1533 = vmatprep.subr.bf16.mxu0 0
        %1534 = vmatpush1.bf16.msra.mxu0 0
        %1535 = vmatprep.subr.bf16.mxu0 0
        %1536 = vmatpush1.bf16.msra.mxu0 %v1517
        %1537 = vmatprep.subr.bf16.mxu0 0
        %1538 = vmatpush1.bf16.msra.mxu0 %v1516
        %1539 = vmatprep.subr.bf16.mxu0 0
        %1540 = vmatpush2.bf16.msra.mxu0 0
        %1541 = vmatprep.subr.bf16.mxu0 0
        %1542 = vmatpush2.bf16.msra.mxu0 0
        %1543 = vmatprep.subr.bf16.mxu0 0
        %1544 = vmatpush2.bf16.msra.mxu0 0
        %1545 = vmatprep.subr.bf16.mxu0 0
        %1546 = vmatpush2.bf16.msra.mxu0 0
        %1547 = vmatprep.subr.bf16.mxu0 0
        %1548 = vmatpush2.bf16.msra.mxu0 0
        %1549 = vmatprep.subr.bf16.mxu0 0
        %1550 = vmatpush2.bf16.msra.mxu0 0
        %1551 = vmatprep.subr.bf16.mxu0 0
        %1552 = vmatpush2.bf16.msra.mxu0 0
        %1553 = vmatprep.subr.bf16.mxu0 0
        %1554 = vmatpush2.bf16.msra.mxu0 0
        %1555 = vmatprep.mubr.bf16.mxu0 0
        %1556 = vmatmul.mubr.bf16.gmra.mxu0 %v1521
        %v1557 = vpop.f32.mrf.mxu0
        %v1558 = vadd.f32 %v1507, %v1557
        %v1559 = vpop.f32.mrf.mxu0
        %v1560 = vpop.f32.mrf.mxu0
        %v1561 = vpop.f32.mrf.mxu0
        %1562 = vdwg.mxu0
        %v1563 = vlaneseq
        %v1564 = vshrl.u32 %v1563, 7
        %v1565 = vsub.s32 0, %v1564
        %v1566 = vrot.slane %v1558, %v1565
        %v1567 = vadd.f32 %v1440, %v1566
        %v1568 = vsel %vm620, %v1567, 0.0
        %1569 = vadd.xlane.f32.xlu0 %v1568
        %v1570 = vpop.xlane.xlu0 %1569
        %v1571 = vmul.f32 %v1570, %v1420
        %v1572 = vsub.f32 %v1567, %v1571
        %v1573 = vmul.f32 %v1572, %v1572
        %v1574 = vsel %vm620, %v1573, 0.0
        %1575 = vadd.xlane.f32.xlu0 %v1574
        %v1576 = vpop.xlane.xlu0 %1575
        %v1577 = vmul.f32 %v1576, %v1420
        %v1578 = vadd.f32 %v1577, 1e-05
        %v1579 = vrsqrt.pop %v1578
        %v1580 = vmul.f32 %v1572, %v1579
        %v1581 = vlaneseq
        %v1582 = vshrl.u32 %v1581, 7
        %v1583 = vsub.s32 1, %v1582
        %v1584 = vrot.slane %v594, %v1583
        %v1585 = vmul.f32 %v1580, %v1584
        %v1586 = vlaneseq
        %v1587 = vshrl.u32 %v1586, 7
        %v1588 = vsub.s32 1, %v1587
        %v1589 = vrot.slane %v595, %v1588
        %v1590 = vadd.f32 %v1585, %v1589
        %v1591 = vpack.c.bf16 %v1590, %v1590
        %v1592 = vld [vmem:[%s10] sm:$0xff]
        %v1593 = vld [vmem:[%s10 + $0x8] sm:$0xff]
        %v1594 = vld [vmem:[%s10 + $0x10] sm:$0xff]
        %v1595 = vld [vmem:[%s10 + $0x18] sm:$0xff]
        %v1596 = vld [vmem:[%s10 + $0x20] sm:$0xff]
        %v1597 = vld [vmem:[%s10 + $0x28] sm:$0xff]
        %v1598 = vld [vmem:[%s10 + $0x30] sm:$0xff]
        %v1599 = vld [vmem:[%s10 + $0x38] sm:$0xff]
        %v1600 = vld [vmem:[%s10 + $0x40] sm:$0xff]
        %v1601 = vld [vmem:[%s10 + $0x48] sm:$0xff]
        %v1602 = vld [vmem:[%s10 + $0x50] sm:$0xff]
        %v1603 = vld [vmem:[%s10 + $0x58] sm:$0xff]
        %v1604 = vld [vmem:[%s10 + $0x60] sm:$0xff]
        %v1605 = vld [vmem:[%s10 + $0x68] sm:$0xff]
        %v1606 = vld [vmem:[%s10 + $0x70] sm:$0xff]
        %v1607 = vld [vmem:[%s10 + $0x78] sm:$0xff]
        %v1608 = vld [vmem:[%s10 + $0x80] sm:$0xff]
        %v1609 = vld [vmem:[%s10 + $0x88] sm:$0xff]
        %v1610 = vld [vmem:[%s10 + $0x90] sm:$0xff]
        %v1611 = vld [vmem:[%s10 + $0x98] sm:$0xff]
        %v1612 = vld [vmem:[%s10 + $0xa0] sm:$0xff]
        %v1613 = vld [vmem:[%s10 + $0xa8] sm:$0xff]
        %v1614 = vld [vmem:[%s10 + $0xb0] sm:$0xff]
        %v1615 = vld [vmem:[%s10 + $0xb8] sm:$0xff]
        %v1616 = vld [vmem:[%s10 + $0xc0] sm:$0xff]
        %v1617 = vld [vmem:[%s10 + $0xc8] sm:$0xff]
        %v1618 = vld [vmem:[%s10 + $0xd0] sm:$0xff]
        %v1619 = vld [vmem:[%s10 + $0xd8] sm:$0xff]
        %v1620 = vld [vmem:[%s10 + $0xe0] sm:$0xff]
        %v1621 = vld [vmem:[%s10 + $0xe8] sm:$0xff]
        %v1622 = vld [vmem:[%s10 + $0xf0] sm:$0xff]
        %v1623 = vld [vmem:[%s10 + $0xf8] sm:$0xff]
        %v1624 = vld [vmem:[%s11] sm:$0xff]
        %v1625 = vld [vmem:[%s11 + $0x8] sm:$0xff]
        %v1628 = vlaneseq
        %v1629 = vshrl.u32 %v1628, 7
        %v1630 = vsub.s32 0, %v1629
        %v1631 = vrot.slane %v1624, %v1630
        %v1632 = vlaneseq
        %v1633 = vshrl.u32 %v1632, 7
        %v1634 = vsub.s32 1, %v1633
        %v1635 = vrot.slane %v1624, %v1634
        %v1636 = vlaneseq
        %v1637 = vshrl.u32 %v1636, 7
        %v1638 = vsub.s32 2, %v1637
        %v1639 = vrot.slane %v1624, %v1638
        %v1640 = vlaneseq
        %v1641 = vshrl.u32 %v1640, 7
        %v1642 = vsub.s32 3, %v1641
        %v1643 = vrot.slane %v1624, %v1642
        %v1644 = vlaneseq
        %v1645 = vshrl.u32 %v1644, 7
        %v1646 = vsub.s32 4, %v1645
        %v1647 = vrot.slane %v1624, %v1646
        %v1648 = vlaneseq
        %v1649 = vshrl.u32 %v1648, 7
        %v1650 = vsub.s32 5, %v1649
        %v1651 = vrot.slane %v1624, %v1650
        %v1652 = vlaneseq
        %v1653 = vshrl.u32 %v1652, 7
        %v1654 = vsub.s32 6, %v1653
        %v1655 = vrot.slane %v1624, %v1654
        %v1656 = vlaneseq
        %v1657 = vshrl.u32 %v1656, 7
        %v1658 = vsub.s32 7, %v1657
        %v1659 = vrot.slane %v1624, %v1658
        %v1660 = vlaneseq
        %v1661 = vshrl.u32 %v1660, 7
        %v1662 = vsub.s32 0, %v1661
        %v1663 = vrot.slane %v1625, %v1662
        %v1664 = vlaneseq
        %v1665 = vshrl.u32 %v1664, 7
        %v1666 = vsub.s32 1, %v1665
        %v1667 = vrot.slane %v1625, %v1666
        %v1668 = vlaneseq
        %v1669 = vshrl.u32 %v1668, 7
        %v1670 = vsub.s32 2, %v1669
        %v1671 = vrot.slane %v1625, %v1670
        %v1672 = vlaneseq
        %v1673 = vshrl.u32 %v1672, 7
        %v1674 = vsub.s32 3, %v1673
        %v1675 = vrot.slane %v1625, %v1674
        %v1676 = vlaneseq
        %v1677 = vshrl.u32 %v1676, 7
        %v1678 = vsub.s32 4, %v1677
        %v1679 = vrot.slane %v1625, %v1678
        %v1680 = vlaneseq
        %v1681 = vshrl.u32 %v1680, 7
        %v1682 = vsub.s32 5, %v1681
        %v1683 = vrot.slane %v1625, %v1682
        %v1684 = vlaneseq
        %v1685 = vshrl.u32 %v1684, 7
        %v1686 = vsub.s32 6, %v1685
        %v1687 = vrot.slane %v1625, %v1686
        %v1688 = vlaneseq
        %v1689 = vshrl.u32 %v1688, 7
        %v1690 = vsub.s32 7, %v1689
        %v1691 = vrot.slane %v1625, %v1690
        %v1740 = vunpack.c.l.b16 %v1592
        %v1741 = vunpack.c.h.b16 %v1592
        %v1742 = vunpack.c.l.b16 %v1593
        %v1743 = vunpack.c.h.b16 %v1593
        %v1744 = vunpack.c.l.b16 %v1594
        %v1745 = vunpack.c.h.b16 %v1594
        %v1746 = vunpack.c.l.b16 %v1595
        %v1747 = vunpack.c.h.b16 %v1595
        %v1748 = vunpack.c.l.b16 %v1596
        %v1749 = vunpack.c.h.b16 %v1596
        %v1750 = vunpack.c.l.b16 %v1597
        %v1751 = vunpack.c.h.b16 %v1597
        %v1752 = vunpack.c.l.b16 %v1598
        %v1753 = vunpack.c.h.b16 %v1598
        %v1754 = vunpack.c.l.b16 %v1599
        %v1755 = vunpack.c.h.b16 %v1599
        %v1756 = vunpack.c.l.b16 %v1600
        %v1757 = vunpack.c.h.b16 %v1600
        %v1758 = vunpack.c.l.b16 %v1601
        %v1759 = vunpack.c.h.b16 %v1601
        %v1760 = vunpack.c.l.b16 %v1602
        %v1761 = vunpack.c.h.b16 %v1602
        %v1762 = vunpack.c.l.b16 %v1603
        %v1763 = vunpack.c.h.b16 %v1603
        %v1764 = vunpack.c.l.b16 %v1604
        %v1765 = vunpack.c.h.b16 %v1604
        %v1766 = vunpack.c.l.b16 %v1605
        %v1767 = vunpack.c.h.b16 %v1605
        %v1768 = vunpack.c.l.b16 %v1606
        %v1769 = vunpack.c.h.b16 %v1606
        %v1770 = vunpack.c.l.b16 %v1607
        %v1771 = vunpack.c.h.b16 %v1607
        %v1772 = vunpack.c.l.b16 %v1608
        %v1773 = vunpack.c.h.b16 %v1608
        %v1774 = vunpack.c.l.b16 %v1609
        %v1775 = vunpack.c.h.b16 %v1609
        %v1776 = vunpack.c.l.b16 %v1610
        %v1777 = vunpack.c.h.b16 %v1610
        %v1778 = vunpack.c.l.b16 %v1611
        %v1779 = vunpack.c.h.b16 %v1611
        %v1780 = vunpack.c.l.b16 %v1612
        %v1781 = vunpack.c.h.b16 %v1612
        %v1782 = vunpack.c.l.b16 %v1613
        %v1783 = vunpack.c.h.b16 %v1613
        %v1784 = vunpack.c.l.b16 %v1614
        %v1785 = vunpack.c.h.b16 %v1614
        %v1786 = vunpack.c.l.b16 %v1615
        %v1787 = vunpack.c.h.b16 %v1615
        %v1788 = vunpack.c.l.b16 %v1616
        %v1789 = vunpack.c.h.b16 %v1616
        %v1790 = vunpack.c.l.b16 %v1617
        %v1791 = vunpack.c.h.b16 %v1617
        %v1792 = vunpack.c.l.b16 %v1618
        %v1793 = vunpack.c.h.b16 %v1618
        %v1794 = vunpack.c.l.b16 %v1619
        %v1795 = vunpack.c.h.b16 %v1619
        %v1796 = vunpack.c.l.b16 %v1620
        %v1797 = vunpack.c.h.b16 %v1620
        %v1798 = vunpack.c.l.b16 %v1621
        %v1799 = vunpack.c.h.b16 %v1621
        %v1800 = vunpack.c.l.b16 %v1622
        %v1801 = vunpack.c.h.b16 %v1622
        %v1802 = vunpack.c.l.b16 %v1623
        %v1803 = vunpack.c.h.b16 %v1623
        %v1804 = vpack.c.b16 %v1756, %v1740
        %v1805 = vpack.c.b16 %v1757, %v1741
        %v1806 = vpack.c.b16 %v1758, %v1742
        %v1807 = vpack.c.b16 %v1759, %v1743
        %v1808 = vpack.c.b16 %v1760, %v1744
        %v1809 = vpack.c.b16 %v1761, %v1745
        %v1810 = vpack.c.b16 %v1762, %v1746
        %v1811 = vpack.c.b16 %v1763, %v1747
        %v1812 = vpack.c.b16 %v1764, %v1748
        %v1813 = vpack.c.b16 %v1765, %v1749
        %v1814 = vpack.c.b16 %v1766, %v1750
        %v1815 = vpack.c.b16 %v1767, %v1751
        %v1816 = vpack.c.b16 %v1768, %v1752
        %v1817 = vpack.c.b16 %v1769, %v1753
        %v1818 = vpack.c.b16 %v1770, %v1754
        %v1819 = vpack.c.b16 %v1771, %v1755
        %v1820 = vpack.c.b16 %v1788, %v1772
        %v1821 = vpack.c.b16 %v1789, %v1773
        %v1822 = vpack.c.b16 %v1790, %v1774
        %v1823 = vpack.c.b16 %v1791, %v1775
        %v1824 = vpack.c.b16 %v1792, %v1776
        %v1825 = vpack.c.b16 %v1793, %v1777
        %v1826 = vpack.c.b16 %v1794, %v1778
        %v1827 = vpack.c.b16 %v1795, %v1779
        %v1828 = vpack.c.b16 %v1796, %v1780
        %v1829 = vpack.c.b16 %v1797, %v1781
        %v1830 = vpack.c.b16 %v1798, %v1782
        %v1831 = vpack.c.b16 %v1799, %v1783
        %v1832 = vpack.c.b16 %v1800, %v1784
        %v1833 = vpack.c.b16 %v1801, %v1785
        %v1834 = vpack.c.b16 %v1802, %v1786
        %v1835 = vpack.c.b16 %v1803, %v1787
        %v1869 = vsel %vm620, %v1591, 0
        %1871 = vmatprep.subr.bf16.mxu0 0
        %1872 = vmatpush1.bf16.msra.mxu0 0
        %1873 = vmatprep.subr.bf16.mxu0 0
        %1874 = vmatpush1.bf16.msra.mxu0 0
        %1875 = vmatprep.subr.bf16.mxu0 0
        %1876 = vmatpush1.bf16.msra.mxu0 0
        %1877 = vmatprep.subr.bf16.mxu0 0
        %1878 = vmatpush1.bf16.msra.mxu0 0
        %1879 = vmatprep.subr.bf16.mxu0 0
        %1880 = vmatpush1.bf16.msra.mxu0 0
        %1881 = vmatprep.subr.bf16.mxu0 0
        %1882 = vmatpush1.bf16.msra.mxu0 0
        %1883 = vmatprep.subr.bf16.mxu0 %v1821
        %1884 = vmatpush1.bf16.msra.mxu0 %v1820
        %1885 = vmatprep.subr.bf16.mxu0 %v1805
        %1886 = vmatpush1.bf16.msra.mxu0 %v1804
        %1887 = vmatprep.subr.bf16.mxu0 0
        %1888 = vmatpush2.bf16.msra.mxu0 0
        %1889 = vmatprep.subr.bf16.mxu0 0
        %1890 = vmatpush2.bf16.msra.mxu0 0
        %1891 = vmatprep.subr.bf16.mxu0 0
        %1892 = vmatpush2.bf16.msra.mxu0 0
        %1893 = vmatprep.subr.bf16.mxu0 0
        %1894 = vmatpush2.bf16.msra.mxu0 0
        %1895 = vmatprep.subr.bf16.mxu0 0
        %1896 = vmatpush2.bf16.msra.mxu0 0
        %1897 = vmatprep.subr.bf16.mxu0 0
        %1898 = vmatpush2.bf16.msra.mxu0 0
        %1899 = vmatprep.subr.bf16.mxu0 0
        %1900 = vmatpush2.bf16.msra.mxu0 0
        %1901 = vmatprep.subr.bf16.mxu0 0
        %1902 = vmatpush2.bf16.msra.mxu0 0
        %1903 = vmatprep.mubr.bf16.mxu0 0
        %1904 = vmatmul.mubr.bf16.gmra.mxu0 %v1869
        %v1905 = vpop.f32.mrf.mxu0
        %v1906 = vadd.f32 %v1631, %v1905
        %v1907 = vpop.f32.mrf.mxu0
        %v1908 = vadd.f32 %v1635, %v1907
        %v1909 = vpop.f32.mrf.mxu0
        %v1910 = vpop.f32.mrf.mxu0
        %1911 = vdwg.mxu0
        %1912 = vmatprep.subr.bf16.mxu0 0
        %1913 = vmatpush1.bf16.msra.mxu0 0
        %1914 = vmatprep.subr.bf16.mxu0 0
        %1915 = vmatpush1.bf16.msra.mxu0 0
        %1916 = vmatprep.subr.bf16.mxu0 0
        %1917 = vmatpush1.bf16.msra.mxu0 0
        %1918 = vmatprep.subr.bf16.mxu0 0
        %1919 = vmatpush1.bf16.msra.mxu0 0
        %1920 = vmatprep.subr.bf16.mxu0 0
        %1921 = vmatpush1.bf16.msra.mxu0 0
        %1922 = vmatprep.subr.bf16.mxu0 0
        %1923 = vmatpush1.bf16.msra.mxu0 0
        %1924 = vmatprep.subr.bf16.mxu0 %v1823
        %1925 = vmatpush1.bf16.msra.mxu0 %v1822
        %1926 = vmatprep.subr.bf16.mxu0 %v1807
        %1927 = vmatpush1.bf16.msra.mxu0 %v1806
        %1928 = vmatprep.subr.bf16.mxu0 0
        %1929 = vmatpush2.bf16.msra.mxu0 0
        %1930 = vmatprep.subr.bf16.mxu0 0
        %1931 = vmatpush2.bf16.msra.mxu0 0
        %1932 = vmatprep.subr.bf16.mxu0 0
        %1933 = vmatpush2.bf16.msra.mxu0 0
        %1934 = vmatprep.subr.bf16.mxu0 0
        %1935 = vmatpush2.bf16.msra.mxu0 0
        %1936 = vmatprep.subr.bf16.mxu0 0
        %1937 = vmatpush2.bf16.msra.mxu0 0
        %1938 = vmatprep.subr.bf16.mxu0 0
        %1939 = vmatpush2.bf16.msra.mxu0 0
        %1940 = vmatprep.subr.bf16.mxu0 0
        %1941 = vmatpush2.bf16.msra.mxu0 0
        %1942 = vmatprep.subr.bf16.mxu0 0
        %1943 = vmatpush2.bf16.msra.mxu0 0
        %1944 = vmatprep.mubr.bf16.mxu0 0
        %1945 = vmatmul.mubr.bf16.gmra.mxu0 %v1869
        %v1946 = vpop.f32.mrf.mxu0
        %v1947 = vadd.f32 %v1639, %v1946
        %v1948 = vpop.f32.mrf.mxu0
        %v1949 = vadd.f32 %v1643, %v1948
        %v1950 = vpop.f32.mrf.mxu0
        %v1951 = vpop.f32.mrf.mxu0
        %1952 = vdwg.mxu0
        %1953 = vmatprep.subr.bf16.mxu0 0
        %1954 = vmatpush1.bf16.msra.mxu0 0
        %1955 = vmatprep.subr.bf16.mxu0 0
        %1956 = vmatpush1.bf16.msra.mxu0 0
        %1957 = vmatprep.subr.bf16.mxu0 0
        %1958 = vmatpush1.bf16.msra.mxu0 0
        %1959 = vmatprep.subr.bf16.mxu0 0
        %1960 = vmatpush1.bf16.msra.mxu0 0
        %1961 = vmatprep.subr.bf16.mxu0 0
        %1962 = vmatpush1.bf16.msra.mxu0 0
        %1963 = vmatprep.subr.bf16.mxu0 0
        %1964 = vmatpush1.bf16.msra.mxu0 0
        %1965 = vmatprep.subr.bf16.mxu0 %v1825
        %1966 = vmatpush1.bf16.msra.mxu0 %v1824
        %1967 = vmatprep.subr.bf16.mxu0 %v1809
        %1968 = vmatpush1.bf16.msra.mxu0 %v1808
        %1969 = vmatprep.subr.bf16.mxu0 0
        %1970 = vmatpush2.bf16.msra.mxu0 0
        %1971 = vmatprep.subr.bf16.mxu0 0
        %1972 = vmatpush2.bf16.msra.mxu0 0
        %1973 = vmatprep.subr.bf16.mxu0 0
        %1974 = vmatpush2.bf16.msra.mxu0 0
        %1975 = vmatprep.subr.bf16.mxu0 0
        %1976 = vmatpush2.bf16.msra.mxu0 0
        %1977 = vmatprep.subr.bf16.mxu0 0
        %1978 = vmatpush2.bf16.msra.mxu0 0
        %1979 = vmatprep.subr.bf16.mxu0 0
        %1980 = vmatpush2.bf16.msra.mxu0 0
        %1981 = vmatprep.subr.bf16.mxu0 0
        %1982 = vmatpush2.bf16.msra.mxu0 0
        %1983 = vmatprep.subr.bf16.mxu0 0
        %1984 = vmatpush2.bf16.msra.mxu0 0
        %1985 = vmatprep.mubr.bf16.mxu0 0
        %1986 = vmatmul.mubr.bf16.gmra.mxu0 %v1869
        %v1987 = vpop.f32.mrf.mxu0
        %v1988 = vadd.f32 %v1647, %v1987
        %v1989 = vpop.f32.mrf.mxu0
        %v1990 = vadd.f32 %v1651, %v1989
        %v1991 = vpop.f32.mrf.mxu0
        %v1992 = vpop.f32.mrf.mxu0
        %1993 = vdwg.mxu0
        %1994 = vmatprep.subr.bf16.mxu0 0
        %1995 = vmatpush1.bf16.msra.mxu0 0
        %1996 = vmatprep.subr.bf16.mxu0 0
        %1997 = vmatpush1.bf16.msra.mxu0 0
        %1998 = vmatprep.subr.bf16.mxu0 0
        %1999 = vmatpush1.bf16.msra.mxu0 0
        %2000 = vmatprep.subr.bf16.mxu0 0
        %2001 = vmatpush1.bf16.msra.mxu0 0
        %2002 = vmatprep.subr.bf16.mxu0 0
        %2003 = vmatpush1.bf16.msra.mxu0 0
        %2004 = vmatprep.subr.bf16.mxu0 0
        %2005 = vmatpush1.bf16.msra.mxu0 0
        %2006 = vmatprep.subr.bf16.mxu0 %v1827
        %2007 = vmatpush1.bf16.msra.mxu0 %v1826
        %2008 = vmatprep.subr.bf16.mxu0 %v1811
        %2009 = vmatpush1.bf16.msra.mxu0 %v1810
        %2010 = vmatprep.subr.bf16.mxu0 0
        %2011 = vmatpush2.bf16.msra.mxu0 0
        %2012 = vmatprep.subr.bf16.mxu0 0
        %2013 = vmatpush2.bf16.msra.mxu0 0
        %2014 = vmatprep.subr.bf16.mxu0 0
        %2015 = vmatpush2.bf16.msra.mxu0 0
        %2016 = vmatprep.subr.bf16.mxu0 0
        %2017 = vmatpush2.bf16.msra.mxu0 0
        %2018 = vmatprep.subr.bf16.mxu0 0
        %2019 = vmatpush2.bf16.msra.mxu0 0
        %2020 = vmatprep.subr.bf16.mxu0 0
        %2021 = vmatpush2.bf16.msra.mxu0 0
        %2022 = vmatprep.subr.bf16.mxu0 0
        %2023 = vmatpush2.bf16.msra.mxu0 0
        %2024 = vmatprep.subr.bf16.mxu0 0
        %2025 = vmatpush2.bf16.msra.mxu0 0
        %2026 = vmatprep.mubr.bf16.mxu0 0
        %2027 = vmatmul.mubr.bf16.gmra.mxu0 %v1869
        %v2028 = vpop.f32.mrf.mxu0
        %v2029 = vadd.f32 %v1655, %v2028
        %v2030 = vpop.f32.mrf.mxu0
        %v2031 = vadd.f32 %v1659, %v2030
        %v2032 = vpop.f32.mrf.mxu0
        %v2033 = vpop.f32.mrf.mxu0
        %2034 = vdwg.mxu0
        %2035 = vmatprep.subr.bf16.mxu0 0
        %2036 = vmatpush1.bf16.msra.mxu0 0
        %2037 = vmatprep.subr.bf16.mxu0 0
        %2038 = vmatpush1.bf16.msra.mxu0 0
        %2039 = vmatprep.subr.bf16.mxu0 0
        %2040 = vmatpush1.bf16.msra.mxu0 0
        %2041 = vmatprep.subr.bf16.mxu0 0
        %2042 = vmatpush1.bf16.msra.mxu0 0
        %2043 = vmatprep.subr.bf16.mxu0 0
        %2044 = vmatpush1.bf16.msra.mxu0 0
        %2045 = vmatprep.subr.bf16.mxu0 0
        %2046 = vmatpush1.bf16.msra.mxu0 0
        %2047 = vmatprep.subr.bf16.mxu0 %v1829
        %2048 = vmatpush1.bf16.msra.mxu0 %v1828
        %2049 = vmatprep.subr.bf16.mxu0 %v1813
        %2050 = vmatpush1.bf16.msra.mxu0 %v1812
        %2051 = vmatprep.subr.bf16.mxu0 0
        %2052 = vmatpush2.bf16.msra.mxu0 0
        %2053 = vmatprep.subr.bf16.mxu0 0
        %2054 = vmatpush2.bf16.msra.mxu0 0
        %2055 = vmatprep.subr.bf16.mxu0 0
        %2056 = vmatpush2.bf16.msra.mxu0 0
        %2057 = vmatprep.subr.bf16.mxu0 0
        %2058 = vmatpush2.bf16.msra.mxu0 0
        %2059 = vmatprep.subr.bf16.mxu0 0
        %2060 = vmatpush2.bf16.msra.mxu0 0
        %2061 = vmatprep.subr.bf16.mxu0 0
        %2062 = vmatpush2.bf16.msra.mxu0 0
        %2063 = vmatprep.subr.bf16.mxu0 0
        %2064 = vmatpush2.bf16.msra.mxu0 0
        %2065 = vmatprep.subr.bf16.mxu0 0
        %2066 = vmatpush2.bf16.msra.mxu0 0
        %2067 = vmatprep.mubr.bf16.mxu0 0
        %2068 = vmatmul.mubr.bf16.gmra.mxu0 %v1869
        %v2069 = vpop.f32.mrf.mxu0
        %v2070 = vadd.f32 %v1663, %v2069
        %v2071 = vpop.f32.mrf.mxu0
        %v2072 = vadd.f32 %v1667, %v2071
        %v2073 = vpop.f32.mrf.mxu0
        %v2074 = vpop.f32.mrf.mxu0
        %2075 = vdwg.mxu0
        %2076 = vmatprep.subr.bf16.mxu0 0
        %2077 = vmatpush1.bf16.msra.mxu0 0
        %2078 = vmatprep.subr.bf16.mxu0 0
        %2079 = vmatpush1.bf16.msra.mxu0 0
        %2080 = vmatprep.subr.bf16.mxu0 0
        %2081 = vmatpush1.bf16.msra.mxu0 0
        %2082 = vmatprep.subr.bf16.mxu0 0
        %2083 = vmatpush1.bf16.msra.mxu0 0
        %2084 = vmatprep.subr.bf16.mxu0 0
        %2085 = vmatpush1.bf16.msra.mxu0 0
        %2086 = vmatprep.subr.bf16.mxu0 0
        %2087 = vmatpush1.bf16.msra.mxu0 0
        %2088 = vmatprep.subr.bf16.mxu0 %v1831
        %2089 = vmatpush1.bf16.msra.mxu0 %v1830
        %2090 = vmatprep.subr.bf16.mxu0 %v1815
        %2091 = vmatpush1.bf16.msra.mxu0 %v1814
        %2092 = vmatprep.subr.bf16.mxu0 0
        %2093 = vmatpush2.bf16.msra.mxu0 0
        %2094 = vmatprep.subr.bf16.mxu0 0
        %2095 = vmatpush2.bf16.msra.mxu0 0
        %2096 = vmatprep.subr.bf16.mxu0 0
        %2097 = vmatpush2.bf16.msra.mxu0 0
        %2098 = vmatprep.subr.bf16.mxu0 0
        %2099 = vmatpush2.bf16.msra.mxu0 0
        %2100 = vmatprep.subr.bf16.mxu0 0
        %2101 = vmatpush2.bf16.msra.mxu0 0
        %2102 = vmatprep.subr.bf16.mxu0 0
        %2103 = vmatpush2.bf16.msra.mxu0 0
        %2104 = vmatprep.subr.bf16.mxu0 0
        %2105 = vmatpush2.bf16.msra.mxu0 0
        %2106 = vmatprep.subr.bf16.mxu0 0
        %2107 = vmatpush2.bf16.msra.mxu0 0
        %2108 = vmatprep.mubr.bf16.mxu0 0
        %2109 = vmatmul.mubr.bf16.gmra.mxu0 %v1869
        %v2110 = vpop.f32.mrf.mxu0
        %v2111 = vadd.f32 %v1671, %v2110
        %v2112 = vpop.f32.mrf.mxu0
        %v2113 = vadd.f32 %v1675, %v2112
        %v2114 = vpop.f32.mrf.mxu0
        %v2115 = vpop.f32.mrf.mxu0
        %2116 = vdwg.mxu0
        %2117 = vmatprep.subr.bf16.mxu0 0
        %2118 = vmatpush1.bf16.msra.mxu0 0
        %2119 = vmatprep.subr.bf16.mxu0 0
        %2120 = vmatpush1.bf16.msra.mxu0 0
        %2121 = vmatprep.subr.bf16.mxu0 0
        %2122 = vmatpush1.bf16.msra.mxu0 0
        %2123 = vmatprep.subr.bf16.mxu0 0
        %2124 = vmatpush1.bf16.msra.mxu0 0
        %2125 = vmatprep.subr.bf16.mxu0 0
        %2126 = vmatpush1.bf16.msra.mxu0 0
        %2127 = vmatprep.subr.bf16.mxu0 0
        %2128 = vmatpush1.bf16.msra.mxu0 0
        %2129 = vmatprep.subr.bf16.mxu0 %v1833
        %2130 = vmatpush1.bf16.msra.mxu0 %v1832
        %2131 = vmatprep.subr.bf16.mxu0 %v1817
        %2132 = vmatpush1.bf16.msra.mxu0 %v1816
        %2133 = vmatprep.subr.bf16.mxu0 0
        %2134 = vmatpush2.bf16.msra.mxu0 0
        %2135 = vmatprep.subr.bf16.mxu0 0
        %2136 = vmatpush2.bf16.msra.mxu0 0
        %2137 = vmatprep.subr.bf16.mxu0 0
        %2138 = vmatpush2.bf16.msra.mxu0 0
        %2139 = vmatprep.subr.bf16.mxu0 0
        %2140 = vmatpush2.bf16.msra.mxu0 0
        %2141 = vmatprep.subr.bf16.mxu0 0
        %2142 = vmatpush2.bf16.msra.mxu0 0
        %2143 = vmatprep.subr.bf16.mxu0 0
        %2144 = vmatpush2.bf16.msra.mxu0 0
        %2145 = vmatprep.subr.bf16.mxu0 0
        %2146 = vmatpush2.bf16.msra.mxu0 0
        %2147 = vmatprep.subr.bf16.mxu0 0
        %2148 = vmatpush2.bf16.msra.mxu0 0
        %2149 = vmatprep.mubr.bf16.mxu0 0
        %2150 = vmatmul.mubr.bf16.gmra.mxu0 %v1869
        %v2151 = vpop.f32.mrf.mxu0
        %v2152 = vadd.f32 %v1679, %v2151
        %v2153 = vpop.f32.mrf.mxu0
        %v2154 = vadd.f32 %v1683, %v2153
        %v2155 = vpop.f32.mrf.mxu0
        %v2156 = vpop.f32.mrf.mxu0
        %2157 = vdwg.mxu0
        %2158 = vmatprep.subr.bf16.mxu0 0
        %2159 = vmatpush1.bf16.msra.mxu0 0
        %2160 = vmatprep.subr.bf16.mxu0 0
        %2161 = vmatpush1.bf16.msra.mxu0 0
        %2162 = vmatprep.subr.bf16.mxu0 0
        %2163 = vmatpush1.bf16.msra.mxu0 0
        %2164 = vmatprep.subr.bf16.mxu0 0
        %2165 = vmatpush1.bf16.msra.mxu0 0
        %2166 = vmatprep.subr.bf16.mxu0 0
        %2167 = vmatpush1.bf16.msra.mxu0 0
        %2168 = vmatprep.subr.bf16.mxu0 0
        %2169 = vmatpush1.bf16.msra.mxu0 0
        %2170 = vmatprep.subr.bf16.mxu0 %v1835
        %2171 = vmatpush1.bf16.msra.mxu0 %v1834
        %2172 = vmatprep.subr.bf16.mxu0 %v1819
        %2173 = vmatpush1.bf16.msra.mxu0 %v1818
        %2174 = vmatprep.subr.bf16.mxu0 0
        %2175 = vmatpush2.bf16.msra.mxu0 0
        %2176 = vmatprep.subr.bf16.mxu0 0
        %2177 = vmatpush2.bf16.msra.mxu0 0
        %2178 = vmatprep.subr.bf16.mxu0 0
        %2179 = vmatpush2.bf16.msra.mxu0 0
        %2180 = vmatprep.subr.bf16.mxu0 0
        %2181 = vmatpush2.bf16.msra.mxu0 0
        %2182 = vmatprep.subr.bf16.mxu0 0
        %2183 = vmatpush2.bf16.msra.mxu0 0
        %2184 = vmatprep.subr.bf16.mxu0 0
        %2185 = vmatpush2.bf16.msra.mxu0 0
        %2186 = vmatprep.subr.bf16.mxu0 0
        %2187 = vmatpush2.bf16.msra.mxu0 0
        %2188 = vmatprep.subr.bf16.mxu0 0
        %2189 = vmatpush2.bf16.msra.mxu0 0
        %2190 = vmatprep.mubr.bf16.mxu0 0
        %2191 = vmatmul.mubr.bf16.gmra.mxu0 %v1869
        %v2192 = vpop.f32.mrf.mxu0
        %v2193 = vadd.f32 %v1687, %v2192
        %v2194 = vpop.f32.mrf.mxu0
        %v2195 = vadd.f32 %v1691, %v2194
        %v2196 = vpop.f32.mrf.mxu0
        %v2197 = vpop.f32.mrf.mxu0
        %2198 = vdwg.mxu0
        %v2199 = vmax.f32 %v1906, 0.0
        %v2200 = vmax.f32 %v1908, 0.0
        %v2201 = vmax.f32 %v1947, 0.0
        %v2202 = vmax.f32 %v1949, 0.0
        %v2203 = vmax.f32 %v1988, 0.0
        %v2204 = vmax.f32 %v1990, 0.0
        %v2205 = vmax.f32 %v2029, 0.0
        %v2206 = vmax.f32 %v2031, 0.0
        %v2207 = vmax.f32 %v2070, 0.0
        %v2208 = vmax.f32 %v2072, 0.0
        %v2209 = vmax.f32 %v2111, 0.0
        %v2210 = vmax.f32 %v2113, 0.0
        %v2211 = vmax.f32 %v2152, 0.0
        %v2212 = vmax.f32 %v2154, 0.0
        %v2213 = vmax.f32 %v2193, 0.0
        %v2214 = vmax.f32 %v2195, 0.0
        %v2215 = vpack.c.bf16 %v2199, %v2199
        %v2216 = vpack.c.bf16 %v2200, %v2200
        %v2217 = vpack.c.bf16 %v2201, %v2201
        %v2218 = vpack.c.bf16 %v2202, %v2202
        %v2219 = vpack.c.bf16 %v2203, %v2203
        %v2220 = vpack.c.bf16 %v2204, %v2204
        %v2221 = vpack.c.bf16 %v2205, %v2205
        %v2222 = vpack.c.bf16 %v2206, %v2206
        %v2223 = vpack.c.bf16 %v2207, %v2207
        %v2224 = vpack.c.bf16 %v2208, %v2208
        %v2225 = vpack.c.bf16 %v2209, %v2209
        %v2226 = vpack.c.bf16 %v2210, %v2210
        %v2227 = vpack.c.bf16 %v2211, %v2211
        %v2228 = vpack.c.bf16 %v2212, %v2212
        %v2229 = vpack.c.bf16 %v2213, %v2213
        %v2230 = vpack.c.bf16 %v2214, %v2214
        %v2231 = vld [vmem:[%s12] sm:$0xff]
        %v2232 = vld [vmem:[%s12 + $0x8] sm:$0xff]
        %v2233 = vld [vmem:[%s12 + $0x10] sm:$0xff]
        %v2234 = vld [vmem:[%s12 + $0x18] sm:$0xff]
        %v2235 = vld [vmem:[%s12 + $0x20] sm:$0xff]
        %v2236 = vld [vmem:[%s12 + $0x28] sm:$0xff]
        %v2237 = vld [vmem:[%s12 + $0x30] sm:$0xff]
        %v2238 = vld [vmem:[%s12 + $0x38] sm:$0xff]
        %v2239 = vld [vmem:[%s12 + $0x40] sm:$0xff]
        %v2240 = vld [vmem:[%s12 + $0x48] sm:$0xff]
        %v2241 = vld [vmem:[%s12 + $0x50] sm:$0xff]
        %v2242 = vld [vmem:[%s12 + $0x58] sm:$0xff]
        %v2243 = vld [vmem:[%s12 + $0x60] sm:$0xff]
        %v2244 = vld [vmem:[%s12 + $0x68] sm:$0xff]
        %v2245 = vld [vmem:[%s12 + $0x70] sm:$0xff]
        %v2246 = vld [vmem:[%s12 + $0x78] sm:$0xff]
        %v2247 = vld [vmem:[%s12 + $0x80] sm:$0xff]
        %v2248 = vld [vmem:[%s12 + $0x88] sm:$0xff]
        %v2249 = vld [vmem:[%s12 + $0x90] sm:$0xff]
        %v2250 = vld [vmem:[%s12 + $0x98] sm:$0xff]
        %v2251 = vld [vmem:[%s12 + $0xa0] sm:$0xff]
        %v2252 = vld [vmem:[%s12 + $0xa8] sm:$0xff]
        %v2253 = vld [vmem:[%s12 + $0xb0] sm:$0xff]
        %v2254 = vld [vmem:[%s12 + $0xb8] sm:$0xff]
        %v2255 = vld [vmem:[%s12 + $0xc0] sm:$0xff]
        %v2256 = vld [vmem:[%s12 + $0xc8] sm:$0xff]
        %v2257 = vld [vmem:[%s12 + $0xd0] sm:$0xff]
        %v2258 = vld [vmem:[%s12 + $0xd8] sm:$0xff]
        %v2259 = vld [vmem:[%s12 + $0xe0] sm:$0xff]
        %v2260 = vld [vmem:[%s12 + $0xe8] sm:$0xff]
        %v2261 = vld [vmem:[%s12 + $0xf0] sm:$0xff]
        %v2262 = vld [vmem:[%s12 + $0xf8] sm:$0xff]
        %v2263 = vld [vmem:[%s13] sm:$0x1]
        %v2265 = vlaneseq
        %v2266 = vshrl.u32 %v2265, 7
        %v2267 = vsub.s32 0, %v2266
        %v2268 = vrot.slane %v2263, %v2267
        %v2302 = vunpack.c.l.b16 %v2231
        %v2303 = vunpack.c.h.b16 %v2231
        %v2304 = vunpack.c.l.b16 %v2232
        %v2305 = vunpack.c.h.b16 %v2232
        %v2306 = vunpack.c.l.b16 %v2233
        %v2307 = vunpack.c.h.b16 %v2233
        %v2308 = vunpack.c.l.b16 %v2234
        %v2309 = vunpack.c.h.b16 %v2234
        %v2310 = vunpack.c.l.b16 %v2235
        %v2311 = vunpack.c.h.b16 %v2235
        %v2312 = vunpack.c.l.b16 %v2236
        %v2313 = vunpack.c.h.b16 %v2236
        %v2314 = vunpack.c.l.b16 %v2237
        %v2315 = vunpack.c.h.b16 %v2237
        %v2316 = vunpack.c.l.b16 %v2238
        %v2317 = vunpack.c.h.b16 %v2238
        %v2318 = vunpack.c.l.b16 %v2239
        %v2319 = vunpack.c.h.b16 %v2239
        %v2320 = vunpack.c.l.b16 %v2240
        %v2321 = vunpack.c.h.b16 %v2240
        %v2322 = vunpack.c.l.b16 %v2241
        %v2323 = vunpack.c.h.b16 %v2241
        %v2324 = vunpack.c.l.b16 %v2242
        %v2325 = vunpack.c.h.b16 %v2242
        %v2326 = vunpack.c.l.b16 %v2243
        %v2327 = vunpack.c.h.b16 %v2243
        %v2328 = vunpack.c.l.b16 %v2244
        %v2329 = vunpack.c.h.b16 %v2244
        %v2330 = vunpack.c.l.b16 %v2245
        %v2331 = vunpack.c.h.b16 %v2245
        %v2332 = vunpack.c.l.b16 %v2246
        %v2333 = vunpack.c.h.b16 %v2246
        %v2334 = vunpack.c.l.b16 %v2247
        %v2335 = vunpack.c.h.b16 %v2247
        %v2336 = vunpack.c.l.b16 %v2248
        %v2337 = vunpack.c.h.b16 %v2248
        %v2338 = vunpack.c.l.b16 %v2249
        %v2339 = vunpack.c.h.b16 %v2249
        %v2340 = vunpack.c.l.b16 %v2250
        %v2341 = vunpack.c.h.b16 %v2250
        %v2342 = vunpack.c.l.b16 %v2251
        %v2343 = vunpack.c.h.b16 %v2251
        %v2344 = vunpack.c.l.b16 %v2252
        %v2345 = vunpack.c.h.b16 %v2252
        %v2346 = vunpack.c.l.b16 %v2253
        %v2347 = vunpack.c.h.b16 %v2253
        %v2348 = vunpack.c.l.b16 %v2254
        %v2349 = vunpack.c.h.b16 %v2254
        %v2350 = vunpack.c.l.b16 %v2255
        %v2351 = vunpack.c.h.b16 %v2255
        %v2352 = vunpack.c.l.b16 %v2256
        %v2353 = vunpack.c.h.b16 %v2256
        %v2354 = vunpack.c.l.b16 %v2257
        %v2355 = vunpack.c.h.b16 %v2257
        %v2356 = vunpack.c.l.b16 %v2258
        %v2357 = vunpack.c.h.b16 %v2258
        %v2358 = vunpack.c.l.b16 %v2259
        %v2359 = vunpack.c.h.b16 %v2259
        %v2360 = vunpack.c.l.b16 %v2260
        %v2361 = vunpack.c.h.b16 %v2260
        %v2362 = vunpack.c.l.b16 %v2261
        %v2363 = vunpack.c.h.b16 %v2261
        %v2364 = vunpack.c.l.b16 %v2262
        %v2365 = vunpack.c.h.b16 %v2262
        %v2366 = vpack.c.b16 %v2318, %v2302
        %v2367 = vpack.c.b16 %v2319, %v2303
        %v2368 = vpack.c.b16 %v2320, %v2304
        %v2369 = vpack.c.b16 %v2321, %v2305
        %v2370 = vpack.c.b16 %v2322, %v2306
        %v2371 = vpack.c.b16 %v2323, %v2307
        %v2372 = vpack.c.b16 %v2324, %v2308
        %v2373 = vpack.c.b16 %v2325, %v2309
        %v2374 = vpack.c.b16 %v2326, %v2310
        %v2375 = vpack.c.b16 %v2327, %v2311
        %v2376 = vpack.c.b16 %v2328, %v2312
        %v2377 = vpack.c.b16 %v2329, %v2313
        %v2378 = vpack.c.b16 %v2330, %v2314
        %v2379 = vpack.c.b16 %v2331, %v2315
        %v2380 = vpack.c.b16 %v2332, %v2316
        %v2381 = vpack.c.b16 %v2333, %v2317
        %v2382 = vpack.c.b16 %v2350, %v2334
        %v2383 = vpack.c.b16 %v2351, %v2335
        %v2384 = vpack.c.b16 %v2352, %v2336
        %v2385 = vpack.c.b16 %v2353, %v2337
        %v2386 = vpack.c.b16 %v2354, %v2338
        %v2387 = vpack.c.b16 %v2355, %v2339
        %v2388 = vpack.c.b16 %v2356, %v2340
        %v2389 = vpack.c.b16 %v2357, %v2341
        %v2390 = vpack.c.b16 %v2358, %v2342
        %v2391 = vpack.c.b16 %v2359, %v2343
        %v2392 = vpack.c.b16 %v2360, %v2344
        %v2393 = vpack.c.b16 %v2361, %v2345
        %v2394 = vpack.c.b16 %v2362, %v2346
        %v2395 = vpack.c.b16 %v2363, %v2347
        %v2396 = vpack.c.b16 %v2364, %v2348
        %v2397 = vpack.c.b16 %v2365, %v2349
        %2430 = vmatprep.subr.bf16.mxu0 0
        %2431 = vmatpush1.bf16.xpose.msra.mxu0 0
        %2432 = vmatprep.subr.bf16.mxu0 0
        %2433 = vmatpush1.bf16.xpose.msra.mxu0 0
        %2434 = vmatprep.subr.bf16.mxu0 0
        %2435 = vmatpush1.bf16.xpose.msra.mxu0 0
        %2436 = vmatprep.subr.bf16.mxu0 0
        %2437 = vmatpush1.bf16.xpose.msra.mxu0 0
        %2438 = vmatprep.subr.bf16.mxu0 0
        %2439 = vmatpush1.bf16.xpose.msra.mxu0 0
        %2440 = vmatprep.subr.bf16.mxu0 0
        %2441 = vmatpush1.bf16.xpose.msra.mxu0 0
        %2442 = vmatprep.subr.bf16.mxu0 %v2383
        %2443 = vmatpush1.bf16.xpose.msra.mxu0 %v2382
        %2444 = vmatprep.subr.bf16.mxu0 %v2367
        %2445 = vmatpush1.bf16.xpose.msra.mxu0 %v2366
        %2446 = vmatprep.subr.bf16.mxu0 0
        %2447 = vmatpush2.bf16.xpose.msra.mxu0 0
        %2448 = vmatprep.subr.bf16.mxu0 0
        %2449 = vmatpush2.bf16.xpose.msra.mxu0 0
        %2450 = vmatprep.subr.bf16.mxu0 0
        %2451 = vmatpush2.bf16.xpose.msra.mxu0 0
        %2452 = vmatprep.subr.bf16.mxu0 0
        %2453 = vmatpush2.bf16.xpose.msra.mxu0 0
        %2454 = vmatprep.subr.bf16.mxu0 0
        %2455 = vmatpush2.bf16.xpose.msra.mxu0 0
        %2456 = vmatprep.subr.bf16.mxu0 0
        %2457 = vmatpush2.bf16.xpose.msra.mxu0 0
        %2458 = vmatprep.subr.bf16.mxu0 0
        %2459 = vmatpush2.bf16.xpose.msra.mxu0 0
        %2460 = vmatprep.subr.bf16.mxu0 0
        %2461 = vmatpush2.bf16.xpose.msra.mxu0 0
        %2462 = vmatprep.mubr.bf16.mxu0 %v2216
        %2463 = vmatmul.mubr.bf16.gmra.mxu0 %v2215
        %v2464 = vpop.f32.mrf.mxu0
        %v2465 = vadd.f32 %v2268, %v2464
        %v2466 = vpop.f32.mrf.mxu0
        %v2467 = vpop.f32.mrf.mxu0
        %v2468 = vpop.f32.mrf.mxu0
        %2469 = vdwg.mxu0
        %2470 = vmatprep.subr.bf16.mxu0 0
        %2471 = vmatpush1.bf16.xpose.msra.mxu0 0
        %2472 = vmatprep.subr.bf16.mxu0 0
        %2473 = vmatpush1.bf16.xpose.msra.mxu0 0
        %2474 = vmatprep.subr.bf16.mxu0 0
        %2475 = vmatpush1.bf16.xpose.msra.mxu0 0
        %2476 = vmatprep.subr.bf16.mxu0 0
        %2477 = vmatpush1.bf16.xpose.msra.mxu0 0
        %2478 = vmatprep.subr.bf16.mxu0 0
        %2479 = vmatpush1.bf16.xpose.msra.mxu0 0
        %2480 = vmatprep.subr.bf16.mxu0 0
        %2481 = vmatpush1.bf16.xpose.msra.mxu0 0
        %2482 = vmatprep.subr.bf16.mxu0 %v2385
        %2483 = vmatpush1.bf16.xpose.msra.mxu0 %v2384
        %2484 = vmatprep.subr.bf16.mxu0 %v2369
        %2485 = vmatpush1.bf16.xpose.msra.mxu0 %v2368
        %2486 = vmatprep.subr.bf16.mxu0 0
        %2487 = vmatpush2.bf16.xpose.msra.mxu0 0
        %2488 = vmatprep.subr.bf16.mxu0 0
        %2489 = vmatpush2.bf16.xpose.msra.mxu0 0
        %2490 = vmatprep.subr.bf16.mxu0 0
        %2491 = vmatpush2.bf16.xpose.msra.mxu0 0
        %2492 = vmatprep.subr.bf16.mxu0 0
        %2493 = vmatpush2.bf16.xpose.msra.mxu0 0
        %2494 = vmatprep.subr.bf16.mxu0 0
        %2495 = vmatpush2.bf16.xpose.msra.mxu0 0
        %2496 = vmatprep.subr.bf16.mxu0 0
        %2497 = vmatpush2.bf16.xpose.msra.mxu0 0
        %2498 = vmatprep.subr.bf16.mxu0 0
        %2499 = vmatpush2.bf16.xpose.msra.mxu0 0
        %2500 = vmatprep.subr.bf16.mxu0 0
        %2501 = vmatpush2.bf16.xpose.msra.mxu0 0
        %2502 = vmatprep.mubr.bf16.mxu0 %v2218
        %2503 = vmatmul.mubr.bf16.gmra.mxu0 %v2217
        %v2504 = vpop.f32.mrf.mxu0
        %v2505 = vadd.f32 %v2465, %v2504
        %v2506 = vpop.f32.mrf.mxu0
        %v2507 = vpop.f32.mrf.mxu0
        %v2508 = vpop.f32.mrf.mxu0
        %2509 = vdwg.mxu0
        %2510 = vmatprep.subr.bf16.mxu0 0
        %2511 = vmatpush1.bf16.xpose.msra.mxu0 0
        %2512 = vmatprep.subr.bf16.mxu0 0
        %2513 = vmatpush1.bf16.xpose.msra.mxu0 0
        %2514 = vmatprep.subr.bf16.mxu0 0
        %2515 = vmatpush1.bf16.xpose.msra.mxu0 0
        %2516 = vmatprep.subr.bf16.mxu0 0
        %2517 = vmatpush1.bf16.xpose.msra.mxu0 0
        %2518 = vmatprep.subr.bf16.mxu0 0
        %2519 = vmatpush1.bf16.xpose.msra.mxu0 0
        %2520 = vmatprep.subr.bf16.mxu0 0
        %2521 = vmatpush1.bf16.xpose.msra.mxu0 0
        %2522 = vmatprep.subr.bf16.mxu0 %v2387
        %2523 = vmatpush1.bf16.xpose.msra.mxu0 %v2386
        %2524 = vmatprep.subr.bf16.mxu0 %v2371
        %2525 = vmatpush1.bf16.xpose.msra.mxu0 %v2370
        %2526 = vmatprep.subr.bf16.mxu0 0
        %2527 = vmatpush2.bf16.xpose.msra.mxu0 0
        %2528 = vmatprep.subr.bf16.mxu0 0
        %2529 = vmatpush2.bf16.xpose.msra.mxu0 0
        %2530 = vmatprep.subr.bf16.mxu0 0
        %2531 = vmatpush2.bf16.xpose.msra.mxu0 0
        %2532 = vmatprep.subr.bf16.mxu0 0
        %2533 = vmatpush2.bf16.xpose.msra.mxu0 0
        %2534 = vmatprep.subr.bf16.mxu0 0
        %2535 = vmatpush2.bf16.xpose.msra.mxu0 0
        %2536 = vmatprep.subr.bf16.mxu0 0
        %2537 = vmatpush2.bf16.xpose.msra.mxu0 0
        %2538 = vmatprep.subr.bf16.mxu0 0
        %2539 = vmatpush2.bf16.xpose.msra.mxu0 0
        %2540 = vmatprep.subr.bf16.mxu0 0
        %2541 = vmatpush2.bf16.xpose.msra.mxu0 0
        %2542 = vmatprep.mubr.bf16.mxu0 %v2220
        %2543 = vmatmul.mubr.bf16.gmra.mxu0 %v2219
        %v2544 = vpop.f32.mrf.mxu0
        %v2545 = vadd.f32 %v2505, %v2544
        %v2546 = vpop.f32.mrf.mxu0
        %v2547 = vpop.f32.mrf.mxu0
        %v2548 = vpop.f32.mrf.mxu0
        %2549 = vdwg.mxu0
        %2550 = vmatprep.subr.bf16.mxu0 0
        %2551 = vmatpush1.bf16.xpose.msra.mxu0 0
        %2552 = vmatprep.subr.bf16.mxu0 0
        %2553 = vmatpush1.bf16.xpose.msra.mxu0 0
        %2554 = vmatprep.subr.bf16.mxu0 0
        %2555 = vmatpush1.bf16.xpose.msra.mxu0 0
        %2556 = vmatprep.subr.bf16.mxu0 0
        %2557 = vmatpush1.bf16.xpose.msra.mxu0 0
        %2558 = vmatprep.subr.bf16.mxu0 0
        %2559 = vmatpush1.bf16.xpose.msra.mxu0 0
        %2560 = vmatprep.subr.bf16.mxu0 0
        %2561 = vmatpush1.bf16.xpose.msra.mxu0 0
        %2562 = vmatprep.subr.bf16.mxu0 %v2389
        %2563 = vmatpush1.bf16.xpose.msra.mxu0 %v2388
        %2564 = vmatprep.subr.bf16.mxu0 %v2373
        %2565 = vmatpush1.bf16.xpose.msra.mxu0 %v2372
        %2566 = vmatprep.subr.bf16.mxu0 0
        %2567 = vmatpush2.bf16.xpose.msra.mxu0 0
        %2568 = vmatprep.subr.bf16.mxu0 0
        %2569 = vmatpush2.bf16.xpose.msra.mxu0 0
        %2570 = vmatprep.subr.bf16.mxu0 0
        %2571 = vmatpush2.bf16.xpose.msra.mxu0 0
        %2572 = vmatprep.subr.bf16.mxu0 0
        %2573 = vmatpush2.bf16.xpose.msra.mxu0 0
        %2574 = vmatprep.subr.bf16.mxu0 0
        %2575 = vmatpush2.bf16.xpose.msra.mxu0 0
        %2576 = vmatprep.subr.bf16.mxu0 0
        %2577 = vmatpush2.bf16.xpose.msra.mxu0 0
        %2578 = vmatprep.subr.bf16.mxu0 0
        %2579 = vmatpush2.bf16.xpose.msra.mxu0 0
        %2580 = vmatprep.subr.bf16.mxu0 0
        %2581 = vmatpush2.bf16.xpose.msra.mxu0 0
        %2582 = vmatprep.mubr.bf16.mxu0 %v2222
        %2583 = vmatmul.mubr.bf16.gmra.mxu0 %v2221
        %v2584 = vpop.f32.mrf.mxu0
        %v2585 = vadd.f32 %v2545, %v2584
        %v2586 = vpop.f32.mrf.mxu0
        %v2587 = vpop.f32.mrf.mxu0
        %v2588 = vpop.f32.mrf.mxu0
        %2589 = vdwg.mxu0
        %2590 = vmatprep.subr.bf16.mxu0 0
        %2591 = vmatpush1.bf16.xpose.msra.mxu0 0
        %2592 = vmatprep.subr.bf16.mxu0 0
        %2593 = vmatpush1.bf16.xpose.msra.mxu0 0
        %2594 = vmatprep.subr.bf16.mxu0 0
        %2595 = vmatpush1.bf16.xpose.msra.mxu0 0
        %2596 = vmatprep.subr.bf16.mxu0 0
        %2597 = vmatpush1.bf16.xpose.msra.mxu0 0
        %2598 = vmatprep.subr.bf16.mxu0 0
        %2599 = vmatpush1.bf16.xpose.msra.mxu0 0
        %2600 = vmatprep.subr.bf16.mxu0 0
        %2601 = vmatpush1.bf16.xpose.msra.mxu0 0
        %2602 = vmatprep.subr.bf16.mxu0 %v2391
        %2603 = vmatpush1.bf16.xpose.msra.mxu0 %v2390
        %2604 = vmatprep.subr.bf16.mxu0 %v2375
        %2605 = vmatpush1.bf16.xpose.msra.mxu0 %v2374
        %2606 = vmatprep.subr.bf16.mxu0 0
        %2607 = vmatpush2.bf16.xpose.msra.mxu0 0
        %2608 = vmatprep.subr.bf16.mxu0 0
        %2609 = vmatpush2.bf16.xpose.msra.mxu0 0
        %2610 = vmatprep.subr.bf16.mxu0 0
        %2611 = vmatpush2.bf16.xpose.msra.mxu0 0
        %2612 = vmatprep.subr.bf16.mxu0 0
        %2613 = vmatpush2.bf16.xpose.msra.mxu0 0
        %2614 = vmatprep.subr.bf16.mxu0 0
        %2615 = vmatpush2.bf16.xpose.msra.mxu0 0
        %2616 = vmatprep.subr.bf16.mxu0 0
        %2617 = vmatpush2.bf16.xpose.msra.mxu0 0
        %2618 = vmatprep.subr.bf16.mxu0 0
        %2619 = vmatpush2.bf16.xpose.msra.mxu0 0
        %2620 = vmatprep.subr.bf16.mxu0 0
        %2621 = vmatpush2.bf16.xpose.msra.mxu0 0
        %2622 = vmatprep.mubr.bf16.mxu0 %v2224
        %2623 = vmatmul.mubr.bf16.gmra.mxu0 %v2223
        %v2624 = vpop.f32.mrf.mxu0
        %v2625 = vadd.f32 %v2585, %v2624
        %v2626 = vpop.f32.mrf.mxu0
        %v2627 = vpop.f32.mrf.mxu0
        %v2628 = vpop.f32.mrf.mxu0
        %2629 = vdwg.mxu0
        %2630 = vmatprep.subr.bf16.mxu0 0
        %2631 = vmatpush1.bf16.xpose.msra.mxu0 0
        %2632 = vmatprep.subr.bf16.mxu0 0
        %2633 = vmatpush1.bf16.xpose.msra.mxu0 0
        %2634 = vmatprep.subr.bf16.mxu0 0
        %2635 = vmatpush1.bf16.xpose.msra.mxu0 0
        %2636 = vmatprep.subr.bf16.mxu0 0
        %2637 = vmatpush1.bf16.xpose.msra.mxu0 0
        %2638 = vmatprep.subr.bf16.mxu0 0
        %2639 = vmatpush1.bf16.xpose.msra.mxu0 0
        %2640 = vmatprep.subr.bf16.mxu0 0
        %2641 = vmatpush1.bf16.xpose.msra.mxu0 0
        %2642 = vmatprep.subr.bf16.mxu0 %v2393
        %2643 = vmatpush1.bf16.xpose.msra.mxu0 %v2392
        %2644 = vmatprep.subr.bf16.mxu0 %v2377
        %2645 = vmatpush1.bf16.xpose.msra.mxu0 %v2376
        %2646 = vmatprep.subr.bf16.mxu0 0
        %2647 = vmatpush2.bf16.xpose.msra.mxu0 0
        %2648 = vmatprep.subr.bf16.mxu0 0
        %2649 = vmatpush2.bf16.xpose.msra.mxu0 0
        %2650 = vmatprep.subr.bf16.mxu0 0
        %2651 = vmatpush2.bf16.xpose.msra.mxu0 0
        %2652 = vmatprep.subr.bf16.mxu0 0
        %2653 = vmatpush2.bf16.xpose.msra.mxu0 0
        %2654 = vmatprep.subr.bf16.mxu0 0
        %2655 = vmatpush2.bf16.xpose.msra.mxu0 0
        %2656 = vmatprep.subr.bf16.mxu0 0
        %2657 = vmatpush2.bf16.xpose.msra.mxu0 0
        %2658 = vmatprep.subr.bf16.mxu0 0
        %2659 = vmatpush2.bf16.xpose.msra.mxu0 0
        %2660 = vmatprep.subr.bf16.mxu0 0
        %2661 = vmatpush2.bf16.xpose.msra.mxu0 0
        %2662 = vmatprep.mubr.bf16.mxu0 %v2226
        %2663 = vmatmul.mubr.bf16.gmra.mxu0 %v2225
        %v2664 = vpop.f32.mrf.mxu0
        %v2665 = vadd.f32 %v2625, %v2664
        %v2666 = vpop.f32.mrf.mxu0
        %v2667 = vpop.f32.mrf.mxu0
        %v2668 = vpop.f32.mrf.mxu0
        %2669 = vdwg.mxu0
        %2670 = vmatprep.subr.bf16.mxu0 0
        %2671 = vmatpush1.bf16.xpose.msra.mxu0 0
        %2672 = vmatprep.subr.bf16.mxu0 0
        %2673 = vmatpush1.bf16.xpose.msra.mxu0 0
        %2674 = vmatprep.subr.bf16.mxu0 0
        %2675 = vmatpush1.bf16.xpose.msra.mxu0 0
        %2676 = vmatprep.subr.bf16.mxu0 0
        %2677 = vmatpush1.bf16.xpose.msra.mxu0 0
        %2678 = vmatprep.subr.bf16.mxu0 0
        %2679 = vmatpush1.bf16.xpose.msra.mxu0 0
        %2680 = vmatprep.subr.bf16.mxu0 0
        %2681 = vmatpush1.bf16.xpose.msra.mxu0 0
        %2682 = vmatprep.subr.bf16.mxu0 %v2395
        %2683 = vmatpush1.bf16.xpose.msra.mxu0 %v2394
        %2684 = vmatprep.subr.bf16.mxu0 %v2379
        %2685 = vmatpush1.bf16.xpose.msra.mxu0 %v2378
        %2686 = vmatprep.subr.bf16.mxu0 0
        %2687 = vmatpush2.bf16.xpose.msra.mxu0 0
        %2688 = vmatprep.subr.bf16.mxu0 0
        %2689 = vmatpush2.bf16.xpose.msra.mxu0 0
        %2690 = vmatprep.subr.bf16.mxu0 0
        %2691 = vmatpush2.bf16.xpose.msra.mxu0 0
        %2692 = vmatprep.subr.bf16.mxu0 0
        %2693 = vmatpush2.bf16.xpose.msra.mxu0 0
        %2694 = vmatprep.subr.bf16.mxu0 0
        %2695 = vmatpush2.bf16.xpose.msra.mxu0 0
        %2696 = vmatprep.subr.bf16.mxu0 0
        %2697 = vmatpush2.bf16.xpose.msra.mxu0 0
        %2698 = vmatprep.subr.bf16.mxu0 0
        %2699 = vmatpush2.bf16.xpose.msra.mxu0 0
        %2700 = vmatprep.subr.bf16.mxu0 0
        %2701 = vmatpush2.bf16.xpose.msra.mxu0 0
        %2702 = vmatprep.mubr.bf16.mxu0 %v2228
        %2703 = vmatmul.mubr.bf16.gmra.mxu0 %v2227
        %v2704 = vpop.f32.mrf.mxu0
        %v2705 = vadd.f32 %v2665, %v2704
        %v2706 = vpop.f32.mrf.mxu0
        %v2707 = vpop.f32.mrf.mxu0
        %v2708 = vpop.f32.mrf.mxu0
        %2709 = vdwg.mxu0
        %2710 = vmatprep.subr.bf16.mxu0 0
        %2711 = vmatpush1.bf16.xpose.msra.mxu0 0
        %2712 = vmatprep.subr.bf16.mxu0 0
        %2713 = vmatpush1.bf16.xpose.msra.mxu0 0
        %2714 = vmatprep.subr.bf16.mxu0 0
        %2715 = vmatpush1.bf16.xpose.msra.mxu0 0
        %2716 = vmatprep.subr.bf16.mxu0 0
        %2717 = vmatpush1.bf16.xpose.msra.mxu0 0
        %2718 = vmatprep.subr.bf16.mxu0 0
        %2719 = vmatpush1.bf16.xpose.msra.mxu0 0
        %2720 = vmatprep.subr.bf16.mxu0 0
        %2721 = vmatpush1.bf16.xpose.msra.mxu0 0
        %2722 = vmatprep.subr.bf16.mxu0 %v2397
        %2723 = vmatpush1.bf16.xpose.msra.mxu0 %v2396
        %2724 = vmatprep.subr.bf16.mxu0 %v2381
        %2725 = vmatpush1.bf16.xpose.msra.mxu0 %v2380
        %2726 = vmatprep.subr.bf16.mxu0 0
        %2727 = vmatpush2.bf16.xpose.msra.mxu0 0
        %2728 = vmatprep.subr.bf16.mxu0 0
        %2729 = vmatpush2.bf16.xpose.msra.mxu0 0
        %2730 = vmatprep.subr.bf16.mxu0 0
        %2731 = vmatpush2.bf16.xpose.msra.mxu0 0
        %2732 = vmatprep.subr.bf16.mxu0 0
        %2733 = vmatpush2.bf16.xpose.msra.mxu0 0
        %2734 = vmatprep.subr.bf16.mxu0 0
        %2735 = vmatpush2.bf16.xpose.msra.mxu0 0
        %2736 = vmatprep.subr.bf16.mxu0 0
        %2737 = vmatpush2.bf16.xpose.msra.mxu0 0
        %2738 = vmatprep.subr.bf16.mxu0 0
        %2739 = vmatpush2.bf16.xpose.msra.mxu0 0
        %2740 = vmatprep.subr.bf16.mxu0 0
        %2741 = vmatpush2.bf16.xpose.msra.mxu0 0
        %2742 = vmatprep.mubr.bf16.mxu0 %v2230
        %2743 = vmatmul.mubr.bf16.gmra.mxu0 %v2229
        %v2744 = vpop.f32.mrf.mxu0
        %v2745 = vadd.f32 %v2705, %v2744
        %v2746 = vpop.f32.mrf.mxu0
        %v2747 = vpop.f32.mrf.mxu0
        %v2748 = vpop.f32.mrf.mxu0
        %2749 = vdwg.mxu0
        %v2750 = vadd.f32 %v1590, %v2745
        %v2751 = vsel %vm620, %v2750, 0.0
        %2752 = vadd.xlane.f32.xlu0 %v2751
        %v2753 = vpop.xlane.xlu0 %2752
        %v2754 = vmul.f32 %v2753, %v1420
        %v2755 = vsub.f32 %v2750, %v2754
        %v2756 = vmul.f32 %v2755, %v2755
        %v2757 = vsel %vm620, %v2756, 0.0
        %2758 = vadd.xlane.f32.xlu0 %v2757
        %v2759 = vpop.xlane.xlu0 %2758
        %v2760 = vmul.f32 %v2759, %v1420
        %v2761 = vadd.f32 %v2760, 1e-05
        %v2762 = vrsqrt.pop %v2761
        %v2763 = vmul.f32 %v2755, %v2762
        %v2764 = vlaneseq
        %v2765 = vshrl.u32 %v2764, 7
        %v2766 = vsub.s32 2, %v2765
        %v2767 = vrot.slane %v594, %v2766
        %v2768 = vmul.f32 %v2763, %v2767
        %v2769 = vlaneseq
        %v2770 = vshrl.u32 %v2769, 7
        %v2771 = vsub.s32 2, %v2770
        %v2772 = vrot.slane %v595, %v2771
        %v2773 = vadd.f32 %v2768, %v2772
        %s2774 = scalar_lea.vmem %s14, 4
        %v2775 = vld [vmem:[%s2774] sm:$0x7]
        %s2776 = scalar_lea.vmem %s15, 4
        %v2777 = vld [vmem:[%s2776] sm:$0x7]
        %v2778 = vpack.c.bf16 %v2773, %v2773
        %s2779 = scalar_lea.vmem %s2, 16
        %v2780 = vld [vmem:[%s2779] sm:$0xf]
        %v2781 = vld [vmem:[%s2779 + $0x4] sm:$0xf]
        %v2782 = vld [vmem:[%s2779 + $0x8] sm:$0xf]
        %v2783 = vld [vmem:[%s2779 + $0xc] sm:$0xf]
        %s2784 = scalar_lea.vmem %s3, 1
        %v2785 = vld [vmem:[%s2784] sm:$0x1]
        %v2787 = vlaneseq
        %v2788 = vshrl.u32 %v2787, 7
        %v2789 = vsub.s32 0, %v2788
        %v2790 = vrot.slane %v2785, %v2789
        %v2796 = vunpack.c.l.b16 %v2780
        %v2797 = vunpack.c.l.b16 %v2781
        %v2798 = vunpack.c.l.b16 %v2782
        %v2799 = vunpack.c.l.b16 %v2783
        %v2800 = vpack.c.b16 %v2797, %v2796
        %v2801 = vpack.c.b16 %v2799, %v2798
        %v2805 = vsel %vm620, %v2778, 0
        %2807 = vmatprep.subr.bf16.mxu0 0
        %2808 = vmatpush1.bf16.msra.mxu0 0
        %2809 = vmatprep.subr.bf16.mxu0 0
        %2810 = vmatpush1.bf16.msra.mxu0 0
        %2811 = vmatprep.subr.bf16.mxu0 0
        %2812 = vmatpush1.bf16.msra.mxu0 0
        %2813 = vmatprep.subr.bf16.mxu0 0
        %2814 = vmatpush1.bf16.msra.mxu0 0
        %2815 = vmatprep.subr.bf16.mxu0 0
        %2816 = vmatpush1.bf16.msra.mxu0 0
        %2817 = vmatprep.subr.bf16.mxu0 0
        %2818 = vmatpush1.bf16.msra.mxu0 0
        %2819 = vmatprep.subr.bf16.mxu0 0
        %2820 = vmatpush1.bf16.msra.mxu0 %v2801
        %2821 = vmatprep.subr.bf16.mxu0 0
        %2822 = vmatpush1.bf16.msra.mxu0 %v2800
        %2823 = vmatprep.subr.bf16.mxu0 0
        %2824 = vmatpush2.bf16.msra.mxu0 0
        %2825 = vmatprep.subr.bf16.mxu0 0
        %2826 = vmatpush2.bf16.msra.mxu0 0
        %2827 = vmatprep.subr.bf16.mxu0 0
        %2828 = vmatpush2.bf16.msra.mxu0 0
        %2829 = vmatprep.subr.bf16.mxu0 0
        %2830 = vmatpush2.bf16.msra.mxu0 0
        %2831 = vmatprep.subr.bf16.mxu0 0
        %2832 = vmatpush2.bf16.msra.mxu0 0
        %2833 = vmatprep.subr.bf16.mxu0 0
        %2834 = vmatpush2.bf16.msra.mxu0 0
        %2835 = vmatprep.subr.bf16.mxu0 0
        %2836 = vmatpush2.bf16.msra.mxu0 0
        %2837 = vmatprep.subr.bf16.mxu0 0
        %2838 = vmatpush2.bf16.msra.mxu0 0
        %2839 = vmatprep.mubr.bf16.mxu0 0
        %2840 = vmatmul.mubr.bf16.gmra.mxu0 %v2805
        %v2841 = vpop.f32.mrf.mxu0
        %v2842 = vadd.f32 %v2790, %v2841
        %v2843 = vpop.f32.mrf.mxu0
        %v2844 = vpop.f32.mrf.mxu0
        %v2845 = vpop.f32.mrf.mxu0
        %2846 = vdwg.mxu0
        %2848 = vrot.lane.b32.xlu0 %v2842, 96
        %v2849 = vpop.permute.xlu0 %2848
        %v2850 = vsel %vm667, %v2842, 0
        %v2852 = vsel %vm667, %v2849, 0
        %2854 = vmatprep.subr.mxu0 0.0
        %2855 = vmatpush1.xpose.msra.mxu0 0.0
        %2856 = vmatprep.subr.mxu0 0.0
        %2857 = vmatpush1.xpose.msra.mxu0 0.0
        %2858 = vmatprep.subr.mxu0 0.0
        %2859 = vmatpush1.xpose.msra.mxu0 0.0
        %2860 = vmatprep.subr.mxu0 0.0
        %2861 = vmatpush1.xpose.msra.mxu0 0.0
        %2862 = vmatprep.subr.mxu0 0.0
        %2863 = vmatpush1.xpose.msra.mxu0 0.0
        %2864 = vmatprep.subr.mxu0 0.0
        %2865 = vmatpush1.xpose.msra.mxu0 0.0
        %2866 = vmatprep.subr.mxu0 0.0
        %2867 = vmatpush1.xpose.msra.mxu0 0.0
        %2868 = vmatprep.subr.mxu0 0.0
        %2869 = vmatpush1.xpose.msra.mxu0 0.0
        %2870 = vmatprep.subr.mxu0 0.0
        %2871 = vmatpush1.xpose.msra.mxu0 0.0
        %2872 = vmatprep.subr.mxu0 0.0
        %2873 = vmatpush1.xpose.msra.mxu0 0.0
        %2874 = vmatprep.subr.mxu0 0.0
        %2875 = vmatpush1.xpose.msra.mxu0 0.0
        %2876 = vmatprep.subr.mxu0 0.0
        %2877 = vmatpush1.xpose.msra.mxu0 0.0
        %2878 = vmatprep.subr.mxu0 0.0
        %2879 = vmatpush1.xpose.msra.mxu0 0.0
        %2880 = vmatprep.subr.mxu0 0.0
        %2881 = vmatpush1.xpose.msra.mxu0 0.0
        %2882 = vmatprep.subr.mxu0 0.0
        %2883 = vmatpush1.xpose.msra.mxu0 0.0
        %2884 = vmatprep.subr.mxu0 0.0
        %2885 = vmatpush1.xpose.msra.mxu0 %v2852
        %2886 = vmatprep.subr.mxu0 0.0
        %2887 = vmatpush2.xpose.msra.mxu0 0.0
        %2888 = vmatprep.subr.mxu0 0.0
        %2889 = vmatpush2.xpose.msra.mxu0 0.0
        %2890 = vmatprep.subr.mxu0 0.0
        %2891 = vmatpush2.xpose.msra.mxu0 0.0
        %2892 = vmatprep.subr.mxu0 0.0
        %2893 = vmatpush2.xpose.msra.mxu0 0.0
        %2894 = vmatprep.subr.mxu0 0.0
        %2895 = vmatpush2.xpose.msra.mxu0 0.0
        %2896 = vmatprep.subr.mxu0 0.0
        %2897 = vmatpush2.xpose.msra.mxu0 0.0
        %2898 = vmatprep.subr.mxu0 0.0
        %2899 = vmatpush2.xpose.msra.mxu0 0.0
        %2900 = vmatprep.subr.mxu0 0.0
        %2901 = vmatpush2.xpose.msra.mxu0 0.0
        %2902 = vmatprep.subr.mxu0 0.0
        %2903 = vmatpush2.xpose.msra.mxu0 0.0
        %2904 = vmatprep.subr.mxu0 0.0
        %2905 = vmatpush2.xpose.msra.mxu0 0.0
        %2906 = vmatprep.subr.mxu0 0.0
        %2907 = vmatpush2.xpose.msra.mxu0 0.0
        %2908 = vmatprep.subr.mxu0 0.0
        %2909 = vmatpush2.xpose.msra.mxu0 0.0
        %2910 = vmatprep.subr.mxu0 0.0
        %2911 = vmatpush2.xpose.msra.mxu0 0.0
        %2912 = vmatprep.subr.mxu0 0.0
        %2913 = vmatpush2.xpose.msra.mxu0 0.0
        %2914 = vmatprep.subr.mxu0 0.0
        %2915 = vmatpush2.xpose.msra.mxu0 0.0
        %2916 = vmatprep.subr.mxu0 0.0
        %2917 = vmatpush2.xpose.msra.mxu0 0.0
        %2918 = vmatprep.mubr.f32.mxu0 0.0
        %2919 = vmatmul.mubr.f32.gmra.mxu0 %v2850
        %v2920 = vpop.f32.mrf.mxu0
        %v2921 = vadd.f32 0.0, %v2920
        %v2922 = vpop.f32.mrf.mxu0
        %2923 = vdwg.mxu0
        %v2924 = vmul.f32 %v2921, 0.35355338
        %v2925 = vadd.f32 %v2924, %v593
        %v2926 = vsel %vm667, %v2925, -inf
        %2927 = vmax.xlane.f32.xlu0 %v2926
        %v2928 = vpop.xlane.xlu0 %2927
        %v2929 = vsub.f32 %v2925, %v2928
        %v2930 = vmul.f32 %v2929, 1.442695
        %v2931 = vpow.pop %v2930
        %v2932 = vsel %vm667, %v2931, 0.0
        %2933 = vadd.xlane.f32.xlu0 %v2932
        %v2934 = vpop.xlane.xlu0 %2933
        %v2935 = vrcp.pop %v2934
        %v2936 = vmul.f32 %v2931, %v2935
        %2937 = vrot.lane.b32.xlu0 %v2842, 64
        %v2938 = vpop.permute.xlu0 %2937
        %v2941 = vsel %vm667, %v2936, 0
        %2943 = vmatprep.subr.mxu0 0.0
        %2944 = vmatpush1.msra.mxu0 0.0
        %2945 = vmatprep.subr.mxu0 0.0
        %2946 = vmatpush1.msra.mxu0 0.0
        %2947 = vmatprep.subr.mxu0 0.0
        %2948 = vmatpush1.msra.mxu0 0.0
        %2949 = vmatprep.subr.mxu0 0.0
        %2950 = vmatpush1.msra.mxu0 0.0
        %2951 = vmatprep.subr.mxu0 0.0
        %2952 = vmatpush1.msra.mxu0 0.0
        %2953 = vmatprep.subr.mxu0 0.0
        %2954 = vmatpush1.msra.mxu0 0.0
        %2955 = vmatprep.subr.mxu0 0.0
        %2956 = vmatpush1.msra.mxu0 0.0
        %2957 = vmatprep.subr.mxu0 0.0
        %2958 = vmatpush1.msra.mxu0 0.0
        %2959 = vmatprep.subr.mxu0 0.0
        %2960 = vmatpush1.msra.mxu0 0.0
        %2961 = vmatprep.subr.mxu0 0.0
        %2962 = vmatpush1.msra.mxu0 0.0
        %2963 = vmatprep.subr.mxu0 0.0
        %2964 = vmatpush1.msra.mxu0 0.0
        %2965 = vmatprep.subr.mxu0 0.0
        %2966 = vmatpush1.msra.mxu0 0.0
        %2967 = vmatprep.subr.mxu0 0.0
        %2968 = vmatpush1.msra.mxu0 0.0
        %2969 = vmatprep.subr.mxu0 0.0
        %2970 = vmatpush1.msra.mxu0 0.0
        %2971 = vmatprep.subr.mxu0 0.0
        %2972 = vmatpush1.msra.mxu0 0.0
        %2973 = vmatprep.subr.mxu0 0.0
        %2974 = vmatpush1.msra.mxu0 %v2938
        %2975 = vmatprep.subr.mxu0 0.0
        %2976 = vmatpush2.msra.mxu0 0.0
        %2977 = vmatprep.subr.mxu0 0.0
        %2978 = vmatpush2.msra.mxu0 0.0
        %2979 = vmatprep.subr.mxu0 0.0
        %2980 = vmatpush2.msra.mxu0 0.0
        %2981 = vmatprep.subr.mxu0 0.0
        %2982 = vmatpush2.msra.mxu0 0.0
        %2983 = vmatprep.subr.mxu0 0.0
        %2984 = vmatpush2.msra.mxu0 0.0
        %2985 = vmatprep.subr.mxu0 0.0
        %2986 = vmatpush2.msra.mxu0 0.0
        %2987 = vmatprep.subr.mxu0 0.0
        %2988 = vmatpush2.msra.mxu0 0.0
        %2989 = vmatprep.subr.mxu0 0.0
        %2990 = vmatpush2.msra.mxu0 0.0
        %2991 = vmatprep.subr.mxu0 0.0
        %2992 = vmatpush2.msra.mxu0 0.0
        %2993 = vmatprep.subr.mxu0 0.0
        %2994 = vmatpush2.msra.mxu0 0.0
        %2995 = vmatprep.subr.mxu0 0.0
        %2996 = vmatpush2.msra.mxu0 0.0
        %2997 = vmatprep.subr.mxu0 0.0
        %2998 = vmatpush2.msra.mxu0 0.0
        %2999 = vmatprep.subr.mxu0 0.0
        %3000 = vmatpush2.msra.mxu0 0.0
        %3001 = vmatprep.subr.mxu0 0.0
        %3002 = vmatpush2.msra.mxu0 0.0
        %3003 = vmatprep.subr.mxu0 0.0
        %3004 = vmatpush2.msra.mxu0 0.0
        %3005 = vmatprep.subr.mxu0 0.0
        %3006 = vmatpush2.msra.mxu0 0.0
        %3007 = vmatprep.mubr.f32.mxu0 0.0
        %3008 = vmatmul.mubr.f32.gmra.mxu0 %v2941
        %v3009 = vpop.f32.mrf.mxu0
        %v3010 = vadd.f32 0.0, %v3009
        %v3011 = vpop.f32.mrf.mxu0
        %3012 = vdwg.mxu0
        %3013 = vrot.lane.b32.xlu0 %v2842, 120
        %v3014 = vpop.permute.xlu0 %3013
        %3015 = vrot.lane.b32.xlu0 %v2842, 88
        %v3016 = vpop.permute.xlu0 %3015
        %v3017 = vsel %vm667, %v3014, 0
        %v3019 = vsel %vm667, %v3016, 0
        %3021 = vmatprep.subr.mxu0 0.0
        %3022 = vmatpush1.xpose.msra.mxu0 0.0
        %3023 = vmatprep.subr.mxu0 0.0
        %3024 = vmatpush1.xpose.msra.mxu0 0.0
        %3025 = vmatprep.subr.mxu0 0.0
        %3026 = vmatpush1.xpose.msra.mxu0 0.0
        %3027 = vmatprep.subr.mxu0 0.0
        %3028 = vmatpush1.xpose.msra.mxu0 0.0
        %3029 = vmatprep.subr.mxu0 0.0
        %3030 = vmatpush1.xpose.msra.mxu0 0.0
        %3031 = vmatprep.subr.mxu0 0.0
        %3032 = vmatpush1.xpose.msra.mxu0 0.0
        %3033 = vmatprep.subr.mxu0 0.0
        %3034 = vmatpush1.xpose.msra.mxu0 0.0
        %3035 = vmatprep.subr.mxu0 0.0
        %3036 = vmatpush1.xpose.msra.mxu0 0.0
        %3037 = vmatprep.subr.mxu0 0.0
        %3038 = vmatpush1.xpose.msra.mxu0 0.0
        %3039 = vmatprep.subr.mxu0 0.0
        %3040 = vmatpush1.xpose.msra.mxu0 0.0
        %3041 = vmatprep.subr.mxu0 0.0
        %3042 = vmatpush1.xpose.msra.mxu0 0.0
        %3043 = vmatprep.subr.mxu0 0.0
        %3044 = vmatpush1.xpose.msra.mxu0 0.0
        %3045 = vmatprep.subr.mxu0 0.0
        %3046 = vmatpush1.xpose.msra.mxu0 0.0
        %3047 = vmatprep.subr.mxu0 0.0
        %3048 = vmatpush1.xpose.msra.mxu0 0.0
        %3049 = vmatprep.subr.mxu0 0.0
        %3050 = vmatpush1.xpose.msra.mxu0 0.0
        %3051 = vmatprep.subr.mxu0 0.0
        %3052 = vmatpush1.xpose.msra.mxu0 %v3019
        %3053 = vmatprep.subr.mxu0 0.0
        %3054 = vmatpush2.xpose.msra.mxu0 0.0
        %3055 = vmatprep.subr.mxu0 0.0
        %3056 = vmatpush2.xpose.msra.mxu0 0.0
        %3057 = vmatprep.subr.mxu0 0.0
        %3058 = vmatpush2.xpose.msra.mxu0 0.0
        %3059 = vmatprep.subr.mxu0 0.0
        %3060 = vmatpush2.xpose.msra.mxu0 0.0
        %3061 = vmatprep.subr.mxu0 0.0
        %3062 = vmatpush2.xpose.msra.mxu0 0.0
        %3063 = vmatprep.subr.mxu0 0.0
        %3064 = vmatpush2.xpose.msra.mxu0 0.0
        %3065 = vmatprep.subr.mxu0 0.0
        %3066 = vmatpush2.xpose.msra.mxu0 0.0
        %3067 = vmatprep.subr.mxu0 0.0
        %3068 = vmatpush2.xpose.msra.mxu0 0.0
        %3069 = vmatprep.subr.mxu0 0.0
        %3070 = vmatpush2.xpose.msra.mxu0 0.0
        %3071 = vmatprep.subr.mxu0 0.0
        %3072 = vmatpush2.xpose.msra.mxu0 0.0
        %3073 = vmatprep.subr.mxu0 0.0
        %3074 = vmatpush2.xpose.msra.mxu0 0.0
        %3075 = vmatprep.subr.mxu0 0.0
        %3076 = vmatpush2.xpose.msra.mxu0 0.0
        %3077 = vmatprep.subr.mxu0 0.0
        %3078 = vmatpush2.xpose.msra.mxu0 0.0
        %3079 = vmatprep.subr.mxu0 0.0
        %3080 = vmatpush2.xpose.msra.mxu0 0.0
        %3081 = vmatprep.subr.mxu0 0.0
        %3082 = vmatpush2.xpose.msra.mxu0 0.0
        %3083 = vmatprep.subr.mxu0 0.0
        %3084 = vmatpush2.xpose.msra.mxu0 0.0
        %3085 = vmatprep.mubr.f32.mxu0 0.0
        %3086 = vmatmul.mubr.f32.gmra.mxu0 %v3017
        %v3087 = vpop.f32.mrf.mxu0
        %v3088 = vadd.f32 0.0, %v3087
        %v3089 = vpop.f32.mrf.mxu0
        %3090 = vdwg.mxu0
        %v3091 = vmul.f32 %v3088, 0.35355338
        %v3092 = vadd.f32 %v3091, %v593
        %v3093 = vsel %vm667, %v3092, -inf
        %3094 = vmax.xlane.f32.xlu0 %v3093
        %v3095 = vpop.xlane.xlu0 %3094
        %v3096 = vsub.f32 %v3092, %v3095
        %v3097 = vmul.f32 %v3096, 1.442695
        %v3098 = vpow.pop %v3097
        %v3099 = vsel %vm667, %v3098, 0.0
        %3100 = vadd.xlane.f32.xlu0 %v3099
        %v3101 = vpop.xlane.xlu0 %3100
        %v3102 = vrcp.pop %v3101
        %v3103 = vmul.f32 %v3098, %v3102
        %3104 = vrot.lane.b32.xlu0 %v2842, 56
        %v3105 = vpop.permute.xlu0 %3104
        %v3108 = vsel %vm667, %v3103, 0
        %3110 = vmatprep.subr.mxu0 0.0
        %3111 = vmatpush1.msra.mxu0 0.0
        %3112 = vmatprep.subr.mxu0 0.0
        %3113 = vmatpush1.msra.mxu0 0.0
        %3114 = vmatprep.subr.mxu0 0.0
        %3115 = vmatpush1.msra.mxu0 0.0
        %3116 = vmatprep.subr.mxu0 0.0
        %3117 = vmatpush1.msra.mxu0 0.0
        %3118 = vmatprep.subr.mxu0 0.0
        %3119 = vmatpush1.msra.mxu0 0.0
        %3120 = vmatprep.subr.mxu0 0.0
        %3121 = vmatpush1.msra.mxu0 0.0
        %3122 = vmatprep.subr.mxu0 0.0
        %3123 = vmatpush1.msra.mxu0 0.0
        %3124 = vmatprep.subr.mxu0 0.0
        %3125 = vmatpush1.msra.mxu0 0.0
        %3126 = vmatprep.subr.mxu0 0.0
        %3127 = vmatpush1.msra.mxu0 0.0
        %3128 = vmatprep.subr.mxu0 0.0
        %3129 = vmatpush1.msra.mxu0 0.0
        %3130 = vmatprep.subr.mxu0 0.0
        %3131 = vmatpush1.msra.mxu0 0.0
        %3132 = vmatprep.subr.mxu0 0.0
        %3133 = vmatpush1.msra.mxu0 0.0
        %3134 = vmatprep.subr.mxu0 0.0
        %3135 = vmatpush1.msra.mxu0 0.0
        %3136 = vmatprep.subr.mxu0 0.0
        %3137 = vmatpush1.msra.mxu0 0.0
        %3138 = vmatprep.subr.mxu0 0.0
        %3139 = vmatpush1.msra.mxu0 0.0
        %3140 = vmatprep.subr.mxu0 0.0
        %3141 = vmatpush1.msra.mxu0 %v3105
        %3142 = vmatprep.subr.mxu0 0.0
        %3143 = vmatpush2.msra.mxu0 0.0
        %3144 = vmatprep.subr.mxu0 0.0
        %3145 = vmatpush2.msra.mxu0 0.0
        %3146 = vmatprep.subr.mxu0 0.0
        %3147 = vmatpush2.msra.mxu0 0.0
        %3148 = vmatprep.subr.mxu0 0.0
        %3149 = vmatpush2.msra.mxu0 0.0
        %3150 = vmatprep.subr.mxu0 0.0
        %3151 = vmatpush2.msra.mxu0 0.0
        %3152 = vmatprep.subr.mxu0 0.0
        %3153 = vmatpush2.msra.mxu0 0.0
        %3154 = vmatprep.subr.mxu0 0.0
        %3155 = vmatpush2.msra.mxu0 0.0
        %3156 = vmatprep.subr.mxu0 0.0
        %3157 = vmatpush2.msra.mxu0 0.0
        %3158 = vmatprep.subr.mxu0 0.0
        %3159 = vmatpush2.msra.mxu0 0.0
        %3160 = vmatprep.subr.mxu0 0.0
        %3161 = vmatpush2.msra.mxu0 0.0
        %3162 = vmatprep.subr.mxu0 0.0
        %3163 = vmatpush2.msra.mxu0 0.0
        %3164 = vmatprep.subr.mxu0 0.0
        %3165 = vmatpush2.msra.mxu0 0.0
        %3166 = vmatprep.subr.mxu0 0.0
        %3167 = vmatpush2.msra.mxu0 0.0
        %3168 = vmatprep.subr.mxu0 0.0
        %3169 = vmatpush2.msra.mxu0 0.0
        %3170 = vmatprep.subr.mxu0 0.0
        %3171 = vmatpush2.msra.mxu0 0.0
        %3172 = vmatprep.subr.mxu0 0.0
        %3173 = vmatpush2.msra.mxu0 0.0
        %3174 = vmatprep.mubr.f32.mxu0 0.0
        %3175 = vmatmul.mubr.f32.gmra.mxu0 %v3108
        %v3176 = vpop.f32.mrf.mxu0
        %v3177 = vadd.f32 0.0, %v3176
        %v3178 = vpop.f32.mrf.mxu0
        %3179 = vdwg.mxu0
        %3180 = vrot.lane.b32.xlu0 %v2842, 112
        %v3181 = vpop.permute.xlu0 %3180
        %3182 = vrot.lane.b32.xlu0 %v2842, 80
        %v3183 = vpop.permute.xlu0 %3182
        %v3184 = vsel %vm667, %v3181, 0
        %v3186 = vsel %vm667, %v3183, 0
        %3188 = vmatprep.subr.mxu0 0.0
        %3189 = vmatpush1.xpose.msra.mxu0 0.0
        %3190 = vmatprep.subr.mxu0 0.0
        %3191 = vmatpush1.xpose.msra.mxu0 0.0
        %3192 = vmatprep.subr.mxu0 0.0
        %3193 = vmatpush1.xpose.msra.mxu0 0.0
        %3194 = vmatprep.subr.mxu0 0.0
        %3195 = vmatpush1.xpose.msra.mxu0 0.0
        %3196 = vmatprep.subr.mxu0 0.0
        %3197 = vmatpush1.xpose.msra.mxu0 0.0
        %3198 = vmatprep.subr.mxu0 0.0
        %3199 = vmatpush1.xpose.msra.mxu0 0.0
        %3200 = vmatprep.subr.mxu0 0.0
        %3201 = vmatpush1.xpose.msra.mxu0 0.0
        %3202 = vmatprep.subr.mxu0 0.0
        %3203 = vmatpush1.xpose.msra.mxu0 0.0
        %3204 = vmatprep.subr.mxu0 0.0
        %3205 = vmatpush1.xpose.msra.mxu0 0.0
        %3206 = vmatprep.subr.mxu0 0.0
        %3207 = vmatpush1.xpose.msra.mxu0 0.0
        %3208 = vmatprep.subr.mxu0 0.0
        %3209 = vmatpush1.xpose.msra.mxu0 0.0
        %3210 = vmatprep.subr.mxu0 0.0
        %3211 = vmatpush1.xpose.msra.mxu0 0.0
        %3212 = vmatprep.subr.mxu0 0.0
        %3213 = vmatpush1.xpose.msra.mxu0 0.0
        %3214 = vmatprep.subr.mxu0 0.0
        %3215 = vmatpush1.xpose.msra.mxu0 0.0
        %3216 = vmatprep.subr.mxu0 0.0
        %3217 = vmatpush1.xpose.msra.mxu0 0.0
        %3218 = vmatprep.subr.mxu0 0.0
        %3219 = vmatpush1.xpose.msra.mxu0 %v3186
        %3220 = vmatprep.subr.mxu0 0.0
        %3221 = vmatpush2.xpose.msra.mxu0 0.0
        %3222 = vmatprep.subr.mxu0 0.0
        %3223 = vmatpush2.xpose.msra.mxu0 0.0
        %3224 = vmatprep.subr.mxu0 0.0
        %3225 = vmatpush2.xpose.msra.mxu0 0.0
        %3226 = vmatprep.subr.mxu0 0.0
        %3227 = vmatpush2.xpose.msra.mxu0 0.0
        %3228 = vmatprep.subr.mxu0 0.0
        %3229 = vmatpush2.xpose.msra.mxu0 0.0
        %3230 = vmatprep.subr.mxu0 0.0
        %3231 = vmatpush2.xpose.msra.mxu0 0.0
        %3232 = vmatprep.subr.mxu0 0.0
        %3233 = vmatpush2.xpose.msra.mxu0 0.0
        %3234 = vmatprep.subr.mxu0 0.0
        %3235 = vmatpush2.xpose.msra.mxu0 0.0
        %3236 = vmatprep.subr.mxu0 0.0
        %3237 = vmatpush2.xpose.msra.mxu0 0.0
        %3238 = vmatprep.subr.mxu0 0.0
        %3239 = vmatpush2.xpose.msra.mxu0 0.0
        %3240 = vmatprep.subr.mxu0 0.0
        %3241 = vmatpush2.xpose.msra.mxu0 0.0
        %3242 = vmatprep.subr.mxu0 0.0
        %3243 = vmatpush2.xpose.msra.mxu0 0.0
        %3244 = vmatprep.subr.mxu0 0.0
        %3245 = vmatpush2.xpose.msra.mxu0 0.0
        %3246 = vmatprep.subr.mxu0 0.0
        %3247 = vmatpush2.xpose.msra.mxu0 0.0
        %3248 = vmatprep.subr.mxu0 0.0
        %3249 = vmatpush2.xpose.msra.mxu0 0.0
        %3250 = vmatprep.subr.mxu0 0.0
        %3251 = vmatpush2.xpose.msra.mxu0 0.0
        %3252 = vmatprep.mubr.f32.mxu0 0.0
        %3253 = vmatmul.mubr.f32.gmra.mxu0 %v3184
        %v3254 = vpop.f32.mrf.mxu0
        %v3255 = vadd.f32 0.0, %v3254
        %v3256 = vpop.f32.mrf.mxu0
        %3257 = vdwg.mxu0
        %v3258 = vmul.f32 %v3255, 0.35355338
        %v3259 = vadd.f32 %v3258, %v593
        %v3260 = vsel %vm667, %v3259, -inf
        %3261 = vmax.xlane.f32.xlu0 %v3260
        %v3262 = vpop.xlane.xlu0 %3261
        %v3263 = vsub.f32 %v3259, %v3262
        %v3264 = vmul.f32 %v3263, 1.442695
        %v3265 = vpow.pop %v3264
        %v3266 = vsel %vm667, %v3265, 0.0
        %3267 = vadd.xlane.f32.xlu0 %v3266
        %v3268 = vpop.xlane.xlu0 %3267
        %v3269 = vrcp.pop %v3268
        %v3270 = vmul.f32 %v3265, %v3269
        %3271 = vrot.lane.b32.xlu0 %v2842, 48
        %v3272 = vpop.permute.xlu0 %3271
        %v3275 = vsel %vm667, %v3270, 0
        %3277 = vmatprep.subr.mxu0 0.0
        %3278 = vmatpush1.msra.mxu0 0.0
        %3279 = vmatprep.subr.mxu0 0.0
        %3280 = vmatpush1.msra.mxu0 0.0
        %3281 = vmatprep.subr.mxu0 0.0
        %3282 = vmatpush1.msra.mxu0 0.0
        %3283 = vmatprep.subr.mxu0 0.0
        %3284 = vmatpush1.msra.mxu0 0.0
        %3285 = vmatprep.subr.mxu0 0.0
        %3286 = vmatpush1.msra.mxu0 0.0
        %3287 = vmatprep.subr.mxu0 0.0
        %3288 = vmatpush1.msra.mxu0 0.0
        %3289 = vmatprep.subr.mxu0 0.0
        %3290 = vmatpush1.msra.mxu0 0.0
        %3291 = vmatprep.subr.mxu0 0.0
        %3292 = vmatpush1.msra.mxu0 0.0
        %3293 = vmatprep.subr.mxu0 0.0
        %3294 = vmatpush1.msra.mxu0 0.0
        %3295 = vmatprep.subr.mxu0 0.0
        %3296 = vmatpush1.msra.mxu0 0.0
        %3297 = vmatprep.subr.mxu0 0.0
        %3298 = vmatpush1.msra.mxu0 0.0
        %3299 = vmatprep.subr.mxu0 0.0
        %3300 = vmatpush1.msra.mxu0 0.0
        %3301 = vmatprep.subr.mxu0 0.0
        %3302 = vmatpush1.msra.mxu0 0.0
        %3303 = vmatprep.subr.mxu0 0.0
        %3304 = vmatpush1.msra.mxu0 0.0
        %3305 = vmatprep.subr.mxu0 0.0
        %3306 = vmatpush1.msra.mxu0 0.0
        %3307 = vmatprep.subr.mxu0 0.0
        %3308 = vmatpush1.msra.mxu0 %v3272
        %3309 = vmatprep.subr.mxu0 0.0
        %3310 = vmatpush2.msra.mxu0 0.0
        %3311 = vmatprep.subr.mxu0 0.0
        %3312 = vmatpush2.msra.mxu0 0.0
        %3313 = vmatprep.subr.mxu0 0.0
        %3314 = vmatpush2.msra.mxu0 0.0
        %3315 = vmatprep.subr.mxu0 0.0
        %3316 = vmatpush2.msra.mxu0 0.0
        %3317 = vmatprep.subr.mxu0 0.0
        %3318 = vmatpush2.msra.mxu0 0.0
        %3319 = vmatprep.subr.mxu0 0.0
        %3320 = vmatpush2.msra.mxu0 0.0
        %3321 = vmatprep.subr.mxu0 0.0
        %3322 = vmatpush2.msra.mxu0 0.0
        %3323 = vmatprep.subr.mxu0 0.0
        %3324 = vmatpush2.msra.mxu0 0.0
        %3325 = vmatprep.subr.mxu0 0.0
        %3326 = vmatpush2.msra.mxu0 0.0
        %3327 = vmatprep.subr.mxu0 0.0
        %3328 = vmatpush2.msra.mxu0 0.0
        %3329 = vmatprep.subr.mxu0 0.0
        %3330 = vmatpush2.msra.mxu0 0.0
        %3331 = vmatprep.subr.mxu0 0.0
        %3332 = vmatpush2.msra.mxu0 0.0
        %3333 = vmatprep.subr.mxu0 0.0
        %3334 = vmatpush2.msra.mxu0 0.0
        %3335 = vmatprep.subr.mxu0 0.0
        %3336 = vmatpush2.msra.mxu0 0.0
        %3337 = vmatprep.subr.mxu0 0.0
        %3338 = vmatpush2.msra.mxu0 0.0
        %3339 = vmatprep.subr.mxu0 0.0
        %3340 = vmatpush2.msra.mxu0 0.0
        %3341 = vmatprep.mubr.f32.mxu0 0.0
        %3342 = vmatmul.mubr.f32.gmra.mxu0 %v3275
        %v3343 = vpop.f32.mrf.mxu0
        %v3344 = vadd.f32 0.0, %v3343
        %v3345 = vpop.f32.mrf.mxu0
        %3346 = vdwg.mxu0
        %3347 = vrot.lane.b32.xlu0 %v2842, 104
        %v3348 = vpop.permute.xlu0 %3347
        %3349 = vrot.lane.b32.xlu0 %v2842, 72
        %v3350 = vpop.permute.xlu0 %3349
        %v3351 = vsel %vm667, %v3348, 0
        %v3353 = vsel %vm667, %v3350, 0
        %3355 = vmatprep.subr.mxu0 0.0
        %3356 = vmatpush1.xpose.msra.mxu0 0.0
        %3357 = vmatprep.subr.mxu0 0.0
        %3358 = vmatpush1.xpose.msra.mxu0 0.0
        %3359 = vmatprep.subr.mxu0 0.0
        %3360 = vmatpush1.xpose.msra.mxu0 0.0
        %3361 = vmatprep.subr.mxu0 0.0
        %3362 = vmatpush1.xpose.msra.mxu0 0.0
        %3363 = vmatprep.subr.mxu0 0.0
        %3364 = vmatpush1.xpose.msra.mxu0 0.0
        %3365 = vmatprep.subr.mxu0 0.0
        %3366 = vmatpush1.xpose.msra.mxu0 0.0
        %3367 = vmatprep.subr.mxu0 0.0
        %3368 = vmatpush1.xpose.msra.mxu0 0.0
        %3369 = vmatprep.subr.mxu0 0.0
        %3370 = vmatpush1.xpose.msra.mxu0 0.0
        %3371 = vmatprep.subr.mxu0 0.0
        %3372 = vmatpush1.xpose.msra.mxu0 0.0
        %3373 = vmatprep.subr.mxu0 0.0
        %3374 = vmatpush1.xpose.msra.mxu0 0.0
        %3375 = vmatprep.subr.mxu0 0.0
        %3376 = vmatpush1.xpose.msra.mxu0 0.0
        %3377 = vmatprep.subr.mxu0 0.0
        %3378 = vmatpush1.xpose.msra.mxu0 0.0
        %3379 = vmatprep.subr.mxu0 0.0
        %3380 = vmatpush1.xpose.msra.mxu0 0.0
        %3381 = vmatprep.subr.mxu0 0.0
        %3382 = vmatpush1.xpose.msra.mxu0 0.0
        %3383 = vmatprep.subr.mxu0 0.0
        %3384 = vmatpush1.xpose.msra.mxu0 0.0
        %3385 = vmatprep.subr.mxu0 0.0
        %3386 = vmatpush1.xpose.msra.mxu0 %v3353
        %3387 = vmatprep.subr.mxu0 0.0
        %3388 = vmatpush2.xpose.msra.mxu0 0.0
        %3389 = vmatprep.subr.mxu0 0.0
        %3390 = vmatpush2.xpose.msra.mxu0 0.0
        %3391 = vmatprep.subr.mxu0 0.0
        %3392 = vmatpush2.xpose.msra.mxu0 0.0
        %3393 = vmatprep.subr.mxu0 0.0
        %3394 = vmatpush2.xpose.msra.mxu0 0.0
        %3395 = vmatprep.subr.mxu0 0.0
        %3396 = vmatpush2.xpose.msra.mxu0 0.0
        %3397 = vmatprep.subr.mxu0 0.0
        %3398 = vmatpush2.xpose.msra.mxu0 0.0
        %3399 = vmatprep.subr.mxu0 0.0
        %3400 = vmatpush2.xpose.msra.mxu0 0.0
        %3401 = vmatprep.subr.mxu0 0.0
        %3402 = vmatpush2.xpose.msra.mxu0 0.0
        %3403 = vmatprep.subr.mxu0 0.0
        %3404 = vmatpush2.xpose.msra.mxu0 0.0
        %3405 = vmatprep.subr.mxu0 0.0
        %3406 = vmatpush2.xpose.msra.mxu0 0.0
        %3407 = vmatprep.subr.mxu0 0.0
        %3408 = vmatpush2.xpose.msra.mxu0 0.0
        %3409 = vmatprep.subr.mxu0 0.0
        %3410 = vmatpush2.xpose.msra.mxu0 0.0
        %3411 = vmatprep.subr.mxu0 0.0
        %3412 = vmatpush2.xpose.msra.mxu0 0.0
        %3413 = vmatprep.subr.mxu0 0.0
        %3414 = vmatpush2.xpose.msra.mxu0 0.0
        %3415 = vmatprep.subr.mxu0 0.0
        %3416 = vmatpush2.xpose.msra.mxu0 0.0
        %3417 = vmatprep.subr.mxu0 0.0
        %3418 = vmatpush2.xpose.msra.mxu0 0.0
        %3419 = vmatprep.mubr.f32.mxu0 0.0
        %3420 = vmatmul.mubr.f32.gmra.mxu0 %v3351
        %v3421 = vpop.f32.mrf.mxu0
        %v3422 = vadd.f32 0.0, %v3421
        %v3423 = vpop.f32.mrf.mxu0
        %3424 = vdwg.mxu0
        %v3425 = vmul.f32 %v3422, 0.35355338
        %v3426 = vadd.f32 %v3425, %v593
        %v3427 = vsel %vm667, %v3426, -inf
        %3428 = vmax.xlane.f32.xlu0 %v3427
        %v3429 = vpop.xlane.xlu0 %3428
        %v3430 = vsub.f32 %v3426, %v3429
        %v3431 = vmul.f32 %v3430, 1.442695
        %v3432 = vpow.pop %v3431
        %v3433 = vsel %vm667, %v3432, 0.0
        %3434 = vadd.xlane.f32.xlu0 %v3433
        %v3435 = vpop.xlane.xlu0 %3434
        %v3436 = vrcp.pop %v3435
        %v3437 = vmul.f32 %v3432, %v3436
        %3438 = vrot.lane.b32.xlu0 %v2842, 40
        %v3439 = vpop.permute.xlu0 %3438
        %v3442 = vsel %vm667, %v3437, 0
        %3444 = vmatprep.subr.mxu0 0.0
        %3445 = vmatpush1.msra.mxu0 0.0
        %3446 = vmatprep.subr.mxu0 0.0
        %3447 = vmatpush1.msra.mxu0 0.0
        %3448 = vmatprep.subr.mxu0 0.0
        %3449 = vmatpush1.msra.mxu0 0.0
        %3450 = vmatprep.subr.mxu0 0.0
        %3451 = vmatpush1.msra.mxu0 0.0
        %3452 = vmatprep.subr.mxu0 0.0
        %3453 = vmatpush1.msra.mxu0 0.0
        %3454 = vmatprep.subr.mxu0 0.0
        %3455 = vmatpush1.msra.mxu0 0.0
        %3456 = vmatprep.subr.mxu0 0.0
        %3457 = vmatpush1.msra.mxu0 0.0
        %3458 = vmatprep.subr.mxu0 0.0
        %3459 = vmatpush1.msra.mxu0 0.0
        %3460 = vmatprep.subr.mxu0 0.0
        %3461 = vmatpush1.msra.mxu0 0.0
        %3462 = vmatprep.subr.mxu0 0.0
        %3463 = vmatpush1.msra.mxu0 0.0
        %3464 = vmatprep.subr.mxu0 0.0
        %3465 = vmatpush1.msra.mxu0 0.0
        %3466 = vmatprep.subr.mxu0 0.0
        %3467 = vmatpush1.msra.mxu0 0.0
        %3468 = vmatprep.subr.mxu0 0.0
        %3469 = vmatpush1.msra.mxu0 0.0
        %3470 = vmatprep.subr.mxu0 0.0
        %3471 = vmatpush1.msra.mxu0 0.0
        %3472 = vmatprep.subr.mxu0 0.0
        %3473 = vmatpush1.msra.mxu0 0.0
        %3474 = vmatprep.subr.mxu0 0.0
        %3475 = vmatpush1.msra.mxu0 %v3439
        %3476 = vmatprep.subr.mxu0 0.0
        %3477 = vmatpush2.msra.mxu0 0.0
        %3478 = vmatprep.subr.mxu0 0.0
        %3479 = vmatpush2.msra.mxu0 0.0
        %3480 = vmatprep.subr.mxu0 0.0
        %3481 = vmatpush2.msra.mxu0 0.0
        %3482 = vmatprep.subr.mxu0 0.0
        %3483 = vmatpush2.msra.mxu0 0.0
        %3484 = vmatprep.subr.mxu0 0.0
        %3485 = vmatpush2.msra.mxu0 0.0
        %3486 = vmatprep.subr.mxu0 0.0
        %3487 = vmatpush2.msra.mxu0 0.0
        %3488 = vmatprep.subr.mxu0 0.0
        %3489 = vmatpush2.msra.mxu0 0.0
        %3490 = vmatprep.subr.mxu0 0.0
        %3491 = vmatpush2.msra.mxu0 0.0
        %3492 = vmatprep.subr.mxu0 0.0
        %3493 = vmatpush2.msra.mxu0 0.0
        %3494 = vmatprep.subr.mxu0 0.0
        %3495 = vmatpush2.msra.mxu0 0.0
        %3496 = vmatprep.subr.mxu0 0.0
        %3497 = vmatpush2.msra.mxu0 0.0
        %3498 = vmatprep.subr.mxu0 0.0
        %3499 = vmatpush2.msra.mxu0 0.0
        %3500 = vmatprep.subr.mxu0 0.0
        %3501 = vmatpush2.msra.mxu0 0.0
        %3502 = vmatprep.subr.mxu0 0.0
        %3503 = vmatpush2.msra.mxu0 0.0
        %3504 = vmatprep.subr.mxu0 0.0
        %3505 = vmatpush2.msra.mxu0 0.0
        %3506 = vmatprep.subr.mxu0 0.0
        %3507 = vmatpush2.msra.mxu0 0.0
        %3508 = vmatprep.mubr.f32.mxu0 0.0
        %3509 = vmatmul.mubr.f32.gmra.mxu0 %v3442
        %v3510 = vpop.f32.mrf.mxu0
        %v3511 = vadd.f32 0.0, %v3510
        %v3512 = vpop.f32.mrf.mxu0
        %3513 = vdwg.mxu0
        %3515 = vrot.lane.b32.xlu0 %v3177, 8
        %v3516 = vpop.permute.xlu0 %3515
        %3519 = vrot.lane.b32.xlu0 %v3344, 16
        %v3520 = vpop.permute.xlu0 %3519
        %3523 = vrot.lane.b32.xlu0 %v3511, 24
        %v3524 = vpop.permute.xlu0 %3523
        %v3526 = vsel %vm667, %v3010, %v3516
        %v3527 = vsel %vm1345, %v3526, %v3520
        %v3528 = vsel %vm1347, %v3527, %v3524
        %v3529 = vpack.c.bf16 %v3528, %v3528
        %s3530 = scalar_lea.vmem %s4, 16
        %v3531 = vld [vmem:[%s3530] sm:$0xf]
        %v3532 = vld [vmem:[%s3530 + $0x4] sm:$0xf]
        %v3533 = vld [vmem:[%s3530 + $0x8] sm:$0xf]
        %v3534 = vld [vmem:[%s3530 + $0xc] sm:$0xf]
        %s3535 = scalar_lea.vmem %s5, 1
        %v3536 = vld [vmem:[%s3535] sm:$0x1]
        %v3538 = vlaneseq
        %v3539 = vshrl.u32 %v3538, 7
        %v3540 = vsub.s32 0, %v3539
        %v3541 = vrot.slane %v3536, %v3540
        %v3547 = vunpack.c.l.b16 %v3531
        %v3548 = vunpack.c.l.b16 %v3532
        %v3549 = vunpack.c.l.b16 %v3533
        %v3550 = vunpack.c.l.b16 %v3534
        %v3551 = vpack.c.b16 %v3548, %v3547
        %v3552 = vpack.c.b16 %v3550, %v3549
        %v3556 = vsel %vm620, %v3529, 0
        %3558 = vmatprep.subr.bf16.mxu0 0
        %3559 = vmatpush1.bf16.msra.mxu0 0
        %3560 = vmatprep.subr.bf16.mxu0 0
        %3561 = vmatpush1.bf16.msra.mxu0 0
        %3562 = vmatprep.subr.bf16.mxu0 0
        %3563 = vmatpush1.bf16.msra.mxu0 0
        %3564 = vmatprep.subr.bf16.mxu0 0
        %3565 = vmatpush1.bf16.msra.mxu0 0
        %3566 = vmatprep.subr.bf16.mxu0 0
        %3567 = vmatpush1.bf16.msra.mxu0 0
        %3568 = vmatprep.subr.bf16.mxu0 0
        %3569 = vmatpush1.bf16.msra.mxu0 0
        %3570 = vmatprep.subr.bf16.mxu0 0
        %3571 = vmatpush1.bf16.msra.mxu0 %v3552
        %3572 = vmatprep.subr.bf16.mxu0 0
        %3573 = vmatpush1.bf16.msra.mxu0 %v3551
        %3574 = vmatprep.subr.bf16.mxu0 0
        %3575 = vmatpush2.bf16.msra.mxu0 0
        %3576 = vmatprep.subr.bf16.mxu0 0
        %3577 = vmatpush2.bf16.msra.mxu0 0
        %3578 = vmatprep.subr.bf16.mxu0 0
        %3579 = vmatpush2.bf16.msra.mxu0 0
        %3580 = vmatprep.subr.bf16.mxu0 0
        %3581 = vmatpush2.bf16.msra.mxu0 0
        %3582 = vmatprep.subr.bf16.mxu0 0
        %3583 = vmatpush2.bf16.msra.mxu0 0
        %3584 = vmatprep.subr.bf16.mxu0 0
        %3585 = vmatpush2.bf16.msra.mxu0 0
        %3586 = vmatprep.subr.bf16.mxu0 0
        %3587 = vmatpush2.bf16.msra.mxu0 0
        %3588 = vmatprep.subr.bf16.mxu0 0
        %3589 = vmatpush2.bf16.msra.mxu0 0
        %3590 = vmatprep.mubr.bf16.mxu0 0
        %3591 = vmatmul.mubr.bf16.gmra.mxu0 %v3556
        %v3592 = vpop.f32.mrf.mxu0
        %v3593 = vadd.f32 %v3541, %v3592
        %v3594 = vpop.f32.mrf.mxu0
        %v3595 = vpop.f32.mrf.mxu0
        %v3596 = vpop.f32.mrf.mxu0
        %3597 = vdwg.mxu0
        %v3598 = vadd.f32 %v2773, %v3593
        %v3599 = vsel %vm620, %v3598, 0.0
        %3600 = vadd.xlane.f32.xlu0 %v3599
        %v3601 = vpop.xlane.xlu0 %3600
        %v3602 = vmul.f32 %v3601, %v1420
        %v3603 = vsub.f32 %v3598, %v3602
        %v3604 = vmul.f32 %v3603, %v3603
        %v3605 = vsel %vm620, %v3604, 0.0
        %3606 = vadd.xlane.f32.xlu0 %v3605
        %v3607 = vpop.xlane.xlu0 %3606
        %v3608 = vmul.f32 %v3607, %v1420
        %v3609 = vadd.f32 %v3608, 1e-05
        %v3610 = vrsqrt.pop %v3609
        %v3611 = vmul.f32 %v3603, %v3610
        %v3612 = vlaneseq
        %v3613 = vshrl.u32 %v3612, 7
        %v3614 = vsub.s32 0, %v3613
        %v3615 = vrot.slane %v2775, %v3614
        %v3616 = vmul.f32 %v3611, %v3615
        %v3617 = vlaneseq
        %v3618 = vshrl.u32 %v3617, 7
        %v3619 = vsub.s32 0, %v3618
        %v3620 = vrot.slane %v2777, %v3619
        %v3621 = vadd.f32 %v3616, %v3620
        %s3622 = scalar_lea.vmem %s6, 16
        %v3623 = vld [vmem:[%s3622] sm:$0xf]
        %v3624 = vld [vmem:[%s3622 + $0x4] sm:$0xf]
        %v3625 = vld [vmem:[%s3622 + $0x8] sm:$0xf]
        %v3626 = vld [vmem:[%s3622 + $0xc] sm:$0xf]
        %s3627 = scalar_lea.vmem %s7, 1
        %v3628 = vld [vmem:[%s3627] sm:$0x1]
        %v3633 = vunpack.c.l.b16 %v3623
        %v3634 = vunpack.c.l.b16 %v3624
        %v3635 = vunpack.c.l.b16 %v3625
        %v3636 = vunpack.c.l.b16 %v3626
        %v3637 = vpack.c.b16 %v3634, %v3633
        %v3638 = vpack.c.b16 %v3636, %v3635
        %3641 = vmatprep.subr.bf16.mxu0 0
        %3642 = vmatpush1.bf16.msra.mxu0 0
        %3643 = vmatprep.subr.bf16.mxu0 0
        %3644 = vmatpush1.bf16.msra.mxu0 0
        %3645 = vmatprep.subr.bf16.mxu0 0
        %3646 = vmatpush1.bf16.msra.mxu0 0
        %3647 = vmatprep.subr.bf16.mxu0 0
        %3648 = vmatpush1.bf16.msra.mxu0 0
        %3649 = vmatprep.subr.bf16.mxu0 0
        %3650 = vmatpush1.bf16.msra.mxu0 0
        %3651 = vmatprep.subr.bf16.mxu0 0
        %3652 = vmatpush1.bf16.msra.mxu0 0
        %3653 = vmatprep.subr.bf16.mxu0 0
        %3654 = vmatpush1.bf16.msra.mxu0 %v3638
        %3655 = vmatprep.subr.bf16.mxu0 0
        %3656 = vmatpush1.bf16.msra.mxu0 %v3637
        %3657 = vmatprep.subr.bf16.mxu0 0
        %3658 = vmatpush2.bf16.msra.mxu0 0
        %3659 = vmatprep.subr.bf16.mxu0 0
        %3660 = vmatpush2.bf16.msra.mxu0 0
        %3661 = vmatprep.subr.bf16.mxu0 0
        %3662 = vmatpush2.bf16.msra.mxu0 0
        %3663 = vmatprep.subr.bf16.mxu0 0
        %3664 = vmatpush2.bf16.msra.mxu0 0
        %3665 = vmatprep.subr.bf16.mxu0 0
        %3666 = vmatpush2.bf16.msra.mxu0 0
        %3667 = vmatprep.subr.bf16.mxu0 0
        %3668 = vmatpush2.bf16.msra.mxu0 0
        %3669 = vmatprep.subr.bf16.mxu0 0
        %3670 = vmatpush2.bf16.msra.mxu0 0
        %3671 = vmatprep.subr.bf16.mxu0 0
        %3672 = vmatpush2.bf16.msra.mxu0 0
        %3673 = vmatprep.mubr.bf16.mxu0 0
        %3674 = vmatmul.mubr.bf16.gmra.mxu0 %v1460
        %v3675 = vpop.f32.mrf.mxu0
        %v3676 = vadd.f32 %v3628, %v3675
        %v3677 = vpop.f32.mrf.mxu0
        %v3678 = vpop.f32.mrf.mxu0
        %v3679 = vpop.f32.mrf.mxu0
        %3680 = vdwg.mxu0
        %v3681 = vpack.c.bf16 %v3676, %v3676
        %s3682 = scalar_lea.vmem %s8, 16
        %v3683 = vld [vmem:[%s3682] sm:$0xf]
        %v3684 = vld [vmem:[%s3682 + $0x4] sm:$0xf]
        %v3685 = vld [vmem:[%s3682 + $0x8] sm:$0xf]
        %v3686 = vld [vmem:[%s3682 + $0xc] sm:$0xf]
        %s3687 = scalar_lea.vmem %s9, 1
        %v3688 = vld [vmem:[%s3687] sm:$0x1]
        %v3693 = vunpack.c.l.b16 %v3683
        %v3694 = vunpack.c.l.b16 %v3684
        %v3695 = vunpack.c.l.b16 %v3685
        %v3696 = vunpack.c.l.b16 %v3686
        %v3697 = vpack.c.b16 %v3694, %v3693
        %v3698 = vpack.c.b16 %v3696, %v3695
        %v3702 = vsel %vm620, %v3681, 0
        %3704 = vmatprep.subr.bf16.mxu0 0
        %3705 = vmatpush1.bf16.msra.mxu0 0
        %3706 = vmatprep.subr.bf16.mxu0 0
        %3707 = vmatpush1.bf16.msra.mxu0 0
        %3708 = vmatprep.subr.bf16.mxu0 0
        %3709 = vmatpush1.bf16.msra.mxu0 0
        %3710 = vmatprep.subr.bf16.mxu0 0
        %3711 = vmatpush1.bf16.msra.mxu0 0
        %3712 = vmatprep.subr.bf16.mxu0 0
        %3713 = vmatpush1.bf16.msra.mxu0 0
        %3714 = vmatprep.subr.bf16.mxu0 0
        %3715 = vmatpush1.bf16.msra.mxu0 0
        %3716 = vmatprep.subr.bf16.mxu0 0
        %3717 = vmatpush1.bf16.msra.mxu0 %v3698
        %3718 = vmatprep.subr.bf16.mxu0 0
        %3719 = vmatpush1.bf16.msra.mxu0 %v3697
        %3720 = vmatprep.subr.bf16.mxu0 0
        %3721 = vmatpush2.bf16.msra.mxu0 0
        %3722 = vmatprep.subr.bf16.mxu0 0
        %3723 = vmatpush2.bf16.msra.mxu0 0
        %3724 = vmatprep.subr.bf16.mxu0 0
        %3725 = vmatpush2.bf16.msra.mxu0 0
        %3726 = vmatprep.subr.bf16.mxu0 0
        %3727 = vmatpush2.bf16.msra.mxu0 0
        %3728 = vmatprep.subr.bf16.mxu0 0
        %3729 = vmatpush2.bf16.msra.mxu0 0
        %3730 = vmatprep.subr.bf16.mxu0 0
        %3731 = vmatpush2.bf16.msra.mxu0 0
        %3732 = vmatprep.subr.bf16.mxu0 0
        %3733 = vmatpush2.bf16.msra.mxu0 0
        %3734 = vmatprep.subr.bf16.mxu0 0
        %3735 = vmatpush2.bf16.msra.mxu0 0
        %3736 = vmatprep.mubr.bf16.mxu0 0
        %3737 = vmatmul.mubr.bf16.gmra.mxu0 %v3702
        %v3738 = vpop.f32.mrf.mxu0
        %v3739 = vadd.f32 %v3688, %v3738
        %v3740 = vpop.f32.mrf.mxu0
        %v3741 = vpop.f32.mrf.mxu0
        %v3742 = vpop.f32.mrf.mxu0
        %3743 = vdwg.mxu0
        %v3744 = vlaneseq
        %v3745 = vshrl.u32 %v3744, 7
        %v3746 = vsub.s32 0, %v3745
        %v3747 = vrot.slane %v3739, %v3746
        %v3748 = vadd.f32 %v3621, %v3747
        %v3749 = vsel %vm620, %v3748, 0.0
        %3750 = vadd.xlane.f32.xlu0 %v3749
        %v3751 = vpop.xlane.xlu0 %3750
        %v3752 = vmul.f32 %v3751, %v1420
        %v3753 = vsub.f32 %v3748, %v3752
        %v3754 = vmul.f32 %v3753, %v3753
        %v3755 = vsel %vm620, %v3754, 0.0
        %3756 = vadd.xlane.f32.xlu0 %v3755
        %v3757 = vpop.xlane.xlu0 %3756
        %v3758 = vmul.f32 %v3757, %v1420
        %v3759 = vadd.f32 %v3758, 1e-05
        %v3760 = vrsqrt.pop %v3759
        %v3761 = vmul.f32 %v3753, %v3760
        %v3762 = vlaneseq
        %v3763 = vshrl.u32 %v3762, 7
        %v3764 = vsub.s32 1, %v3763
        %v3765 = vrot.slane %v2775, %v3764
        %v3766 = vmul.f32 %v3761, %v3765
        %v3767 = vlaneseq
        %v3768 = vshrl.u32 %v3767, 7
        %v3769 = vsub.s32 1, %v3768
        %v3770 = vrot.slane %v2777, %v3769
        %v3771 = vadd.f32 %v3766, %v3770
        %v3772 = vpack.c.bf16 %v3771, %v3771
        %s3773 = scalar_lea.vmem %s10, 256
        %v3774 = vld [vmem:[%s3773] sm:$0xff]
        %v3775 = vld [vmem:[%s3773 + $0x8] sm:$0xff]
        %v3776 = vld [vmem:[%s3773 + $0x10] sm:$0xff]
        %v3777 = vld [vmem:[%s3773 + $0x18] sm:$0xff]
        %v3778 = vld [vmem:[%s3773 + $0x20] sm:$0xff]
        %v3779 = vld [vmem:[%s3773 + $0x28] sm:$0xff]
        %v3780 = vld [vmem:[%s3773 + $0x30] sm:$0xff]
        %v3781 = vld [vmem:[%s3773 + $0x38] sm:$0xff]
        %v3782 = vld [vmem:[%s3773 + $0x40] sm:$0xff]
        %v3783 = vld [vmem:[%s3773 + $0x48] sm:$0xff]
        %v3784 = vld [vmem:[%s3773 + $0x50] sm:$0xff]
        %v3785 = vld [vmem:[%s3773 + $0x58] sm:$0xff]
        %v3786 = vld [vmem:[%s3773 + $0x60] sm:$0xff]
        %v3787 = vld [vmem:[%s3773 + $0x68] sm:$0xff]
        %v3788 = vld [vmem:[%s3773 + $0x70] sm:$0xff]
        %v3789 = vld [vmem:[%s3773 + $0x78] sm:$0xff]
        %v3790 = vld [vmem:[%s3773 + $0x80] sm:$0xff]
        %v3791 = vld [vmem:[%s3773 + $0x88] sm:$0xff]
        %v3792 = vld [vmem:[%s3773 + $0x90] sm:$0xff]
        %v3793 = vld [vmem:[%s3773 + $0x98] sm:$0xff]
        %v3794 = vld [vmem:[%s3773 + $0xa0] sm:$0xff]
        %v3795 = vld [vmem:[%s3773 + $0xa8] sm:$0xff]
        %v3796 = vld [vmem:[%s3773 + $0xb0] sm:$0xff]
        %v3797 = vld [vmem:[%s3773 + $0xb8] sm:$0xff]
        %v3798 = vld [vmem:[%s3773 + $0xc0] sm:$0xff]
        %v3799 = vld [vmem:[%s3773 + $0xc8] sm:$0xff]
        %v3800 = vld [vmem:[%s3773 + $0xd0] sm:$0xff]
        %v3801 = vld [vmem:[%s3773 + $0xd8] sm:$0xff]
        %v3802 = vld [vmem:[%s3773 + $0xe0] sm:$0xff]
        %v3803 = vld [vmem:[%s3773 + $0xe8] sm:$0xff]
        %v3804 = vld [vmem:[%s3773 + $0xf0] sm:$0xff]
        %v3805 = vld [vmem:[%s3773 + $0xf8] sm:$0xff]
        %s3806 = scalar_lea.vmem %s11, 16
        %v3807 = vld [vmem:[%s3806] sm:$0xff]
        %v3808 = vld [vmem:[%s3806 + $0x8] sm:$0xff]
        %v3811 = vlaneseq
        %v3812 = vshrl.u32 %v3811, 7
        %v3813 = vsub.s32 0, %v3812
        %v3814 = vrot.slane %v3807, %v3813
        %v3815 = vlaneseq
        %v3816 = vshrl.u32 %v3815, 7
        %v3817 = vsub.s32 1, %v3816
        %v3818 = vrot.slane %v3807, %v3817
        %v3819 = vlaneseq
        %v3820 = vshrl.u32 %v3819, 7
        %v3821 = vsub.s32 2, %v3820
        %v3822 = vrot.slane %v3807, %v3821
        %v3823 = vlaneseq
        %v3824 = vshrl.u32 %v3823, 7
        %v3825 = vsub.s32 3, %v3824
        %v3826 = vrot.slane %v3807, %v3825
        %v3827 = vlaneseq
        %v3828 = vshrl.u32 %v3827, 7
        %v3829 = vsub.s32 4, %v3828
        %v3830 = vrot.slane %v3807, %v3829
        %v3831 = vlaneseq
        %v3832 = vshrl.u32 %v3831, 7
        %v3833 = vsub.s32 5, %v3832
        %v3834 = vrot.slane %v3807, %v3833
        %v3835 = vlaneseq
        %v3836 = vshrl.u32 %v3835, 7
        %v3837 = vsub.s32 6, %v3836
        %v3838 = vrot.slane %v3807, %v3837
        %v3839 = vlaneseq
        %v3840 = vshrl.u32 %v3839, 7
        %v3841 = vsub.s32 7, %v3840
        %v3842 = vrot.slane %v3807, %v3841
        %v3843 = vlaneseq
        %v3844 = vshrl.u32 %v3843, 7
        %v3845 = vsub.s32 0, %v3844
        %v3846 = vrot.slane %v3808, %v3845
        %v3847 = vlaneseq
        %v3848 = vshrl.u32 %v3847, 7
        %v3849 = vsub.s32 1, %v3848
        %v3850 = vrot.slane %v3808, %v3849
        %v3851 = vlaneseq
        %v3852 = vshrl.u32 %v3851, 7
        %v3853 = vsub.s32 2, %v3852
        %v3854 = vrot.slane %v3808, %v3853
        %v3855 = vlaneseq
        %v3856 = vshrl.u32 %v3855, 7
        %v3857 = vsub.s32 3, %v3856
        %v3858 = vrot.slane %v3808, %v3857
        %v3859 = vlaneseq
        %v3860 = vshrl.u32 %v3859, 7
        %v3861 = vsub.s32 4, %v3860
        %v3862 = vrot.slane %v3808, %v3861
        %v3863 = vlaneseq
        %v3864 = vshrl.u32 %v3863, 7
        %v3865 = vsub.s32 5, %v3864
        %v3866 = vrot.slane %v3808, %v3865
        %v3867 = vlaneseq
        %v3868 = vshrl.u32 %v3867, 7
        %v3869 = vsub.s32 6, %v3868
        %v3870 = vrot.slane %v3808, %v3869
        %v3871 = vlaneseq
        %v3872 = vshrl.u32 %v3871, 7
        %v3873 = vsub.s32 7, %v3872
        %v3874 = vrot.slane %v3808, %v3873
        %v3923 = vunpack.c.l.b16 %v3774
        %v3924 = vunpack.c.h.b16 %v3774
        %v3925 = vunpack.c.l.b16 %v3775
        %v3926 = vunpack.c.h.b16 %v3775
        %v3927 = vunpack.c.l.b16 %v3776
        %v3928 = vunpack.c.h.b16 %v3776
        %v3929 = vunpack.c.l.b16 %v3777
        %v3930 = vunpack.c.h.b16 %v3777
        %v3931 = vunpack.c.l.b16 %v3778
        %v3932 = vunpack.c.h.b16 %v3778
        %v3933 = vunpack.c.l.b16 %v3779
        %v3934 = vunpack.c.h.b16 %v3779
        %v3935 = vunpack.c.l.b16 %v3780
        %v3936 = vunpack.c.h.b16 %v3780
        %v3937 = vunpack.c.l.b16 %v3781
        %v3938 = vunpack.c.h.b16 %v3781
        %v3939 = vunpack.c.l.b16 %v3782
        %v3940 = vunpack.c.h.b16 %v3782
        %v3941 = vunpack.c.l.b16 %v3783
        %v3942 = vunpack.c.h.b16 %v3783
        %v3943 = vunpack.c.l.b16 %v3784
        %v3944 = vunpack.c.h.b16 %v3784
        %v3945 = vunpack.c.l.b16 %v3785
        %v3946 = vunpack.c.h.b16 %v3785
        %v3947 = vunpack.c.l.b16 %v3786
        %v3948 = vunpack.c.h.b16 %v3786
        %v3949 = vunpack.c.l.b16 %v3787
        %v3950 = vunpack.c.h.b16 %v3787
        %v3951 = vunpack.c.l.b16 %v3788
        %v3952 = vunpack.c.h.b16 %v3788
        %v3953 = vunpack.c.l.b16 %v3789
        %v3954 = vunpack.c.h.b16 %v3789
        %v3955 = vunpack.c.l.b16 %v3790
        %v3956 = vunpack.c.h.b16 %v3790
        %v3957 = vunpack.c.l.b16 %v3791
        %v3958 = vunpack.c.h.b16 %v3791
        %v3959 = vunpack.c.l.b16 %v3792
        %v3960 = vunpack.c.h.b16 %v3792
        %v3961 = vunpack.c.l.b16 %v3793
        %v3962 = vunpack.c.h.b16 %v3793
        %v3963 = vunpack.c.l.b16 %v3794
        %v3964 = vunpack.c.h.b16 %v3794
        %v3965 = vunpack.c.l.b16 %v3795
        %v3966 = vunpack.c.h.b16 %v3795
        %v3967 = vunpack.c.l.b16 %v3796
        %v3968 = vunpack.c.h.b16 %v3796
        %v3969 = vunpack.c.l.b16 %v3797
        %v3970 = vunpack.c.h.b16 %v3797
        %v3971 = vunpack.c.l.b16 %v3798
        %v3972 = vunpack.c.h.b16 %v3798
        %v3973 = vunpack.c.l.b16 %v3799
        %v3974 = vunpack.c.h.b16 %v3799
        %v3975 = vunpack.c.l.b16 %v3800
        %v3976 = vunpack.c.h.b16 %v3800
        %v3977 = vunpack.c.l.b16 %v3801
        %v3978 = vunpack.c.h.b16 %v3801
        %v3979 = vunpack.c.l.b16 %v3802
        %v3980 = vunpack.c.h.b16 %v3802
        %v3981 = vunpack.c.l.b16 %v3803
        %v3982 = vunpack.c.h.b16 %v3803
        %v3983 = vunpack.c.l.b16 %v3804
        %v3984 = vunpack.c.h.b16 %v3804
        %v3985 = vunpack.c.l.b16 %v3805
        %v3986 = vunpack.c.h.b16 %v3805
        %v3987 = vpack.c.b16 %v3939, %v3923
        %v3988 = vpack.c.b16 %v3940, %v3924
        %v3989 = vpack.c.b16 %v3941, %v3925
        %v3990 = vpack.c.b16 %v3942, %v3926
        %v3991 = vpack.c.b16 %v3943, %v3927
        %v3992 = vpack.c.b16 %v3944, %v3928
        %v3993 = vpack.c.b16 %v3945, %v3929
        %v3994 = vpack.c.b16 %v3946, %v3930
        %v3995 = vpack.c.b16 %v3947, %v3931
        %v3996 = vpack.c.b16 %v3948, %v3932
        %v3997 = vpack.c.b16 %v3949, %v3933
        %v3998 = vpack.c.b16 %v3950, %v3934
        %v3999 = vpack.c.b16 %v3951, %v3935
        %v4000 = vpack.c.b16 %v3952, %v3936
        %v4001 = vpack.c.b16 %v3953, %v3937
        %v4002 = vpack.c.b16 %v3954, %v3938
        %v4003 = vpack.c.b16 %v3971, %v3955
        %v4004 = vpack.c.b16 %v3972, %v3956
        %v4005 = vpack.c.b16 %v3973, %v3957
        %v4006 = vpack.c.b16 %v3974, %v3958
        %v4007 = vpack.c.b16 %v3975, %v3959
        %v4008 = vpack.c.b16 %v3976, %v3960
        %v4009 = vpack.c.b16 %v3977, %v3961
        %v4010 = vpack.c.b16 %v3978, %v3962
        %v4011 = vpack.c.b16 %v3979, %v3963
        %v4012 = vpack.c.b16 %v3980, %v3964
        %v4013 = vpack.c.b16 %v3981, %v3965
        %v4014 = vpack.c.b16 %v3982, %v3966
        %v4015 = vpack.c.b16 %v3983, %v3967
        %v4016 = vpack.c.b16 %v3984, %v3968
        %v4017 = vpack.c.b16 %v3985, %v3969
        %v4018 = vpack.c.b16 %v3986, %v3970
        %v4052 = vsel %vm620, %v3772, 0
        %4054 = vmatprep.subr.bf16.mxu0 0
        %4055 = vmatpush1.bf16.msra.mxu0 0
        %4056 = vmatprep.subr.bf16.mxu0 0
        %4057 = vmatpush1.bf16.msra.mxu0 0
        %4058 = vmatprep.subr.bf16.mxu0 0
        %4059 = vmatpush1.bf16.msra.mxu0 0
        %4060 = vmatprep.subr.bf16.mxu0 0
        %4061 = vmatpush1.bf16.msra.mxu0 0
        %4062 = vmatprep.subr.bf16.mxu0 0
        %4063 = vmatpush1.bf16.msra.mxu0 0
        %4064 = vmatprep.subr.bf16.mxu0 0
        %4065 = vmatpush1.bf16.msra.mxu0 0
        %4066 = vmatprep.subr.bf16.mxu0 %v4004
        %4067 = vmatpush1.bf16.msra.mxu0 %v4003
        %4068 = vmatprep.subr.bf16.mxu0 %v3988
        %4069 = vmatpush1.bf16.msra.mxu0 %v3987
        %4070 = vmatprep.subr.bf16.mxu0 0
        %4071 = vmatpush2.bf16.msra.mxu0 0
        %4072 = vmatprep.subr.bf16.mxu0 0
        %4073 = vmatpush2.bf16.msra.mxu0 0
        %4074 = vmatprep.subr.bf16.mxu0 0
        %4075 = vmatpush2.bf16.msra.mxu0 0
        %4076 = vmatprep.subr.bf16.mxu0 0
        %4077 = vmatpush2.bf16.msra.mxu0 0
        %4078 = vmatprep.subr.bf16.mxu0 0
        %4079 = vmatpush2.bf16.msra.mxu0 0
        %4080 = vmatprep.subr.bf16.mxu0 0
        %4081 = vmatpush2.bf16.msra.mxu0 0
        %4082 = vmatprep.subr.bf16.mxu0 0
        %4083 = vmatpush2.bf16.msra.mxu0 0
        %4084 = vmatprep.subr.bf16.mxu0 0
        %4085 = vmatpush2.bf16.msra.mxu0 0
        %4086 = vmatprep.mubr.bf16.mxu0 0
        %4087 = vmatmul.mubr.bf16.gmra.mxu0 %v4052
        %v4088 = vpop.f32.mrf.mxu0
        %v4089 = vadd.f32 %v3814, %v4088
        %v4090 = vpop.f32.mrf.mxu0
        %v4091 = vadd.f32 %v3818, %v4090
        %v4092 = vpop.f32.mrf.mxu0
        %v4093 = vpop.f32.mrf.mxu0
        %4094 = vdwg.mxu0
        %4095 = vmatprep.subr.bf16.mxu0 0
        %4096 = vmatpush1.bf16.msra.mxu0 0
        %4097 = vmatprep.subr.bf16.mxu0 0
        %4098 = vmatpush1.bf16.msra.mxu0 0
        %4099 = vmatprep.subr.bf16.mxu0 0
        %4100 = vmatpush1.bf16.msra.mxu0 0
        %4101 = vmatprep.subr.bf16.mxu0 0
        %4102 = vmatpush1.bf16.msra.mxu0 0
        %4103 = vmatprep.subr.bf16.mxu0 0
        %4104 = vmatpush1.bf16.msra.mxu0 0
        %4105 = vmatprep.subr.bf16.mxu0 0
        %4106 = vmatpush1.bf16.msra.mxu0 0
        %4107 = vmatprep.subr.bf16.mxu0 %v4006
        %4108 = vmatpush1.bf16.msra.mxu0 %v4005
        %4109 = vmatprep.subr.bf16.mxu0 %v3990
        %4110 = vmatpush1.bf16.msra.mxu0 %v3989
        %4111 = vmatprep.subr.bf16.mxu0 0
        %4112 = vmatpush2.bf16.msra.mxu0 0
        %4113 = vmatprep.subr.bf16.mxu0 0
        %4114 = vmatpush2.bf16.msra.mxu0 0
        %4115 = vmatprep.subr.bf16.mxu0 0
        %4116 = vmatpush2.bf16.msra.mxu0 0
        %4117 = vmatprep.subr.bf16.mxu0 0
        %4118 = vmatpush2.bf16.msra.mxu0 0
        %4119 = vmatprep.subr.bf16.mxu0 0
        %4120 = vmatpush2.bf16.msra.mxu0 0
        %4121 = vmatprep.subr.bf16.mxu0 0
        %4122 = vmatpush2.bf16.msra.mxu0 0
        %4123 = vmatprep.subr.bf16.mxu0 0
        %4124 = vmatpush2.bf16.msra.mxu0 0
        %4125 = vmatprep.subr.bf16.mxu0 0
        %4126 = vmatpush2.bf16.msra.mxu0 0
        %4127 = vmatprep.mubr.bf16.mxu0 0
        %4128 = vmatmul.mubr.bf16.gmra.mxu0 %v4052
        %v4129 = vpop.f32.mrf.mxu0
        %v4130 = vadd.f32 %v3822, %v4129
        %v4131 = vpop.f32.mrf.mxu0
        %v4132 = vadd.f32 %v3826, %v4131
        %v4133 = vpop.f32.mrf.mxu0
        %v4134 = vpop.f32.mrf.mxu0
        %4135 = vdwg.mxu0
        %4136 = vmatprep.subr.bf16.mxu0 0
        %4137 = vmatpush1.bf16.msra.mxu0 0
        %4138 = vmatprep.subr.bf16.mxu0 0
        %4139 = vmatpush1.bf16.msra.mxu0 0
        %4140 = vmatprep.subr.bf16.mxu0 0
        %4141 = vmatpush1.bf16.msra.mxu0 0
        %4142 = vmatprep.subr.bf16.mxu0 0
        %4143 = vmatpush1.bf16.msra.mxu0 0
        %4144 = vmatprep.subr.bf16.mxu0 0
        %4145 = vmatpush1.bf16.msra.mxu0 0
        %4146 = vmatprep.subr.bf16.mxu0 0
        %4147 = vmatpush1.bf16.msra.mxu0 0
        %4148 = vmatprep.subr.bf16.mxu0 %v4008
        %4149 = vmatpush1.bf16.msra.mxu0 %v4007
        %4150 = vmatprep.subr.bf16.mxu0 %v3992
        %4151 = vmatpush1.bf16.msra.mxu0 %v3991
        %4152 = vmatprep.subr.bf16.mxu0 0
        %4153 = vmatpush2.bf16.msra.mxu0 0
        %4154 = vmatprep.subr.bf16.mxu0 0
        %4155 = vmatpush2.bf16.msra.mxu0 0
        %4156 = vmatprep.subr.bf16.mxu0 0
        %4157 = vmatpush2.bf16.msra.mxu0 0
        %4158 = vmatprep.subr.bf16.mxu0 0
        %4159 = vmatpush2.bf16.msra.mxu0 0
        %4160 = vmatprep.subr.bf16.mxu0 0
        %4161 = vmatpush2.bf16.msra.mxu0 0
        %4162 = vmatprep.subr.bf16.mxu0 0
        %4163 = vmatpush2.bf16.msra.mxu0 0
        %4164 = vmatprep.subr.bf16.mxu0 0
        %4165 = vmatpush2.bf16.msra.mxu0 0
        %4166 = vmatprep.subr.bf16.mxu0 0
        %4167 = vmatpush2.bf16.msra.mxu0 0
        %4168 = vmatprep.mubr.bf16.mxu0 0
        %4169 = vmatmul.mubr.bf16.gmra.mxu0 %v4052
        %v4170 = vpop.f32.mrf.mxu0
        %v4171 = vadd.f32 %v3830, %v4170
        %v4172 = vpop.f32.mrf.mxu0
        %v4173 = vadd.f32 %v3834, %v4172
        %v4174 = vpop.f32.mrf.mxu0
        %v4175 = vpop.f32.mrf.mxu0
        %4176 = vdwg.mxu0
        %4177 = vmatprep.subr.bf16.mxu0 0
        %4178 = vmatpush1.bf16.msra.mxu0 0
        %4179 = vmatprep.subr.bf16.mxu0 0
        %4180 = vmatpush1.bf16.msra.mxu0 0
        %4181 = vmatprep.subr.bf16.mxu0 0
        %4182 = vmatpush1.bf16.msra.mxu0 0
        %4183 = vmatprep.subr.bf16.mxu0 0
        %4184 = vmatpush1.bf16.msra.mxu0 0
        %4185 = vmatprep.subr.bf16.mxu0 0
        %4186 = vmatpush1.bf16.msra.mxu0 0
        %4187 = vmatprep.subr.bf16.mxu0 0
        %4188 = vmatpush1.bf16.msra.mxu0 0
        %4189 = vmatprep.subr.bf16.mxu0 %v4010
        %4190 = vmatpush1.bf16.msra.mxu0 %v4009
        %4191 = vmatprep.subr.bf16.mxu0 %v3994
        %4192 = vmatpush1.bf16.msra.mxu0 %v3993
        %4193 = vmatprep.subr.bf16.mxu0 0
        %4194 = vmatpush2.bf16.msra.mxu0 0
        %4195 = vmatprep.subr.bf16.mxu0 0
        %4196 = vmatpush2.bf16.msra.mxu0 0
        %4197 = vmatprep.subr.bf16.mxu0 0
        %4198 = vmatpush2.bf16.msra.mxu0 0
        %4199 = vmatprep.subr.bf16.mxu0 0
        %4200 = vmatpush2.bf16.msra.mxu0 0
        %4201 = vmatprep.subr.bf16.mxu0 0
        %4202 = vmatpush2.bf16.msra.mxu0 0
        %4203 = vmatprep.subr.bf16.mxu0 0
        %4204 = vmatpush2.bf16.msra.mxu0 0
        %4205 = vmatprep.subr.bf16.mxu0 0
        %4206 = vmatpush2.bf16.msra.mxu0 0
        %4207 = vmatprep.subr.bf16.mxu0 0
        %4208 = vmatpush2.bf16.msra.mxu0 0
        %4209 = vmatprep.mubr.bf16.mxu0 0
        %4210 = vmatmul.mubr.bf16.gmra.mxu0 %v4052
        %v4211 = vpop.f32.mrf.mxu0
        %v4212 = vadd.f32 %v3838, %v4211
        %v4213 = vpop.f32.mrf.mxu0
        %v4214 = vadd.f32 %v3842, %v4213
        %v4215 = vpop.f32.mrf.mxu0
        %v4216 = vpop.f32.mrf.mxu0
        %4217 = vdwg.mxu0
        %4218 = vmatprep.subr.bf16.mxu0 0
        %4219 = vmatpush1.bf16.msra.mxu0 0
        %4220 = vmatprep.subr.bf16.mxu0 0
        %4221 = vmatpush1.bf16.msra.mxu0 0
        %4222 = vmatprep.subr.bf16.mxu0 0
        %4223 = vmatpush1.bf16.msra.mxu0 0
        %4224 = vmatprep.subr.bf16.mxu0 0
        %4225 = vmatpush1.bf16.msra.mxu0 0
        %4226 = vmatprep.subr.bf16.mxu0 0
        %4227 = vmatpush1.bf16.msra.mxu0 0
        %4228 = vmatprep.subr.bf16.mxu0 0
        %4229 = vmatpush1.bf16.msra.mxu0 0
        %4230 = vmatprep.subr.bf16.mxu0 %v4012
        %4231 = vmatpush1.bf16.msra.mxu0 %v4011
        %4232 = vmatprep.subr.bf16.mxu0 %v3996
        %4233 = vmatpush1.bf16.msra.mxu0 %v3995
        %4234 = vmatprep.subr.bf16.mxu0 0
        %4235 = vmatpush2.bf16.msra.mxu0 0
        %4236 = vmatprep.subr.bf16.mxu0 0
        %4237 = vmatpush2.bf16.msra.mxu0 0
        %4238 = vmatprep.subr.bf16.mxu0 0
        %4239 = vmatpush2.bf16.msra.mxu0 0
        %4240 = vmatprep.subr.bf16.mxu0 0
        %4241 = vmatpush2.bf16.msra.mxu0 0
        %4242 = vmatprep.subr.bf16.mxu0 0
        %4243 = vmatpush2.bf16.msra.mxu0 0
        %4244 = vmatprep.subr.bf16.mxu0 0
        %4245 = vmatpush2.bf16.msra.mxu0 0
        %4246 = vmatprep.subr.bf16.mxu0 0
        %4247 = vmatpush2.bf16.msra.mxu0 0
        %4248 = vmatprep.subr.bf16.mxu0 0
        %4249 = vmatpush2.bf16.msra.mxu0 0
        %4250 = vmatprep.mubr.bf16.mxu0 0
        %4251 = vmatmul.mubr.bf16.gmra.mxu0 %v4052
        %v4252 = vpop.f32.mrf.mxu0
        %v4253 = vadd.f32 %v3846, %v4252
        %v4254 = vpop.f32.mrf.mxu0
        %v4255 = vadd.f32 %v3850, %v4254
        %v4256 = vpop.f32.mrf.mxu0
        %v4257 = vpop.f32.mrf.mxu0
        %4258 = vdwg.mxu0
        %4259 = vmatprep.subr.bf16.mxu0 0
        %4260 = vmatpush1.bf16.msra.mxu0 0
        %4261 = vmatprep.subr.bf16.mxu0 0
        %4262 = vmatpush1.bf16.msra.mxu0 0
        %4263 = vmatprep.subr.bf16.mxu0 0
        %4264 = vmatpush1.bf16.msra.mxu0 0
        %4265 = vmatprep.subr.bf16.mxu0 0
        %4266 = vmatpush1.bf16.msra.mxu0 0
        %4267 = vmatprep.subr.bf16.mxu0 0
        %4268 = vmatpush1.bf16.msra.mxu0 0
        %4269 = vmatprep.subr.bf16.mxu0 0
        %4270 = vmatpush1.bf16.msra.mxu0 0
        %4271 = vmatprep.subr.bf16.mxu0 %v4014
        %4272 = vmatpush1.bf16.msra.mxu0 %v4013
        %4273 = vmatprep.subr.bf16.mxu0 %v3998
        %4274 = vmatpush1.bf16.msra.mxu0 %v3997
        %4275 = vmatprep.subr.bf16.mxu0 0
        %4276 = vmatpush2.bf16.msra.mxu0 0
        %4277 = vmatprep.subr.bf16.mxu0 0
        %4278 = vmatpush2.bf16.msra.mxu0 0
        %4279 = vmatprep.subr.bf16.mxu0 0
        %4280 = vmatpush2.bf16.msra.mxu0 0
        %4281 = vmatprep.subr.bf16.mxu0 0
        %4282 = vmatpush2.bf16.msra.mxu0 0
        %4283 = vmatprep.subr.bf16.mxu0 0
        %4284 = vmatpush2.bf16.msra.mxu0 0
        %4285 = vmatprep.subr.bf16.mxu0 0
        %4286 = vmatpush2.bf16.msra.mxu0 0
        %4287 = vmatprep.subr.bf16.mxu0 0
        %4288 = vmatpush2.bf16.msra.mxu0 0
        %4289 = vmatprep.subr.bf16.mxu0 0
        %4290 = vmatpush2.bf16.msra.mxu0 0
        %4291 = vmatprep.mubr.bf16.mxu0 0
        %4292 = vmatmul.mubr.bf16.gmra.mxu0 %v4052
        %v4293 = vpop.f32.mrf.mxu0
        %v4294 = vadd.f32 %v3854, %v4293
        %v4295 = vpop.f32.mrf.mxu0
        %v4296 = vadd.f32 %v3858, %v4295
        %v4297 = vpop.f32.mrf.mxu0
        %v4298 = vpop.f32.mrf.mxu0
        %4299 = vdwg.mxu0
        %4300 = vmatprep.subr.bf16.mxu0 0
        %4301 = vmatpush1.bf16.msra.mxu0 0
        %4302 = vmatprep.subr.bf16.mxu0 0
        %4303 = vmatpush1.bf16.msra.mxu0 0
        %4304 = vmatprep.subr.bf16.mxu0 0
        %4305 = vmatpush1.bf16.msra.mxu0 0
        %4306 = vmatprep.subr.bf16.mxu0 0
        %4307 = vmatpush1.bf16.msra.mxu0 0
        %4308 = vmatprep.subr.bf16.mxu0 0
        %4309 = vmatpush1.bf16.msra.mxu0 0
        %4310 = vmatprep.subr.bf16.mxu0 0
        %4311 = vmatpush1.bf16.msra.mxu0 0
        %4312 = vmatprep.subr.bf16.mxu0 %v4016
        %4313 = vmatpush1.bf16.msra.mxu0 %v4015
        %4314 = vmatprep.subr.bf16.mxu0 %v4000
        %4315 = vmatpush1.bf16.msra.mxu0 %v3999
        %4316 = vmatprep.subr.bf16.mxu0 0
        %4317 = vmatpush2.bf16.msra.mxu0 0
        %4318 = vmatprep.subr.bf16.mxu0 0
        %4319 = vmatpush2.bf16.msra.mxu0 0
        %4320 = vmatprep.subr.bf16.mxu0 0
        %4321 = vmatpush2.bf16.msra.mxu0 0
        %4322 = vmatprep.subr.bf16.mxu0 0
        %4323 = vmatpush2.bf16.msra.mxu0 0
        %4324 = vmatprep.subr.bf16.mxu0 0
        %4325 = vmatpush2.bf16.msra.mxu0 0
        %4326 = vmatprep.subr.bf16.mxu0 0
        %4327 = vmatpush2.bf16.msra.mxu0 0
        %4328 = vmatprep.subr.bf16.mxu0 0
        %4329 = vmatpush2.bf16.msra.mxu0 0
        %4330 = vmatprep.subr.bf16.mxu0 0
        %4331 = vmatpush2.bf16.msra.mxu0 0
        %4332 = vmatprep.mubr.bf16.mxu0 0
        %4333 = vmatmul.mubr.bf16.gmra.mxu0 %v4052
        %v4334 = vpop.f32.mrf.mxu0
        %v4335 = vadd.f32 %v3862, %v4334
        %v4336 = vpop.f32.mrf.mxu0
        %v4337 = vadd.f32 %v3866, %v4336
        %v4338 = vpop.f32.mrf.mxu0
        %v4339 = vpop.f32.mrf.mxu0
        %4340 = vdwg.mxu0
        %4341 = vmatprep.subr.bf16.mxu0 0
        %4342 = vmatpush1.bf16.msra.mxu0 0
        %4343 = vmatprep.subr.bf16.mxu0 0
        %4344 = vmatpush1.bf16.msra.mxu0 0
        %4345 = vmatprep.subr.bf16.mxu0 0
        %4346 = vmatpush1.bf16.msra.mxu0 0
        %4347 = vmatprep.subr.bf16.mxu0 0
        %4348 = vmatpush1.bf16.msra.mxu0 0
        %4349 = vmatprep.subr.bf16.mxu0 0
        %4350 = vmatpush1.bf16.msra.mxu0 0
        %4351 = vmatprep.subr.bf16.mxu0 0
        %4352 = vmatpush1.bf16.msra.mxu0 0
        %4353 = vmatprep.subr.bf16.mxu0 %v4018
        %4354 = vmatpush1.bf16.msra.mxu0 %v4017
        %4355 = vmatprep.subr.bf16.mxu0 %v4002
        %4356 = vmatpush1.bf16.msra.mxu0 %v4001
        %4357 = vmatprep.subr.bf16.mxu0 0
        %4358 = vmatpush2.bf16.msra.mxu0 0
        %4359 = vmatprep.subr.bf16.mxu0 0
        %4360 = vmatpush2.bf16.msra.mxu0 0
        %4361 = vmatprep.subr.bf16.mxu0 0
        %4362 = vmatpush2.bf16.msra.mxu0 0
        %4363 = vmatprep.subr.bf16.mxu0 0
        %4364 = vmatpush2.bf16.msra.mxu0 0
        %4365 = vmatprep.subr.bf16.mxu0 0
        %4366 = vmatpush2.bf16.msra.mxu0 0
        %4367 = vmatprep.subr.bf16.mxu0 0
        %4368 = vmatpush2.bf16.msra.mxu0 0
        %4369 = vmatprep.subr.bf16.mxu0 0
        %4370 = vmatpush2.bf16.msra.mxu0 0
        %4371 = vmatprep.subr.bf16.mxu0 0
        %4372 = vmatpush2.bf16.msra.mxu0 0
        %4373 = vmatprep.mubr.bf16.mxu0 0
        %4374 = vmatmul.mubr.bf16.gmra.mxu0 %v4052
        %v4375 = vpop.f32.mrf.mxu0
        %v4376 = vadd.f32 %v3870, %v4375
        %v4377 = vpop.f32.mrf.mxu0
        %v4378 = vadd.f32 %v3874, %v4377
        %v4379 = vpop.f32.mrf.mxu0
        %v4380 = vpop.f32.mrf.mxu0
        %4381 = vdwg.mxu0
        %v4382 = vmax.f32 %v4089, 0.0
        %v4383 = vmax.f32 %v4091, 0.0
        %v4384 = vmax.f32 %v4130, 0.0
        %v4385 = vmax.f32 %v4132, 0.0
        %v4386 = vmax.f32 %v4171, 0.0
        %v4387 = vmax.f32 %v4173, 0.0
        %v4388 = vmax.f32 %v4212, 0.0
        %v4389 = vmax.f32 %v4214, 0.0
        %v4390 = vmax.f32 %v4253, 0.0
        %v4391 = vmax.f32 %v4255, 0.0
        %v4392 = vmax.f32 %v4294, 0.0
        %v4393 = vmax.f32 %v4296, 0.0
        %v4394 = vmax.f32 %v4335, 0.0
        %v4395 = vmax.f32 %v4337, 0.0
        %v4396 = vmax.f32 %v4376, 0.0
        %v4397 = vmax.f32 %v4378, 0.0
        %v4398 = vpack.c.bf16 %v4382, %v4382
        %v4399 = vpack.c.bf16 %v4383, %v4383
        %v4400 = vpack.c.bf16 %v4384, %v4384
        %v4401 = vpack.c.bf16 %v4385, %v4385
        %v4402 = vpack.c.bf16 %v4386, %v4386
        %v4403 = vpack.c.bf16 %v4387, %v4387
        %v4404 = vpack.c.bf16 %v4388, %v4388
        %v4405 = vpack.c.bf16 %v4389, %v4389
        %v4406 = vpack.c.bf16 %v4390, %v4390
        %v4407 = vpack.c.bf16 %v4391, %v4391
        %v4408 = vpack.c.bf16 %v4392, %v4392
        %v4409 = vpack.c.bf16 %v4393, %v4393
        %v4410 = vpack.c.bf16 %v4394, %v4394
        %v4411 = vpack.c.bf16 %v4395, %v4395
        %v4412 = vpack.c.bf16 %v4396, %v4396
        %v4413 = vpack.c.bf16 %v4397, %v4397
        %s4414 = scalar_lea.vmem %s12, 256
        %v4415 = vld [vmem:[%s4414] sm:$0xff]
        %v4416 = vld [vmem:[%s4414 + $0x8] sm:$0xff]
        %v4417 = vld [vmem:[%s4414 + $0x10] sm:$0xff]
        %v4418 = vld [vmem:[%s4414 + $0x18] sm:$0xff]
        %v4419 = vld [vmem:[%s4414 + $0x20] sm:$0xff]
        %v4420 = vld [vmem:[%s4414 + $0x28] sm:$0xff]
        %v4421 = vld [vmem:[%s4414 + $0x30] sm:$0xff]
        %v4422 = vld [vmem:[%s4414 + $0x38] sm:$0xff]
        %v4423 = vld [vmem:[%s4414 + $0x40] sm:$0xff]
        %v4424 = vld [vmem:[%s4414 + $0x48] sm:$0xff]
        %v4425 = vld [vmem:[%s4414 + $0x50] sm:$0xff]
        %v4426 = vld [vmem:[%s4414 + $0x58] sm:$0xff]
        %v4427 = vld [vmem:[%s4414 + $0x60] sm:$0xff]
        %v4428 = vld [vmem:[%s4414 + $0x68] sm:$0xff]
        %v4429 = vld [vmem:[%s4414 + $0x70] sm:$0xff]
        %v4430 = vld [vmem:[%s4414 + $0x78] sm:$0xff]
        %v4431 = vld [vmem:[%s4414 + $0x80] sm:$0xff]
        %v4432 = vld [vmem:[%s4414 + $0x88] sm:$0xff]
        %v4433 = vld [vmem:[%s4414 + $0x90] sm:$0xff]
        %v4434 = vld [vmem:[%s4414 + $0x98] sm:$0xff]
        %v4435 = vld [vmem:[%s4414 + $0xa0] sm:$0xff]
        %v4436 = vld [vmem:[%s4414 + $0xa8] sm:$0xff]
        %v4437 = vld [vmem:[%s4414 + $0xb0] sm:$0xff]
        %v4438 = vld [vmem:[%s4414 + $0xb8] sm:$0xff]
        %v4439 = vld [vmem:[%s4414 + $0xc0] sm:$0xff]
        %v4440 = vld [vmem:[%s4414 + $0xc8] sm:$0xff]
        %v4441 = vld [vmem:[%s4414 + $0xd0] sm:$0xff]
        %v4442 = vld [vmem:[%s4414 + $0xd8] sm:$0xff]
        %v4443 = vld [vmem:[%s4414 + $0xe0] sm:$0xff]
        %v4444 = vld [vmem:[%s4414 + $0xe8] sm:$0xff]
        %v4445 = vld [vmem:[%s4414 + $0xf0] sm:$0xff]
        %v4446 = vld [vmem:[%s4414 + $0xf8] sm:$0xff]
        %s4447 = scalar_lea.vmem %s13, 1
        %v4448 = vld [vmem:[%s4447] sm:$0x1]
        %v4450 = vlaneseq
        %v4451 = vshrl.u32 %v4450, 7
        %v4452 = vsub.s32 0, %v4451
        %v4453 = vrot.slane %v4448, %v4452
        %v4487 = vunpack.c.l.b16 %v4415
        %v4488 = vunpack.c.h.b16 %v4415
        %v4489 = vunpack.c.l.b16 %v4416
        %v4490 = vunpack.c.h.b16 %v4416
        %v4491 = vunpack.c.l.b16 %v4417
        %v4492 = vunpack.c.h.b16 %v4417
        %v4493 = vunpack.c.l.b16 %v4418
        %v4494 = vunpack.c.h.b16 %v4418
        %v4495 = vunpack.c.l.b16 %v4419
        %v4496 = vunpack.c.h.b16 %v4419
        %v4497 = vunpack.c.l.b16 %v4420
        %v4498 = vunpack.c.h.b16 %v4420
        %v4499 = vunpack.c.l.b16 %v4421
        %v4500 = vunpack.c.h.b16 %v4421
        %v4501 = vunpack.c.l.b16 %v4422
        %v4502 = vunpack.c.h.b16 %v4422
        %v4503 = vunpack.c.l.b16 %v4423
        %v4504 = vunpack.c.h.b16 %v4423
        %v4505 = vunpack.c.l.b16 %v4424
        %v4506 = vunpack.c.h.b16 %v4424
        %v4507 = vunpack.c.l.b16 %v4425
        %v4508 = vunpack.c.h.b16 %v4425
        %v4509 = vunpack.c.l.b16 %v4426
        %v4510 = vunpack.c.h.b16 %v4426
        %v4511 = vunpack.c.l.b16 %v4427
        %v4512 = vunpack.c.h.b16 %v4427
        %v4513 = vunpack.c.l.b16 %v4428
        %v4514 = vunpack.c.h.b16 %v4428
        %v4515 = vunpack.c.l.b16 %v4429
        %v4516 = vunpack.c.h.b16 %v4429
        %v4517 = vunpack.c.l.b16 %v4430
        %v4518 = vunpack.c.h.b16 %v4430
        %v4519 = vunpack.c.l.b16 %v4431
        %v4520 = vunpack.c.h.b16 %v4431
        %v4521 = vunpack.c.l.b16 %v4432
        %v4522 = vunpack.c.h.b16 %v4432
        %v4523 = vunpack.c.l.b16 %v4433
        %v4524 = vunpack.c.h.b16 %v4433
        %v4525 = vunpack.c.l.b16 %v4434
        %v4526 = vunpack.c.h.b16 %v4434
        %v4527 = vunpack.c.l.b16 %v4435
        %v4528 = vunpack.c.h.b16 %v4435
        %v4529 = vunpack.c.l.b16 %v4436
        %v4530 = vunpack.c.h.b16 %v4436
        %v4531 = vunpack.c.l.b16 %v4437
        %v4532 = vunpack.c.h.b16 %v4437
        %v4533 = vunpack.c.l.b16 %v4438
        %v4534 = vunpack.c.h.b16 %v4438
        %v4535 = vunpack.c.l.b16 %v4439
        %v4536 = vunpack.c.h.b16 %v4439
        %v4537 = vunpack.c.l.b16 %v4440
        %v4538 = vunpack.c.h.b16 %v4440
        %v4539 = vunpack.c.l.b16 %v4441
        %v4540 = vunpack.c.h.b16 %v4441
        %v4541 = vunpack.c.l.b16 %v4442
        %v4542 = vunpack.c.h.b16 %v4442
        %v4543 = vunpack.c.l.b16 %v4443
        %v4544 = vunpack.c.h.b16 %v4443
        %v4545 = vunpack.c.l.b16 %v4444
        %v4546 = vunpack.c.h.b16 %v4444
        %v4547 = vunpack.c.l.b16 %v4445
        %v4548 = vunpack.c.h.b16 %v4445
        %v4549 = vunpack.c.l.b16 %v4446
        %v4550 = vunpack.c.h.b16 %v4446
        %v4551 = vpack.c.b16 %v4503, %v4487
        %v4552 = vpack.c.b16 %v4504, %v4488
        %v4553 = vpack.c.b16 %v4505, %v4489
        %v4554 = vpack.c.b16 %v4506, %v4490
        %v4555 = vpack.c.b16 %v4507, %v4491
        %v4556 = vpack.c.b16 %v4508, %v4492
        %v4557 = vpack.c.b16 %v4509, %v4493
        %v4558 = vpack.c.b16 %v4510, %v4494
        %v4559 = vpack.c.b16 %v4511, %v4495
        %v4560 = vpack.c.b16 %v4512, %v4496
        %v4561 = vpack.c.b16 %v4513, %v4497
        %v4562 = vpack.c.b16 %v4514, %v4498
        %v4563 = vpack.c.b16 %v4515, %v4499
        %v4564 = vpack.c.b16 %v4516, %v4500
        %v4565 = vpack.c.b16 %v4517, %v4501
        %v4566 = vpack.c.b16 %v4518, %v4502
        %v4567 = vpack.c.b16 %v4535, %v4519
        %v4568 = vpack.c.b16 %v4536, %v4520
        %v4569 = vpack.c.b16 %v4537, %v4521
        %v4570 = vpack.c.b16 %v4538, %v4522
        %v4571 = vpack.c.b16 %v4539, %v4523
        %v4572 = vpack.c.b16 %v4540, %v4524
        %v4573 = vpack.c.b16 %v4541, %v4525
        %v4574 = vpack.c.b16 %v4542, %v4526
        %v4575 = vpack.c.b16 %v4543, %v4527
        %v4576 = vpack.c.b16 %v4544, %v4528
        %v4577 = vpack.c.b16 %v4545, %v4529
        %v4578 = vpack.c.b16 %v4546, %v4530
        %v4579 = vpack.c.b16 %v4547, %v4531
        %v4580 = vpack.c.b16 %v4548, %v4532
        %v4581 = vpack.c.b16 %v4549, %v4533
        %v4582 = vpack.c.b16 %v4550, %v4534
        %4615 = vmatprep.subr.bf16.mxu0 0
        %4616 = vmatpush1.bf16.xpose.msra.mxu0 0
        %4617 = vmatprep.subr.bf16.mxu0 0
        %4618 = vmatpush1.bf16.xpose.msra.mxu0 0
        %4619 = vmatprep.subr.bf16.mxu0 0
        %4620 = vmatpush1.bf16.xpose.msra.mxu0 0
        %4621 = vmatprep.subr.bf16.mxu0 0
        %4622 = vmatpush1.bf16.xpose.msra.mxu0 0
        %4623 = vmatprep.subr.bf16.mxu0 0
        %4624 = vmatpush1.bf16.xpose.msra.mxu0 0
        %4625 = vmatprep.subr.bf16.mxu0 0
        %4626 = vmatpush1.bf16.xpose.msra.mxu0 0
        %4627 = vmatprep.subr.bf16.mxu0 %v4568
        %4628 = vmatpush1.bf16.xpose.msra.mxu0 %v4567
        %4629 = vmatprep.subr.bf16.mxu0 %v4552
        %4630 = vmatpush1.bf16.xpose.msra.mxu0 %v4551
        %4631 = vmatprep.subr.bf16.mxu0 0
        %4632 = vmatpush2.bf16.xpose.msra.mxu0 0
        %4633 = vmatprep.subr.bf16.mxu0 0
        %4634 = vmatpush2.bf16.xpose.msra.mxu0 0
        %4635 = vmatprep.subr.bf16.mxu0 0
        %4636 = vmatpush2.bf16.xpose.msra.mxu0 0
        %4637 = vmatprep.subr.bf16.mxu0 0
        %4638 = vmatpush2.bf16.xpose.msra.mxu0 0
        %4639 = vmatprep.subr.bf16.mxu0 0
        %4640 = vmatpush2.bf16.xpose.msra.mxu0 0
        %4641 = vmatprep.subr.bf16.mxu0 0
        %4642 = vmatpush2.bf16.xpose.msra.mxu0 0
        %4643 = vmatprep.subr.bf16.mxu0 0
        %4644 = vmatpush2.bf16.xpose.msra.mxu0 0
        %4645 = vmatprep.subr.bf16.mxu0 0
        %4646 = vmatpush2.bf16.xpose.msra.mxu0 0
        %4647 = vmatprep.mubr.bf16.mxu0 %v4399
        %4648 = vmatmul.mubr.bf16.gmra.mxu0 %v4398
        %v4649 = vpop.f32.mrf.mxu0
        %v4650 = vadd.f32 %v4453, %v4649
        %v4651 = vpop.f32.mrf.mxu0
        %v4652 = vpop.f32.mrf.mxu0
        %v4653 = vpop.f32.mrf.mxu0
        %4654 = vdwg.mxu0
        %4655 = vmatprep.subr.bf16.mxu0 0
        %4656 = vmatpush1.bf16.xpose.msra.mxu0 0
        %4657 = vmatprep.subr.bf16.mxu0 0
        %4658 = vmatpush1.bf16.xpose.msra.mxu0 0
        %4659 = vmatprep.subr.bf16.mxu0 0
        %4660 = vmatpush1.bf16.xpose.msra.mxu0 0
        %4661 = vmatprep.subr.bf16.mxu0 0
        %4662 = vmatpush1.bf16.xpose.msra.mxu0 0
        %4663 = vmatprep.subr.bf16.mxu0 0
        %4664 = vmatpush1.bf16.xpose.msra.mxu0 0
        %4665 = vmatprep.subr.bf16.mxu0 0
        %4666 = vmatpush1.bf16.xpose.msra.mxu0 0
        %4667 = vmatprep.subr.bf16.mxu0 %v4570
        %4668 = vmatpush1.bf16.xpose.msra.mxu0 %v4569
        %4669 = vmatprep.subr.bf16.mxu0 %v4554
        %4670 = vmatpush1.bf16.xpose.msra.mxu0 %v4553
        %4671 = vmatprep.subr.bf16.mxu0 0
        %4672 = vmatpush2.bf16.xpose.msra.mxu0 0
        %4673 = vmatprep.subr.bf16.mxu0 0
        %4674 = vmatpush2.bf16.xpose.msra.mxu0 0
        %4675 = vmatprep.subr.bf16.mxu0 0
        %4676 = vmatpush2.bf16.xpose.msra.mxu0 0
        %4677 = vmatprep.subr.bf16.mxu0 0
        %4678 = vmatpush2.bf16.xpose.msra.mxu0 0
        %4679 = vmatprep.subr.bf16.mxu0 0
        %4680 = vmatpush2.bf16.xpose.msra.mxu0 0
        %4681 = vmatprep.subr.bf16.mxu0 0
        %4682 = vmatpush2.bf16.xpose.msra.mxu0 0
        %4683 = vmatprep.subr.bf16.mxu0 0
        %4684 = vmatpush2.bf16.xpose.msra.mxu0 0
        %4685 = vmatprep.subr.bf16.mxu0 0
        %4686 = vmatpush2.bf16.xpose.msra.mxu0 0
        %4687 = vmatprep.mubr.bf16.mxu0 %v4401
        %4688 = vmatmul.mubr.bf16.gmra.mxu0 %v4400
        %v4689 = vpop.f32.mrf.mxu0
        %v4690 = vadd.f32 %v4650, %v4689
        %v4691 = vpop.f32.mrf.mxu0
        %v4692 = vpop.f32.mrf.mxu0
        %v4693 = vpop.f32.mrf.mxu0
        %4694 = vdwg.mxu0
        %4695 = vmatprep.subr.bf16.mxu0 0
        %4696 = vmatpush1.bf16.xpose.msra.mxu0 0
        %4697 = vmatprep.subr.bf16.mxu0 0
        %4698 = vmatpush1.bf16.xpose.msra.mxu0 0
        %4699 = vmatprep.subr.bf16.mxu0 0
        %4700 = vmatpush1.bf16.xpose.msra.mxu0 0
        %4701 = vmatprep.subr.bf16.mxu0 0
        %4702 = vmatpush1.bf16.xpose.msra.mxu0 0
        %4703 = vmatprep.subr.bf16.mxu0 0
        %4704 = vmatpush1.bf16.xpose.msra.mxu0 0
        %4705 = vmatprep.subr.bf16.mxu0 0
        %4706 = vmatpush1.bf16.xpose.msra.mxu0 0
        %4707 = vmatprep.subr.bf16.mxu0 %v4572
        %4708 = vmatpush1.bf16.xpose.msra.mxu0 %v4571
        %4709 = vmatprep.subr.bf16.mxu0 %v4556
        %4710 = vmatpush1.bf16.xpose.msra.mxu0 %v4555
        %4711 = vmatprep.subr.bf16.mxu0 0
        %4712 = vmatpush2.bf16.xpose.msra.mxu0 0
        %4713 = vmatprep.subr.bf16.mxu0 0
        %4714 = vmatpush2.bf16.xpose.msra.mxu0 0
        %4715 = vmatprep.subr.bf16.mxu0 0
        %4716 = vmatpush2.bf16.xpose.msra.mxu0 0
        %4717 = vmatprep.subr.bf16.mxu0 0
        %4718 = vmatpush2.bf16.xpose.msra.mxu0 0
        %4719 = vmatprep.subr.bf16.mxu0 0
        %4720 = vmatpush2.bf16.xpose.msra.mxu0 0
        %4721 = vmatprep.subr.bf16.mxu0 0
        %4722 = vmatpush2.bf16.xpose.msra.mxu0 0
        %4723 = vmatprep.subr.bf16.mxu0 0
        %4724 = vmatpush2.bf16.xpose.msra.mxu0 0
        %4725 = vmatprep.subr.bf16.mxu0 0
        %4726 = vmatpush2.bf16.xpose.msra.mxu0 0
        %4727 = vmatprep.mubr.bf16.mxu0 %v4403
        %4728 = vmatmul.mubr.bf16.gmra.mxu0 %v4402
        %v4729 = vpop.f32.mrf.mxu0
        %v4730 = vadd.f32 %v4690, %v4729
        %v4731 = vpop.f32.mrf.mxu0
        %v4732 = vpop.f32.mrf.mxu0
        %v4733 = vpop.f32.mrf.mxu0
        %4734 = vdwg.mxu0
        %4735 = vmatprep.subr.bf16.mxu0 0
        %4736 = vmatpush1.bf16.xpose.msra.mxu0 0
        %4737 = vmatprep.subr.bf16.mxu0 0
        %4738 = vmatpush1.bf16.xpose.msra.mxu0 0
        %4739 = vmatprep.subr.bf16.mxu0 0
        %4740 = vmatpush1.bf16.xpose.msra.mxu0 0
        %4741 = vmatprep.subr.bf16.mxu0 0
        %4742 = vmatpush1.bf16.xpose.msra.mxu0 0
        %4743 = vmatprep.subr.bf16.mxu0 0
        %4744 = vmatpush1.bf16.xpose.msra.mxu0 0
        %4745 = vmatprep.subr.bf16.mxu0 0
        %4746 = vmatpush1.bf16.xpose.msra.mxu0 0
        %4747 = vmatprep.subr.bf16.mxu0 %v4574
        %4748 = vmatpush1.bf16.xpose.msra.mxu0 %v4573
        %4749 = vmatprep.subr.bf16.mxu0 %v4558
        %4750 = vmatpush1.bf16.xpose.msra.mxu0 %v4557
        %4751 = vmatprep.subr.bf16.mxu0 0
        %4752 = vmatpush2.bf16.xpose.msra.mxu0 0
        %4753 = vmatprep.subr.bf16.mxu0 0
        %4754 = vmatpush2.bf16.xpose.msra.mxu0 0
        %4755 = vmatprep.subr.bf16.mxu0 0
        %4756 = vmatpush2.bf16.xpose.msra.mxu0 0
        %4757 = vmatprep.subr.bf16.mxu0 0
        %4758 = vmatpush2.bf16.xpose.msra.mxu0 0
        %4759 = vmatprep.subr.bf16.mxu0 0
        %4760 = vmatpush2.bf16.xpose.msra.mxu0 0
        %4761 = vmatprep.subr.bf16.mxu0 0
        %4762 = vmatpush2.bf16.xpose.msra.mxu0 0
        %4763 = vmatprep.subr.bf16.mxu0 0
        %4764 = vmatpush2.bf16.xpose.msra.mxu0 0
        %4765 = vmatprep.subr.bf16.mxu0 0
        %4766 = vmatpush2.bf16.xpose.msra.mxu0 0
        %4767 = vmatprep.mubr.bf16.mxu0 %v4405
        %4768 = vmatmul.mubr.bf16.gmra.mxu0 %v4404
        %v4769 = vpop.f32.mrf.mxu0
        %v4770 = vadd.f32 %v4730, %v4769
        %v4771 = vpop.f32.mrf.mxu0
        %v4772 = vpop.f32.mrf.mxu0
        %v4773 = vpop.f32.mrf.mxu0
        %4774 = vdwg.mxu0
        %4775 = vmatprep.subr.bf16.mxu0 0
        %4776 = vmatpush1.bf16.xpose.msra.mxu0 0
        %4777 = vmatprep.subr.bf16.mxu0 0
        %4778 = vmatpush1.bf16.xpose.msra.mxu0 0
        %4779 = vmatprep.subr.bf16.mxu0 0
        %4780 = vmatpush1.bf16.xpose.msra.mxu0 0
        %4781 = vmatprep.subr.bf16.mxu0 0
        %4782 = vmatpush1.bf16.xpose.msra.mxu0 0
        %4783 = vmatprep.subr.bf16.mxu0 0
        %4784 = vmatpush1.bf16.xpose.msra.mxu0 0
        %4785 = vmatprep.subr.bf16.mxu0 0
        %4786 = vmatpush1.bf16.xpose.msra.mxu0 0
        %4787 = vmatprep.subr.bf16.mxu0 %v4576
        %4788 = vmatpush1.bf16.xpose.msra.mxu0 %v4575
        %4789 = vmatprep.subr.bf16.mxu0 %v4560
        %4790 = vmatpush1.bf16.xpose.msra.mxu0 %v4559
        %4791 = vmatprep.subr.bf16.mxu0 0
        %4792 = vmatpush2.bf16.xpose.msra.mxu0 0
        %4793 = vmatprep.subr.bf16.mxu0 0
        %4794 = vmatpush2.bf16.xpose.msra.mxu0 0
        %4795 = vmatprep.subr.bf16.mxu0 0
        %4796 = vmatpush2.bf16.xpose.msra.mxu0 0
        %4797 = vmatprep.subr.bf16.mxu0 0
        %4798 = vmatpush2.bf16.xpose.msra.mxu0 0
        %4799 = vmatprep.subr.bf16.mxu0 0
        %4800 = vmatpush2.bf16.xpose.msra.mxu0 0
        %4801 = vmatprep.subr.bf16.mxu0 0
        %4802 = vmatpush2.bf16.xpose.msra.mxu0 0
        %4803 = vmatprep.subr.bf16.mxu0 0
        %4804 = vmatpush2.bf16.xpose.msra.mxu0 0
        %4805 = vmatprep.subr.bf16.mxu0 0
        %4806 = vmatpush2.bf16.xpose.msra.mxu0 0
        %4807 = vmatprep.mubr.bf16.mxu0 %v4407
        %4808 = vmatmul.mubr.bf16.gmra.mxu0 %v4406
        %v4809 = vpop.f32.mrf.mxu0
        %v4810 = vadd.f32 %v4770, %v4809
        %v4811 = vpop.f32.mrf.mxu0
        %v4812 = vpop.f32.mrf.mxu0
        %v4813 = vpop.f32.mrf.mxu0
        %4814 = vdwg.mxu0
        %4815 = vmatprep.subr.bf16.mxu0 0
        %4816 = vmatpush1.bf16.xpose.msra.mxu0 0
        %4817 = vmatprep.subr.bf16.mxu0 0
        %4818 = vmatpush1.bf16.xpose.msra.mxu0 0
        %4819 = vmatprep.subr.bf16.mxu0 0
        %4820 = vmatpush1.bf16.xpose.msra.mxu0 0
        %4821 = vmatprep.subr.bf16.mxu0 0
        %4822 = vmatpush1.bf16.xpose.msra.mxu0 0
        %4823 = vmatprep.subr.bf16.mxu0 0
        %4824 = vmatpush1.bf16.xpose.msra.mxu0 0
        %4825 = vmatprep.subr.bf16.mxu0 0
        %4826 = vmatpush1.bf16.xpose.msra.mxu0 0
        %4827 = vmatprep.subr.bf16.mxu0 %v4578
        %4828 = vmatpush1.bf16.xpose.msra.mxu0 %v4577
        %4829 = vmatprep.subr.bf16.mxu0 %v4562
        %4830 = vmatpush1.bf16.xpose.msra.mxu0 %v4561
        %4831 = vmatprep.subr.bf16.mxu0 0
        %4832 = vmatpush2.bf16.xpose.msra.mxu0 0
        %4833 = vmatprep.subr.bf16.mxu0 0
        %4834 = vmatpush2.bf16.xpose.msra.mxu0 0
        %4835 = vmatprep.subr.bf16.mxu0 0
        %4836 = vmatpush2.bf16.xpose.msra.mxu0 0
        %4837 = vmatprep.subr.bf16.mxu0 0
        %4838 = vmatpush2.bf16.xpose.msra.mxu0 0
        %4839 = vmatprep.subr.bf16.mxu0 0
        %4840 = vmatpush2.bf16.xpose.msra.mxu0 0
        %4841 = vmatprep.subr.bf16.mxu0 0
        %4842 = vmatpush2.bf16.xpose.msra.mxu0 0
        %4843 = vmatprep.subr.bf16.mxu0 0
        %4844 = vmatpush2.bf16.xpose.msra.mxu0 0
        %4845 = vmatprep.subr.bf16.mxu0 0
        %4846 = vmatpush2.bf16.xpose.msra.mxu0 0
        %4847 = vmatprep.mubr.bf16.mxu0 %v4409
        %4848 = vmatmul.mubr.bf16.gmra.mxu0 %v4408
        %v4849 = vpop.f32.mrf.mxu0
        %v4850 = vadd.f32 %v4810, %v4849
        %v4851 = vpop.f32.mrf.mxu0
        %v4852 = vpop.f32.mrf.mxu0
        %v4853 = vpop.f32.mrf.mxu0
        %4854 = vdwg.mxu0
        %4855 = vmatprep.subr.bf16.mxu0 0
        %4856 = vmatpush1.bf16.xpose.msra.mxu0 0
        %4857 = vmatprep.subr.bf16.mxu0 0
        %4858 = vmatpush1.bf16.xpose.msra.mxu0 0
        %4859 = vmatprep.subr.bf16.mxu0 0
        %4860 = vmatpush1.bf16.xpose.msra.mxu0 0
        %4861 = vmatprep.subr.bf16.mxu0 0
        %4862 = vmatpush1.bf16.xpose.msra.mxu0 0
        %4863 = vmatprep.subr.bf16.mxu0 0
        %4864 = vmatpush1.bf16.xpose.msra.mxu0 0
        %4865 = vmatprep.subr.bf16.mxu0 0
        %4866 = vmatpush1.bf16.xpose.msra.mxu0 0
        %4867 = vmatprep.subr.bf16.mxu0 %v4580
        %4868 = vmatpush1.bf16.xpose.msra.mxu0 %v4579
        %4869 = vmatprep.subr.bf16.mxu0 %v4564
        %4870 = vmatpush1.bf16.xpose.msra.mxu0 %v4563
        %4871 = vmatprep.subr.bf16.mxu0 0
        %4872 = vmatpush2.bf16.xpose.msra.mxu0 0
        %4873 = vmatprep.subr.bf16.mxu0 0
        %4874 = vmatpush2.bf16.xpose.msra.mxu0 0
        %4875 = vmatprep.subr.bf16.mxu0 0
        %4876 = vmatpush2.bf16.xpose.msra.mxu0 0
        %4877 = vmatprep.subr.bf16.mxu0 0
        %4878 = vmatpush2.bf16.xpose.msra.mxu0 0
        %4879 = vmatprep.subr.bf16.mxu0 0
        %4880 = vmatpush2.bf16.xpose.msra.mxu0 0
        %4881 = vmatprep.subr.bf16.mxu0 0
        %4882 = vmatpush2.bf16.xpose.msra.mxu0 0
        %4883 = vmatprep.subr.bf16.mxu0 0
        %4884 = vmatpush2.bf16.xpose.msra.mxu0 0
        %4885 = vmatprep.subr.bf16.mxu0 0
        %4886 = vmatpush2.bf16.xpose.msra.mxu0 0
        %4887 = vmatprep.mubr.bf16.mxu0 %v4411
        %4888 = vmatmul.mubr.bf16.gmra.mxu0 %v4410
        %v4889 = vpop.f32.mrf.mxu0
        %v4890 = vadd.f32 %v4850, %v4889
        %v4891 = vpop.f32.mrf.mxu0
        %v4892 = vpop.f32.mrf.mxu0
        %v4893 = vpop.f32.mrf.mxu0
        %4894 = vdwg.mxu0
        %4895 = vmatprep.subr.bf16.mxu0 0
        %4896 = vmatpush1.bf16.xpose.msra.mxu0 0
        %4897 = vmatprep.subr.bf16.mxu0 0
        %4898 = vmatpush1.bf16.xpose.msra.mxu0 0
        %4899 = vmatprep.subr.bf16.mxu0 0
        %4900 = vmatpush1.bf16.xpose.msra.mxu0 0
        %4901 = vmatprep.subr.bf16.mxu0 0
        %4902 = vmatpush1.bf16.xpose.msra.mxu0 0
        %4903 = vmatprep.subr.bf16.mxu0 0
        %4904 = vmatpush1.bf16.xpose.msra.mxu0 0
        %4905 = vmatprep.subr.bf16.mxu0 0
        %4906 = vmatpush1.bf16.xpose.msra.mxu0 0
        %4907 = vmatprep.subr.bf16.mxu0 %v4582
        %4908 = vmatpush1.bf16.xpose.msra.mxu0 %v4581
        %4909 = vmatprep.subr.bf16.mxu0 %v4566
        %4910 = vmatpush1.bf16.xpose.msra.mxu0 %v4565
        %4911 = vmatprep.subr.bf16.mxu0 0
        %4912 = vmatpush2.bf16.xpose.msra.mxu0 0
        %4913 = vmatprep.subr.bf16.mxu0 0
        %4914 = vmatpush2.bf16.xpose.msra.mxu0 0
        %4915 = vmatprep.subr.bf16.mxu0 0
        %4916 = vmatpush2.bf16.xpose.msra.mxu0 0
        %4917 = vmatprep.subr.bf16.mxu0 0
        %4918 = vmatpush2.bf16.xpose.msra.mxu0 0
        %4919 = vmatprep.subr.bf16.mxu0 0
        %4920 = vmatpush2.bf16.xpose.msra.mxu0 0
        %4921 = vmatprep.subr.bf16.mxu0 0
        %4922 = vmatpush2.bf16.xpose.msra.mxu0 0
        %4923 = vmatprep.subr.bf16.mxu0 0
        %4924 = vmatpush2.bf16.xpose.msra.mxu0 0
        %4925 = vmatprep.subr.bf16.mxu0 0
        %4926 = vmatpush2.bf16.xpose.msra.mxu0 0
        %4927 = vmatprep.mubr.bf16.mxu0 %v4413
        %4928 = vmatmul.mubr.bf16.gmra.mxu0 %v4412
        %v4929 = vpop.f32.mrf.mxu0
        %v4930 = vadd.f32 %v4890, %v4929
        %v4931 = vpop.f32.mrf.mxu0
        %v4932 = vpop.f32.mrf.mxu0
        %v4933 = vpop.f32.mrf.mxu0
        %4934 = vdwg.mxu0
        %v4935 = vadd.f32 %v3771, %v4930
        %v4936 = vsel %vm620, %v4935, 0.0
        %4937 = vadd.xlane.f32.xlu0 %v4936
        %v4938 = vpop.xlane.xlu0 %4937
        %v4939 = vmul.f32 %v4938, %v1420
        %v4940 = vsub.f32 %v4935, %v4939
        %v4941 = vmul.f32 %v4940, %v4940
        %v4942 = vsel %vm620, %v4941, 0.0
        %4943 = vadd.xlane.f32.xlu0 %v4942
        %v4944 = vpop.xlane.xlu0 %4943
        %v4945 = vmul.f32 %v4944, %v1420
        %v4946 = vadd.f32 %v4945, 1e-05
        %v4947 = vrsqrt.pop %v4946
        %v4948 = vmul.f32 %v4940, %v4947
        %v4949 = vlaneseq
        %v4950 = vshrl.u32 %v4949, 7
        %v4951 = vsub.s32 2, %v4950
        %v4952 = vrot.slane %v2775, %v4951
        %v4953 = vmul.f32 %v4948, %v4952
        %v4954 = vlaneseq
        %v4955 = vshrl.u32 %v4954, 7
        %v4956 = vsub.s32 2, %v4955
        %v4957 = vrot.slane %v2777, %v4956
        %v4958 = vadd.f32 %v4953, %v4957
        %s4959 = scalar_lea.vmem %s14, 8
        %v4960 = vld [vmem:[%s4959] sm:$0x7]
        %s4961 = scalar_lea.vmem %s15, 8
        %v4962 = vld [vmem:[%s4961] sm:$0x7]
        %v4963 = vpack.c.bf16 %v4958, %v4958
        %s4964 = scalar_lea.vmem %s2, 32
        %v4965 = vld [vmem:[%s4964] sm:$0xf]
        %v4966 = vld [vmem:[%s4964 + $0x4] sm:$0xf]
        %v4967 = vld [vmem:[%s4964 + $0x8] sm:$0xf]
        %v4968 = vld [vmem:[%s4964 + $0xc] sm:$0xf]
        %s4969 = scalar_lea.vmem %s3, 2
        %v4970 = vld [vmem:[%s4969] sm:$0x1]
        %v4972 = vlaneseq
        %v4973 = vshrl.u32 %v4972, 7
        %v4974 = vsub.s32 0, %v4973
        %v4975 = vrot.slane %v4970, %v4974
        %v4981 = vunpack.c.l.b16 %v4965
        %v4982 = vunpack.c.l.b16 %v4966
        %v4983 = vunpack.c.l.b16 %v4967
        %v4984 = vunpack.c.l.b16 %v4968
        %v4985 = vpack.c.b16 %v4982, %v4981
        %v4986 = vpack.c.b16 %v4984, %v4983
        %v4990 = vsel %vm620, %v4963, 0
        %4992 = vmatprep.subr.bf16.mxu0 0
        %4993 = vmatpush1.bf16.msra.mxu0 0
        %4994 = vmatprep.subr.bf16.mxu0 0
        %4995 = vmatpush1.bf16.msra.mxu0 0
        %4996 = vmatprep.subr.bf16.mxu0 0
        %4997 = vmatpush1.bf16.msra.mxu0 0
        %4998 = vmatprep.subr.bf16.mxu0 0
        %4999 = vmatpush1.bf16.msra.mxu0 0
        %5000 = vmatprep.subr.bf16.mxu0 0
        %5001 = vmatpush1.bf16.msra.mxu0 0
        %5002 = vmatprep.subr.bf16.mxu0 0
        %5003 = vmatpush1.bf16.msra.mxu0 0
        %5004 = vmatprep.subr.bf16.mxu0 0
        %5005 = vmatpush1.bf16.msra.mxu0 %v4986
        %5006 = vmatprep.subr.bf16.mxu0 0
        %5007 = vmatpush1.bf16.msra.mxu0 %v4985
        %5008 = vmatprep.subr.bf16.mxu0 0
        %5009 = vmatpush2.bf16.msra.mxu0 0
        %5010 = vmatprep.subr.bf16.mxu0 0
        %5011 = vmatpush2.bf16.msra.mxu0 0
        %5012 = vmatprep.subr.bf16.mxu0 0
        %5013 = vmatpush2.bf16.msra.mxu0 0
        %5014 = vmatprep.subr.bf16.mxu0 0
        %5015 = vmatpush2.bf16.msra.mxu0 0
        %5016 = vmatprep.subr.bf16.mxu0 0
        %5017 = vmatpush2.bf16.msra.mxu0 0
        %5018 = vmatprep.subr.bf16.mxu0 0
        %5019 = vmatpush2.bf16.msra.mxu0 0
        %5020 = vmatprep.subr.bf16.mxu0 0
        %5021 = vmatpush2.bf16.msra.mxu0 0
        %5022 = vmatprep.subr.bf16.mxu0 0
        %5023 = vmatpush2.bf16.msra.mxu0 0
        %5024 = vmatprep.mubr.bf16.mxu0 0
        %5025 = vmatmul.mubr.bf16.gmra.mxu0 %v4990
        %v5026 = vpop.f32.mrf.mxu0
        %v5027 = vadd.f32 %v4975, %v5026
        %v5028 = vpop.f32.mrf.mxu0
        %v5029 = vpop.f32.mrf.mxu0
        %v5030 = vpop.f32.mrf.mxu0
        %5031 = vdwg.mxu0
        %5033 = vrot.lane.b32.xlu0 %v5027, 96
        %v5034 = vpop.permute.xlu0 %5033
        %v5035 = vsel %vm667, %v5027, 0
        %v5037 = vsel %vm667, %v5034, 0
        %5039 = vmatprep.subr.mxu0 0.0
        %5040 = vmatpush1.xpose.msra.mxu0 0.0
        %5041 = vmatprep.subr.mxu0 0.0
        %5042 = vmatpush1.xpose.msra.mxu0 0.0
        %5043 = vmatprep.subr.mxu0 0.0
        %5044 = vmatpush1.xpose.msra.mxu0 0.0
        %5045 = vmatprep.subr.mxu0 0.0
        %5046 = vmatpush1.xpose.msra.mxu0 0.0
        %5047 = vmatprep.subr.mxu0 0.0
        %5048 = vmatpush1.xpose.msra.mxu0 0.0
        %5049 = vmatprep.subr.mxu0 0.0
        %5050 = vmatpush1.xpose.msra.mxu0 0.0
        %5051 = vmatprep.subr.mxu0 0.0
        %5052 = vmatpush1.xpose.msra.mxu0 0.0
        %5053 = vmatprep.subr.mxu0 0.0
        %5054 = vmatpush1.xpose.msra.mxu0 0.0
        %5055 = vmatprep.subr.mxu0 0.0
        %5056 = vmatpush1.xpose.msra.mxu0 0.0
        %5057 = vmatprep.subr.mxu0 0.0
        %5058 = vmatpush1.xpose.msra.mxu0 0.0
        %5059 = vmatprep.subr.mxu0 0.0
        %5060 = vmatpush1.xpose.msra.mxu0 0.0
        %5061 = vmatprep.subr.mxu0 0.0
        %5062 = vmatpush1.xpose.msra.mxu0 0.0
        %5063 = vmatprep.subr.mxu0 0.0
        %5064 = vmatpush1.xpose.msra.mxu0 0.0
        %5065 = vmatprep.subr.mxu0 0.0
        %5066 = vmatpush1.xpose.msra.mxu0 0.0
        %5067 = vmatprep.subr.mxu0 0.0
        %5068 = vmatpush1.xpose.msra.mxu0 0.0
        %5069 = vmatprep.subr.mxu0 0.0
        %5070 = vmatpush1.xpose.msra.mxu0 %v5037
        %5071 = vmatprep.subr.mxu0 0.0
        %5072 = vmatpush2.xpose.msra.mxu0 0.0
        %5073 = vmatprep.subr.mxu0 0.0
        %5074 = vmatpush2.xpose.msra.mxu0 0.0
        %5075 = vmatprep.subr.mxu0 0.0
        %5076 = vmatpush2.xpose.msra.mxu0 0.0
        %5077 = vmatprep.subr.mxu0 0.0
        %5078 = vmatpush2.xpose.msra.mxu0 0.0
        %5079 = vmatprep.subr.mxu0 0.0
        %5080 = vmatpush2.xpose.msra.mxu0 0.0
        %5081 = vmatprep.subr.mxu0 0.0
        %5082 = vmatpush2.xpose.msra.mxu0 0.0
        %5083 = vmatprep.subr.mxu0 0.0
        %5084 = vmatpush2.xpose.msra.mxu0 0.0
        %5085 = vmatprep.subr.mxu0 0.0
        %5086 = vmatpush2.xpose.msra.mxu0 0.0
        %5087 = vmatprep.subr.mxu0 0.0
        %5088 = vmatpush2.xpose.msra.mxu0 0.0
        %5089 = vmatprep.subr.mxu0 0.0
        %5090 = vmatpush2.xpose.msra.mxu0 0.0
        %5091 = vmatprep.subr.mxu0 0.0
        %5092 = vmatpush2.xpose.msra.mxu0 0.0
        %5093 = vmatprep.subr.mxu0 0.0
        %5094 = vmatpush2.xpose.msra.mxu0 0.0
        %5095 = vmatprep.subr.mxu0 0.0
        %5096 = vmatpush2.xpose.msra.mxu0 0.0
        %5097 = vmatprep.subr.mxu0 0.0
        %5098 = vmatpush2.xpose.msra.mxu0 0.0
        %5099 = vmatprep.subr.mxu0 0.0
        %5100 = vmatpush2.xpose.msra.mxu0 0.0
        %5101 = vmatprep.subr.mxu0 0.0
        %5102 = vmatpush2.xpose.msra.mxu0 0.0
        %5103 = vmatprep.mubr.f32.mxu0 0.0
        %5104 = vmatmul.mubr.f32.gmra.mxu0 %v5035
        %v5105 = vpop.f32.mrf.mxu0
        %v5106 = vadd.f32 0.0, %v5105
        %v5107 = vpop.f32.mrf.mxu0
        %5108 = vdwg.mxu0
        %v5109 = vmul.f32 %v5106, 0.35355338
        %v5110 = vadd.f32 %v5109, %v593
        %v5111 = vsel %vm667, %v5110, -inf
        %5112 = vmax.xlane.f32.xlu0 %v5111
        %v5113 = vpop.xlane.xlu0 %5112
        %v5114 = vsub.f32 %v5110, %v5113
        %v5115 = vmul.f32 %v5114, 1.442695
        %v5116 = vpow.pop %v5115
        %v5117 = vsel %vm667, %v5116, 0.0
        %5118 = vadd.xlane.f32.xlu0 %v5117
        %v5119 = vpop.xlane.xlu0 %5118
        %v5120 = vrcp.pop %v5119
        %v5121 = vmul.f32 %v5116, %v5120
        %5122 = vrot.lane.b32.xlu0 %v5027, 64
        %v5123 = vpop.permute.xlu0 %5122
        %v5126 = vsel %vm667, %v5121, 0
        %5128 = vmatprep.subr.mxu0 0.0
        %5129 = vmatpush1.msra.mxu0 0.0
        %5130 = vmatprep.subr.mxu0 0.0
        %5131 = vmatpush1.msra.mxu0 0.0
        %5132 = vmatprep.subr.mxu0 0.0
        %5133 = vmatpush1.msra.mxu0 0.0
        %5134 = vmatprep.subr.mxu0 0.0
        %5135 = vmatpush1.msra.mxu0 0.0
        %5136 = vmatprep.subr.mxu0 0.0
        %5137 = vmatpush1.msra.mxu0 0.0
        %5138 = vmatprep.subr.mxu0 0.0
        %5139 = vmatpush1.msra.mxu0 0.0
        %5140 = vmatprep.subr.mxu0 0.0
        %5141 = vmatpush1.msra.mxu0 0.0
        %5142 = vmatprep.subr.mxu0 0.0
        %5143 = vmatpush1.msra.mxu0 0.0
        %5144 = vmatprep.subr.mxu0 0.0
        %5145 = vmatpush1.msra.mxu0 0.0
        %5146 = vmatprep.subr.mxu0 0.0
        %5147 = vmatpush1.msra.mxu0 0.0
        %5148 = vmatprep.subr.mxu0 0.0
        %5149 = vmatpush1.msra.mxu0 0.0
        %5150 = vmatprep.subr.mxu0 0.0
        %5151 = vmatpush1.msra.mxu0 0.0
        %5152 = vmatprep.subr.mxu0 0.0
        %5153 = vmatpush1.msra.mxu0 0.0
        %5154 = vmatprep.subr.mxu0 0.0
        %5155 = vmatpush1.msra.mxu0 0.0
        %5156 = vmatprep.subr.mxu0 0.0
        %5157 = vmatpush1.msra.mxu0 0.0
        %5158 = vmatprep.subr.mxu0 0.0
        %5159 = vmatpush1.msra.mxu0 %v5123
        %5160 = vmatprep.subr.mxu0 0.0
        %5161 = vmatpush2.msra.mxu0 0.0
        %5162 = vmatprep.subr.mxu0 0.0
        %5163 = vmatpush2.msra.mxu0 0.0
        %5164 = vmatprep.subr.mxu0 0.0
        %5165 = vmatpush2.msra.mxu0 0.0
        %5166 = vmatprep.subr.mxu0 0.0
        %5167 = vmatpush2.msra.mxu0 0.0
        %5168 = vmatprep.subr.mxu0 0.0
        %5169 = vmatpush2.msra.mxu0 0.0
        %5170 = vmatprep.subr.mxu0 0.0
        %5171 = vmatpush2.msra.mxu0 0.0
        %5172 = vmatprep.subr.mxu0 0.0
        %5173 = vmatpush2.msra.mxu0 0.0
        %5174 = vmatprep.subr.mxu0 0.0
        %5175 = vmatpush2.msra.mxu0 0.0
        %5176 = vmatprep.subr.mxu0 0.0
        %5177 = vmatpush2.msra.mxu0 0.0
        %5178 = vmatprep.subr.mxu0 0.0
        %5179 = vmatpush2.msra.mxu0 0.0
        %5180 = vmatprep.subr.mxu0 0.0
        %5181 = vmatpush2.msra.mxu0 0.0
        %5182 = vmatprep.subr.mxu0 0.0
        %5183 = vmatpush2.msra.mxu0 0.0
        %5184 = vmatprep.subr.mxu0 0.0
        %5185 = vmatpush2.msra.mxu0 0.0
        %5186 = vmatprep.subr.mxu0 0.0
        %5187 = vmatpush2.msra.mxu0 0.0
        %5188 = vmatprep.subr.mxu0 0.0
        %5189 = vmatpush2.msra.mxu0 0.0
        %5190 = vmatprep.subr.mxu0 0.0
        %5191 = vmatpush2.msra.mxu0 0.0
        %5192 = vmatprep.mubr.f32.mxu0 0.0
        %5193 = vmatmul.mubr.f32.gmra.mxu0 %v5126
        %v5194 = vpop.f32.mrf.mxu0
        %v5195 = vadd.f32 0.0, %v5194
        %v5196 = vpop.f32.mrf.mxu0
        %5197 = vdwg.mxu0
        %5198 = vrot.lane.b32.xlu0 %v5027, 120
        %v5199 = vpop.permute.xlu0 %5198
        %5200 = vrot.lane.b32.xlu0 %v5027, 88
        %v5201 = vpop.permute.xlu0 %5200
        %v5202 = vsel %vm667, %v5199, 0
        %v5204 = vsel %vm667, %v5201, 0
        %5206 = vmatprep.subr.mxu0 0.0
        %5207 = vmatpush1.xpose.msra.mxu0 0.0
        %5208 = vmatprep.subr.mxu0 0.0
        %5209 = vmatpush1.xpose.msra.mxu0 0.0
        %5210 = vmatprep.subr.mxu0 0.0
        %5211 = vmatpush1.xpose.msra.mxu0 0.0
        %5212 = vmatprep.subr.mxu0 0.0
        %5213 = vmatpush1.xpose.msra.mxu0 0.0
        %5214 = vmatprep.subr.mxu0 0.0
        %5215 = vmatpush1.xpose.msra.mxu0 0.0
        %5216 = vmatprep.subr.mxu0 0.0
        %5217 = vmatpush1.xpose.msra.mxu0 0.0
        %5218 = vmatprep.subr.mxu0 0.0
        %5219 = vmatpush1.xpose.msra.mxu0 0.0
        %5220 = vmatprep.subr.mxu0 0.0
        %5221 = vmatpush1.xpose.msra.mxu0 0.0
        %5222 = vmatprep.subr.mxu0 0.0
        %5223 = vmatpush1.xpose.msra.mxu0 0.0
        %5224 = vmatprep.subr.mxu0 0.0
        %5225 = vmatpush1.xpose.msra.mxu0 0.0
        %5226 = vmatprep.subr.mxu0 0.0
        %5227 = vmatpush1.xpose.msra.mxu0 0.0
        %5228 = vmatprep.subr.mxu0 0.0
        %5229 = vmatpush1.xpose.msra.mxu0 0.0
        %5230 = vmatprep.subr.mxu0 0.0
        %5231 = vmatpush1.xpose.msra.mxu0 0.0
        %5232 = vmatprep.subr.mxu0 0.0
        %5233 = vmatpush1.xpose.msra.mxu0 0.0
        %5234 = vmatprep.subr.mxu0 0.0
        %5235 = vmatpush1.xpose.msra.mxu0 0.0
        %5236 = vmatprep.subr.mxu0 0.0
        %5237 = vmatpush1.xpose.msra.mxu0 %v5204
        %5238 = vmatprep.subr.mxu0 0.0
        %5239 = vmatpush2.xpose.msra.mxu0 0.0
        %5240 = vmatprep.subr.mxu0 0.0
        %5241 = vmatpush2.xpose.msra.mxu0 0.0
        %5242 = vmatprep.subr.mxu0 0.0
        %5243 = vmatpush2.xpose.msra.mxu0 0.0
        %5244 = vmatprep.subr.mxu0 0.0
        %5245 = vmatpush2.xpose.msra.mxu0 0.0
        %5246 = vmatprep.subr.mxu0 0.0
        %5247 = vmatpush2.xpose.msra.mxu0 0.0
        %5248 = vmatprep.subr.mxu0 0.0
        %5249 = vmatpush2.xpose.msra.mxu0 0.0
        %5250 = vmatprep.subr.mxu0 0.0
        %5251 = vmatpush2.xpose.msra.mxu0 0.0
        %5252 = vmatprep.subr.mxu0 0.0
        %5253 = vmatpush2.xpose.msra.mxu0 0.0
        %5254 = vmatprep.subr.mxu0 0.0
        %5255 = vmatpush2.xpose.msra.mxu0 0.0
        %5256 = vmatprep.subr.mxu0 0.0
        %5257 = vmatpush2.xpose.msra.mxu0 0.0
        %5258 = vmatprep.subr.mxu0 0.0
        %5259 = vmatpush2.xpose.msra.mxu0 0.0
        %5260 = vmatprep.subr.mxu0 0.0
        %5261 = vmatpush2.xpose.msra.mxu0 0.0
        %5262 = vmatprep.subr.mxu0 0.0
        %5263 = vmatpush2.xpose.msra.mxu0 0.0
        %5264 = vmatprep.subr.mxu0 0.0
        %5265 = vmatpush2.xpose.msra.mxu0 0.0
        %5266 = vmatprep.subr.mxu0 0.0
        %5267 = vmatpush2.xpose.msra.mxu0 0.0
        %5268 = vmatprep.subr.mxu0 0.0
        %5269 = vmatpush2.xpose.msra.mxu0 0.0
        %5270 = vmatprep.mubr.f32.mxu0 0.0
        %5271 = vmatmul.mubr.f32.gmra.mxu0 %v5202
        %v5272 = vpop.f32.mrf.mxu0
        %v5273 = vadd.f32 0.0, %v5272
        %v5274 = vpop.f32.mrf.mxu0
        %5275 = vdwg.mxu0
        %v5276 = vmul.f32 %v5273, 0.35355338
        %v5277 = vadd.f32 %v5276, %v593
        %v5278 = vsel %vm667, %v5277, -inf
        %5279 = vmax.xlane.f32.xlu0 %v5278
        %v5280 = vpop.xlane.xlu0 %5279
        %v5281 = vsub.f32 %v5277, %v5280
        %v5282 = vmul.f32 %v5281, 1.442695
        %v5283 = vpow.pop %v5282
        %v5284 = vsel %vm667, %v5283, 0.0
        %5285 = vadd.xlane.f32.xlu0 %v5284
        %v5286 = vpop.xlane.xlu0 %5285
        %v5287 = vrcp.pop %v5286
        %v5288 = vmul.f32 %v5283, %v5287
        %5289 = vrot.lane.b32.xlu0 %v5027, 56
        %v5290 = vpop.permute.xlu0 %5289
        %v5293 = vsel %vm667, %v5288, 0
        %5295 = vmatprep.subr.mxu0 0.0
        %5296 = vmatpush1.msra.mxu0 0.0
        %5297 = vmatprep.subr.mxu0 0.0
        %5298 = vmatpush1.msra.mxu0 0.0
        %5299 = vmatprep.subr.mxu0 0.0
        %5300 = vmatpush1.msra.mxu0 0.0
        %5301 = vmatprep.subr.mxu0 0.0
        %5302 = vmatpush1.msra.mxu0 0.0
        %5303 = vmatprep.subr.mxu0 0.0
        %5304 = vmatpush1.msra.mxu0 0.0
        %5305 = vmatprep.subr.mxu0 0.0
        %5306 = vmatpush1.msra.mxu0 0.0
        %5307 = vmatprep.subr.mxu0 0.0
        %5308 = vmatpush1.msra.mxu0 0.0
        %5309 = vmatprep.subr.mxu0 0.0
        %5310 = vmatpush1.msra.mxu0 0.0
        %5311 = vmatprep.subr.mxu0 0.0
        %5312 = vmatpush1.msra.mxu0 0.0
        %5313 = vmatprep.subr.mxu0 0.0
        %5314 = vmatpush1.msra.mxu0 0.0
        %5315 = vmatprep.subr.mxu0 0.0
        %5316 = vmatpush1.msra.mxu0 0.0
        %5317 = vmatprep.subr.mxu0 0.0
        %5318 = vmatpush1.msra.mxu0 0.0
        %5319 = vmatprep.subr.mxu0 0.0
        %5320 = vmatpush1.msra.mxu0 0.0
        %5321 = vmatprep.subr.mxu0 0.0
        %5322 = vmatpush1.msra.mxu0 0.0
        %5323 = vmatprep.subr.mxu0 0.0
        %5324 = vmatpush1.msra.mxu0 0.0
        %5325 = vmatprep.subr.mxu0 0.0
        %5326 = vmatpush1.msra.mxu0 %v5290
        %5327 = vmatprep.subr.mxu0 0.0
        %5328 = vmatpush2.msra.mxu0 0.0
        %5329 = vmatprep.subr.mxu0 0.0
        %5330 = vmatpush2.msra.mxu0 0.0
        %5331 = vmatprep.subr.mxu0 0.0
        %5332 = vmatpush2.msra.mxu0 0.0
        %5333 = vmatprep.subr.mxu0 0.0
        %5334 = vmatpush2.msra.mxu0 0.0
        %5335 = vmatprep.subr.mxu0 0.0
        %5336 = vmatpush2.msra.mxu0 0.0
        %5337 = vmatprep.subr.mxu0 0.0
        %5338 = vmatpush2.msra.mxu0 0.0
        %5339 = vmatprep.subr.mxu0 0.0
        %5340 = vmatpush2.msra.mxu0 0.0
        %5341 = vmatprep.subr.mxu0 0.0
        %5342 = vmatpush2.msra.mxu0 0.0
        %5343 = vmatprep.subr.mxu0 0.0
        %5344 = vmatpush2.msra.mxu0 0.0
        %5345 = vmatprep.subr.mxu0 0.0
        %5346 = vmatpush2.msra.mxu0 0.0
        %5347 = vmatprep.subr.mxu0 0.0
        %5348 = vmatpush2.msra.mxu0 0.0
        %5349 = vmatprep.subr.mxu0 0.0
        %5350 = vmatpush2.msra.mxu0 0.0
        %5351 = vmatprep.subr.mxu0 0.0
        %5352 = vmatpush2.msra.mxu0 0.0
        %5353 = vmatprep.subr.mxu0 0.0
        %5354 = vmatpush2.msra.mxu0 0.0
        %5355 = vmatprep.subr.mxu0 0.0
        %5356 = vmatpush2.msra.mxu0 0.0
        %5357 = vmatprep.subr.mxu0 0.0
        %5358 = vmatpush2.msra.mxu0 0.0
        %5359 = vmatprep.mubr.f32.mxu0 0.0
        %5360 = vmatmul.mubr.f32.gmra.mxu0 %v5293
        %v5361 = vpop.f32.mrf.mxu0
        %v5362 = vadd.f32 0.0, %v5361
        %v5363 = vpop.f32.mrf.mxu0
        %5364 = vdwg.mxu0
        %5365 = vrot.lane.b32.xlu0 %v5027, 112
        %v5366 = vpop.permute.xlu0 %5365
        %5367 = vrot.lane.b32.xlu0 %v5027, 80
        %v5368 = vpop.permute.xlu0 %5367
        %v5369 = vsel %vm667, %v5366, 0
        %v5371 = vsel %vm667, %v5368, 0
        %5373 = vmatprep.subr.mxu0 0.0
        %5374 = vmatpush1.xpose.msra.mxu0 0.0
        %5375 = vmatprep.subr.mxu0 0.0
        %5376 = vmatpush1.xpose.msra.mxu0 0.0
        %5377 = vmatprep.subr.mxu0 0.0
        %5378 = vmatpush1.xpose.msra.mxu0 0.0
        %5379 = vmatprep.subr.mxu0 0.0
        %5380 = vmatpush1.xpose.msra.mxu0 0.0
        %5381 = vmatprep.subr.mxu0 0.0
        %5382 = vmatpush1.xpose.msra.mxu0 0.0
        %5383 = vmatprep.subr.mxu0 0.0
        %5384 = vmatpush1.xpose.msra.mxu0 0.0
        %5385 = vmatprep.subr.mxu0 0.0
        %5386 = vmatpush1.xpose.msra.mxu0 0.0
        %5387 = vmatprep.subr.mxu0 0.0
        %5388 = vmatpush1.xpose.msra.mxu0 0.0
        %5389 = vmatprep.subr.mxu0 0.0
        %5390 = vmatpush1.xpose.msra.mxu0 0.0
        %5391 = vmatprep.subr.mxu0 0.0
        %5392 = vmatpush1.xpose.msra.mxu0 0.0
        %5393 = vmatprep.subr.mxu0 0.0
        %5394 = vmatpush1.xpose.msra.mxu0 0.0
        %5395 = vmatprep.subr.mxu0 0.0
        %5396 = vmatpush1.xpose.msra.mxu0 0.0
        %5397 = vmatprep.subr.mxu0 0.0
        %5398 = vmatpush1.xpose.msra.mxu0 0.0
        %5399 = vmatprep.subr.mxu0 0.0
        %5400 = vmatpush1.xpose.msra.mxu0 0.0
        %5401 = vmatprep.subr.mxu0 0.0
        %5402 = vmatpush1.xpose.msra.mxu0 0.0
        %5403 = vmatprep.subr.mxu0 0.0
        %5404 = vmatpush1.xpose.msra.mxu0 %v5371
        %5405 = vmatprep.subr.mxu0 0.0
        %5406 = vmatpush2.xpose.msra.mxu0 0.0
        %5407 = vmatprep.subr.mxu0 0.0
        %5408 = vmatpush2.xpose.msra.mxu0 0.0
        %5409 = vmatprep.subr.mxu0 0.0
        %5410 = vmatpush2.xpose.msra.mxu0 0.0
        %5411 = vmatprep.subr.mxu0 0.0
        %5412 = vmatpush2.xpose.msra.mxu0 0.0
        %5413 = vmatprep.subr.mxu0 0.0
        %5414 = vmatpush2.xpose.msra.mxu0 0.0
        %5415 = vmatprep.subr.mxu0 0.0
        %5416 = vmatpush2.xpose.msra.mxu0 0.0
        %5417 = vmatprep.subr.mxu0 0.0
        %5418 = vmatpush2.xpose.msra.mxu0 0.0
        %5419 = vmatprep.subr.mxu0 0.0
        %5420 = vmatpush2.xpose.msra.mxu0 0.0
        %5421 = vmatprep.subr.mxu0 0.0
        %5422 = vmatpush2.xpose.msra.mxu0 0.0
        %5423 = vmatprep.subr.mxu0 0.0
        %5424 = vmatpush2.xpose.msra.mxu0 0.0
        %5425 = vmatprep.subr.mxu0 0.0
        %5426 = vmatpush2.xpose.msra.mxu0 0.0
        %5427 = vmatprep.subr.mxu0 0.0
        %5428 = vmatpush2.xpose.msra.mxu0 0.0
        %5429 = vmatprep.subr.mxu0 0.0
        %5430 = vmatpush2.xpose.msra.mxu0 0.0
        %5431 = vmatprep.subr.mxu0 0.0
        %5432 = vmatpush2.xpose.msra.mxu0 0.0
        %5433 = vmatprep.subr.mxu0 0.0
        %5434 = vmatpush2.xpose.msra.mxu0 0.0
        %5435 = vmatprep.subr.mxu0 0.0
        %5436 = vmatpush2.xpose.msra.mxu0 0.0
        %5437 = vmatprep.mubr.f32.mxu0 0.0
        %5438 = vmatmul.mubr.f32.gmra.mxu0 %v5369
        %v5439 = vpop.f32.mrf.mxu0
        %v5440 = vadd.f32 0.0, %v5439
        %v5441 = vpop.f32.mrf.mxu0
        %5442 = vdwg.mxu0
        %v5443 = vmul.f32 %v5440, 0.35355338
        %v5444 = vadd.f32 %v5443, %v593
        %v5445 = vsel %vm667, %v5444, -inf
        %5446 = vmax.xlane.f32.xlu0 %v5445
        %v5447 = vpop.xlane.xlu0 %5446
        %v5448 = vsub.f32 %v5444, %v5447
        %v5449 = vmul.f32 %v5448, 1.442695
        %v5450 = vpow.pop %v5449
        %v5451 = vsel %vm667, %v5450, 0.0
        %5452 = vadd.xlane.f32.xlu0 %v5451
        %v5453 = vpop.xlane.xlu0 %5452
        %v5454 = vrcp.pop %v5453
        %v5455 = vmul.f32 %v5450, %v5454
        %5456 = vrot.lane.b32.xlu0 %v5027, 48
        %v5457 = vpop.permute.xlu0 %5456
        %v5460 = vsel %vm667, %v5455, 0
        %5462 = vmatprep.subr.mxu0 0.0
        %5463 = vmatpush1.msra.mxu0 0.0
        %5464 = vmatprep.subr.mxu0 0.0
        %5465 = vmatpush1.msra.mxu0 0.0
        %5466 = vmatprep.subr.mxu0 0.0
        %5467 = vmatpush1.msra.mxu0 0.0
        %5468 = vmatprep.subr.mxu0 0.0
        %5469 = vmatpush1.msra.mxu0 0.0
        %5470 = vmatprep.subr.mxu0 0.0
        %5471 = vmatpush1.msra.mxu0 0.0
        %5472 = vmatprep.subr.mxu0 0.0
        %5473 = vmatpush1.msra.mxu0 0.0
        %5474 = vmatprep.subr.mxu0 0.0
        %5475 = vmatpush1.msra.mxu0 0.0
        %5476 = vmatprep.subr.mxu0 0.0
        %5477 = vmatpush1.msra.mxu0 0.0
        %5478 = vmatprep.subr.mxu0 0.0
        %5479 = vmatpush1.msra.mxu0 0.0
        %5480 = vmatprep.subr.mxu0 0.0
        %5481 = vmatpush1.msra.mxu0 0.0
        %5482 = vmatprep.subr.mxu0 0.0
        %5483 = vmatpush1.msra.mxu0 0.0
        %5484 = vmatprep.subr.mxu0 0.0
        %5485 = vmatpush1.msra.mxu0 0.0
        %5486 = vmatprep.subr.mxu0 0.0
        %5487 = vmatpush1.msra.mxu0 0.0
        %5488 = vmatprep.subr.mxu0 0.0
        %5489 = vmatpush1.msra.mxu0 0.0
        %5490 = vmatprep.subr.mxu0 0.0
        %5491 = vmatpush1.msra.mxu0 0.0
        %5492 = vmatprep.subr.mxu0 0.0
        %5493 = vmatpush1.msra.mxu0 %v5457
        %5494 = vmatprep.subr.mxu0 0.0
        %5495 = vmatpush2.msra.mxu0 0.0
        %5496 = vmatprep.subr.mxu0 0.0
        %5497 = vmatpush2.msra.mxu0 0.0
        %5498 = vmatprep.subr.mxu0 0.0
        %5499 = vmatpush2.msra.mxu0 0.0
        %5500 = vmatprep.subr.mxu0 0.0
        %5501 = vmatpush2.msra.mxu0 0.0
        %5502 = vmatprep.subr.mxu0 0.0
        %5503 = vmatpush2.msra.mxu0 0.0
        %5504 = vmatprep.subr.mxu0 0.0
        %5505 = vmatpush2.msra.mxu0 0.0
        %5506 = vmatprep.subr.mxu0 0.0
        %5507 = vmatpush2.msra.mxu0 0.0
        %5508 = vmatprep.subr.mxu0 0.0
        %5509 = vmatpush2.msra.mxu0 0.0
        %5510 = vmatprep.subr.mxu0 0.0
        %5511 = vmatpush2.msra.mxu0 0.0
        %5512 = vmatprep.subr.mxu0 0.0
        %5513 = vmatpush2.msra.mxu0 0.0
        %5514 = vmatprep.subr.mxu0 0.0
        %5515 = vmatpush2.msra.mxu0 0.0
        %5516 = vmatprep.subr.mxu0 0.0
        %5517 = vmatpush2.msra.mxu0 0.0
        %5518 = vmatprep.subr.mxu0 0.0
        %5519 = vmatpush2.msra.mxu0 0.0
        %5520 = vmatprep.subr.mxu0 0.0
        %5521 = vmatpush2.msra.mxu0 0.0
        %5522 = vmatprep.subr.mxu0 0.0
        %5523 = vmatpush2.msra.mxu0 0.0
        %5524 = vmatprep.subr.mxu0 0.0
        %5525 = vmatpush2.msra.mxu0 0.0
        %5526 = vmatprep.mubr.f32.mxu0 0.0
        %5527 = vmatmul.mubr.f32.gmra.mxu0 %v5460
        %v5528 = vpop.f32.mrf.mxu0
        %v5529 = vadd.f32 0.0, %v5528
        %v5530 = vpop.f32.mrf.mxu0
        %5531 = vdwg.mxu0
        %5532 = vrot.lane.b32.xlu0 %v5027, 104
        %v5533 = vpop.permute.xlu0 %5532
        %5534 = vrot.lane.b32.xlu0 %v5027, 72
        %v5535 = vpop.permute.xlu0 %5534
        %v5536 = vsel %vm667, %v5533, 0
        %v5538 = vsel %vm667, %v5535, 0
        %5540 = vmatprep.subr.mxu0 0.0
        %5541 = vmatpush1.xpose.msra.mxu0 0.0
        %5542 = vmatprep.subr.mxu0 0.0
        %5543 = vmatpush1.xpose.msra.mxu0 0.0
        %5544 = vmatprep.subr.mxu0 0.0
        %5545 = vmatpush1.xpose.msra.mxu0 0.0
        %5546 = vmatprep.subr.mxu0 0.0
        %5547 = vmatpush1.xpose.msra.mxu0 0.0
        %5548 = vmatprep.subr.mxu0 0.0
        %5549 = vmatpush1.xpose.msra.mxu0 0.0
        %5550 = vmatprep.subr.mxu0 0.0
        %5551 = vmatpush1.xpose.msra.mxu0 0.0
        %5552 = vmatprep.subr.mxu0 0.0
        %5553 = vmatpush1.xpose.msra.mxu0 0.0
        %5554 = vmatprep.subr.mxu0 0.0
        %5555 = vmatpush1.xpose.msra.mxu0 0.0
        %5556 = vmatprep.subr.mxu0 0.0
        %5557 = vmatpush1.xpose.msra.mxu0 0.0
        %5558 = vmatprep.subr.mxu0 0.0
        %5559 = vmatpush1.xpose.msra.mxu0 0.0
        %5560 = vmatprep.subr.mxu0 0.0
        %5561 = vmatpush1.xpose.msra.mxu0 0.0
        %5562 = vmatprep.subr.mxu0 0.0
        %5563 = vmatpush1.xpose.msra.mxu0 0.0
        %5564 = vmatprep.subr.mxu0 0.0
        %5565 = vmatpush1.xpose.msra.mxu0 0.0
        %5566 = vmatprep.subr.mxu0 0.0
        %5567 = vmatpush1.xpose.msra.mxu0 0.0
        %5568 = vmatprep.subr.mxu0 0.0
        %5569 = vmatpush1.xpose.msra.mxu0 0.0
        %5570 = vmatprep.subr.mxu0 0.0
        %5571 = vmatpush1.xpose.msra.mxu0 %v5538
        %5572 = vmatprep.subr.mxu0 0.0
        %5573 = vmatpush2.xpose.msra.mxu0 0.0
        %5574 = vmatprep.subr.mxu0 0.0
        %5575 = vmatpush2.xpose.msra.mxu0 0.0
        %5576 = vmatprep.subr.mxu0 0.0
        %5577 = vmatpush2.xpose.msra.mxu0 0.0
        %5578 = vmatprep.subr.mxu0 0.0
        %5579 = vmatpush2.xpose.msra.mxu0 0.0
        %5580 = vmatprep.subr.mxu0 0.0
        %5581 = vmatpush2.xpose.msra.mxu0 0.0
        %5582 = vmatprep.subr.mxu0 0.0
        %5583 = vmatpush2.xpose.msra.mxu0 0.0
        %5584 = vmatprep.subr.mxu0 0.0
        %5585 = vmatpush2.xpose.msra.mxu0 0.0
        %5586 = vmatprep.subr.mxu0 0.0
        %5587 = vmatpush2.xpose.msra.mxu0 0.0
        %5588 = vmatprep.subr.mxu0 0.0
        %5589 = vmatpush2.xpose.msra.mxu0 0.0
        %5590 = vmatprep.subr.mxu0 0.0
        %5591 = vmatpush2.xpose.msra.mxu0 0.0
        %5592 = vmatprep.subr.mxu0 0.0
        %5593 = vmatpush2.xpose.msra.mxu0 0.0
        %5594 = vmatprep.subr.mxu0 0.0
        %5595 = vmatpush2.xpose.msra.mxu0 0.0
        %5596 = vmatprep.subr.mxu0 0.0
        %5597 = vmatpush2.xpose.msra.mxu0 0.0
        %5598 = vmatprep.subr.mxu0 0.0
        %5599 = vmatpush2.xpose.msra.mxu0 0.0
        %5600 = vmatprep.subr.mxu0 0.0
        %5601 = vmatpush2.xpose.msra.mxu0 0.0
        %5602 = vmatprep.subr.mxu0 0.0
        %5603 = vmatpush2.xpose.msra.mxu0 0.0
        %5604 = vmatprep.mubr.f32.mxu0 0.0
        %5605 = vmatmul.mubr.f32.gmra.mxu0 %v5536
        %v5606 = vpop.f32.mrf.mxu0
        %v5607 = vadd.f32 0.0, %v5606
        %v5608 = vpop.f32.mrf.mxu0
        %5609 = vdwg.mxu0
        %v5610 = vmul.f32 %v5607, 0.35355338
        %v5611 = vadd.f32 %v5610, %v593
        %v5612 = vsel %vm667, %v5611, -inf
        %5613 = vmax.xlane.f32.xlu0 %v5612
        %v5614 = vpop.xlane.xlu0 %5613
        %v5615 = vsub.f32 %v5611, %v5614
        %v5616 = vmul.f32 %v5615, 1.442695
        %v5617 = vpow.pop %v5616
        %v5618 = vsel %vm667, %v5617, 0.0
        %5619 = vadd.xlane.f32.xlu0 %v5618
        %v5620 = vpop.xlane.xlu0 %5619
        %v5621 = vrcp.pop %v5620
        %v5622 = vmul.f32 %v5617, %v5621
        %5623 = vrot.lane.b32.xlu0 %v5027, 40
        %v5624 = vpop.permute.xlu0 %5623
        %v5627 = vsel %vm667, %v5622, 0
        %5629 = vmatprep.subr.mxu0 0.0
        %5630 = vmatpush1.msra.mxu0 0.0
        %5631 = vmatprep.subr.mxu0 0.0
        %5632 = vmatpush1.msra.mxu0 0.0
        %5633 = vmatprep.subr.mxu0 0.0
        %5634 = vmatpush1.msra.mxu0 0.0
        %5635 = vmatprep.subr.mxu0 0.0
        %5636 = vmatpush1.msra.mxu0 0.0
        %5637 = vmatprep.subr.mxu0 0.0
        %5638 = vmatpush1.msra.mxu0 0.0
        %5639 = vmatprep.subr.mxu0 0.0
        %5640 = vmatpush1.msra.mxu0 0.0
        %5641 = vmatprep.subr.mxu0 0.0
        %5642 = vmatpush1.msra.mxu0 0.0
        %5643 = vmatprep.subr.mxu0 0.0
        %5644 = vmatpush1.msra.mxu0 0.0
        %5645 = vmatprep.subr.mxu0 0.0
        %5646 = vmatpush1.msra.mxu0 0.0
        %5647 = vmatprep.subr.mxu0 0.0
        %5648 = vmatpush1.msra.mxu0 0.0
        %5649 = vmatprep.subr.mxu0 0.0
        %5650 = vmatpush1.msra.mxu0 0.0
        %5651 = vmatprep.subr.mxu0 0.0
        %5652 = vmatpush1.msra.mxu0 0.0
        %5653 = vmatprep.subr.mxu0 0.0
        %5654 = vmatpush1.msra.mxu0 0.0
        %5655 = vmatprep.subr.mxu0 0.0
        %5656 = vmatpush1.msra.mxu0 0.0
        %5657 = vmatprep.subr.mxu0 0.0
        %5658 = vmatpush1.msra.mxu0 0.0
        %5659 = vmatprep.subr.mxu0 0.0
        %5660 = vmatpush1.msra.mxu0 %v5624
        %5661 = vmatprep.subr.mxu0 0.0
        %5662 = vmatpush2.msra.mxu0 0.0
        %5663 = vmatprep.subr.mxu0 0.0
        %5664 = vmatpush2.msra.mxu0 0.0
        %5665 = vmatprep.subr.mxu0 0.0
        %5666 = vmatpush2.msra.mxu0 0.0
        %5667 = vmatprep.subr.mxu0 0.0
        %5668 = vmatpush2.msra.mxu0 0.0
        %5669 = vmatprep.subr.mxu0 0.0
        %5670 = vmatpush2.msra.mxu0 0.0
        %5671 = vmatprep.subr.mxu0 0.0
        %5672 = vmatpush2.msra.mxu0 0.0
        %5673 = vmatprep.subr.mxu0 0.0
        %5674 = vmatpush2.msra.mxu0 0.0
        %5675 = vmatprep.subr.mxu0 0.0
        %5676 = vmatpush2.msra.mxu0 0.0
        %5677 = vmatprep.subr.mxu0 0.0
        %5678 = vmatpush2.msra.mxu0 0.0
        %5679 = vmatprep.subr.mxu0 0.0
        %5680 = vmatpush2.msra.mxu0 0.0
        %5681 = vmatprep.subr.mxu0 0.0
        %5682 = vmatpush2.msra.mxu0 0.0
        %5683 = vmatprep.subr.mxu0 0.0
        %5684 = vmatpush2.msra.mxu0 0.0
        %5685 = vmatprep.subr.mxu0 0.0
        %5686 = vmatpush2.msra.mxu0 0.0
        %5687 = vmatprep.subr.mxu0 0.0
        %5688 = vmatpush2.msra.mxu0 0.0
        %5689 = vmatprep.subr.mxu0 0.0
        %5690 = vmatpush2.msra.mxu0 0.0
        %5691 = vmatprep.subr.mxu0 0.0
        %5692 = vmatpush2.msra.mxu0 0.0
        %5693 = vmatprep.mubr.f32.mxu0 0.0
        %5694 = vmatmul.mubr.f32.gmra.mxu0 %v5627
        %v5695 = vpop.f32.mrf.mxu0
        %v5696 = vadd.f32 0.0, %v5695
        %v5697 = vpop.f32.mrf.mxu0
        %5698 = vdwg.mxu0
        %5700 = vrot.lane.b32.xlu0 %v5362, 8
        %v5701 = vpop.permute.xlu0 %5700
        %5704 = vrot.lane.b32.xlu0 %v5529, 16
        %v5705 = vpop.permute.xlu0 %5704
        %5708 = vrot.lane.b32.xlu0 %v5696, 24
        %v5709 = vpop.permute.xlu0 %5708
        %v5711 = vsel %vm667, %v5195, %v5701
        %v5712 = vsel %vm1345, %v5711, %v5705
        %v5713 = vsel %vm1347, %v5712, %v5709
        %v5714 = vpack.c.bf16 %v5713, %v5713
        %s5715 = scalar_lea.vmem %s4, 32
        %v5716 = vld [vmem:[%s5715] sm:$0xf]
        %v5717 = vld [vmem:[%s5715 + $0x4] sm:$0xf]
        %v5718 = vld [vmem:[%s5715 + $0x8] sm:$0xf]
        %v5719 = vld [vmem:[%s5715 + $0xc] sm:$0xf]
        %s5720 = scalar_lea.vmem %s5, 2
        %v5721 = vld [vmem:[%s5720] sm:$0x1]
        %v5723 = vlaneseq
        %v5724 = vshrl.u32 %v5723, 7
        %v5725 = vsub.s32 0, %v5724
        %v5726 = vrot.slane %v5721, %v5725
        %v5732 = vunpack.c.l.b16 %v5716
        %v5733 = vunpack.c.l.b16 %v5717
        %v5734 = vunpack.c.l.b16 %v5718
        %v5735 = vunpack.c.l.b16 %v5719
        %v5736 = vpack.c.b16 %v5733, %v5732
        %v5737 = vpack.c.b16 %v5735, %v5734
        %v5741 = vsel %vm620, %v5714, 0
        %5743 = vmatprep.subr.bf16.mxu0 0
        %5744 = vmatpush1.bf16.msra.mxu0 0
        %5745 = vmatprep.subr.bf16.mxu0 0
        %5746 = vmatpush1.bf16.msra.mxu0 0
        %5747 = vmatprep.subr.bf16.mxu0 0
        %5748 = vmatpush1.bf16.msra.mxu0 0
        %5749 = vmatprep.subr.bf16.mxu0 0
        %5750 = vmatpush1.bf16.msra.mxu0 0
        %5751 = vmatprep.subr.bf16.mxu0 0
        %5752 = vmatpush1.bf16.msra.mxu0 0
        %5753 = vmatprep.subr.bf16.mxu0 0
        %5754 = vmatpush1.bf16.msra.mxu0 0
        %5755 = vmatprep.subr.bf16.mxu0 0
        %5756 = vmatpush1.bf16.msra.mxu0 %v5737
        %5757 = vmatprep.subr.bf16.mxu0 0
        %5758 = vmatpush1.bf16.msra.mxu0 %v5736
        %5759 = vmatprep.subr.bf16.mxu0 0
        %5760 = vmatpush2.bf16.msra.mxu0 0
        %5761 = vmatprep.subr.bf16.mxu0 0
        %5762 = vmatpush2.bf16.msra.mxu0 0
        %5763 = vmatprep.subr.bf16.mxu0 0
        %5764 = vmatpush2.bf16.msra.mxu0 0
        %5765 = vmatprep.subr.bf16.mxu0 0
        %5766 = vmatpush2.bf16.msra.mxu0 0
        %5767 = vmatprep.subr.bf16.mxu0 0
        %5768 = vmatpush2.bf16.msra.mxu0 0
        %5769 = vmatprep.subr.bf16.mxu0 0
        %5770 = vmatpush2.bf16.msra.mxu0 0
        %5771 = vmatprep.subr.bf16.mxu0 0
        %5772 = vmatpush2.bf16.msra.mxu0 0
        %5773 = vmatprep.subr.bf16.mxu0 0
        %5774 = vmatpush2.bf16.msra.mxu0 0
        %5775 = vmatprep.mubr.bf16.mxu0 0
        %5776 = vmatmul.mubr.bf16.gmra.mxu0 %v5741
        %v5777 = vpop.f32.mrf.mxu0
        %v5778 = vadd.f32 %v5726, %v5777
        %v5779 = vpop.f32.mrf.mxu0
        %v5780 = vpop.f32.mrf.mxu0
        %v5781 = vpop.f32.mrf.mxu0
        %5782 = vdwg.mxu0
        %v5783 = vadd.f32 %v4958, %v5778
        %v5784 = vsel %vm620, %v5783, 0.0
        %5785 = vadd.xlane.f32.xlu0 %v5784
        %v5786 = vpop.xlane.xlu0 %5785
        %v5787 = vmul.f32 %v5786, %v1420
        %v5788 = vsub.f32 %v5783, %v5787
        %v5789 = vmul.f32 %v5788, %v5788
        %v5790 = vsel %vm620, %v5789, 0.0
        %5791 = vadd.xlane.f32.xlu0 %v5790
        %v5792 = vpop.xlane.xlu0 %5791
        %v5793 = vmul.f32 %v5792, %v1420
        %v5794 = vadd.f32 %v5793, 1e-05
        %v5795 = vrsqrt.pop %v5794
        %v5796 = vmul.f32 %v5788, %v5795
        %v5797 = vlaneseq
        %v5798 = vshrl.u32 %v5797, 7
        %v5799 = vsub.s32 0, %v5798
        %v5800 = vrot.slane %v4960, %v5799
        %v5801 = vmul.f32 %v5796, %v5800
        %v5802 = vlaneseq
        %v5803 = vshrl.u32 %v5802, 7
        %v5804 = vsub.s32 0, %v5803
        %v5805 = vrot.slane %v4962, %v5804
        %v5806 = vadd.f32 %v5801, %v5805
        %s5807 = scalar_lea.vmem %s6, 32
        %v5808 = vld [vmem:[%s5807] sm:$0xf]
        %v5809 = vld [vmem:[%s5807 + $0x4] sm:$0xf]
        %v5810 = vld [vmem:[%s5807 + $0x8] sm:$0xf]
        %v5811 = vld [vmem:[%s5807 + $0xc] sm:$0xf]
        %s5812 = scalar_lea.vmem %s7, 2
        %v5813 = vld [vmem:[%s5812] sm:$0x1]
        %v5818 = vunpack.c.l.b16 %v5808
        %v5819 = vunpack.c.l.b16 %v5809
        %v5820 = vunpack.c.l.b16 %v5810
        %v5821 = vunpack.c.l.b16 %v5811
        %v5822 = vpack.c.b16 %v5819, %v5818
        %v5823 = vpack.c.b16 %v5821, %v5820
        %5826 = vmatprep.subr.bf16.mxu0 0
        %5827 = vmatpush1.bf16.msra.mxu0 0
        %5828 = vmatprep.subr.bf16.mxu0 0
        %5829 = vmatpush1.bf16.msra.mxu0 0
        %5830 = vmatprep.subr.bf16.mxu0 0
        %5831 = vmatpush1.bf16.msra.mxu0 0
        %5832 = vmatprep.subr.bf16.mxu0 0
        %5833 = vmatpush1.bf16.msra.mxu0 0
        %5834 = vmatprep.subr.bf16.mxu0 0
        %5835 = vmatpush1.bf16.msra.mxu0 0
        %5836 = vmatprep.subr.bf16.mxu0 0
        %5837 = vmatpush1.bf16.msra.mxu0 0
        %5838 = vmatprep.subr.bf16.mxu0 0
        %5839 = vmatpush1.bf16.msra.mxu0 %v5823
        %5840 = vmatprep.subr.bf16.mxu0 0
        %5841 = vmatpush1.bf16.msra.mxu0 %v5822
        %5842 = vmatprep.subr.bf16.mxu0 0
        %5843 = vmatpush2.bf16.msra.mxu0 0
        %5844 = vmatprep.subr.bf16.mxu0 0
        %5845 = vmatpush2.bf16.msra.mxu0 0
        %5846 = vmatprep.subr.bf16.mxu0 0
        %5847 = vmatpush2.bf16.msra.mxu0 0
        %5848 = vmatprep.subr.bf16.mxu0 0
        %5849 = vmatpush2.bf16.msra.mxu0 0
        %5850 = vmatprep.subr.bf16.mxu0 0
        %5851 = vmatpush2.bf16.msra.mxu0 0
        %5852 = vmatprep.subr.bf16.mxu0 0
        %5853 = vmatpush2.bf16.msra.mxu0 0
        %5854 = vmatprep.subr.bf16.mxu0 0
        %5855 = vmatpush2.bf16.msra.mxu0 0
        %5856 = vmatprep.subr.bf16.mxu0 0
        %5857 = vmatpush2.bf16.msra.mxu0 0
        %5858 = vmatprep.mubr.bf16.mxu0 0
        %5859 = vmatmul.mubr.bf16.gmra.mxu0 %v1460
        %v5860 = vpop.f32.mrf.mxu0
        %v5861 = vadd.f32 %v5813, %v5860
        %v5862 = vpop.f32.mrf.mxu0
        %v5863 = vpop.f32.mrf.mxu0
        %v5864 = vpop.f32.mrf.mxu0
        %5865 = vdwg.mxu0
        %v5866 = vpack.c.bf16 %v5861, %v5861
        %s5867 = scalar_lea.vmem %s8, 32
        %v5868 = vld [vmem:[%s5867] sm:$0xf]
        %v5869 = vld [vmem:[%s5867 + $0x4] sm:$0xf]
        %v5870 = vld [vmem:[%s5867 + $0x8] sm:$0xf]
        %v5871 = vld [vmem:[%s5867 + $0xc] sm:$0xf]
        %s5872 = scalar_lea.vmem %s9, 2
        %v5873 = vld [vmem:[%s5872] sm:$0x1]
        %v5878 = vunpack.c.l.b16 %v5868
        %v5879 = vunpack.c.l.b16 %v5869
        %v5880 = vunpack.c.l.b16 %v5870
        %v5881 = vunpack.c.l.b16 %v5871
        %v5882 = vpack.c.b16 %v5879, %v5878
        %v5883 = vpack.c.b16 %v5881, %v5880
        %v5887 = vsel %vm620, %v5866, 0
        %5889 = vmatprep.subr.bf16.mxu0 0
        %5890 = vmatpush1.bf16.msra.mxu0 0
        %5891 = vmatprep.subr.bf16.mxu0 0
        %5892 = vmatpush1.bf16.msra.mxu0 0
        %5893 = vmatprep.subr.bf16.mxu0 0
        %5894 = vmatpush1.bf16.msra.mxu0 0
        %5895 = vmatprep.subr.bf16.mxu0 0
        %5896 = vmatpush1.bf16.msra.mxu0 0
        %5897 = vmatprep.subr.bf16.mxu0 0
        %5898 = vmatpush1.bf16.msra.mxu0 0
        %5899 = vmatprep.subr.bf16.mxu0 0
        %5900 = vmatpush1.bf16.msra.mxu0 0
        %5901 = vmatprep.subr.bf16.mxu0 0
        %5902 = vmatpush1.bf16.msra.mxu0 %v5883
        %5903 = vmatprep.subr.bf16.mxu0 0
        %5904 = vmatpush1.bf16.msra.mxu0 %v5882
        %5905 = vmatprep.subr.bf16.mxu0 0
        %5906 = vmatpush2.bf16.msra.mxu0 0
        %5907 = vmatprep.subr.bf16.mxu0 0
        %5908 = vmatpush2.bf16.msra.mxu0 0
        %5909 = vmatprep.subr.bf16.mxu0 0
        %5910 = vmatpush2.bf16.msra.mxu0 0
        %5911 = vmatprep.subr.bf16.mxu0 0
        %5912 = vmatpush2.bf16.msra.mxu0 0
        %5913 = vmatprep.subr.bf16.mxu0 0
        %5914 = vmatpush2.bf16.msra.mxu0 0
        %5915 = vmatprep.subr.bf16.mxu0 0
        %5916 = vmatpush2.bf16.msra.mxu0 0
        %5917 = vmatprep.subr.bf16.mxu0 0
        %5918 = vmatpush2.bf16.msra.mxu0 0
        %5919 = vmatprep.subr.bf16.mxu0 0
        %5920 = vmatpush2.bf16.msra.mxu0 0
        %5921 = vmatprep.mubr.bf16.mxu0 0
        %5922 = vmatmul.mubr.bf16.gmra.mxu0 %v5887
        %v5923 = vpop.f32.mrf.mxu0
        %v5924 = vadd.f32 %v5873, %v5923
        %v5925 = vpop.f32.mrf.mxu0
        %v5926 = vpop.f32.mrf.mxu0
        %v5927 = vpop.f32.mrf.mxu0
        %5928 = vdwg.mxu0
        %v5929 = vlaneseq
        %v5930 = vshrl.u32 %v5929, 7
        %v5931 = vsub.s32 0, %v5930
        %v5932 = vrot.slane %v5924, %v5931
        %v5933 = vadd.f32 %v5806, %v5932
        %v5934 = vsel %vm620, %v5933, 0.0
        %5935 = vadd.xlane.f32.xlu0 %v5934
        %v5936 = vpop.xlane.xlu0 %5935
        %v5937 = vmul.f32 %v5936, %v1420
        %v5938 = vsub.f32 %v5933, %v5937
        %v5939 = vmul.f32 %v5938, %v5938
        %v5940 = vsel %vm620, %v5939, 0.0
        %5941 = vadd.xlane.f32.xlu0 %v5940
        %v5942 = vpop.xlane.xlu0 %5941
        %v5943 = vmul.f32 %v5942, %v1420
        %v5944 = vadd.f32 %v5943, 1e-05
        %v5945 = vrsqrt.pop %v5944
        %v5946 = vmul.f32 %v5938, %v5945
        %v5947 = vlaneseq
        %v5948 = vshrl.u32 %v5947, 7
        %v5949 = vsub.s32 1, %v5948
        %v5950 = vrot.slane %v4960, %v5949
        %v5951 = vmul.f32 %v5946, %v5950
        %v5952 = vlaneseq
        %v5953 = vshrl.u32 %v5952, 7
        %v5954 = vsub.s32 1, %v5953
        %v5955 = vrot.slane %v4962, %v5954
        %v5956 = vadd.f32 %v5951, %v5955
        %v5957 = vpack.c.bf16 %v5956, %v5956
        %s5958 = scalar_lea.vmem %s10, 512
        %v5959 = vld [vmem:[%s5958] sm:$0xff]
        %v5960 = vld [vmem:[%s5958 + $0x8] sm:$0xff]
        %v5961 = vld [vmem:[%s5958 + $0x10] sm:$0xff]
        %v5962 = vld [vmem:[%s5958 + $0x18] sm:$0xff]
        %v5963 = vld [vmem:[%s5958 + $0x20] sm:$0xff]
        %v5964 = vld [vmem:[%s5958 + $0x28] sm:$0xff]
        %v5965 = vld [vmem:[%s5958 + $0x30] sm:$0xff]
        %v5966 = vld [vmem:[%s5958 + $0x38] sm:$0xff]
        %v5967 = vld [vmem:[%s5958 + $0x40] sm:$0xff]
        %v5968 = vld [vmem:[%s5958 + $0x48] sm:$0xff]
        %v5969 = vld [vmem:[%s5958 + $0x50] sm:$0xff]
        %v5970 = vld [vmem:[%s5958 + $0x58] sm:$0xff]
        %v5971 = vld [vmem:[%s5958 + $0x60] sm:$0xff]
        %v5972 = vld [vmem:[%s5958 + $0x68] sm:$0xff]
        %v5973 = vld [vmem:[%s5958 + $0x70] sm:$0xff]
        %v5974 = vld [vmem:[%s5958 + $0x78] sm:$0xff]
        %v5975 = vld [vmem:[%s5958 + $0x80] sm:$0xff]
        %v5976 = vld [vmem:[%s5958 + $0x88] sm:$0xff]
        %v5977 = vld [vmem:[%s5958 + $0x90] sm:$0xff]
        %v5978 = vld [vmem:[%s5958 + $0x98] sm:$0xff]
        %v5979 = vld [vmem:[%s5958 + $0xa0] sm:$0xff]
        %v5980 = vld [vmem:[%s5958 + $0xa8] sm:$0xff]
        %v5981 = vld [vmem:[%s5958 + $0xb0] sm:$0xff]
        %v5982 = vld [vmem:[%s5958 + $0xb8] sm:$0xff]
        %v5983 = vld [vmem:[%s5958 + $0xc0] sm:$0xff]
        %v5984 = vld [vmem:[%s5958 + $0xc8] sm:$0xff]
        %v5985 = vld [vmem:[%s5958 + $0xd0] sm:$0xff]
        %v5986 = vld [vmem:[%s5958 + $0xd8] sm:$0xff]
        %v5987 = vld [vmem:[%s5958 + $0xe0] sm:$0xff]
        %v5988 = vld [vmem:[%s5958 + $0xe8] sm:$0xff]
        %v5989 = vld [vmem:[%s5958 + $0xf0] sm:$0xff]
        %v5990 = vld [vmem:[%s5958 + $0xf8] sm:$0xff]
        %s5991 = scalar_lea.vmem %s11, 32
        %v5992 = vld [vmem:[%s5991] sm:$0xff]
        %v5993 = vld [vmem:[%s5991 + $0x8] sm:$0xff]
        %v5996 = vlaneseq
        %v5997 = vshrl.u32 %v5996, 7
        %v5998 = vsub.s32 0, %v5997
        %v5999 = vrot.slane %v5992, %v5998
        %v6000 = vlaneseq
        %v6001 = vshrl.u32 %v6000, 7
        %v6002 = vsub.s32 1, %v6001
        %v6003 = vrot.slane %v5992, %v6002
        %v6004 = vlaneseq
        %v6005 = vshrl.u32 %v6004, 7
        %v6006 = vsub.s32 2, %v6005
        %v6007 = vrot.slane %v5992, %v6006
        %v6008 = vlaneseq
        %v6009 = vshrl.u32 %v6008, 7
        %v6010 = vsub.s32 3, %v6009
        %v6011 = vrot.slane %v5992, %v6010
        %v6012 = vlaneseq
        %v6013 = vshrl.u32 %v6012, 7
        %v6014 = vsub.s32 4, %v6013
        %v6015 = vrot.slane %v5992, %v6014
        %v6016 = vlaneseq
        %v6017 = vshrl.u32 %v6016, 7
        %v6018 = vsub.s32 5, %v6017
        %v6019 = vrot.slane %v5992, %v6018
        %v6020 = vlaneseq
        %v6021 = vshrl.u32 %v6020, 7
        %v6022 = vsub.s32 6, %v6021
        %v6023 = vrot.slane %v5992, %v6022
        %v6024 = vlaneseq
        %v6025 = vshrl.u32 %v6024, 7
        %v6026 = vsub.s32 7, %v6025
        %v6027 = vrot.slane %v5992, %v6026
        %v6028 = vlaneseq
        %v6029 = vshrl.u32 %v6028, 7
        %v6030 = vsub.s32 0, %v6029
        %v6031 = vrot.slane %v5993, %v6030
        %v6032 = vlaneseq
        %v6033 = vshrl.u32 %v6032, 7
        %v6034 = vsub.s32 1, %v6033
        %v6035 = vrot.slane %v5993, %v6034
        %v6036 = vlaneseq
        %v6037 = vshrl.u32 %v6036, 7
        %v6038 = vsub.s32 2, %v6037
        %v6039 = vrot.slane %v5993, %v6038
        %v6040 = vlaneseq
        %v6041 = vshrl.u32 %v6040, 7
        %v6042 = vsub.s32 3, %v6041
        %v6043 = vrot.slane %v5993, %v6042
        %v6044 = vlaneseq
        %v6045 = vshrl.u32 %v6044, 7
        %v6046 = vsub.s32 4, %v6045
        %v6047 = vrot.slane %v5993, %v6046
        %v6048 = vlaneseq
        %v6049 = vshrl.u32 %v6048, 7
        %v6050 = vsub.s32 5, %v6049
        %v6051 = vrot.slane %v5993, %v6050
        %v6052 = vlaneseq
        %v6053 = vshrl.u32 %v6052, 7
        %v6054 = vsub.s32 6, %v6053
        %v6055 = vrot.slane %v5993, %v6054
        %v6056 = vlaneseq
        %v6057 = vshrl.u32 %v6056, 7
        %v6058 = vsub.s32 7, %v6057
        %v6059 = vrot.slane %v5993, %v6058
        %v6108 = vunpack.c.l.b16 %v5959
        %v6109 = vunpack.c.h.b16 %v5959
        %v6110 = vunpack.c.l.b16 %v5960
        %v6111 = vunpack.c.h.b16 %v5960
        %v6112 = vunpack.c.l.b16 %v5961
        %v6113 = vunpack.c.h.b16 %v5961
        %v6114 = vunpack.c.l.b16 %v5962
        %v6115 = vunpack.c.h.b16 %v5962
        %v6116 = vunpack.c.l.b16 %v5963
        %v6117 = vunpack.c.h.b16 %v5963
        %v6118 = vunpack.c.l.b16 %v5964
        %v6119 = vunpack.c.h.b16 %v5964
        %v6120 = vunpack.c.l.b16 %v5965
        %v6121 = vunpack.c.h.b16 %v5965
        %v6122 = vunpack.c.l.b16 %v5966
        %v6123 = vunpack.c.h.b16 %v5966
        %v6124 = vunpack.c.l.b16 %v5967
        %v6125 = vunpack.c.h.b16 %v5967
        %v6126 = vunpack.c.l.b16 %v5968
        %v6127 = vunpack.c.h.b16 %v5968
        %v6128 = vunpack.c.l.b16 %v5969
        %v6129 = vunpack.c.h.b16 %v5969
        %v6130 = vunpack.c.l.b16 %v5970
        %v6131 = vunpack.c.h.b16 %v5970
        %v6132 = vunpack.c.l.b16 %v5971
        %v6133 = vunpack.c.h.b16 %v5971
        %v6134 = vunpack.c.l.b16 %v5972
        %v6135 = vunpack.c.h.b16 %v5972
        %v6136 = vunpack.c.l.b16 %v5973
        %v6137 = vunpack.c.h.b16 %v5973
        %v6138 = vunpack.c.l.b16 %v5974
        %v6139 = vunpack.c.h.b16 %v5974
        %v6140 = vunpack.c.l.b16 %v5975
        %v6141 = vunpack.c.h.b16 %v5975
        %v6142 = vunpack.c.l.b16 %v5976
        %v6143 = vunpack.c.h.b16 %v5976
        %v6144 = vunpack.c.l.b16 %v5977
        %v6145 = vunpack.c.h.b16 %v5977
        %v6146 = vunpack.c.l.b16 %v5978
        %v6147 = vunpack.c.h.b16 %v5978
        %v6148 = vunpack.c.l.b16 %v5979
        %v6149 = vunpack.c.h.b16 %v5979
        %v6150 = vunpack.c.l.b16 %v5980
        %v6151 = vunpack.c.h.b16 %v5980
        %v6152 = vunpack.c.l.b16 %v5981
        %v6153 = vunpack.c.h.b16 %v5981
        %v6154 = vunpack.c.l.b16 %v5982
        %v6155 = vunpack.c.h.b16 %v5982
        %v6156 = vunpack.c.l.b16 %v5983
        %v6157 = vunpack.c.h.b16 %v5983
        %v6158 = vunpack.c.l.b16 %v5984
        %v6159 = vunpack.c.h.b16 %v5984
        %v6160 = vunpack.c.l.b16 %v5985
        %v6161 = vunpack.c.h.b16 %v5985
        %v6162 = vunpack.c.l.b16 %v5986
        %v6163 = vunpack.c.h.b16 %v5986
        %v6164 = vunpack.c.l.b16 %v5987
        %v6165 = vunpack.c.h.b16 %v5987
        %v6166 = vunpack.c.l.b16 %v5988
        %v6167 = vunpack.c.h.b16 %v5988
        %v6168 = vunpack.c.l.b16 %v5989
        %v6169 = vunpack.c.h.b16 %v5989
        %v6170 = vunpack.c.l.b16 %v5990
        %v6171 = vunpack.c.h.b16 %v5990
        %v6172 = vpack.c.b16 %v6124, %v6108
        %v6173 = vpack.c.b16 %v6125, %v6109
        %v6174 = vpack.c.b16 %v6126, %v6110
        %v6175 = vpack.c.b16 %v6127, %v6111
        %v6176 = vpack.c.b16 %v6128, %v6112
        %v6177 = vpack.c.b16 %v6129, %v6113
        %v6178 = vpack.c.b16 %v6130, %v6114
        %v6179 = vpack.c.b16 %v6131, %v6115
        %v6180 = vpack.c.b16 %v6132, %v6116
        %v6181 = vpack.c.b16 %v6133, %v6117
        %v6182 = vpack.c.b16 %v6134, %v6118
        %v6183 = vpack.c.b16 %v6135, %v6119
        %v6184 = vpack.c.b16 %v6136, %v6120
        %v6185 = vpack.c.b16 %v6137, %v6121
        %v6186 = vpack.c.b16 %v6138, %v6122
        %v6187 = vpack.c.b16 %v6139, %v6123
        %v6188 = vpack.c.b16 %v6156, %v6140
        %v6189 = vpack.c.b16 %v6157, %v6141
        %v6190 = vpack.c.b16 %v6158, %v6142
        %v6191 = vpack.c.b16 %v6159, %v6143
        %v6192 = vpack.c.b16 %v6160, %v6144
        %v6193 = vpack.c.b16 %v6161, %v6145
        %v6194 = vpack.c.b16 %v6162, %v6146
        %v6195 = vpack.c.b16 %v6163, %v6147
        %v6196 = vpack.c.b16 %v6164, %v6148
        %v6197 = vpack.c.b16 %v6165, %v6149
        %v6198 = vpack.c.b16 %v6166, %v6150
        %v6199 = vpack.c.b16 %v6167, %v6151
        %v6200 = vpack.c.b16 %v6168, %v6152
        %v6201 = vpack.c.b16 %v6169, %v6153
        %v6202 = vpack.c.b16 %v6170, %v6154
        %v6203 = vpack.c.b16 %v6171, %v6155
        %v6237 = vsel %vm620, %v5957, 0
        %6239 = vmatprep.subr.bf16.mxu0 0
        %6240 = vmatpush1.bf16.msra.mxu0 0
        %6241 = vmatprep.subr.bf16.mxu0 0
        %6242 = vmatpush1.bf16.msra.mxu0 0
        %6243 = vmatprep.subr.bf16.mxu0 0
        %6244 = vmatpush1.bf16.msra.mxu0 0
        %6245 = vmatprep.subr.bf16.mxu0 0
        %6246 = vmatpush1.bf16.msra.mxu0 0
        %6247 = vmatprep.subr.bf16.mxu0 0
        %6248 = vmatpush1.bf16.msra.mxu0 0
        %6249 = vmatprep.subr.bf16.mxu0 0
        %6250 = vmatpush1.bf16.msra.mxu0 0
        %6251 = vmatprep.subr.bf16.mxu0 %v6189
        %6252 = vmatpush1.bf16.msra.mxu0 %v6188
        %6253 = vmatprep.subr.bf16.mxu0 %v6173
        %6254 = vmatpush1.bf16.msra.mxu0 %v6172
        %6255 = vmatprep.subr.bf16.mxu0 0
        %6256 = vmatpush2.bf16.msra.mxu0 0
        %6257 = vmatprep.subr.bf16.mxu0 0
        %6258 = vmatpush2.bf16.msra.mxu0 0
        %6259 = vmatprep.subr.bf16.mxu0 0
        %6260 = vmatpush2.bf16.msra.mxu0 0
        %6261 = vmatprep.subr.bf16.mxu0 0
        %6262 = vmatpush2.bf16.msra.mxu0 0
        %6263 = vmatprep.subr.bf16.mxu0 0
        %6264 = vmatpush2.bf16.msra.mxu0 0
        %6265 = vmatprep.subr.bf16.mxu0 0
        %6266 = vmatpush2.bf16.msra.mxu0 0
        %6267 = vmatprep.subr.bf16.mxu0 0
        %6268 = vmatpush2.bf16.msra.mxu0 0
        %6269 = vmatprep.subr.bf16.mxu0 0
        %6270 = vmatpush2.bf16.msra.mxu0 0
        %6271 = vmatprep.mubr.bf16.mxu0 0
        %6272 = vmatmul.mubr.bf16.gmra.mxu0 %v6237
        %v6273 = vpop.f32.mrf.mxu0
        %v6274 = vadd.f32 %v5999, %v6273
        %v6275 = vpop.f32.mrf.mxu0
        %v6276 = vadd.f32 %v6003, %v6275
        %v6277 = vpop.f32.mrf.mxu0
        %v6278 = vpop.f32.mrf.mxu0
        %6279 = vdwg.mxu0
        %6280 = vmatprep.subr.bf16.mxu0 0
        %6281 = vmatpush1.bf16.msra.mxu0 0
        %6282 = vmatprep.subr.bf16.mxu0 0
        %6283 = vmatpush1.bf16.msra.mxu0 0
        %6284 = vmatprep.subr.bf16.mxu0 0
        %6285 = vmatpush1.bf16.msra.mxu0 0
        %6286 = vmatprep.subr.bf16.mxu0 0
        %6287 = vmatpush1.bf16.msra.mxu0 0
        %6288 = vmatprep.subr.bf16.mxu0 0
        %6289 = vmatpush1.bf16.msra.mxu0 0
        %6290 = vmatprep.subr.bf16.mxu0 0
        %6291 = vmatpush1.bf16.msra.mxu0 0
        %6292 = vmatprep.subr.bf16.mxu0 %v6191
        %6293 = vmatpush1.bf16.msra.mxu0 %v6190
        %6294 = vmatprep.subr.bf16.mxu0 %v6175
        %6295 = vmatpush1.bf16.msra.mxu0 %v6174
        %6296 = vmatprep.subr.bf16.mxu0 0
        %6297 = vmatpush2.bf16.msra.mxu0 0
        %6298 = vmatprep.subr.bf16.mxu0 0
        %6299 = vmatpush2.bf16.msra.mxu0 0
        %6300 = vmatprep.subr.bf16.mxu0 0
        %6301 = vmatpush2.bf16.msra.mxu0 0
        %6302 = vmatprep.subr.bf16.mxu0 0
        %6303 = vmatpush2.bf16.msra.mxu0 0
        %6304 = vmatprep.subr.bf16.mxu0 0
        %6305 = vmatpush2.bf16.msra.mxu0 0
        %6306 = vmatprep.subr.bf16.mxu0 0
        %6307 = vmatpush2.bf16.msra.mxu0 0
        %6308 = vmatprep.subr.bf16.mxu0 0
        %6309 = vmatpush2.bf16.msra.mxu0 0
        %6310 = vmatprep.subr.bf16.mxu0 0
        %6311 = vmatpush2.bf16.msra.mxu0 0
        %6312 = vmatprep.mubr.bf16.mxu0 0
        %6313 = vmatmul.mubr.bf16.gmra.mxu0 %v6237
        %v6314 = vpop.f32.mrf.mxu0
        %v6315 = vadd.f32 %v6007, %v6314
        %v6316 = vpop.f32.mrf.mxu0
        %v6317 = vadd.f32 %v6011, %v6316
        %v6318 = vpop.f32.mrf.mxu0
        %v6319 = vpop.f32.mrf.mxu0
        %6320 = vdwg.mxu0
        %6321 = vmatprep.subr.bf16.mxu0 0
        %6322 = vmatpush1.bf16.msra.mxu0 0
        %6323 = vmatprep.subr.bf16.mxu0 0
        %6324 = vmatpush1.bf16.msra.mxu0 0
        %6325 = vmatprep.subr.bf16.mxu0 0
        %6326 = vmatpush1.bf16.msra.mxu0 0
        %6327 = vmatprep.subr.bf16.mxu0 0
        %6328 = vmatpush1.bf16.msra.mxu0 0
        %6329 = vmatprep.subr.bf16.mxu0 0
        %6330 = vmatpush1.bf16.msra.mxu0 0
        %6331 = vmatprep.subr.bf16.mxu0 0
        %6332 = vmatpush1.bf16.msra.mxu0 0
        %6333 = vmatprep.subr.bf16.mxu0 %v6193
        %6334 = vmatpush1.bf16.msra.mxu0 %v6192
        %6335 = vmatprep.subr.bf16.mxu0 %v6177
        %6336 = vmatpush1.bf16.msra.mxu0 %v6176
        %6337 = vmatprep.subr.bf16.mxu0 0
        %6338 = vmatpush2.bf16.msra.mxu0 0
        %6339 = vmatprep.subr.bf16.mxu0 0
        %6340 = vmatpush2.bf16.msra.mxu0 0
        %6341 = vmatprep.subr.bf16.mxu0 0
        %6342 = vmatpush2.bf16.msra.mxu0 0
        %6343 = vmatprep.subr.bf16.mxu0 0
        %6344 = vmatpush2.bf16.msra.mxu0 0
        %6345 = vmatprep.subr.bf16.mxu0 0
        %6346 = vmatpush2.bf16.msra.mxu0 0
        %6347 = vmatprep.subr.bf16.mxu0 0
        %6348 = vmatpush2.bf16.msra.mxu0 0
        %6349 = vmatprep.subr.bf16.mxu0 0
        %6350 = vmatpush2.bf16.msra.mxu0 0
        %6351 = vmatprep.subr.bf16.mxu0 0
        %6352 = vmatpush2.bf16.msra.mxu0 0
        %6353 = vmatprep.mubr.bf16.mxu0 0
        %6354 = vmatmul.mubr.bf16.gmra.mxu0 %v6237
        %v6355 = vpop.f32.mrf.mxu0
        %v6356 = vadd.f32 %v6015, %v6355
        %v6357 = vpop.f32.mrf.mxu0
        %v6358 = vadd.f32 %v6019, %v6357
        %v6359 = vpop.f32.mrf.mxu0
        %v6360 = vpop.f32.mrf.mxu0
        %6361 = vdwg.mxu0
        %6362 = vmatprep.subr.bf16.mxu0 0
        %6363 = vmatpush1.bf16.msra.mxu0 0
        %6364 = vmatprep.subr.bf16.mxu0 0
        %6365 = vmatpush1.bf16.msra.mxu0 0
        %6366 = vmatprep.subr.bf16.mxu0 0
        %6367 = vmatpush1.bf16.msra.mxu0 0
        %6368 = vmatprep.subr.bf16.mxu0 0
        %6369 = vmatpush1.bf16.msra.mxu0 0
        %6370 = vmatprep.subr.bf16.mxu0 0
        %6371 = vmatpush1.bf16.msra.mxu0 0
        %6372 = vmatprep.subr.bf16.mxu0 0
        %6373 = vmatpush1.bf16.msra.mxu0 0
        %6374 = vmatprep.subr.bf16.mxu0 %v6195
        %6375 = vmatpush1.bf16.msra.mxu0 %v6194
        %6376 = vmatprep.subr.bf16.mxu0 %v6179
        %6377 = vmatpush1.bf16.msra.mxu0 %v6178
        %6378 = vmatprep.subr.bf16.mxu0 0
        %6379 = vmatpush2.bf16.msra.mxu0 0
        %6380 = vmatprep.subr.bf16.mxu0 0
        %6381 = vmatpush2.bf16.msra.mxu0 0
        %6382 = vmatprep.subr.bf16.mxu0 0
        %6383 = vmatpush2.bf16.msra.mxu0 0
        %6384 = vmatprep.subr.bf16.mxu0 0
        %6385 = vmatpush2.bf16.msra.mxu0 0
        %6386 = vmatprep.subr.bf16.mxu0 0
        %6387 = vmatpush2.bf16.msra.mxu0 0
        %6388 = vmatprep.subr.bf16.mxu0 0
        %6389 = vmatpush2.bf16.msra.mxu0 0
        %6390 = vmatprep.subr.bf16.mxu0 0
        %6391 = vmatpush2.bf16.msra.mxu0 0
        %6392 = vmatprep.subr.bf16.mxu0 0
        %6393 = vmatpush2.bf16.msra.mxu0 0
        %6394 = vmatprep.mubr.bf16.mxu0 0
        %6395 = vmatmul.mubr.bf16.gmra.mxu0 %v6237
        %v6396 = vpop.f32.mrf.mxu0
        %v6397 = vadd.f32 %v6023, %v6396
        %v6398 = vpop.f32.mrf.mxu0
        %v6399 = vadd.f32 %v6027, %v6398
        %v6400 = vpop.f32.mrf.mxu0
        %v6401 = vpop.f32.mrf.mxu0
        %6402 = vdwg.mxu0
        %6403 = vmatprep.subr.bf16.mxu0 0
        %6404 = vmatpush1.bf16.msra.mxu0 0
        %6405 = vmatprep.subr.bf16.mxu0 0
        %6406 = vmatpush1.bf16.msra.mxu0 0
        %6407 = vmatprep.subr.bf16.mxu0 0
        %6408 = vmatpush1.bf16.msra.mxu0 0
        %6409 = vmatprep.subr.bf16.mxu0 0
        %6410 = vmatpush1.bf16.msra.mxu0 0
        %6411 = vmatprep.subr.bf16.mxu0 0
        %6412 = vmatpush1.bf16.msra.mxu0 0
        %6413 = vmatprep.subr.bf16.mxu0 0
        %6414 = vmatpush1.bf16.msra.mxu0 0
        %6415 = vmatprep.subr.bf16.mxu0 %v6197
        %6416 = vmatpush1.bf16.msra.mxu0 %v6196
        %6417 = vmatprep.subr.bf16.mxu0 %v6181
        %6418 = vmatpush1.bf16.msra.mxu0 %v6180
        %6419 = vmatprep.subr.bf16.mxu0 0
        %6420 = vmatpush2.bf16.msra.mxu0 0
        %6421 = vmatprep.subr.bf16.mxu0 0
        %6422 = vmatpush2.bf16.msra.mxu0 0
        %6423 = vmatprep.subr.bf16.mxu0 0
        %6424 = vmatpush2.bf16.msra.mxu0 0
        %6425 = vmatprep.subr.bf16.mxu0 0
        %6426 = vmatpush2.bf16.msra.mxu0 0
        %6427 = vmatprep.subr.bf16.mxu0 0
        %6428 = vmatpush2.bf16.msra.mxu0 0
        %6429 = vmatprep.subr.bf16.mxu0 0
        %6430 = vmatpush2.bf16.msra.mxu0 0
        %6431 = vmatprep.subr.bf16.mxu0 0
        %6432 = vmatpush2.bf16.msra.mxu0 0
        %6433 = vmatprep.subr.bf16.mxu0 0
        %6434 = vmatpush2.bf16.msra.mxu0 0
        %6435 = vmatprep.mubr.bf16.mxu0 0
        %6436 = vmatmul.mubr.bf16.gmra.mxu0 %v6237
        %v6437 = vpop.f32.mrf.mxu0
        %v6438 = vadd.f32 %v6031, %v6437
        %v6439 = vpop.f32.mrf.mxu0
        %v6440 = vadd.f32 %v6035, %v6439
        %v6441 = vpop.f32.mrf.mxu0
        %v6442 = vpop.f32.mrf.mxu0
        %6443 = vdwg.mxu0
        %6444 = vmatprep.subr.bf16.mxu0 0
        %6445 = vmatpush1.bf16.msra.mxu0 0
        %6446 = vmatprep.subr.bf16.mxu0 0
        %6447 = vmatpush1.bf16.msra.mxu0 0
        %6448 = vmatprep.subr.bf16.mxu0 0
        %6449 = vmatpush1.bf16.msra.mxu0 0
        %6450 = vmatprep.subr.bf16.mxu0 0
        %6451 = vmatpush1.bf16.msra.mxu0 0
        %6452 = vmatprep.subr.bf16.mxu0 0
        %6453 = vmatpush1.bf16.msra.mxu0 0
        %6454 = vmatprep.subr.bf16.mxu0 0
        %6455 = vmatpush1.bf16.msra.mxu0 0
        %6456 = vmatprep.subr.bf16.mxu0 %v6199
        %6457 = vmatpush1.bf16.msra.mxu0 %v6198
        %6458 = vmatprep.subr.bf16.mxu0 %v6183
        %6459 = vmatpush1.bf16.msra.mxu0 %v6182
        %6460 = vmatprep.subr.bf16.mxu0 0
        %6461 = vmatpush2.bf16.msra.mxu0 0
        %6462 = vmatprep.subr.bf16.mxu0 0
        %6463 = vmatpush2.bf16.msra.mxu0 0
        %6464 = vmatprep.subr.bf16.mxu0 0
        %6465 = vmatpush2.bf16.msra.mxu0 0
        %6466 = vmatprep.subr.bf16.mxu0 0
        %6467 = vmatpush2.bf16.msra.mxu0 0
        %6468 = vmatprep.subr.bf16.mxu0 0
        %6469 = vmatpush2.bf16.msra.mxu0 0
        %6470 = vmatprep.subr.bf16.mxu0 0
        %6471 = vmatpush2.bf16.msra.mxu0 0
        %6472 = vmatprep.subr.bf16.mxu0 0
        %6473 = vmatpush2.bf16.msra.mxu0 0
        %6474 = vmatprep.subr.bf16.mxu0 0
        %6475 = vmatpush2.bf16.msra.mxu0 0
        %6476 = vmatprep.mubr.bf16.mxu0 0
        %6477 = vmatmul.mubr.bf16.gmra.mxu0 %v6237
        %v6478 = vpop.f32.mrf.mxu0
        %v6479 = vadd.f32 %v6039, %v6478
        %v6480 = vpop.f32.mrf.mxu0
        %v6481 = vadd.f32 %v6043, %v6480
        %v6482 = vpop.f32.mrf.mxu0
        %v6483 = vpop.f32.mrf.mxu0
        %6484 = vdwg.mxu0
        %6485 = vmatprep.subr.bf16.mxu0 0
        %6486 = vmatpush1.bf16.msra.mxu0 0
        %6487 = vmatprep.subr.bf16.mxu0 0
        %6488 = vmatpush1.bf16.msra.mxu0 0
        %6489 = vmatprep.subr.bf16.mxu0 0
        %6490 = vmatpush1.bf16.msra.mxu0 0
        %6491 = vmatprep.subr.bf16.mxu0 0
        %6492 = vmatpush1.bf16.msra.mxu0 0
        %6493 = vmatprep.subr.bf16.mxu0 0
        %6494 = vmatpush1.bf16.msra.mxu0 0
        %6495 = vmatprep.subr.bf16.mxu0 0
        %6496 = vmatpush1.bf16.msra.mxu0 0
        %6497 = vmatprep.subr.bf16.mxu0 %v6201
        %6498 = vmatpush1.bf16.msra.mxu0 %v6200
        %6499 = vmatprep.subr.bf16.mxu0 %v6185
        %6500 = vmatpush1.bf16.msra.mxu0 %v6184
        %6501 = vmatprep.subr.bf16.mxu0 0
        %6502 = vmatpush2.bf16.msra.mxu0 0
        %6503 = vmatprep.subr.bf16.mxu0 0
        %6504 = vmatpush2.bf16.msra.mxu0 0
        %6505 = vmatprep.subr.bf16.mxu0 0
        %6506 = vmatpush2.bf16.msra.mxu0 0
        %6507 = vmatprep.subr.bf16.mxu0 0
        %6508 = vmatpush2.bf16.msra.mxu0 0
        %6509 = vmatprep.subr.bf16.mxu0 0
        %6510 = vmatpush2.bf16.msra.mxu0 0
        %6511 = vmatprep.subr.bf16.mxu0 0
        %6512 = vmatpush2.bf16.msra.mxu0 0
        %6513 = vmatprep.subr.bf16.mxu0 0
        %6514 = vmatpush2.bf16.msra.mxu0 0
        %6515 = vmatprep.subr.bf16.mxu0 0
        %6516 = vmatpush2.bf16.msra.mxu0 0
        %6517 = vmatprep.mubr.bf16.mxu0 0
        %6518 = vmatmul.mubr.bf16.gmra.mxu0 %v6237
        %v6519 = vpop.f32.mrf.mxu0
        %v6520 = vadd.f32 %v6047, %v6519
        %v6521 = vpop.f32.mrf.mxu0
        %v6522 = vadd.f32 %v6051, %v6521
        %v6523 = vpop.f32.mrf.mxu0
        %v6524 = vpop.f32.mrf.mxu0
        %6525 = vdwg.mxu0
        %6526 = vmatprep.subr.bf16.mxu0 0
        %6527 = vmatpush1.bf16.msra.mxu0 0
        %6528 = vmatprep.subr.bf16.mxu0 0
        %6529 = vmatpush1.bf16.msra.mxu0 0
        %6530 = vmatprep.subr.bf16.mxu0 0
        %6531 = vmatpush1.bf16.msra.mxu0 0
        %6532 = vmatprep.subr.bf16.mxu0 0
        %6533 = vmatpush1.bf16.msra.mxu0 0
        %6534 = vmatprep.subr.bf16.mxu0 0
        %6535 = vmatpush1.bf16.msra.mxu0 0
        %6536 = vmatprep.subr.bf16.mxu0 0
        %6537 = vmatpush1.bf16.msra.mxu0 0
        %6538 = vmatprep.subr.bf16.mxu0 %v6203
        %6539 = vmatpush1.bf16.msra.mxu0 %v6202
        %6540 = vmatprep.subr.bf16.mxu0 %v6187
        %6541 = vmatpush1.bf16.msra.mxu0 %v6186
        %6542 = vmatprep.subr.bf16.mxu0 0
        %6543 = vmatpush2.bf16.msra.mxu0 0
        %6544 = vmatprep.subr.bf16.mxu0 0
        %6545 = vmatpush2.bf16.msra.mxu0 0
        %6546 = vmatprep.subr.bf16.mxu0 0
        %6547 = vmatpush2.bf16.msra.mxu0 0
        %6548 = vmatprep.subr.bf16.mxu0 0
        %6549 = vmatpush2.bf16.msra.mxu0 0
        %6550 = vmatprep.subr.bf16.mxu0 0
        %6551 = vmatpush2.bf16.msra.mxu0 0
        %6552 = vmatprep.subr.bf16.mxu0 0
        %6553 = vmatpush2.bf16.msra.mxu0 0
        %6554 = vmatprep.subr.bf16.mxu0 0
        %6555 = vmatpush2.bf16.msra.mxu0 0
        %6556 = vmatprep.subr.bf16.mxu0 0
        %6557 = vmatpush2.bf16.msra.mxu0 0
        %6558 = vmatprep.mubr.bf16.mxu0 0
        %6559 = vmatmul.mubr.bf16.gmra.mxu0 %v6237
        %v6560 = vpop.f32.mrf.mxu0
        %v6561 = vadd.f32 %v6055, %v6560
        %v6562 = vpop.f32.mrf.mxu0
        %v6563 = vadd.f32 %v6059, %v6562
        %v6564 = vpop.f32.mrf.mxu0
        %v6565 = vpop.f32.mrf.mxu0
        %6566 = vdwg.mxu0
        %v6567 = vmax.f32 %v6274, 0.0
        %v6568 = vmax.f32 %v6276, 0.0
        %v6569 = vmax.f32 %v6315, 0.0
        %v6570 = vmax.f32 %v6317, 0.0
        %v6571 = vmax.f32 %v6356, 0.0
        %v6572 = vmax.f32 %v6358, 0.0
        %v6573 = vmax.f32 %v6397, 0.0
        %v6574 = vmax.f32 %v6399, 0.0
        %v6575 = vmax.f32 %v6438, 0.0
        %v6576 = vmax.f32 %v6440, 0.0
        %v6577 = vmax.f32 %v6479, 0.0
        %v6578 = vmax.f32 %v6481, 0.0
        %v6579 = vmax.f32 %v6520, 0.0
        %v6580 = vmax.f32 %v6522, 0.0
        %v6581 = vmax.f32 %v6561, 0.0
        %v6582 = vmax.f32 %v6563, 0.0
        %v6583 = vpack.c.bf16 %v6567, %v6567
        %v6584 = vpack.c.bf16 %v6568, %v6568
        %v6585 = vpack.c.bf16 %v6569, %v6569
        %v6586 = vpack.c.bf16 %v6570, %v6570
        %v6587 = vpack.c.bf16 %v6571, %v6571
        %v6588 = vpack.c.bf16 %v6572, %v6572
        %v6589 = vpack.c.bf16 %v6573, %v6573
        %v6590 = vpack.c.bf16 %v6574, %v6574
        %v6591 = vpack.c.bf16 %v6575, %v6575
        %v6592 = vpack.c.bf16 %v6576, %v6576
        %v6593 = vpack.c.bf16 %v6577, %v6577
        %v6594 = vpack.c.bf16 %v6578, %v6578
        %v6595 = vpack.c.bf16 %v6579, %v6579
        %v6596 = vpack.c.bf16 %v6580, %v6580
        %v6597 = vpack.c.bf16 %v6581, %v6581
        %v6598 = vpack.c.bf16 %v6582, %v6582
        %s6599 = scalar_lea.vmem %s12, 512
        %v6600 = vld [vmem:[%s6599] sm:$0xff]
        %v6601 = vld [vmem:[%s6599 + $0x8] sm:$0xff]
        %v6602 = vld [vmem:[%s6599 + $0x10] sm:$0xff]
        %v6603 = vld [vmem:[%s6599 + $0x18] sm:$0xff]
        %v6604 = vld [vmem:[%s6599 + $0x20] sm:$0xff]
        %v6605 = vld [vmem:[%s6599 + $0x28] sm:$0xff]
        %v6606 = vld [vmem:[%s6599 + $0x30] sm:$0xff]
        %v6607 = vld [vmem:[%s6599 + $0x38] sm:$0xff]
        %v6608 = vld [vmem:[%s6599 + $0x40] sm:$0xff]
        %v6609 = vld [vmem:[%s6599 + $0x48] sm:$0xff]
        %v6610 = vld [vmem:[%s6599 + $0x50] sm:$0xff]
        %v6611 = vld [vmem:[%s6599 + $0x58] sm:$0xff]
        %v6612 = vld [vmem:[%s6599 + $0x60] sm:$0xff]
        %v6613 = vld [vmem:[%s6599 + $0x68] sm:$0xff]
        %v6614 = vld [vmem:[%s6599 + $0x70] sm:$0xff]
        %v6615 = vld [vmem:[%s6599 + $0x78] sm:$0xff]
        %v6616 = vld [vmem:[%s6599 + $0x80] sm:$0xff]
        %v6617 = vld [vmem:[%s6599 + $0x88] sm:$0xff]
        %v6618 = vld [vmem:[%s6599 + $0x90] sm:$0xff]
        %v6619 = vld [vmem:[%s6599 + $0x98] sm:$0xff]
        %v6620 = vld [vmem:[%s6599 + $0xa0] sm:$0xff]
        %v6621 = vld [vmem:[%s6599 + $0xa8] sm:$0xff]
        %v6622 = vld [vmem:[%s6599 + $0xb0] sm:$0xff]
        %v6623 = vld [vmem:[%s6599 + $0xb8] sm:$0xff]
        %v6624 = vld [vmem:[%s6599 + $0xc0] sm:$0xff]
        %v6625 = vld [vmem:[%s6599 + $0xc8] sm:$0xff]
        %v6626 = vld [vmem:[%s6599 + $0xd0] sm:$0xff]
        %v6627 = vld [vmem:[%s6599 + $0xd8] sm:$0xff]
        %v6628 = vld [vmem:[%s6599 + $0xe0] sm:$0xff]
        %v6629 = vld [vmem:[%s6599 + $0xe8] sm:$0xff]
        %v6630 = vld [vmem:[%s6599 + $0xf0] sm:$0xff]
        %v6631 = vld [vmem:[%s6599 + $0xf8] sm:$0xff]
        %s6632 = scalar_lea.vmem %s13, 2
        %v6633 = vld [vmem:[%s6632] sm:$0x1]
        %v6635 = vlaneseq
        %v6636 = vshrl.u32 %v6635, 7
        %v6637 = vsub.s32 0, %v6636
        %v6638 = vrot.slane %v6633, %v6637
        %v6672 = vunpack.c.l.b16 %v6600
        %v6673 = vunpack.c.h.b16 %v6600
        %v6674 = vunpack.c.l.b16 %v6601
        %v6675 = vunpack.c.h.b16 %v6601
        %v6676 = vunpack.c.l.b16 %v6602
        %v6677 = vunpack.c.h.b16 %v6602
        %v6678 = vunpack.c.l.b16 %v6603
        %v6679 = vunpack.c.h.b16 %v6603
        %v6680 = vunpack.c.l.b16 %v6604
        %v6681 = vunpack.c.h.b16 %v6604
        %v6682 = vunpack.c.l.b16 %v6605
        %v6683 = vunpack.c.h.b16 %v6605
        %v6684 = vunpack.c.l.b16 %v6606
        %v6685 = vunpack.c.h.b16 %v6606
        %v6686 = vunpack.c.l.b16 %v6607
        %v6687 = vunpack.c.h.b16 %v6607
        %v6688 = vunpack.c.l.b16 %v6608
        %v6689 = vunpack.c.h.b16 %v6608
        %v6690 = vunpack.c.l.b16 %v6609
        %v6691 = vunpack.c.h.b16 %v6609
        %v6692 = vunpack.c.l.b16 %v6610
        %v6693 = vunpack.c.h.b16 %v6610
        %v6694 = vunpack.c.l.b16 %v6611
        %v6695 = vunpack.c.h.b16 %v6611
        %v6696 = vunpack.c.l.b16 %v6612
        %v6697 = vunpack.c.h.b16 %v6612
        %v6698 = vunpack.c.l.b16 %v6613
        %v6699 = vunpack.c.h.b16 %v6613
        %v6700 = vunpack.c.l.b16 %v6614
        %v6701 = vunpack.c.h.b16 %v6614
        %v6702 = vunpack.c.l.b16 %v6615
        %v6703 = vunpack.c.h.b16 %v6615
        %v6704 = vunpack.c.l.b16 %v6616
        %v6705 = vunpack.c.h.b16 %v6616
        %v6706 = vunpack.c.l.b16 %v6617
        %v6707 = vunpack.c.h.b16 %v6617
        %v6708 = vunpack.c.l.b16 %v6618
        %v6709 = vunpack.c.h.b16 %v6618
        %v6710 = vunpack.c.l.b16 %v6619
        %v6711 = vunpack.c.h.b16 %v6619
        %v6712 = vunpack.c.l.b16 %v6620
        %v6713 = vunpack.c.h.b16 %v6620
        %v6714 = vunpack.c.l.b16 %v6621
        %v6715 = vunpack.c.h.b16 %v6621
        %v6716 = vunpack.c.l.b16 %v6622
        %v6717 = vunpack.c.h.b16 %v6622
        %v6718 = vunpack.c.l.b16 %v6623
        %v6719 = vunpack.c.h.b16 %v6623
        %v6720 = vunpack.c.l.b16 %v6624
        %v6721 = vunpack.c.h.b16 %v6624
        %v6722 = vunpack.c.l.b16 %v6625
        %v6723 = vunpack.c.h.b16 %v6625
        %v6724 = vunpack.c.l.b16 %v6626
        %v6725 = vunpack.c.h.b16 %v6626
        %v6726 = vunpack.c.l.b16 %v6627
        %v6727 = vunpack.c.h.b16 %v6627
        %v6728 = vunpack.c.l.b16 %v6628
        %v6729 = vunpack.c.h.b16 %v6628
        %v6730 = vunpack.c.l.b16 %v6629
        %v6731 = vunpack.c.h.b16 %v6629
        %v6732 = vunpack.c.l.b16 %v6630
        %v6733 = vunpack.c.h.b16 %v6630
        %v6734 = vunpack.c.l.b16 %v6631
        %v6735 = vunpack.c.h.b16 %v6631
        %v6736 = vpack.c.b16 %v6688, %v6672
        %v6737 = vpack.c.b16 %v6689, %v6673
        %v6738 = vpack.c.b16 %v6690, %v6674
        %v6739 = vpack.c.b16 %v6691, %v6675
        %v6740 = vpack.c.b16 %v6692, %v6676
        %v6741 = vpack.c.b16 %v6693, %v6677
        %v6742 = vpack.c.b16 %v6694, %v6678
        %v6743 = vpack.c.b16 %v6695, %v6679
        %v6744 = vpack.c.b16 %v6696, %v6680
        %v6745 = vpack.c.b16 %v6697, %v6681
        %v6746 = vpack.c.b16 %v6698, %v6682
        %v6747 = vpack.c.b16 %v6699, %v6683
        %v6748 = vpack.c.b16 %v6700, %v6684
        %v6749 = vpack.c.b16 %v6701, %v6685
        %v6750 = vpack.c.b16 %v6702, %v6686
        %v6751 = vpack.c.b16 %v6703, %v6687
        %v6752 = vpack.c.b16 %v6720, %v6704
        %v6753 = vpack.c.b16 %v6721, %v6705
        %v6754 = vpack.c.b16 %v6722, %v6706
        %v6755 = vpack.c.b16 %v6723, %v6707
        %v6756 = vpack.c.b16 %v6724, %v6708
        %v6757 = vpack.c.b16 %v6725, %v6709
        %v6758 = vpack.c.b16 %v6726, %v6710
        %v6759 = vpack.c.b16 %v6727, %v6711
        %v6760 = vpack.c.b16 %v6728, %v6712
        %v6761 = vpack.c.b16 %v6729, %v6713
        %v6762 = vpack.c.b16 %v6730, %v6714
        %v6763 = vpack.c.b16 %v6731, %v6715
        %v6764 = vpack.c.b16 %v6732, %v6716
        %v6765 = vpack.c.b16 %v6733, %v6717
        %v6766 = vpack.c.b16 %v6734, %v6718
        %v6767 = vpack.c.b16 %v6735, %v6719
        %6800 = vmatprep.subr.bf16.mxu0 0
        %6801 = vmatpush1.bf16.xpose.msra.mxu0 0
        %6802 = vmatprep.subr.bf16.mxu0 0
        %6803 = vmatpush1.bf16.xpose.msra.mxu0 0
        %6804 = vmatprep.subr.bf16.mxu0 0
        %6805 = vmatpush1.bf16.xpose.msra.mxu0 0
        %6806 = vmatprep.subr.bf16.mxu0 0
        %6807 = vmatpush1.bf16.xpose.msra.mxu0 0
        %6808 = vmatprep.subr.bf16.mxu0 0
        %6809 = vmatpush1.bf16.xpose.msra.mxu0 0
        %6810 = vmatprep.subr.bf16.mxu0 0
        %6811 = vmatpush1.bf16.xpose.msra.mxu0 0
        %6812 = vmatprep.subr.bf16.mxu0 %v6753
        %6813 = vmatpush1.bf16.xpose.msra.mxu0 %v6752
        %6814 = vmatprep.subr.bf16.mxu0 %v6737
        %6815 = vmatpush1.bf16.xpose.msra.mxu0 %v6736
        %6816 = vmatprep.subr.bf16.mxu0 0
        %6817 = vmatpush2.bf16.xpose.msra.mxu0 0
        %6818 = vmatprep.subr.bf16.mxu0 0
        %6819 = vmatpush2.bf16.xpose.msra.mxu0 0
        %6820 = vmatprep.subr.bf16.mxu0 0
        %6821 = vmatpush2.bf16.xpose.msra.mxu0 0
        %6822 = vmatprep.subr.bf16.mxu0 0
        %6823 = vmatpush2.bf16.xpose.msra.mxu0 0
        %6824 = vmatprep.subr.bf16.mxu0 0
        %6825 = vmatpush2.bf16.xpose.msra.mxu0 0
        %6826 = vmatprep.subr.bf16.mxu0 0
        %6827 = vmatpush2.bf16.xpose.msra.mxu0 0
        %6828 = vmatprep.subr.bf16.mxu0 0
        %6829 = vmatpush2.bf16.xpose.msra.mxu0 0
        %6830 = vmatprep.subr.bf16.mxu0 0
        %6831 = vmatpush2.bf16.xpose.msra.mxu0 0
        %6832 = vmatprep.mubr.bf16.mxu0 %v6584
        %6833 = vmatmul.mubr.bf16.gmra.mxu0 %v6583
        %v6834 = vpop.f32.mrf.mxu0
        %v6835 = vadd.f32 %v6638, %v6834
        %v6836 = vpop.f32.mrf.mxu0
        %v6837 = vpop.f32.mrf.mxu0
        %v6838 = vpop.f32.mrf.mxu0
        %6839 = vdwg.mxu0
        %6840 = vmatprep.subr.bf16.mxu0 0
        %6841 = vmatpush1.bf16.xpose.msra.mxu0 0
        %6842 = vmatprep.subr.bf16.mxu0 0
        %6843 = vmatpush1.bf16.xpose.msra.mxu0 0
        %6844 = vmatprep.subr.bf16.mxu0 0
        %6845 = vmatpush1.bf16.xpose.msra.mxu0 0
        %6846 = vmatprep.subr.bf16.mxu0 0
        %6847 = vmatpush1.bf16.xpose.msra.mxu0 0
        %6848 = vmatprep.subr.bf16.mxu0 0
        %6849 = vmatpush1.bf16.xpose.msra.mxu0 0
        %6850 = vmatprep.subr.bf16.mxu0 0
        %6851 = vmatpush1.bf16.xpose.msra.mxu0 0
        %6852 = vmatprep.subr.bf16.mxu0 %v6755
        %6853 = vmatpush1.bf16.xpose.msra.mxu0 %v6754
        %6854 = vmatprep.subr.bf16.mxu0 %v6739
        %6855 = vmatpush1.bf16.xpose.msra.mxu0 %v6738
        %6856 = vmatprep.subr.bf16.mxu0 0
        %6857 = vmatpush2.bf16.xpose.msra.mxu0 0
        %6858 = vmatprep.subr.bf16.mxu0 0
        %6859 = vmatpush2.bf16.xpose.msra.mxu0 0
        %6860 = vmatprep.subr.bf16.mxu0 0
        %6861 = vmatpush2.bf16.xpose.msra.mxu0 0
        %6862 = vmatprep.subr.bf16.mxu0 0
        %6863 = vmatpush2.bf16.xpose.msra.mxu0 0
        %6864 = vmatprep.subr.bf16.mxu0 0
        %6865 = vmatpush2.bf16.xpose.msra.mxu0 0
        %6866 = vmatprep.subr.bf16.mxu0 0
        %6867 = vmatpush2.bf16.xpose.msra.mxu0 0
        %6868 = vmatprep.subr.bf16.mxu0 0
        %6869 = vmatpush2.bf16.xpose.msra.mxu0 0
        %6870 = vmatprep.subr.bf16.mxu0 0
        %6871 = vmatpush2.bf16.xpose.msra.mxu0 0
        %6872 = vmatprep.mubr.bf16.mxu0 %v6586
        %6873 = vmatmul.mubr.bf16.gmra.mxu0 %v6585
        %v6874 = vpop.f32.mrf.mxu0
        %v6875 = vadd.f32 %v6835, %v6874
        %v6876 = vpop.f32.mrf.mxu0
        %v6877 = vpop.f32.mrf.mxu0
        %v6878 = vpop.f32.mrf.mxu0
        %6879 = vdwg.mxu0
        %6880 = vmatprep.subr.bf16.mxu0 0
        %6881 = vmatpush1.bf16.xpose.msra.mxu0 0
        %6882 = vmatprep.subr.bf16.mxu0 0
        %6883 = vmatpush1.bf16.xpose.msra.mxu0 0
        %6884 = vmatprep.subr.bf16.mxu0 0
        %6885 = vmatpush1.bf16.xpose.msra.mxu0 0
        %6886 = vmatprep.subr.bf16.mxu0 0
        %6887 = vmatpush1.bf16.xpose.msra.mxu0 0
        %6888 = vmatprep.subr.bf16.mxu0 0
        %6889 = vmatpush1.bf16.xpose.msra.mxu0 0
        %6890 = vmatprep.subr.bf16.mxu0 0
        %6891 = vmatpush1.bf16.xpose.msra.mxu0 0
        %6892 = vmatprep.subr.bf16.mxu0 %v6757
        %6893 = vmatpush1.bf16.xpose.msra.mxu0 %v6756
        %6894 = vmatprep.subr.bf16.mxu0 %v6741
        %6895 = vmatpush1.bf16.xpose.msra.mxu0 %v6740
        %6896 = vmatprep.subr.bf16.mxu0 0
        %6897 = vmatpush2.bf16.xpose.msra.mxu0 0
        %6898 = vmatprep.subr.bf16.mxu0 0
        %6899 = vmatpush2.bf16.xpose.msra.mxu0 0
        %6900 = vmatprep.subr.bf16.mxu0 0
        %6901 = vmatpush2.bf16.xpose.msra.mxu0 0
        %6902 = vmatprep.subr.bf16.mxu0 0
        %6903 = vmatpush2.bf16.xpose.msra.mxu0 0
        %6904 = vmatprep.subr.bf16.mxu0 0
        %6905 = vmatpush2.bf16.xpose.msra.mxu0 0
        %6906 = vmatprep.subr.bf16.mxu0 0
        %6907 = vmatpush2.bf16.xpose.msra.mxu0 0
        %6908 = vmatprep.subr.bf16.mxu0 0
        %6909 = vmatpush2.bf16.xpose.msra.mxu0 0
        %6910 = vmatprep.subr.bf16.mxu0 0
        %6911 = vmatpush2.bf16.xpose.msra.mxu0 0
        %6912 = vmatprep.mubr.bf16.mxu0 %v6588
        %6913 = vmatmul.mubr.bf16.gmra.mxu0 %v6587
        %v6914 = vpop.f32.mrf.mxu0
        %v6915 = vadd.f32 %v6875, %v6914
        %v6916 = vpop.f32.mrf.mxu0
        %v6917 = vpop.f32.mrf.mxu0
        %v6918 = vpop.f32.mrf.mxu0
        %6919 = vdwg.mxu0
        %6920 = vmatprep.subr.bf16.mxu0 0
        %6921 = vmatpush1.bf16.xpose.msra.mxu0 0
        %6922 = vmatprep.subr.bf16.mxu0 0
        %6923 = vmatpush1.bf16.xpose.msra.mxu0 0
        %6924 = vmatprep.subr.bf16.mxu0 0
        %6925 = vmatpush1.bf16.xpose.msra.mxu0 0
        %6926 = vmatprep.subr.bf16.mxu0 0
        %6927 = vmatpush1.bf16.xpose.msra.mxu0 0
        %6928 = vmatprep.subr.bf16.mxu0 0
        %6929 = vmatpush1.bf16.xpose.msra.mxu0 0
        %6930 = vmatprep.subr.bf16.mxu0 0
        %6931 = vmatpush1.bf16.xpose.msra.mxu0 0
        %6932 = vmatprep.subr.bf16.mxu0 %v6759
        %6933 = vmatpush1.bf16.xpose.msra.mxu0 %v6758
        %6934 = vmatprep.subr.bf16.mxu0 %v6743
        %6935 = vmatpush1.bf16.xpose.msra.mxu0 %v6742
        %6936 = vmatprep.subr.bf16.mxu0 0
        %6937 = vmatpush2.bf16.xpose.msra.mxu0 0
        %6938 = vmatprep.subr.bf16.mxu0 0
        %6939 = vmatpush2.bf16.xpose.msra.mxu0 0
        %6940 = vmatprep.subr.bf16.mxu0 0
        %6941 = vmatpush2.bf16.xpose.msra.mxu0 0
        %6942 = vmatprep.subr.bf16.mxu0 0
        %6943 = vmatpush2.bf16.xpose.msra.mxu0 0
        %6944 = vmatprep.subr.bf16.mxu0 0
        %6945 = vmatpush2.bf16.xpose.msra.mxu0 0
        %6946 = vmatprep.subr.bf16.mxu0 0
        %6947 = vmatpush2.bf16.xpose.msra.mxu0 0
        %6948 = vmatprep.subr.bf16.mxu0 0
        %6949 = vmatpush2.bf16.xpose.msra.mxu0 0
        %6950 = vmatprep.subr.bf16.mxu0 0
        %6951 = vmatpush2.bf16.xpose.msra.mxu0 0
        %6952 = vmatprep.mubr.bf16.mxu0 %v6590
        %6953 = vmatmul.mubr.bf16.gmra.mxu0 %v6589
        %v6954 = vpop.f32.mrf.mxu0
        %v6955 = vadd.f32 %v6915, %v6954
        %v6956 = vpop.f32.mrf.mxu0
        %v6957 = vpop.f32.mrf.mxu0
        %v6958 = vpop.f32.mrf.mxu0
        %6959 = vdwg.mxu0
        %6960 = vmatprep.subr.bf16.mxu0 0
        %6961 = vmatpush1.bf16.xpose.msra.mxu0 0
        %6962 = vmatprep.subr.bf16.mxu0 0
        %6963 = vmatpush1.bf16.xpose.msra.mxu0 0
        %6964 = vmatprep.subr.bf16.mxu0 0
        %6965 = vmatpush1.bf16.xpose.msra.mxu0 0
        %6966 = vmatprep.subr.bf16.mxu0 0
        %6967 = vmatpush1.bf16.xpose.msra.mxu0 0
        %6968 = vmatprep.subr.bf16.mxu0 0
        %6969 = vmatpush1.bf16.xpose.msra.mxu0 0
        %6970 = vmatprep.subr.bf16.mxu0 0
        %6971 = vmatpush1.bf16.xpose.msra.mxu0 0
        %6972 = vmatprep.subr.bf16.mxu0 %v6761
        %6973 = vmatpush1.bf16.xpose.msra.mxu0 %v6760
        %6974 = vmatprep.subr.bf16.mxu0 %v6745
        %6975 = vmatpush1.bf16.xpose.msra.mxu0 %v6744
        %6976 = vmatprep.subr.bf16.mxu0 0
        %6977 = vmatpush2.bf16.xpose.msra.mxu0 0
        %6978 = vmatprep.subr.bf16.mxu0 0
        %6979 = vmatpush2.bf16.xpose.msra.mxu0 0
        %6980 = vmatprep.subr.bf16.mxu0 0
        %6981 = vmatpush2.bf16.xpose.msra.mxu0 0
        %6982 = vmatprep.subr.bf16.mxu0 0
        %6983 = vmatpush2.bf16.xpose.msra.mxu0 0
        %6984 = vmatprep.subr.bf16.mxu0 0
        %6985 = vmatpush2.bf16.xpose.msra.mxu0 0
        %6986 = vmatprep.subr.bf16.mxu0 0
        %6987 = vmatpush2.bf16.xpose.msra.mxu0 0
        %6988 = vmatprep.subr.bf16.mxu0 0
        %6989 = vmatpush2.bf16.xpose.msra.mxu0 0
        %6990 = vmatprep.subr.bf16.mxu0 0
        %6991 = vmatpush2.bf16.xpose.msra.mxu0 0
        %6992 = vmatprep.mubr.bf16.mxu0 %v6592
        %6993 = vmatmul.mubr.bf16.gmra.mxu0 %v6591
        %v6994 = vpop.f32.mrf.mxu0
        %v6995 = vadd.f32 %v6955, %v6994
        %v6996 = vpop.f32.mrf.mxu0
        %v6997 = vpop.f32.mrf.mxu0
        %v6998 = vpop.f32.mrf.mxu0
        %6999 = vdwg.mxu0
        %7000 = vmatprep.subr.bf16.mxu0 0
        %7001 = vmatpush1.bf16.xpose.msra.mxu0 0
        %7002 = vmatprep.subr.bf16.mxu0 0
        %7003 = vmatpush1.bf16.xpose.msra.mxu0 0
        %7004 = vmatprep.subr.bf16.mxu0 0
        %7005 = vmatpush1.bf16.xpose.msra.mxu0 0
        %7006 = vmatprep.subr.bf16.mxu0 0
        %7007 = vmatpush1.bf16.xpose.msra.mxu0 0
        %7008 = vmatprep.subr.bf16.mxu0 0
        %7009 = vmatpush1.bf16.xpose.msra.mxu0 0
        %7010 = vmatprep.subr.bf16.mxu0 0
        %7011 = vmatpush1.bf16.xpose.msra.mxu0 0
        %7012 = vmatprep.subr.bf16.mxu0 %v6763
        %7013 = vmatpush1.bf16.xpose.msra.mxu0 %v6762
        %7014 = vmatprep.subr.bf16.mxu0 %v6747
        %7015 = vmatpush1.bf16.xpose.msra.mxu0 %v6746
        %7016 = vmatprep.subr.bf16.mxu0 0
        %7017 = vmatpush2.bf16.xpose.msra.mxu0 0
        %7018 = vmatprep.subr.bf16.mxu0 0
        %7019 = vmatpush2.bf16.xpose.msra.mxu0 0
        %7020 = vmatprep.subr.bf16.mxu0 0
        %7021 = vmatpush2.bf16.xpose.msra.mxu0 0
        %7022 = vmatprep.subr.bf16.mxu0 0
        %7023 = vmatpush2.bf16.xpose.msra.mxu0 0
        %7024 = vmatprep.subr.bf16.mxu0 0
        %7025 = vmatpush2.bf16.xpose.msra.mxu0 0
        %7026 = vmatprep.subr.bf16.mxu0 0
        %7027 = vmatpush2.bf16.xpose.msra.mxu0 0
        %7028 = vmatprep.subr.bf16.mxu0 0
        %7029 = vmatpush2.bf16.xpose.msra.mxu0 0
        %7030 = vmatprep.subr.bf16.mxu0 0
        %7031 = vmatpush2.bf16.xpose.msra.mxu0 0
        %7032 = vmatprep.mubr.bf16.mxu0 %v6594
        %7033 = vmatmul.mubr.bf16.gmra.mxu0 %v6593
        %v7034 = vpop.f32.mrf.mxu0
        %v7035 = vadd.f32 %v6995, %v7034
        %v7036 = vpop.f32.mrf.mxu0
        %v7037 = vpop.f32.mrf.mxu0
        %v7038 = vpop.f32.mrf.mxu0
        %7039 = vdwg.mxu0
        %7040 = vmatprep.subr.bf16.mxu0 0
        %7041 = vmatpush1.bf16.xpose.msra.mxu0 0
        %7042 = vmatprep.subr.bf16.mxu0 0
        %7043 = vmatpush1.bf16.xpose.msra.mxu0 0
        %7044 = vmatprep.subr.bf16.mxu0 0
        %7045 = vmatpush1.bf16.xpose.msra.mxu0 0
        %7046 = vmatprep.subr.bf16.mxu0 0
        %7047 = vmatpush1.bf16.xpose.msra.mxu0 0
        %7048 = vmatprep.subr.bf16.mxu0 0
        %7049 = vmatpush1.bf16.xpose.msra.mxu0 0
        %7050 = vmatprep.subr.bf16.mxu0 0
        %7051 = vmatpush1.bf16.xpose.msra.mxu0 0
        %7052 = vmatprep.subr.bf16.mxu0 %v6765
        %7053 = vmatpush1.bf16.xpose.msra.mxu0 %v6764
        %7054 = vmatprep.subr.bf16.mxu0 %v6749
        %7055 = vmatpush1.bf16.xpose.msra.mxu0 %v6748
        %7056 = vmatprep.subr.bf16.mxu0 0
        %7057 = vmatpush2.bf16.xpose.msra.mxu0 0
        %7058 = vmatprep.subr.bf16.mxu0 0
        %7059 = vmatpush2.bf16.xpose.msra.mxu0 0
        %7060 = vmatprep.subr.bf16.mxu0 0
        %7061 = vmatpush2.bf16.xpose.msra.mxu0 0
        %7062 = vmatprep.subr.bf16.mxu0 0
        %7063 = vmatpush2.bf16.xpose.msra.mxu0 0
        %7064 = vmatprep.subr.bf16.mxu0 0
        %7065 = vmatpush2.bf16.xpose.msra.mxu0 0
        %7066 = vmatprep.subr.bf16.mxu0 0
        %7067 = vmatpush2.bf16.xpose.msra.mxu0 0
        %7068 = vmatprep.subr.bf16.mxu0 0
        %7069 = vmatpush2.bf16.xpose.msra.mxu0 0
        %7070 = vmatprep.subr.bf16.mxu0 0
        %7071 = vmatpush2.bf16.xpose.msra.mxu0 0
        %7072 = vmatprep.mubr.bf16.mxu0 %v6596
        %7073 = vmatmul.mubr.bf16.gmra.mxu0 %v6595
        %v7074 = vpop.f32.mrf.mxu0
        %v7075 = vadd.f32 %v7035, %v7074
        %v7076 = vpop.f32.mrf.mxu0
        %v7077 = vpop.f32.mrf.mxu0
        %v7078 = vpop.f32.mrf.mxu0
        %7079 = vdwg.mxu0
        %7080 = vmatprep.subr.bf16.mxu0 0
        %7081 = vmatpush1.bf16.xpose.msra.mxu0 0
        %7082 = vmatprep.subr.bf16.mxu0 0
        %7083 = vmatpush1.bf16.xpose.msra.mxu0 0
        %7084 = vmatprep.subr.bf16.mxu0 0
        %7085 = vmatpush1.bf16.xpose.msra.mxu0 0
        %7086 = vmatprep.subr.bf16.mxu0 0
        %7087 = vmatpush1.bf16.xpose.msra.mxu0 0
        %7088 = vmatprep.subr.bf16.mxu0 0
        %7089 = vmatpush1.bf16.xpose.msra.mxu0 0
        %7090 = vmatprep.subr.bf16.mxu0 0
        %7091 = vmatpush1.bf16.xpose.msra.mxu0 0
        %7092 = vmatprep.subr.bf16.mxu0 %v6767
        %7093 = vmatpush1.bf16.xpose.msra.mxu0 %v6766
        %7094 = vmatprep.subr.bf16.mxu0 %v6751
        %7095 = vmatpush1.bf16.xpose.msra.mxu0 %v6750
        %7096 = vmatprep.subr.bf16.mxu0 0
        %7097 = vmatpush2.bf16.xpose.msra.mxu0 0
        %7098 = vmatprep.subr.bf16.mxu0 0
        %7099 = vmatpush2.bf16.xpose.msra.mxu0 0
        %7100 = vmatprep.subr.bf16.mxu0 0
        %7101 = vmatpush2.bf16.xpose.msra.mxu0 0
        %7102 = vmatprep.subr.bf16.mxu0 0
        %7103 = vmatpush2.bf16.xpose.msra.mxu0 0
        %7104 = vmatprep.subr.bf16.mxu0 0
        %7105 = vmatpush2.bf16.xpose.msra.mxu0 0
        %7106 = vmatprep.subr.bf16.mxu0 0
        %7107 = vmatpush2.bf16.xpose.msra.mxu0 0
        %7108 = vmatprep.subr.bf16.mxu0 0
        %7109 = vmatpush2.bf16.xpose.msra.mxu0 0
        %7110 = vmatprep.subr.bf16.mxu0 0
        %7111 = vmatpush2.bf16.xpose.msra.mxu0 0
        %7112 = vmatprep.mubr.bf16.mxu0 %v6598
        %7113 = vmatmul.mubr.bf16.gmra.mxu0 %v6597
        %v7114 = vpop.f32.mrf.mxu0
        %v7115 = vadd.f32 %v7075, %v7114
        %v7116 = vpop.f32.mrf.mxu0
        %v7117 = vpop.f32.mrf.mxu0
        %v7118 = vpop.f32.mrf.mxu0
        %7119 = vdwg.mxu0
        %v7120 = vadd.f32 %v5956, %v7115
        %v7121 = vsel %vm620, %v7120, 0.0
        %7122 = vadd.xlane.f32.xlu0 %v7121
        %v7123 = vpop.xlane.xlu0 %7122
        %v7124 = vmul.f32 %v7123, %v1420
        %v7125 = vsub.f32 %v7120, %v7124
        %v7126 = vmul.f32 %v7125, %v7125
        %v7127 = vsel %vm620, %v7126, 0.0
        %7128 = vadd.xlane.f32.xlu0 %v7127
        %v7129 = vpop.xlane.xlu0 %7128
        %v7130 = vmul.f32 %v7129, %v1420
        %v7131 = vadd.f32 %v7130, 1e-05
        %v7132 = vrsqrt.pop %v7131
        %v7133 = vmul.f32 %v7125, %v7132
        %v7134 = vlaneseq
        %v7135 = vshrl.u32 %v7134, 7
        %v7136 = vsub.s32 2, %v7135
        %v7137 = vrot.slane %v4960, %v7136
        %v7138 = vmul.f32 %v7133, %v7137
        %v7139 = vlaneseq
        %v7140 = vshrl.u32 %v7139, 7
        %v7141 = vsub.s32 2, %v7140
        %v7142 = vrot.slane %v4962, %v7141
        %v7143 = vadd.f32 %v7138, %v7142
        %v7144 = vpack.c.bf16 %v7143, %v7143
        %v7145 = vld [vmem:[%s16] sm:$0xf]
        %v7146 = vld [vmem:[%s16 + $0x4] sm:$0xf]
        %v7147 = vld [vmem:[%s16 + $0x8] sm:$0xf]
        %v7148 = vld [vmem:[%s16 + $0xc] sm:$0xf]
        %v7149 = vld [vmem:[%s17] sm:$0x1]
        %v7151 = vlaneseq
        %v7152 = vshrl.u32 %v7151, 7
        %v7153 = vsub.s32 0, %v7152
        %v7154 = vrot.slane %v7149, %v7153
        %v7160 = vunpack.c.l.b16 %v7145
        %v7161 = vunpack.c.l.b16 %v7146
        %v7162 = vunpack.c.l.b16 %v7147
        %v7163 = vunpack.c.l.b16 %v7148
        %v7164 = vpack.c.b16 %v7161, %v7160
        %v7165 = vpack.c.b16 %v7163, %v7162
        %v7169 = vsel %vm620, %v7144, 0
        %7171 = vmatprep.subr.bf16.mxu0 0
        %7172 = vmatpush1.bf16.msra.mxu0 0
        %7173 = vmatprep.subr.bf16.mxu0 0
        %7174 = vmatpush1.bf16.msra.mxu0 0
        %7175 = vmatprep.subr.bf16.mxu0 0
        %7176 = vmatpush1.bf16.msra.mxu0 0
        %7177 = vmatprep.subr.bf16.mxu0 0
        %7178 = vmatpush1.bf16.msra.mxu0 0
        %7179 = vmatprep.subr.bf16.mxu0 0
        %7180 = vmatpush1.bf16.msra.mxu0 0
        %7181 = vmatprep.subr.bf16.mxu0 0
        %7182 = vmatpush1.bf16.msra.mxu0 0
        %7183 = vmatprep.subr.bf16.mxu0 0
        %7184 = vmatpush1.bf16.msra.mxu0 %v7165
        %7185 = vmatprep.subr.bf16.mxu0 0
        %7186 = vmatpush1.bf16.msra.mxu0 %v7164
        %7187 = vmatprep.subr.bf16.mxu0 0
        %7188 = vmatpush2.bf16.msra.mxu0 0
        %7189 = vmatprep.subr.bf16.mxu0 0
        %7190 = vmatpush2.bf16.msra.mxu0 0
        %7191 = vmatprep.subr.bf16.mxu0 0
        %7192 = vmatpush2.bf16.msra.mxu0 0
        %7193 = vmatprep.subr.bf16.mxu0 0
        %7194 = vmatpush2.bf16.msra.mxu0 0
        %7195 = vmatprep.subr.bf16.mxu0 0
        %7196 = vmatpush2.bf16.msra.mxu0 0
        %7197 = vmatprep.subr.bf16.mxu0 0
        %7198 = vmatpush2.bf16.msra.mxu0 0
        %7199 = vmatprep.subr.bf16.mxu0 0
        %7200 = vmatpush2.bf16.msra.mxu0 0
        %7201 = vmatprep.subr.bf16.mxu0 0
        %7202 = vmatpush2.bf16.msra.mxu0 0
        %7203 = vmatprep.mubr.bf16.mxu0 0
        %7204 = vmatmul.mubr.bf16.gmra.mxu0 %v7169
        %v7205 = vpop.f32.mrf.mxu0
        %v7206 = vadd.f32 %v7154, %v7205
        %v7207 = vpop.f32.mrf.mxu0
        %v7208 = vpop.f32.mrf.mxu0
        %v7209 = vpop.f32.mrf.mxu0
        %7210 = vdwg.mxu0
        %7211 = vst [vmem:[%s577] sm:$0xff] %v7206
        %s7212 = sand.u32 %s428, 1
        %s7213 = scalar_lea.sflag [#allocation3], %s7212
        %s7214 = sand.u32 %s428, 1
        %s7215 = smul.addr %s7214, 8
        %s7216 = scalar_lea.vmem [#allocation2], %s7215
        // Predicated region
        $region93: #{model_forward.7} parent=91 // pred_check
          %p7217 = pneg %p438
        $region94: #{model_forward.7} parent=91 // pred_check_branch
          %7219 = sbr.rel (%p7217) target = $region96
        $region95: #{model_forward.7} parent=91 // pred_region
          %s7221 = ssub.s32 128, 128
          %7222 = vsyncadd %s7213, %s7221
          %s7223 = smul.addr %s32, 128
          %s7224 = scalar_lea.hbm %s18, %s7223
          %s7226 = sshll.u32 %s7216, 4
          %s7227 = int_to_ptr.vmem [resolvable:$true] %s7226
          %7229 = dma.vmem_to_hbm [thread:$0]  %s7227, 128, %s7224, %s7213
        $region96: #{model_forward.7} parent=91 // pred_fallthru
          _
      $region92: #{model_forward.7} parent=5 // pred_fallthru
        _
      %p7230 = scmp.le.s32.totalorder 2, %s27
      // Predicated region
      $region97: #{model_forward.7} parent=5 // pred_check
        %p7231 = pneg %p7230
      $region98: #{model_forward.7} parent=5 // pred_check_branch
        %7233 = sbr.rel (%p7231) target = $region100
      $region99: #{model_forward.7} parent=5 // pred_region
        %s7234 = ssub.s32 %s27, 2
        // Predicated region
        $region101: #{model_forward.7} parent=99 // pred_check
          %p7235 = pneg %p444
        $region102: #{model_forward.7} parent=99 // pred_check_branch
          %7237 = sbr.rel (%p7235) target = $region104
        $region103: #{model_forward.7} parent=99 // pred_region
          %s7238 = sand.u32 %s429, 1
          %s7239 = scalar_lea.sflag [#allocation3], %s7238
          %s7240 = sand.u32 %s429, 1
          %s7241 = smul.addr %s7240, 8
          %s7242 = scalar_lea.vmem [#allocation2], %s7241
          %7243 = dma.done %s7239, 128
        $region104: #{model_forward.7} parent=99 // pred_fallthru
          _
      $region100: #{model_forward.7} parent=5 // pred_fallthru
        _
    $region6: #{model_forward.7} parent=1 // loop_footer
      %s31 = sadd.s32 1, %s27
    $region7: #{model_forward.7} parent=1 // loop_footer_branch
      %26 = sbr.rel target = $region3
    $region8: #{model_forward.7} parent=1 // loop_exit
      _
    %7244 = vsyncpa [#allocation3], 1
    %s7245 = scalar_lea.sflag [#allocation3], 1
    %7246 = vsyncpa %s7245, 1

</llo_original>
